<compile_context>
chip_gen: v7x
topology: tpu7x:2x2x1
jax: 0.10.0
libtpu: 0.0.40
codegen_flags: <defaults>
</compile_context>

<pallas_src>
import jax
import jax.numpy as jnp
from jax.experimental import pallas as pl
from jax.experimental.pallas import tpu as pltpu


def feat_extract_conv(x_nchw, w1_oihw, b1, w2_oihw, b2, *, block_b=None):
    """Forward pass identical to the PyTorch FeatExtractConv module (NCHW in/out)."""
    B, Cin, H, W = x_nchw.shape
    C1, _, KH1, KW1 = w1_oihw.shape
    C2, _, KH2, KW2 = w2_oihw.shape

    H1, W1 = H - KH1 + 1, W - KW1 + 1          # conv1 (VALID, stride 1)
    Hp1, Wp1 = H1 // 2, W1 // 2                # maxpool 2x2 (floor mode)
    H2c, W2c = Hp1 - KH2 + 1, Wp1 - KW2 + 1    # conv2
    Hp2, Wp2 = H2c // 2, W2c // 2              # maxpool 2x2 (floor mode)
    assert Hp2 >= 1 and Wp2 >= 1, "input too small for this conv stack"
    HW = H * W

    Cin_p = ((Cin + 7) // 8) * 8               # sublane-align conv1 tap pieces
    K1 = KH1 * KW1 * Cin_p                     # conv1 contraction depth (392)
    K2 = KH2 * KW2 * C1                        # conv2 contraction depth (800)

    # Rough per-lane-column VMEM bytes of everything live in a grid step
    # (double-buffered in/out blocks, padded scratch slabs, im2col/chunk
    # temporaries, f32 matmul results) -- used to bound the batch block.
    bytes_per_col = (
        2 * Cin_p * 2 + Cin_p * 2 + K1 * 2 + C1 * 4 + 2 * C1 * 2 + C1 * 2
        + K2 * 2 + C2 * 4 + 2 * C2 * 2 + 2 * C2 * 2
    )

    if block_b is None:
        budget = 26 * (1 << 20)                # v7x-friendly per-step footprint
        Bblk = 1
        for d in range(1, B + 1):
            if B % d == 0 and d <= 8 and d * HW * bytes_per_col <= budget:
                Bblk = d
        if Bblk == B and B > 1:
            # Prefer >= 2 grid steps so both v7x TensorCores get work and the
            # input/output blocks double-buffer.
            for d in range(Bblk - 1, 0, -1):
                if B % d == 0:
                    Bblk = d
                    break
    else:
        Bblk = block_b
    assert B % Bblk == 0, "block_b must divide the batch"
    NBLK = Bblk * HW
    assert NBLK % 128 == 0, "Bblk*H*W must be a multiple of 128 (lane alignment)"

    # Scratch tail padding: every shifted-slice read [delta, delta + NBLK) must
    # stay inside the padded slab.  These bounds (together with VALID conv +
    # floor pooling) are what make the "invalid lanes are never consumed"
    # argument hold -- do not shrink them when changing shapes/strides.
    pad_x = pl.cdiv((KH1 - 1) * W + (KW1 - 1), 128) * 128     # conv1 taps
    pad_y1 = pl.cdiv(W + 1, 128) * 128                        # pool1 taps
    pad_m4 = pl.cdiv(2 * ((KH2 - 1) * W + (KW2 - 1)), 128) * 128  # conv2 taps
    pad_p2 = pl.cdiv(2 * W + 2, 128) * 128                    # pool2 taps
    assert (KH1 - 1) * W + (KW1 - 1) <= pad_x
    assert W + 1 <= pad_y1
    assert 2 * ((KH2 - 1) * W + (KW2 - 1)) <= pad_m4
    assert 2 * W + 2 <= pad_p2

    # ----------------- host-side layout plumbing (outside kernel) -----------------
    # activations: channel-major, batch folded into the flat spatial (lane) axis,
    # input channels zero-padded to Cin_p
    x_cm = jnp.transpose(x_nchw, (1, 0, 2, 3)).reshape(Cin, B * HW)
    x_cm = jnp.pad(x_cm, ((0, Cin_p - Cin), (0, 0))).astype(jnp.bfloat16)
    # conv1 weights: (C1, K1), K ordered (kh, kw, cin_pad) to match im2col rows
    w1p = jnp.pad(w1_oihw, ((0, 0), (0, Cin_p - Cin), (0, 0), (0, 0)))
    w1m = jnp.transpose(w1p, (0, 2, 3, 1)).reshape(C1, K1).astype(jnp.bfloat16)
    # conv2 weights fused into one matmul: (C2, K2), K ordered (kh, kw, c1)
    w2m = jnp.transpose(w2_oihw, (0, 2, 3, 1)).reshape(C2, K2).astype(jnp.bfloat16)
    b1c = b1.reshape(C1, 1).astype(jnp.float32)
    b2c = b2.reshape(C2, 1).astype(jnp.float32)

    def kernel(x_ref, w1_ref, b1_ref, w2_ref, b2_ref, o_ref,
               xpad, y1pad, m4pad, y2pad):
        # One-time hygiene: zero the scratch tails.  Valid output lanes never
        # read tail lanes (tap offsets bounded by the pads above), so this is
        # for determinism only; scratch persists across grid steps and the
        # tails are never overwritten, so do it on the first step only.
        @pl.when(pl.program_id(0) == 0)
        def _init_tails():
            xpad[:, pl.ds(NBLK, pad_x)] = jnp.zeros((Cin_p, pad_x), jnp.bfloat16)
            y1pad[:, pl.ds(NBLK, pad_y1)] = jnp.zeros((C1, pad_y1), jnp.bfloat16)
            m4pad[:, pl.ds(NBLK, pad_m4)] = jnp.zeros((C1, pad_m4), jnp.bfloat16)
            y2pad[:, pl.ds(NBLK, pad_p2)] = jnp.zeros((C2, pad_p2), jnp.bfloat16)

        # -------- stage the input block into the padded scratch -------------
        xpad[:, pl.ds(0, NBLK)] = x_ref[...]

        # -------- conv1: ONE fat im2col matmul, K = KH1*KW1*Cin_p -----------
        im2col1 = jnp.concatenate(
            [xpad[:, pl.ds(kh * W + kw, NBLK)]
             for kh in range(KH1) for kw in range(KW1)], axis=0)    # (K1, NBLK)
        y1 = jnp.dot(w1_ref[...], im2col1,
                     preferred_element_type=jnp.float32)            # (C1, NBLK)
        y1 = jnp.clip(y1 + b1_ref[...], 0.0, 6.0)                   # bias + relu6 (f32)

        # -------- maxpool1 (2x2, floor) on the full stride-W grid -----------
        y1pad[:, pl.ds(0, NBLK)] = y1.astype(jnp.bfloat16)
        m4 = jnp.maximum(
            jnp.maximum(y1pad[:, pl.ds(0, NBLK)], y1pad[:, pl.ds(1, NBLK)]),
            jnp.maximum(y1pad[:, pl.ds(W, NBLK)], y1pad[:, pl.ds(W + 1, NBLK)]))
        # m4 valid at lanes b*HW + 2a*W + 2a' == pool1 output (a, a')
        m4pad[:, pl.ds(0, NBLK)] = m4

        # -------- conv2: ONE fused matmul, K = KH2*KW2*C1 --------------------
        # pool1's stride-2 subsampling is folded into the tap offsets 2*(kh*W+kw)
        chunk = jnp.concatenate(
            [m4pad[:, pl.ds(2 * (kh * W + kw), NBLK)]
             for kh in range(KH2) for kw in range(KW2)], axis=0)    # (K2, NBLK)
        y2 = jnp.dot(w2_ref[...], chunk,
                     preferred_element_type=jnp.float32)            # (C2, NBLK)
        y2 = jnp.clip(y2 + b2_ref[...], 0.0, 6.0)                   # bias + relu6 (f32)
        # y2 valid at lanes b*HW + 2*h2*W + 2*w2 == conv2 output (h2, w2)

        # -------- maxpool2 (2x2, floor), fully vectorized --------------------
        y2pad[:, pl.ds(0, NBLK)] = y2.astype(jnp.bfloat16)
        m2 = jnp.maximum(
            jnp.maximum(y2pad[:, pl.ds(0, NBLK)], y2pad[:, pl.ds(2, NBLK)]),
            jnp.maximum(y2pad[:, pl.ds(2 * W, NBLK)],
                        y2pad[:, pl.ds(2 * W + 2, NBLK)]))
        # m2 valid at lanes b*HW + 4*h3*W + 4*w3 == pool2 output (h3, w3).
        # Lane-dense store; stride-4 compaction + NCHW transpose done in wrapper.
        o_ref[...] = m2

    vmem_est = bytes_per_col * NBLK + (1 << 20)   # + weights / pads / slack
    vmem_limit = int(min(56 << 20, max(32 << 20, vmem_est * 3 // 2)))  # v7x headroom

    slab = pl.pallas_call(
        kernel,
        out_shape=jax.ShapeDtypeStruct((C2, B * HW), jnp.bfloat16),
        grid_spec=pltpu.PrefetchScalarGridSpec(
            num_scalar_prefetch=0,
            grid=(B // Bblk,),
            in_specs=[
                pl.BlockSpec((Cin_p, NBLK), lambda i: (0, i)),
                pl.BlockSpec((C1, K1), lambda i: (0, 0)),
                pl.BlockSpec((C1, 1), lambda i: (0, 0)),
                pl.BlockSpec((C2, K2), lambda i: (0, 0)),
                pl.BlockSpec((C2, 1), lambda i: (0, 0)),
            ],
            out_specs=pl.BlockSpec((C2, NBLK), lambda i: (0, i)),
            scratch_shapes=[
                pltpu.VMEM((Cin_p, NBLK + pad_x), jnp.bfloat16),   # padded input
                pltpu.VMEM((C1, NBLK + pad_y1), jnp.bfloat16),     # padded conv1+relu6
                pltpu.VMEM((C1, NBLK + pad_m4), jnp.bfloat16),     # padded pool1
                pltpu.VMEM((C2, NBLK + pad_p2), jnp.bfloat16),     # padded conv2+relu6
            ],
        ),
        compiler_params=pltpu.CompilerParams(
            dimension_semantics=("parallel",),      # batch blocks are independent
            vmem_limit_bytes=vmem_limit,
        ),
    )(x_cm, w1m, b1c, w2m, b2c)

    # ---- wrapper-side compaction (free layout plumbing, outside the kernel) ----
    slab = slab.reshape(C2, B, H, W)
    out = slab[:, :, : 4 * Hp2 : 4, : 4 * Wp2 : 4]          # keep valid lanes only
    return jnp.transpose(out, (1, 0, 2, 3)).astype(jnp.float32)   # NCHW f32


def reference_forward(x_nchw, w1, b1, w2, b2):
    """Plain-JAX reference matching the PyTorch forward (for verification)."""
    dn = ('NCHW', 'OIHW', 'NCHW')
    y = jax.lax.conv_general_dilated(x_nchw, w1, (1, 1), 'VALID',
                                     dimension_numbers=dn)
    y = jnp.clip(y + b1[None, :, None, None], 0.0, 6.0)
    y = jax.lax.reduce_window(y, -jnp.inf, jax.lax.max,
                              (1, 1, 2, 2), (1, 1, 2, 2), 'VALID')
    y = jax.lax.conv_general_dilated(y, w2, (1, 1), 'VALID',
                                     dimension_numbers=dn)
    y = jnp.clip(y + b2[None, :, None, None], 0.0, 6.0)
    y = jax.lax.reduce_window(y, -jnp.inf, jax.lax.max,
                              (1, 1, 2, 2), (1, 1, 2, 2), 'VALID')
    return y


if __name__ == "__main__":
    key = jax.random.PRNGKey(0)
    kx, kw1, kb1, kw2, kb2 = jax.random.split(key, 5)

    # Smallest round spatial size that survives two VALID convs + two 2x2 pools
    # (32x32 -> 4x4 output); B=4 gives a 2-step grid with the default blocking.
    B, Cin, H, W = 4, 4, 32, 32
    C1, C2 = 32, 32

    x = jax.random.normal(kx, (B, Cin, H, W), jnp.float32)
    # Deterministic synthetic parameters (shapes match nn.Conv2d).
    w1 = jax.random.normal(kw1, (C1, Cin, 7, 7), jnp.float32) * (1.0 / (Cin * 49) ** 0.5)
    b1 = jax.random.normal(kb1, (C1,), jnp.float32) * 0.05
    w2 = jax.random.normal(kw2, (C2, C1, 5, 5), jnp.float32) * (1.0 / (C1 * 25) ** 0.5)
    b2 = jax.random.normal(kb2, (C2,), jnp.float32) * 0.05

    out = jax.block_until_ready(feat_extract_conv(x, w1, b1, w2, b2))
    ref = jax.block_until_ready(reference_forward(x, w1, b1, w2, b2))
    assert out.shape == ref.shape, (out.shape, ref.shape)
    # bf16 matmul inputs / bf16 stored slabs with f32 accumulation -> relaxed
    # (intentional quantization vs the f32 PyTorch reference).
    assert jnp.allclose(out, ref, atol=5e-2, rtol=5e-2), \
        float(jnp.max(jnp.abs(out - ref)))

    print("KERNEL_OK")
</pallas_src>

<mosaic_0001>
module attributes {stable_mosaic.version = 11 : i64} {
  func.func @kernel(%arg0: i32, %arg1: memref<8x2048xbf16, #tpu.memory_space<vmem>>, %arg2: memref<32x392xbf16, #tpu.memory_space<vmem>>, %arg3: memref<32x1xf32, #tpu.memory_space<vmem>>, %arg4: memref<32x800xbf16, #tpu.memory_space<vmem>>, %arg5: memref<32x1xf32, #tpu.memory_space<vmem>>, %arg6: memref<32x2048xbf16, #tpu.memory_space<vmem>>, %arg7: memref<8x2304xbf16, #tpu.memory_space<vmem>>, %arg8: memref<32x2176xbf16, #tpu.memory_space<vmem>>, %arg9: memref<32x2432xbf16, #tpu.memory_space<vmem>>, %arg10: memref<32x2176xbf16, #tpu.memory_space<vmem>>) attributes {dimension_semantics = [#tpu.dimension_semantics<parallel>], iteration_bounds = array<i64: 2>, scalar_prefetch = 0 : i64, scratch_operands = 4 : i64, tpu.core_type = #tpu.core_type<tc>, window_params = [{transform_indices = @transform_0, window_bounds = array<i64: 8, 2048>}, {pipeline_mode = #tpu.pipeline_mode<synchronous>, transform_indices = @transform_1, window_bounds = array<i64: 32, 392>}, {pipeline_mode = #tpu.pipeline_mode<synchronous>, transform_indices = @transform_2, window_bounds = array<i64: 32, 1>}, {pipeline_mode = #tpu.pipeline_mode<synchronous>, transform_indices = @transform_3, window_bounds = array<i64: 32, 800>}, {pipeline_mode = #tpu.pipeline_mode<synchronous>, transform_indices = @transform_4, window_bounds = array<i64: 32, 1>}, {transform_indices = @transform_5, window_bounds = array<i64: 32, 2048>}]} {
    %c0_i32 = arith.constant 0 : i32
    %0 = arith.cmpi eq, %arg0, %c0_i32 : i32
    %1 = arith.extui %0 : i1 to i32
    %c0_i32_0 = arith.constant 0 : i32
    %2 = arith.cmpi ne, %1, %c0_i32_0 : i32
    scf.if %2 {
      %cst_132 = arith.constant 0.000000e+00 : bf16
      %124 = vector.broadcast %cst_132 : bf16 to vector<8x256xbf16>
      %c0_133 = arith.constant 0 : index
      %c2048 = arith.constant 2048 : index
      %125 = vector.load %arg7[%c0_133, %c2048] : memref<8x2304xbf16, #tpu.memory_space<vmem>>, vector<8x256xbf16>
      tpu.vector_store %arg7[%c0_133, %c2048], %124 {strides = array<i32>} : memref<8x2304xbf16, #tpu.memory_space<vmem>>, vector<8x256xbf16>,
      %cst_134 = arith.constant 0.000000e+00 : bf16
      %126 = vector.broadcast %cst_134 : bf16 to vector<32x128xbf16>
      %c0_135 = arith.constant 0 : index
      %c2048_136 = arith.constant 2048 : index
      %127 = vector.load %arg8[%c0_135, %c2048_136] : memref<32x2176xbf16, #tpu.memory_space<vmem>>, vector<32x128xbf16>
      tpu.vector_store %arg8[%c0_135, %c2048_136], %126 {strides = array<i32>} : memref<32x2176xbf16, #tpu.memory_space<vmem>>, vector<32x128xbf16>,
      %cst_137 = arith.constant 0.000000e+00 : bf16
      %128 = vector.broadcast %cst_137 : bf16 to vector<32x384xbf16>
      %c0_138 = arith.constant 0 : index
      %c2048_139 = arith.constant 2048 : index
      %129 = vector.load %arg9[%c0_138, %c2048_139] : memref<32x2432xbf16, #tpu.memory_space<vmem>>, vector<32x384xbf16>
      tpu.vector_store %arg9[%c0_138, %c2048_139], %128 {strides = array<i32>} : memref<32x2432xbf16, #tpu.memory_space<vmem>>, vector<32x384xbf16>,
      %cst_140 = arith.constant 0.000000e+00 : bf16
      %130 = vector.broadcast %cst_140 : bf16 to vector<32x128xbf16>
      %c0_141 = arith.constant 0 : index
      %c2048_142 = arith.constant 2048 : index
      %131 = vector.load %arg10[%c0_141, %c2048_142] : memref<32x2176xbf16, #tpu.memory_space<vmem>>, vector<32x128xbf16>
      tpu.vector_store %arg10[%c0_141, %c2048_142], %130 {strides = array<i32>} : memref<32x2176xbf16, #tpu.memory_space<vmem>>, vector<32x128xbf16>,
    } else {
    }
    %c0 = arith.constant 0 : index
    %c0_1 = arith.constant 0 : index
    %3 = vector.load %arg1[%c0, %c0_1] : memref<8x2048xbf16, #tpu.memory_space<vmem>>, vector<8x2048xbf16>
    %c0_2 = arith.constant 0 : index
    %c0_3 = arith.constant 0 : index
    %4 = vector.load %arg7[%c0_2, %c0_3] : memref<8x2304xbf16, #tpu.memory_space<vmem>>, vector<8x2048xbf16>
    tpu.vector_store %arg7[%c0_2, %c0_3], %3 {strides = array<i32>} : memref<8x2304xbf16, #tpu.memory_space<vmem>>, vector<8x2048xbf16>,
    %c0_4 = arith.constant 0 : index
    %c0_5 = arith.constant 0 : index
    %5 = vector.load %arg7[%c0_4, %c0_5] : memref<8x2304xbf16, #tpu.memory_space<vmem>>, vector<8x2048xbf16>
    %c0_6 = arith.constant 0 : index
    %c1 = arith.constant 1 : index
    %6 = vector.load %arg7[%c0_6, %c1] : memref<8x2304xbf16, #tpu.memory_space<vmem>>, vector<8x2048xbf16>
    %c0_7 = arith.constant 0 : index
    %c2 = arith.constant 2 : index
    %7 = vector.load %arg7[%c0_7, %c2] : memref<8x2304xbf16, #tpu.memory_space<vmem>>, vector<8x2048xbf16>
    %c0_8 = arith.constant 0 : index
    %c3 = arith.constant 3 : index
    %8 = vector.load %arg7[%c0_8, %c3] : memref<8x2304xbf16, #tpu.memory_space<vmem>>, vector<8x2048xbf16>
    %c0_9 = arith.constant 0 : index
    %c4 = arith.constant 4 : index
    %9 = vector.load %arg7[%c0_9, %c4] : memref<8x2304xbf16, #tpu.memory_space<vmem>>, vector<8x2048xbf16>
    %c0_10 = arith.constant 0 : index
    %c5 = arith.constant 5 : index
    %10 = vector.load %arg7[%c0_10, %c5] : memref<8x2304xbf16, #tpu.memory_space<vmem>>, vector<8x2048xbf16>
    %c0_11 = arith.constant 0 : index
    %c6 = arith.constant 6 : index
    %11 = vector.load %arg7[%c0_11, %c6] : memref<8x2304xbf16, #tpu.memory_space<vmem>>, vector<8x2048xbf16>
    %c0_12 = arith.constant 0 : index
    %c32 = arith.constant 32 : index
    %12 = vector.load %arg7[%c0_12, %c32] : memref<8x2304xbf16, #tpu.memory_space<vmem>>, vector<8x2048xbf16>
    %c0_13 = arith.constant 0 : index
    %c33 = arith.constant 33 : index
    %13 = vector.load %arg7[%c0_13, %c33] : memref<8x2304xbf16, #tpu.memory_space<vmem>>, vector<8x2048xbf16>
    %c0_14 = arith.constant 0 : index
    %c34 = arith.constant 34 : index
    %14 = vector.load %arg7[%c0_14, %c34] : memref<8x2304xbf16, #tpu.memory_space<vmem>>, vector<8x2048xbf16>
    %c0_15 = arith.constant 0 : index
    %c35 = arith.constant 35 : index
    %15 = vector.load %arg7[%c0_15, %c35] : memref<8x2304xbf16, #tpu.memory_space<vmem>>, vector<8x2048xbf16>
    %c0_16 = arith.constant 0 : index
    %c36 = arith.constant 36 : index
    %16 = vector.load %arg7[%c0_16, %c36] : memref<8x2304xbf16, #tpu.memory_space<vmem>>, vector<8x2048xbf16>
    %c0_17 = arith.constant 0 : index
    %c37 = arith.constant 37 : index
    %17 = vector.load %arg7[%c0_17, %c37] : memref<8x2304xbf16, #tpu.memory_space<vmem>>, vector<8x2048xbf16>
    %c0_18 = arith.constant 0 : index
    %c38 = arith.constant 38 : index
    %18 = vector.load %arg7[%c0_18, %c38] : memref<8x2304xbf16, #tpu.memory_space<vmem>>, vector<8x2048xbf16>
    %c0_19 = arith.constant 0 : index
    %c64 = arith.constant 64 : index
    %19 = vector.load %arg7[%c0_19, %c64] : memref<8x2304xbf16, #tpu.memory_space<vmem>>, vector<8x2048xbf16>
    %c0_20 = arith.constant 0 : index
    %c65 = arith.constant 65 : index
    %20 = vector.load %arg7[%c0_20, %c65] : memref<8x2304xbf16, #tpu.memory_space<vmem>>, vector<8x2048xbf16>
    %c0_21 = arith.constant 0 : index
    %c66 = arith.constant 66 : index
    %21 = vector.load %arg7[%c0_21, %c66] : memref<8x2304xbf16, #tpu.memory_space<vmem>>, vector<8x2048xbf16>
    %c0_22 = arith.constant 0 : index
    %c67 = arith.constant 67 : index
    %22 = vector.load %arg7[%c0_22, %c67] : memref<8x2304xbf16, #tpu.memory_space<vmem>>, vector<8x2048xbf16>
    %c0_23 = arith.constant 0 : index
    %c68 = arith.constant 68 : index
    %23 = vector.load %arg7[%c0_23, %c68] : memref<8x2304xbf16, #tpu.memory_space<vmem>>, vector<8x2048xbf16>
    %c0_24 = arith.constant 0 : index
    %c69 = arith.constant 69 : index
    %24 = vector.load %arg7[%c0_24, %c69] : memref<8x2304xbf16, #tpu.memory_space<vmem>>, vector<8x2048xbf16>
    %c0_25 = arith.constant 0 : index
    %c70 = arith.constant 70 : index
    %25 = vector.load %arg7[%c0_25, %c70] : memref<8x2304xbf16, #tpu.memory_space<vmem>>, vector<8x2048xbf16>
    %c0_26 = arith.constant 0 : index
    %c96 = arith.constant 96 : index
    %26 = vector.load %arg7[%c0_26, %c96] : memref<8x2304xbf16, #tpu.memory_space<vmem>>, vector<8x2048xbf16>
    %c0_27 = arith.constant 0 : index
    %c97 = arith.constant 97 : index
    %27 = vector.load %arg7[%c0_27, %c97] : memref<8x2304xbf16, #tpu.memory_space<vmem>>, vector<8x2048xbf16>
    %c0_28 = arith.constant 0 : index
    %c98 = arith.constant 98 : index
    %28 = vector.load %arg7[%c0_28, %c98] : memref<8x2304xbf16, #tpu.memory_space<vmem>>, vector<8x2048xbf16>
    %c0_29 = arith.constant 0 : index
    %c99 = arith.constant 99 : index
    %29 = vector.load %arg7[%c0_29, %c99] : memref<8x2304xbf16, #tpu.memory_space<vmem>>, vector<8x2048xbf16>
    %c0_30 = arith.constant 0 : index
    %c100 = arith.constant 100 : index
    %30 = vector.load %arg7[%c0_30, %c100] : memref<8x2304xbf16, #tpu.memory_space<vmem>>, vector<8x2048xbf16>
    %c0_31 = arith.constant 0 : index
    %c101 = arith.constant 101 : index
    %31 = vector.load %arg7[%c0_31, %c101] : memref<8x2304xbf16, #tpu.memory_space<vmem>>, vector<8x2048xbf16>
    %c0_32 = arith.constant 0 : index
    %c102 = arith.constant 102 : index
    %32 = vector.load %arg7[%c0_32, %c102] : memref<8x2304xbf16, #tpu.memory_space<vmem>>, vector<8x2048xbf16>
    %c0_33 = arith.constant 0 : index
    %c128 = arith.constant 128 : index
    %33 = vector.load %arg7[%c0_33, %c128] : memref<8x2304xbf16, #tpu.memory_space<vmem>>, vector<8x2048xbf16>
    %c0_34 = arith.constant 0 : index
    %c129 = arith.constant 129 : index
    %34 = vector.load %arg7[%c0_34, %c129] : memref<8x2304xbf16, #tpu.memory_space<vmem>>, vector<8x2048xbf16>
    %c0_35 = arith.constant 0 : index
    %c130 = arith.constant 130 : index
    %35 = vector.load %arg7[%c0_35, %c130] : memref<8x2304xbf16, #tpu.memory_space<vmem>>, vector<8x2048xbf16>
    %c0_36 = arith.constant 0 : index
    %c131 = arith.constant 131 : index
    %36 = vector.load %arg7[%c0_36, %c131] : memref<8x2304xbf16, #tpu.memory_space<vmem>>, vector<8x2048xbf16>
    %c0_37 = arith.constant 0 : index
    %c132 = arith.constant 132 : index
    %37 = vector.load %arg7[%c0_37, %c132] : memref<8x2304xbf16, #tpu.memory_space<vmem>>, vector<8x2048xbf16>
    %c0_38 = arith.constant 0 : index
    %c133 = arith.constant 133 : index
    %38 = vector.load %arg7[%c0_38, %c133] : memref<8x2304xbf16, #tpu.memory_space<vmem>>, vector<8x2048xbf16>
    %c0_39 = arith.constant 0 : index
    %c134 = arith.constant 134 : index
    %39 = vector.load %arg7[%c0_39, %c134] : memref<8x2304xbf16, #tpu.memory_space<vmem>>, vector<8x2048xbf16>
    %c0_40 = arith.constant 0 : index
    %c160 = arith.constant 160 : index
    %40 = vector.load %arg7[%c0_40, %c160] : memref<8x2304xbf16, #tpu.memory_space<vmem>>, vector<8x2048xbf16>
    %c0_41 = arith.constant 0 : index
    %c161 = arith.constant 161 : index
    %41 = vector.load %arg7[%c0_41, %c161] : memref<8x2304xbf16, #tpu.memory_space<vmem>>, vector<8x2048xbf16>
    %c0_42 = arith.constant 0 : index
    %c162 = arith.constant 162 : index
    %42 = vector.load %arg7[%c0_42, %c162] : memref<8x2304xbf16, #tpu.memory_space<vmem>>, vector<8x2048xbf16>
    %c0_43 = arith.constant 0 : index
    %c163 = arith.constant 163 : index
    %43 = vector.load %arg7[%c0_43, %c163] : memref<8x2304xbf16, #tpu.memory_space<vmem>>, vector<8x2048xbf16>
    %c0_44 = arith.constant 0 : index
    %c164 = arith.constant 164 : index
    %44 = vector.load %arg7[%c0_44, %c164] : memref<8x2304xbf16, #tpu.memory_space<vmem>>, vector<8x2048xbf16>
    %c0_45 = arith.constant 0 : index
    %c165 = arith.constant 165 : index
    %45 = vector.load %arg7[%c0_45, %c165] : memref<8x2304xbf16, #tpu.memory_space<vmem>>, vector<8x2048xbf16>
    %c0_46 = arith.constant 0 : index
    %c166 = arith.constant 166 : index
    %46 = vector.load %arg7[%c0_46, %c166] : memref<8x2304xbf16, #tpu.memory_space<vmem>>, vector<8x2048xbf16>
    %c0_47 = arith.constant 0 : index
    %c192 = arith.constant 192 : index
    %47 = vector.load %arg7[%c0_47, %c192] : memref<8x2304xbf16, #tpu.memory_space<vmem>>, vector<8x2048xbf16>
    %c0_48 = arith.constant 0 : index
    %c193 = arith.constant 193 : index
    %48 = vector.load %arg7[%c0_48, %c193] : memref<8x2304xbf16, #tpu.memory_space<vmem>>, vector<8x2048xbf16>
    %c0_49 = arith.constant 0 : index
    %c194 = arith.constant 194 : index
    %49 = vector.load %arg7[%c0_49, %c194] : memref<8x2304xbf16, #tpu.memory_space<vmem>>, vector<8x2048xbf16>
    %c0_50 = arith.constant 0 : index
    %c195 = arith.constant 195 : index
    %50 = vector.load %arg7[%c0_50, %c195] : memref<8x2304xbf16, #tpu.memory_space<vmem>>, vector<8x2048xbf16>
    %c0_51 = arith.constant 0 : index
    %c196 = arith.constant 196 : index
    %51 = vector.load %arg7[%c0_51, %c196] : memref<8x2304xbf16, #tpu.memory_space<vmem>>, vector<8x2048xbf16>
    %c0_52 = arith.constant 0 : index
    %c197 = arith.constant 197 : index
    %52 = vector.load %arg7[%c0_52, %c197] : memref<8x2304xbf16, #tpu.memory_space<vmem>>, vector<8x2048xbf16>
    %c0_53 = arith.constant 0 : index
    %c198 = arith.constant 198 : index
    %53 = vector.load %arg7[%c0_53, %c198] : memref<8x2304xbf16, #tpu.memory_space<vmem>>, vector<8x2048xbf16>
    %54 = tpu.concatenate %5, %6, %7, %8, %9, %10, %11, %12, %13, %14, %15, %16, %17, %18, %19, %20 in 0 : vector<8x2048xbf16>, vector<8x2048xbf16>, vector<8x2048xbf16>, vector<8x2048xbf16>, vector<8x2048xbf16>, vector<8x2048xbf16>, vector<8x2048xbf16>, vector<8x2048xbf16>, vector<8x2048xbf16>, vector<8x2048xbf16>, vector<8x2048xbf16>, vector<8x2048xbf16>, vector<8x2048xbf16>, vector<8x2048xbf16>, vector<8x2048xbf16>, vector<8x2048xbf16> -> vector<128x2048xbf16>
    %55 = tpu.concatenate %21, %22, %23, %24, %25, %26, %27, %28, %29, %30, %31, %32, %33, %34, %35, %36 in 0 : vector<8x2048xbf16>, vector<8x2048xbf16>, vector<8x2048xbf16>, vector<8x2048xbf16>, vector<8x2048xbf16>, vector<8x2048xbf16>, vector<8x2048xbf16>, vector<8x2048xbf16>, vector<8x2048xbf16>, vector<8x2048xbf16>, vector<8x2048xbf16>, vector<8x2048xbf16>, vector<8x2048xbf16>, vector<8x2048xbf16>, vector<8x2048xbf16>, vector<8x2048xbf16> -> vector<128x2048xbf16>
    %56 = tpu.concatenate %37, %38, %39, %40, %41, %42, %43, %44, %45, %46, %47, %48, %49, %50, %51, %52 in 0 : vector<8x2048xbf16>, vector<8x2048xbf16>, vector<8x2048xbf16>, vector<8x2048xbf16>, vector<8x2048xbf16>, vector<8x2048xbf16>, vector<8x2048xbf16>, vector<8x2048xbf16>, vector<8x2048xbf16>, vector<8x2048xbf16>, vector<8x2048xbf16>, vector<8x2048xbf16>, vector<8x2048xbf16>, vector<8x2048xbf16>, vector<8x2048xbf16>, vector<8x2048xbf16> -> vector<128x2048xbf16>
    %57 = tpu.concatenate %54, %55, %56, %53 in 0 : vector<128x2048xbf16>, vector<128x2048xbf16>, vector<128x2048xbf16>, vector<8x2048xbf16> -> vector<392x2048xbf16>
    %c0_54 = arith.constant 0 : index
    %c0_55 = arith.constant 0 : index
    %58 = vector.load %arg2[%c0_54, %c0_55] : memref<32x392xbf16, #tpu.memory_space<vmem>>, vector<32x392xbf16>
    %cst = arith.constant dense<0.000000e+00> : vector<32x2048xf32>
    %59 = tpu.matmul %58, %57, %cst {dimension_numbers = #tpu.dot_dimension_numbers<[1], [0], [0], [1], [0, 0, 1, 1], [], []>} : vector<32x392xbf16>, vector<392x2048xbf16>, vector<32x2048xf32> -> vector<32x2048xf32>
    %c0_56 = arith.constant 0 : index
    %c0_57 = arith.constant 0 : index
    %60 = vector.load %arg3[%c0_56, %c0_57] : memref<32x1xf32, #tpu.memory_space<vmem>>, vector<32x1xf32>
    %61 = vector.broadcast %60 : vector<32x1xf32> to vector<32x2048xf32>
    %62 = arith.addf %59, %61 : vector<32x2048xf32>
    %cst_58 = arith.constant 0.000000e+00 : f32
    %cst_59 = arith.constant 6.000000e+00 : f32
    %63 = vector.broadcast %cst_58 : f32 to vector<32x2048xf32>
    %64 = arith.maximumf %63, %62 : vector<32x2048xf32>
    %65 = vector.broadcast %cst_59 : f32 to vector<32x2048xf32>
    %66 = arith.minimumf %65, %64 : vector<32x2048xf32>
    %67 = arith.truncf %66 : vector<32x2048xf32> to vector<32x2048xbf16>
    %c0_60 = arith.constant 0 : index
    %c0_61 = arith.constant 0 : index
    %68 = vector.load %arg8[%c0_60, %c0_61] : memref<32x2176xbf16, #tpu.memory_space<vmem>>, vector<32x2048xbf16>
    tpu.vector_store %arg8[%c0_60, %c0_61], %67 {strides = array<i32>} : memref<32x2176xbf16, #tpu.memory_space<vmem>>, vector<32x2048xbf16>,
    %c0_62 = arith.constant 0 : index
    %c0_63 = arith.constant 0 : index
    %69 = vector.load %arg8[%c0_62, %c0_63] : memref<32x2176xbf16, #tpu.memory_space<vmem>>, vector<32x2048xbf16>
    %c0_64 = arith.constant 0 : index
    %c1_65 = arith.constant 1 : index
    %70 = vector.load %arg8[%c0_64, %c1_65] : memref<32x2176xbf16, #tpu.memory_space<vmem>>, vector<32x2048xbf16>
    %71 = arith.maximumf %69, %70 : vector<32x2048xbf16>
    %c0_66 = arith.constant 0 : index
    %c32_67 = arith.constant 32 : index
    %72 = vector.load %arg8[%c0_66, %c32_67] : memref<32x2176xbf16, #tpu.memory_space<vmem>>, vector<32x2048xbf16>
    %c0_68 = arith.constant 0 : index
    %c33_69 = arith.constant 33 : index
    %73 = vector.load %arg8[%c0_68, %c33_69] : memref<32x2176xbf16, #tpu.memory_space<vmem>>, vector<32x2048xbf16>
    %74 = arith.maximumf %72, %73 : vector<32x2048xbf16>
    %75 = arith.maximumf %71, %74 : vector<32x2048xbf16>
    %c0_70 = arith.constant 0 : index
    %c0_71 = arith.constant 0 : index
    %76 = vector.load %arg9[%c0_70, %c0_71] : memref<32x2432xbf16, #tpu.memory_space<vmem>>, vector<32x2048xbf16>
    tpu.vector_store %arg9[%c0_70, %c0_71], %75 {strides = array<i32>} : memref<32x2432xbf16, #tpu.memory_space<vmem>>, vector<32x2048xbf16>,
    %c0_72 = arith.constant 0 : index
    %c0_73 = arith.constant 0 : index
    %77 = vector.load %arg9[%c0_72, %c0_73] : memref<32x2432xbf16, #tpu.memory_space<vmem>>, vector<32x2048xbf16>
    %c0_74 = arith.constant 0 : index
    %c2_75 = arith.constant 2 : index
    %78 = vector.load %arg9[%c0_74, %c2_75] : memref<32x2432xbf16, #tpu.memory_space<vmem>>, vector<32x2048xbf16>
    %c0_76 = arith.constant 0 : index
    %c4_77 = arith.constant 4 : index
    %79 = vector.load %arg9[%c0_76, %c4_77] : memref<32x2432xbf16, #tpu.memory_space<vmem>>, vector<32x2048xbf16>
    %c0_78 = arith.constant 0 : index
    %c6_79 = arith.constant 6 : index
    %80 = vector.load %arg9[%c0_78, %c6_79] : memref<32x2432xbf16, #tpu.memory_space<vmem>>, vector<32x2048xbf16>
    %c0_80 = arith.constant 0 : index
    %c8 = arith.constant 8 : index
    %81 = vector.load %arg9[%c0_80, %c8] : memref<32x2432xbf16, #tpu.memory_space<vmem>>, vector<32x2048xbf16>
    %c0_81 = arith.constant 0 : index
    %c64_82 = arith.constant 64 : index
    %82 = vector.load %arg9[%c0_81, %c64_82] : memref<32x2432xbf16, #tpu.memory_space<vmem>>, vector<32x2048xbf16>
    %c0_83 = arith.constant 0 : index
    %c66_84 = arith.constant 66 : index
    %83 = vector.load %arg9[%c0_83, %c66_84] : memref<32x2432xbf16, #tpu.memory_space<vmem>>, vector<32x2048xbf16>
    %c0_85 = arith.constant 0 : index
    %c68_86 = arith.constant 68 : index
    %84 = vector.load %arg9[%c0_85, %c68_86] : memref<32x2432xbf16, #tpu.memory_space<vmem>>, vector<32x2048xbf16>
    %c0_87 = arith.constant 0 : index
    %c70_88 = arith.constant 70 : index
    %85 = vector.load %arg9[%c0_87, %c70_88] : memref<32x2432xbf16, #tpu.memory_space<vmem>>, vector<32x2048xbf16>
    %c0_89 = arith.constant 0 : index
    %c72 = arith.constant 72 : index
    %86 = vector.load %arg9[%c0_89, %c72] : memref<32x2432xbf16, #tpu.memory_space<vmem>>, vector<32x2048xbf16>
    %c0_90 = arith.constant 0 : index
    %c128_91 = arith.constant 128 : index
    %87 = vector.load %arg9[%c0_90, %c128_91] : memref<32x2432xbf16, #tpu.memory_space<vmem>>, vector<32x2048xbf16>
    %c0_92 = arith.constant 0 : index
    %c130_93 = arith.constant 130 : index
    %88 = vector.load %arg9[%c0_92, %c130_93] : memref<32x2432xbf16, #tpu.memory_space<vmem>>, vector<32x2048xbf16>
    %c0_94 = arith.constant 0 : index
    %c132_95 = arith.constant 132 : index
    %89 = vector.load %arg9[%c0_94, %c132_95] : memref<32x2432xbf16, #tpu.memory_space<vmem>>, vector<32x2048xbf16>
    %c0_96 = arith.constant 0 : index
    %c134_97 = arith.constant 134 : index
    %90 = vector.load %arg9[%c0_96, %c134_97] : memref<32x2432xbf16, #tpu.memory_space<vmem>>, vector<32x2048xbf16>
    %c0_98 = arith.constant 0 : index
    %c136 = arith.constant 136 : index
    %91 = vector.load %arg9[%c0_98, %c136] : memref<32x2432xbf16, #tpu.memory_space<vmem>>, vector<32x2048xbf16>
    %c0_99 = arith.constant 0 : index
    %c192_100 = arith.constant 192 : index
    %92 = vector.load %arg9[%c0_99, %c192_100] : memref<32x2432xbf16, #tpu.memory_space<vmem>>, vector<32x2048xbf16>
    %c0_101 = arith.constant 0 : index
    %c194_102 = arith.constant 194 : index
    %93 = vector.load %arg9[%c0_101, %c194_102] : memref<32x2432xbf16, #tpu.memory_space<vmem>>, vector<32x2048xbf16>
    %c0_103 = arith.constant 0 : index
    %c196_104 = arith.constant 196 : index
    %94 = vector.load %arg9[%c0_103, %c196_104] : memref<32x2432xbf16, #tpu.memory_space<vmem>>, vector<32x2048xbf16>
    %c0_105 = arith.constant 0 : index
    %c198_106 = arith.constant 198 : index
    %95 = vector.load %arg9[%c0_105, %c198_106] : memref<32x2432xbf16, #tpu.memory_space<vmem>>, vector<32x2048xbf16>
    %c0_107 = arith.constant 0 : index
    %c200 = arith.constant 200 : index
    %96 = vector.load %arg9[%c0_107, %c200] : memref<32x2432xbf16, #tpu.memory_space<vmem>>, vector<32x2048xbf16>
    %c0_108 = arith.constant 0 : index
    %c256 = arith.constant 256 : index
    %97 = vector.load %arg9[%c0_108, %c256] : memref<32x2432xbf16, #tpu.memory_space<vmem>>, vector<32x2048xbf16>
    %c0_109 = arith.constant 0 : index
    %c258 = arith.constant 258 : index
    %98 = vector.load %arg9[%c0_109, %c258] : memref<32x2432xbf16, #tpu.memory_space<vmem>>, vector<32x2048xbf16>
    %c0_110 = arith.constant 0 : index
    %c260 = arith.constant 260 : index
    %99 = vector.load %arg9[%c0_110, %c260] : memref<32x2432xbf16, #tpu.memory_space<vmem>>, vector<32x2048xbf16>
    %c0_111 = arith.constant 0 : index
    %c262 = arith.constant 262 : index
    %100 = vector.load %arg9[%c0_111, %c262] : memref<32x2432xbf16, #tpu.memory_space<vmem>>, vector<32x2048xbf16>
    %c0_112 = arith.constant 0 : index
    %c264 = arith.constant 264 : index
    %101 = vector.load %arg9[%c0_112, %c264] : memref<32x2432xbf16, #tpu.memory_space<vmem>>, vector<32x2048xbf16>
    %102 = tpu.concatenate %77, %78, %79, %80, %81, %82, %83, %84, %85, %86, %87, %88, %89, %90, %91, %92 in 0 : vector<32x2048xbf16>, vector<32x2048xbf16>, vector<32x2048xbf16>, vector<32x2048xbf16>, vector<32x2048xbf16>, vector<32x2048xbf16>, vector<32x2048xbf16>, vector<32x2048xbf16>, vector<32x2048xbf16>, vector<32x2048xbf16>, vector<32x2048xbf16>, vector<32x2048xbf16>, vector<32x2048xbf16>, vector<32x2048xbf16>, vector<32x2048xbf16>, vector<32x2048xbf16> -> vector<512x2048xbf16>
    %103 = tpu.concatenate %93, %94, %95, %96, %97, %98, %99, %100, %101 in 0 : vector<32x2048xbf16>, vector<32x2048xbf16>, vector<32x2048xbf16>, vector<32x2048xbf16>, vector<32x2048xbf16>, vector<32x2048xbf16>, vector<32x2048xbf16>, vector<32x2048xbf16>, vector<32x2048xbf16> -> vector<288x2048xbf16>
    %104 = tpu.concatenate %102, %103 in 0 : vector<512x2048xbf16>, vector<288x2048xbf16> -> vector<800x2048xbf16>
    %c0_113 = arith.constant 0 : index
    %c0_114 = arith.constant 0 : index
    %105 = vector.load %arg4[%c0_113, %c0_114] : memref<32x800xbf16, #tpu.memory_space<vmem>>, vector<32x800xbf16>
    %cst_115 = arith.constant dense<0.000000e+00> : vector<32x2048xf32>
    %106 = tpu.matmul %105, %104, %cst_115 {dimension_numbers = #tpu.dot_dimension_numbers<[1], [0], [0], [1], [0, 0, 1, 1], [], []>} : vector<32x800xbf16>, vector<800x2048xbf16>, vector<32x2048xf32> -> vector<32x2048xf32>
    %c0_116 = arith.constant 0 : index
    %c0_117 = arith.constant 0 : index
    %107 = vector.load %arg5[%c0_116, %c0_117] : memref<32x1xf32, #tpu.memory_space<vmem>>, vector<32x1xf32>
    %108 = vector.broadcast %107 : vector<32x1xf32> to vector<32x2048xf32>
    %109 = arith.addf %106, %108 : vector<32x2048xf32>
    %cst_118 = arith.constant 0.000000e+00 : f32
    %cst_119 = arith.constant 6.000000e+00 : f32
    %110 = vector.broadcast %cst_118 : f32 to vector<32x2048xf32>
    %111 = arith.maximumf %110, %109 : vector<32x2048xf32>
    %112 = vector.broadcast %cst_119 : f32 to vector<32x2048xf32>
    %113 = arith.minimumf %112, %111 : vector<32x2048xf32>
    %114 = arith.truncf %113 : vector<32x2048xf32> to vector<32x2048xbf16>
    %c0_120 = arith.constant 0 : index
    %c0_121 = arith.constant 0 : index
    %115 = vector.load %arg10[%c0_120, %c0_121] : memref<32x2176xbf16, #tpu.memory_space<vmem>>, vector<32x2048xbf16>
    tpu.vector_store %arg10[%c0_120, %c0_121], %114 {strides = array<i32>} : memref<32x2176xbf16, #tpu.memory_space<vmem>>, vector<32x2048xbf16>,
    %c0_122 = arith.constant 0 : index
    %c0_123 = arith.constant 0 : index
    %116 = vector.load %arg10[%c0_122, %c0_123] : memref<32x2176xbf16, #tpu.memory_space<vmem>>, vector<32x2048xbf16>
    %c0_124 = arith.constant 0 : index
    %c2_125 = arith.constant 2 : index
    %117 = vector.load %arg10[%c0_124, %c2_125] : memref<32x2176xbf16, #tpu.memory_space<vmem>>, vector<32x2048xbf16>
    %118 = arith.maximumf %116, %117 : vector<32x2048xbf16>
    %c0_126 = arith.constant 0 : index
    %c64_127 = arith.constant 64 : index
    %119 = vector.load %arg10[%c0_126, %c64_127] : memref<32x2176xbf16, #tpu.memory_space<vmem>>, vector<32x2048xbf16>
    %c0_128 = arith.constant 0 : index
    %c66_129 = arith.constant 66 : index
    %120 = vector.load %arg10[%c0_128, %c66_129] : memref<32x2176xbf16, #tpu.memory_space<vmem>>, vector<32x2048xbf16>
    %121 = arith.maximumf %119, %120 : vector<32x2048xbf16>
    %122 = arith.maximumf %118, %121 : vector<32x2048xbf16>
    %c0_130 = arith.constant 0 : index
    %c0_131 = arith.constant 0 : index
    %123 = vector.load %arg6[%c0_130, %c0_131] : memref<32x2048xbf16, #tpu.memory_space<vmem>>, vector<32x2048xbf16>
    tpu.vector_store %arg6[%c0_130, %c0_131], %122 {strides = array<i32>} : memref<32x2048xbf16, #tpu.memory_space<vmem>>, vector<32x2048xbf16>,
    return
  }
  func.func @transform_0(%arg0: i32) -> (i32, i32) {
    %c0_i32 = arith.constant 0 : i32
    %c0_i32_0 = arith.constant 0 : i32
    return %c0_i32, %arg0 : i32, i32
  }
  func.func @transform_1(%arg0: i32) -> (i32, i32) {
    %c0_i32 = arith.constant 0 : i32
    %c0_i32_0 = arith.constant 0 : i32
    %c0_i32_1 = arith.constant 0 : i32
    return %c0_i32, %c0_i32_0 : i32, i32
  }
  func.func @transform_2(%arg0: i32) -> (i32, i32) {
    %c0_i32 = arith.constant 0 : i32
    %c0_i32_0 = arith.constant 0 : i32
    %c0_i32_1 = arith.constant 0 : i32
    return %c0_i32, %c0_i32_0 : i32, i32
  }
  func.func @transform_3(%arg0: i32) -> (i32, i32) {
    %c0_i32 = arith.constant 0 : i32
    %c0_i32_0 = arith.constant 0 : i32
    %c0_i32_1 = arith.constant 0 : i32
    return %c0_i32, %c0_i32_0 : i32, i32
  }
  func.func @transform_4(%arg0: i32) -> (i32, i32) {
    %c0_i32 = arith.constant 0 : i32
    %c0_i32_0 = arith.constant 0 : i32
    %c0_i32_1 = arith.constant 0 : i32
    return %c0_i32, %c0_i32_0 : i32, i32
  }
  func.func @transform_5(%arg0: i32) -> (i32, i32) {
    %c0_i32 = arith.constant 0 : i32
    %c0_i32_0 = arith.constant 0 : i32
    return %c0_i32, %arg0 : i32, i32
  }
}

</mosaic_0001>

<llo_original>
// kernel: tpu_custom_call.1
$region0: #{tpu_custom_call.1}
  #allocation0 [shape = 'u32[]', space=smem, size = 0x4, offset = 0x4, fixed_abs, tag = 'smem constant byte address 0x4 - core index']
  #allocation1 [shape = 'u32[144,128]{1,0:T(1,128)}', space=vmem, size = 0x12000, scoped, tag = 'internal scratch']
  #allocation2 [shape = 'bf16[8,2304]{1,0:T(8,128)(2,1)}', space=vmem, size = 0x9000, scoped, tag = 'scratch operand']
  #allocation3 [shape = 'bf16[32,2176]{1,0:T(16,128)(2,1)}', space=vmem, size = 0x22000, scoped, tag = 'scratch operand']
  #allocation4 [shape = 'bf16[32,2432]{1,0:T(16,128)(2,1)}', space=vmem, size = 0x26000, scoped, tag = 'scratch operand']
  #allocation5 [shape = 'bf16[32,2176]{1,0:T(16,128)(2,1)}', space=vmem, size = 0x22000, scoped, tag = 'scratch operand']
  %s0 = inlined_call_operand.hbm [shape: bf16[8,4096], index: 0, kind: input, shape index: {}]
  %s1 = inlined_call_operand.vmem [shape: bf16[32,392], index: 1, kind: input, shape index: {}]
  %s2 = inlined_call_operand.vmem [shape: f32[32,1], index: 2, kind: input, shape index: {}]
  %s3 = inlined_call_operand.hbm [shape: bf16[32,800], index: 3, kind: input, shape index: {}]
  %s4 = inlined_call_operand.vmem [shape: f32[32,1], index: 4, kind: input, shape index: {}]
  %s5 = inlined_call_operand.hbm [shape: bf16[32,4096], index: 5, kind: output, shape index: {}]
  %s6 = sld [smem:[#allocation0]]
  $region65: #{tpu_custom_call.1} parent=0
    _
  %s8 = ssub.s32 1, %s6
  %s9 = scalar_select 0, %s8, %s6
  $region1: #{tpu_custom_call.1} parent=0
    #allocation6 [shape = 'u8[65536]{0}', space=vmem, size = 0x10000, scoped, tag = 'input window, operand 0']
    #allocation7 [shape = 's32[2]{0}', space=sflag, size = 0x8, scoped, tag = 'scoped memory for tpu_custom_call.1']
    #allocation8 [shape = 's32[2]{0}', space=sflag, size = 0x8, scoped, tag = 'scoped memory for tpu_custom_call.1']
    #allocation9 [shape = 'u8[57344]{0}', space=vmem, size = 0xe000, scoped, tag = 'input window, operand 3, single buffered']
    #allocation10 [shape = 's32[1]{0}', space=sflag, size = 0x4, scoped, tag = 'scoped memory for tpu_custom_call.1']
    #allocation11 [shape = 'u8[262144]{0}', space=vmem, size = 0x40000, scoped, tag = 'output window, operand 0']
    %10 = vsyncpa [#allocation7], 0
    %s11 = scalar_lea.sflag [#allocation7], 1
    %12 = vsyncpa %s11, 0
    %13 = vsyncpa [#allocation10], 0
    %14 = vsyncpa [#allocation8], 0
    %s15 = scalar_lea.sflag [#allocation8], 1
    %16 = vsyncpa %s15, 0
    loop: start=0, step=1, limit=4
    $region2: #{tpu_custom_call.1} parent=1 // loop_pre_header
      _
    $region3: #{tpu_custom_call.1} parent=1 // loop_header
      %s18 = sphi 0, %s22
      %p19 = scmp.ge.s32.totalorder %s18, 4
      %s28 = sphi 0, %s30
      %s31 = sphi 0, %s28
      %s32 = sphi 0, %s31
      %s48 = sphi 0, %s32
      %s52 = sphi 0, %s52
      %s54 = sphi 0, %s52
      %s55 = sphi 0, %s54
      %s69 = sphi 0, %s55
      %s73 = sphi 0, %s73
      %s75 = sphi 0, %s73
      %s76 = sphi 0, %s75
      %s90 = sphi 0, %s76
      %s94 = sphi 0, %s94
      %s96 = sphi 0, %s94
      %s97 = sphi 0, %s96
      %s111 = sphi 0, %s97
      %s115 = sphi 0, %s115
      %s117 = sphi 0, %s115
      %s118 = sphi 0, %s117
      %s132 = sphi 0, %s118
      %s138 = sphi 0, %s140
      %s141 = sphi 0, %s138
      %s142 = sphi 0, %s141
      %s158 = sphi 0, %s142
    $region4: #{tpu_custom_call.1} parent=1 // loop_header_branch
      %21 = sbr.rel (%p19) target = $region8
    $region5: #{tpu_custom_call.1} parent=1 // loop_body
      %s23 = ssub.s32 %s18, 1
      %s24 = ssub.s32 %s18, 2
      %s25 = sadd.s32 %s18, 1
      %s26 = ssub.s32 %s18, %s25
      %p27 = scmp.eq.s32.totalorder %s26, 0
      %s29 = sadd.s32 %s28, 1
      %s30 = scalar_select %p27, %s28, %s29
      %p33 = pneg %p27
      %p34 = scmp.eq.s32.totalorder %s18, 1
      %p35 = por %p33, %p34
      %p36 = scmp.ne.s32.totalorder %s28, %s31
      %p37 = scmp.eq.s32.totalorder %s18, 0
      %p38 = por %p36, %p37
      %p39 = scmp.ne.s32.totalorder %s28, %s31
      %p40 = scmp.eq.s32.totalorder %s23, 1
      %p41 = por %p39, %p40
      %p42 = scmp.ne.s32.totalorder %s31, %s32
      %p43 = scmp.eq.s32.totalorder %s23, 0
      %p44 = por %p42, %p43
      %p45 = scmp.ne.s32.totalorder %s31, %s32
      %p46 = scmp.eq.s32.totalorder %s24, 1
      %p47 = por %p45, %p46
      %p49 = scmp.ne.s32.totalorder %s32, %s48
      %p50 = scmp.eq.s32.totalorder %s24, 0
      %p51 = por %p49, %p50
      %s53 = sadd.s32 %s52, 1
      %p56 = scmp.eq.s32.totalorder %s18, 1
      %p57 = scmp.ne.s32.totalorder %s52, %s54
      %p58 = scmp.eq.s32.totalorder %s18, 0
      %p59 = por %p57, %p58
      %p60 = scmp.ne.s32.totalorder %s52, %s54
      %p61 = scmp.eq.s32.totalorder %s23, 1
      %p62 = por %p60, %p61
      %p63 = scmp.ne.s32.totalorder %s54, %s55
      %p64 = scmp.eq.s32.totalorder %s23, 0
      %p65 = por %p63, %p64
      %p66 = scmp.ne.s32.totalorder %s54, %s55
      %p67 = scmp.eq.s32.totalorder %s24, 1
      %p68 = por %p66, %p67
      %p70 = scmp.ne.s32.totalorder %s55, %s69
      %p71 = scmp.eq.s32.totalorder %s24, 0
      %p72 = por %p70, %p71
      %s74 = sadd.s32 %s73, 1
      %p77 = scmp.eq.s32.totalorder %s18, 1
      %p78 = scmp.ne.s32.totalorder %s73, %s75
      %p79 = scmp.eq.s32.totalorder %s18, 0
      %p80 = por %p78, %p79
      %p81 = scmp.ne.s32.totalorder %s73, %s75
      %p82 = scmp.eq.s32.totalorder %s23, 1
      %p83 = por %p81, %p82
      %p84 = scmp.ne.s32.totalorder %s75, %s76
      %p85 = scmp.eq.s32.totalorder %s23, 0
      %p86 = por %p84, %p85
      %p87 = scmp.ne.s32.totalorder %s75, %s76
      %p88 = scmp.eq.s32.totalorder %s24, 1
      %p89 = por %p87, %p88
      %p91 = scmp.ne.s32.totalorder %s76, %s90
      %p92 = scmp.eq.s32.totalorder %s24, 0
      %p93 = por %p91, %p92
      %s95 = sadd.s32 %s94, 1
      %p98 = scmp.eq.s32.totalorder %s18, 1
      %p99 = scmp.ne.s32.totalorder %s94, %s96
      %p100 = scmp.eq.s32.totalorder %s18, 0
      %p101 = por %p99, %p100
      %p102 = scmp.ne.s32.totalorder %s94, %s96
      %p103 = scmp.eq.s32.totalorder %s23, 1
      %p104 = por %p102, %p103
      %p105 = scmp.ne.s32.totalorder %s96, %s97
      %p106 = scmp.eq.s32.totalorder %s23, 0
      %p107 = por %p105, %p106
      %p108 = scmp.ne.s32.totalorder %s96, %s97
      %p109 = scmp.eq.s32.totalorder %s24, 1
      %p110 = por %p108, %p109
      %p112 = scmp.ne.s32.totalorder %s97, %s111
      %p113 = scmp.eq.s32.totalorder %s24, 0
      %p114 = por %p112, %p113
      %s116 = sadd.s32 %s115, 1
      %p119 = scmp.eq.s32.totalorder %s18, 1
      %p120 = scmp.ne.s32.totalorder %s115, %s117
      %p121 = scmp.eq.s32.totalorder %s18, 0
      %p122 = por %p120, %p121
      %p123 = scmp.ne.s32.totalorder %s115, %s117
      %p124 = scmp.eq.s32.totalorder %s23, 1
      %p125 = por %p123, %p124
      %p126 = scmp.ne.s32.totalorder %s117, %s118
      %p127 = scmp.eq.s32.totalorder %s23, 0
      %p128 = por %p126, %p127
      %p129 = scmp.ne.s32.totalorder %s117, %s118
      %p130 = scmp.eq.s32.totalorder %s24, 1
      %p131 = por %p129, %p130
      %p133 = scmp.ne.s32.totalorder %s118, %s132
      %p134 = scmp.eq.s32.totalorder %s24, 0
      %p135 = por %p133, %p134
      %s136 = ssub.s32 %s18, %s25
      %p137 = scmp.eq.s32.totalorder %s136, 0
      %s139 = sadd.s32 %s138, 1
      %s140 = scalar_select %p137, %s138, %s139
      %p143 = pneg %p137
      %p144 = scmp.eq.s32.totalorder %s18, 1
      %p145 = por %p143, %p144
      %p146 = scmp.ne.s32.totalorder %s138, %s141
      %p147 = scmp.eq.s32.totalorder %s18, 0
      %p148 = por %p146, %p147
      %p149 = scmp.ne.s32.totalorder %s138, %s141
      %p150 = scmp.eq.s32.totalorder %s23, 1
      %p151 = por %p149, %p150
      %p152 = scmp.ne.s32.totalorder %s141, %s142
      %p153 = scmp.eq.s32.totalorder %s23, 0
      %p154 = por %p152, %p153
      %p155 = scmp.ne.s32.totalorder %s141, %s142
      %p156 = scmp.eq.s32.totalorder %s24, 1
      %p157 = por %p155, %p156
      %p159 = scmp.ne.s32.totalorder %s142, %s158
      %p160 = scmp.eq.s32.totalorder %s24, 0
      %p161 = por %p159, %p160
      %p162 = scmp.le.s32.totalorder 1, %s18
      %p163 = scmp.lt.s32.totalorder %s18, 3
      %p164 = pnand %p162, %p163
      %p165 = pneg %p164
      // Predicated region
      $region9: #{tpu_custom_call.1} parent=5 // pred_check
        _
      $region10: #{tpu_custom_call.1} parent=5 // pred_check_branch
        %167 = sbr.rel (%p164) target = $region12
      $region11: #{tpu_custom_call.1} parent=5 // pred_region
        %s168 = ssub.s32 %s18, 1
        // Predicated region
        $region13: #{tpu_custom_call.1} parent=11 // pred_check
          %p169 = pneg %p65
        $region14: #{tpu_custom_call.1} parent=11 // pred_check_branch
          %171 = sbr.rel (%p169) target = $region16
        $region15: #{tpu_custom_call.1} parent=11 // pred_region
          _
        $region16: #{tpu_custom_call.1} parent=11 // pred_fallthru
          _
        // Predicated region
        $region17: #{tpu_custom_call.1} parent=11 // pred_check
          %p172 = pneg %p86
        $region18: #{tpu_custom_call.1} parent=11 // pred_check_branch
          %174 = sbr.rel (%p172) target = $region20
        $region19: #{tpu_custom_call.1} parent=11 // pred_region
          _
        $region20: #{tpu_custom_call.1} parent=11 // pred_fallthru
          _
        // Predicated region
        $region21: #{tpu_custom_call.1} parent=11 // pred_check
          %p175 = pneg %p107
        $region22: #{tpu_custom_call.1} parent=11 // pred_check_branch
          %177 = sbr.rel (%p175) target = $region24
        $region23: #{tpu_custom_call.1} parent=11 // pred_region
          %s179 = ssub.s32 1792, 1792
          %180 = vsyncadd [#allocation10], %s179
          %s181 = sshll.u32 [#allocation9], 4
          %s182 = int_to_ptr.vmem [resolvable:$true] %s181
          %187 = dma.hbm_to_vmem [thread:$0]  %s3, 1792, %s182, [#allocation10], 448, 448, 28
        $region24: #{tpu_custom_call.1} parent=11 // pred_fallthru
          _
        // Predicated region
        $region25: #{tpu_custom_call.1} parent=11 // pred_check
          %p188 = pneg %p128
        $region26: #{tpu_custom_call.1} parent=11 // pred_check_branch
          %190 = sbr.rel (%p188) target = $region28
        $region27: #{tpu_custom_call.1} parent=11 // pred_region
          _
        $region28: #{tpu_custom_call.1} parent=11 // pred_fallthru
          _
      $region12: #{tpu_custom_call.1} parent=5 // pred_fallthru
        _
      %p191 = scmp.lt.s32.totalorder %s18, 2
      // Predicated region
      $region29: #{tpu_custom_call.1} parent=5 // pred_check
        %p192 = pneg %p191
      $region30: #{tpu_custom_call.1} parent=5 // pred_check_branch
        %194 = sbr.rel (%p192) target = $region32
      $region31: #{tpu_custom_call.1} parent=5 // pred_region
        // Predicated region
        $region33: #{tpu_custom_call.1} parent=31 // pred_check
          %p195 = pneg %p38
        $region34: #{tpu_custom_call.1} parent=31 // pred_check_branch
          %197 = sbr.rel (%p195) target = $region36
        $region35: #{tpu_custom_call.1} parent=31 // pred_region
          %s198 = sand.u32 %s28, 1
          %s199 = scalar_lea.sflag [#allocation7], %s198
          %s200 = sand.u32 %s28, 1
          %s201 = smul.addr %s200, 64
          %s202 = scalar_lea.vmem [#allocation6], %s201
          %s203 = smul.u32 16, %s18
          %s205 = ssub.s32 1024, 1024
          %206 = vsyncadd %s199, %s205
          %s207 = smul.addr %s203, 64
          %s208 = scalar_lea.hbm %s0, %s207
          %s210 = sshll.u32 %s202, 4
          %s211 = int_to_ptr.vmem [resolvable:$true] %s210
          %213 = dma.hbm_to_vmem [thread:$0]  %s208, 1024, %s211, %s199
        $region36: #{tpu_custom_call.1} parent=31 // pred_fallthru
          _
      $region32: #{tpu_custom_call.1} parent=5 // pred_fallthru
        _
      %p214 = scmp.le.s32.totalorder 1, %s18
      %p215 = scmp.lt.s32.totalorder %s18, 3
      %p216 = pnand %p214, %p215
      %p217 = pneg %p216
      // Predicated region
      $region37: #{tpu_custom_call.1} parent=5 // pred_check
        _
      $region38: #{tpu_custom_call.1} parent=5 // pred_check_branch
        %219 = sbr.rel (%p216) target = $region40
      $region39: #{tpu_custom_call.1} parent=5 // pred_region
        %s220 = ssub.s32 %s18, 1
        %s221 = sand.u32 %s31, 1
        %s222 = scalar_lea.sflag [#allocation7], %s221
        %s223 = sand.u32 %s31, 1
        %s224 = smul.addr %s223, 64
        %s225 = scalar_lea.vmem [#allocation6], %s224
        // Predicated region
        $region41: #{tpu_custom_call.1} parent=39 // pred_check
          %p226 = pneg %p44
        $region42: #{tpu_custom_call.1} parent=39 // pred_check_branch
          %228 = sbr.rel (%p226) target = $region44
        $region43: #{tpu_custom_call.1} parent=39 // pred_region
          %229 = dma.done %s222, 1024
        $region44: #{tpu_custom_call.1} parent=39 // pred_fallthru
          _
        // Predicated region
        $region45: #{tpu_custom_call.1} parent=39 // pred_check
          %p230 = pneg %p107
        $region46: #{tpu_custom_call.1} parent=39 // pred_check_branch
          %232 = sbr.rel (%p230) target = $region48
        $region47: #{tpu_custom_call.1} parent=39 // pred_region
          %233 = dma.done [#allocation10], 1792
        $region48: #{tpu_custom_call.1} parent=39 // pred_fallthru
          _
        %s234 = sand.u32 %s31, 1
        %s235 = scalar_lea.sflag [#allocation7], %s234
        %s236 = sand.u32 %s31, 1
        %s237 = smul.addr %s236, 64
        %s238 = scalar_lea.vmem [#allocation6], %s237
        %p239 = pneg %p44
        %p240 = pneg %p41
        %p241 = pneg %p65
        %p242 = pneg %p62
        %p243 = pneg %p86
        %p244 = pneg %p83
        %p245 = pneg %p107
        %p246 = pneg %p104
        %p247 = pneg %p128
        %p248 = pneg %p125
        %p249 = pneg %p154
        %p250 = pneg %p151
        %s251 = sand.u32 %s141, 1
        %s252 = scalar_lea.sflag [#allocation8], %s251
        %s253 = sand.u32 %s141, 1
        %s254 = smul.addr %s253, 256
        %s255 = scalar_lea.vmem [#allocation11], %s254
        %s256 = smul.u32 16, %s23
        %s257 = smul.u32 16, %s23
        %p259 = scmp.eq.s32.totalorder %s23, 0
        // Predicated region
        $region49: #{tpu_custom_call.1} parent=39 // pred_check
          %p260 = pneg %p259
        $region50: #{tpu_custom_call.1} parent=39 // pred_check_branch
          %262 = sbr.rel (%p260) target = $region52
        $region51: #{tpu_custom_call.1} parent=39 // pred_region
          %263 = vst [vmem:[#allocation2 + $0x40] sm:$0xff] 0
          %264 = vst [vmem:[#allocation3 + $0x80] sm:$0xff] 0
          %265 = vst [vmem:[#allocation3 + $0x108] sm:$0xff] 0
          %266 = vst [vmem:[#allocation4 + $0x80] sm:$0xff] 0
          %267 = vst [vmem:[#allocation4 + $0x88] sm:$0xff] 0
          %268 = vst [vmem:[#allocation4 + $0x90] sm:$0xff] 0
          %269 = vst [vmem:[#allocation4 + $0x118] sm:$0xff] 0
          %270 = vst [vmem:[#allocation4 + $0x120] sm:$0xff] 0
          %271 = vst [vmem:[#allocation4 + $0x128] sm:$0xff] 0
          %272 = vst [vmem:[#allocation5 + $0x80] sm:$0xff] 0
          %273 = vst [vmem:[#allocation5 + $0x108] sm:$0xff] 0
        $region52: #{tpu_custom_call.1} parent=39 // pred_fallthru
          _
        %v274 = vld [vmem:[%s225] sm:$0xff]
        %v275 = vld [vmem:[%s225 + $0x8] sm:$0xff]
        %v276 = vld [vmem:[%s225 + $0x10] sm:$0xff]
        %v277 = vld [vmem:[%s225 + $0x18] sm:$0xff]
        %v278 = vld [vmem:[%s225 + $0x20] sm:$0xff]
        %v279 = vld [vmem:[%s225 + $0x28] sm:$0xff]
        %v280 = vld [vmem:[%s225 + $0x30] sm:$0xff]
        %v281 = vld [vmem:[%s225 + $0x38] sm:$0xff]
        %282 = vst [vmem:[#allocation2] sm:$0xff] %v274
        %283 = vst [vmem:[#allocation2 + $0x8] sm:$0xff] %v275
        %284 = vst [vmem:[#allocation2 + $0x10] sm:$0xff] %v276
        %285 = vst [vmem:[#allocation2 + $0x18] sm:$0xff] %v277
        %286 = vst [vmem:[#allocation2 + $0x20] sm:$0xff] %v278
        %287 = vst [vmem:[#allocation2 + $0x28] sm:$0xff] %v279
        %288 = vst [vmem:[#allocation2 + $0x30] sm:$0xff] %v280
        %289 = vst [vmem:[#allocation2 + $0x38] sm:$0xff] %v281
        %v290 = vld [vmem:[#allocation2] sm:$0xff]
        %v291 = vld [vmem:[#allocation2 + $0x8] sm:$0xff]
        %v292 = vld [vmem:[#allocation2 + $0x10] sm:$0xff]
        %v293 = vld [vmem:[#allocation2 + $0x18] sm:$0xff]
        %v294 = vld [vmem:[#allocation2 + $0x20] sm:$0xff]
        %v295 = vld [vmem:[#allocation2 + $0x28] sm:$0xff]
        %v296 = vld [vmem:[#allocation2 + $0x30] sm:$0xff]
        %v297 = vld [vmem:[#allocation2 + $0x38] sm:$0xff]
        %v298 = vld [vmem:[#allocation2 + $0x40] sm:$0xf]
        %v299 = vld [vmem:[#allocation2 + $0x4] sm:$0xff]
        %v300 = vld [vmem:[#allocation2 + $0xc] sm:$0xff]
        %v301 = vld [vmem:[#allocation2 + $0x14] sm:$0xff]
        %v302 = vld [vmem:[#allocation2 + $0x1c] sm:$0xff]
        %v303 = vld [vmem:[#allocation2 + $0x24] sm:$0xff]
        %v304 = vld [vmem:[#allocation2 + $0x2c] sm:$0xff]
        %v305 = vld [vmem:[#allocation2 + $0x34] sm:$0xff]
        %v306 = vld [vmem:[#allocation2 + $0x3c] sm:$0xff]
        %v307 = vld [vmem:[#allocation2 + $0x4] sm:$0xff]
        %v308 = vld [vmem:[#allocation2 + $0xc] sm:$0xff]
        %v309 = vld [vmem:[#allocation2 + $0x14] sm:$0xff]
        %v310 = vld [vmem:[#allocation2 + $0x1c] sm:$0xff]
        %v311 = vld [vmem:[#allocation2 + $0x24] sm:$0xff]
        %v312 = vld [vmem:[#allocation2 + $0x2c] sm:$0xff]
        %v313 = vld [vmem:[#allocation2 + $0x34] sm:$0xff]
        %v314 = vld [vmem:[#allocation2 + $0x3c] sm:$0xff]
        %v315 = vld [vmem:[#allocation2 + $0x44] sm:$0xf]
        %v324 = vunpack.c.l.b16 %v290
        %v325 = vunpack.c.h.b16 %v290
        %v326 = vunpack.c.l.b16 %v291
        %v327 = vunpack.c.h.b16 %v291
        %v328 = vunpack.c.l.b16 %v292
        %v329 = vunpack.c.h.b16 %v292
        %v330 = vunpack.c.l.b16 %v293
        %v331 = vunpack.c.h.b16 %v293
        %v332 = vunpack.c.l.b16 %v294
        %v333 = vunpack.c.h.b16 %v294
        %v334 = vunpack.c.l.b16 %v295
        %v335 = vunpack.c.h.b16 %v295
        %v336 = vunpack.c.l.b16 %v296
        %v337 = vunpack.c.h.b16 %v296
        %v338 = vunpack.c.l.b16 %v297
        %v339 = vunpack.c.h.b16 %v297
        %v340 = vpack.c.b16 %v324, %v324
        %v341 = vpack.c.b16 %v325, %v325
        %v342 = vpack.c.b16 %v326, %v326
        %v343 = vpack.c.b16 %v327, %v327
        %v344 = vpack.c.b16 %v328, %v328
        %v345 = vpack.c.b16 %v329, %v329
        %v346 = vpack.c.b16 %v330, %v330
        %v347 = vpack.c.b16 %v331, %v331
        %v348 = vpack.c.b16 %v332, %v332
        %v349 = vpack.c.b16 %v333, %v333
        %v350 = vpack.c.b16 %v334, %v334
        %v351 = vpack.c.b16 %v335, %v335
        %v352 = vpack.c.b16 %v336, %v336
        %v353 = vpack.c.b16 %v337, %v337
        %v354 = vpack.c.b16 %v338, %v338
        %v355 = vpack.c.b16 %v339, %v339
        %v357 = vunpack.c.l.b16 %v298
        %v358 = vpack.c.b16 %v357, %v357
        %359 = vrot.lane.b32.xlu0 %v340, 127
        %v360 = vpop.permute.xlu0 %359
        %361 = vrot.lane.b32.xlu0 %v341, 127
        %v362 = vpop.permute.xlu0 %361
        %363 = vrot.lane.b32.xlu0 %v342, 127
        %v364 = vpop.permute.xlu0 %363
        %365 = vrot.lane.b32.xlu0 %v343, 127
        %v366 = vpop.permute.xlu0 %365
        %367 = vrot.lane.b32.xlu0 %v344, 127
        %v368 = vpop.permute.xlu0 %367
        %369 = vrot.lane.b32.xlu0 %v345, 127
        %v370 = vpop.permute.xlu0 %369
        %371 = vrot.lane.b32.xlu0 %v346, 127
        %v372 = vpop.permute.xlu0 %371
        %373 = vrot.lane.b32.xlu0 %v347, 127
        %v374 = vpop.permute.xlu0 %373
        %375 = vrot.lane.b32.xlu0 %v348, 127
        %v376 = vpop.permute.xlu0 %375
        %377 = vrot.lane.b32.xlu0 %v349, 127
        %v378 = vpop.permute.xlu0 %377
        %379 = vrot.lane.b32.xlu0 %v350, 127
        %v380 = vpop.permute.xlu0 %379
        %381 = vrot.lane.b32.xlu0 %v351, 127
        %v382 = vpop.permute.xlu0 %381
        %383 = vrot.lane.b32.xlu0 %v352, 127
        %v384 = vpop.permute.xlu0 %383
        %385 = vrot.lane.b32.xlu0 %v353, 127
        %v386 = vpop.permute.xlu0 %385
        %387 = vrot.lane.b32.xlu0 %v354, 127
        %v388 = vpop.permute.xlu0 %387
        %389 = vrot.lane.b32.xlu0 %v355, 127
        %v390 = vpop.permute.xlu0 %389
        %391 = vrot.lane.b32.xlu0 %v358, 127
        %v392 = vpop.permute.xlu0 %391
        %vm393 = vcmask 1039360
        %v394 = vsel %vm393, %v360, %v362
        %v395 = vsel %vm393, %v362, %v364
        %v396 = vsel %vm393, %v364, %v366
        %v397 = vsel %vm393, %v366, %v368
        %v398 = vsel %vm393, %v368, %v370
        %v399 = vsel %vm393, %v370, %v372
        %v400 = vsel %vm393, %v372, %v374
        %v401 = vsel %vm393, %v374, %v376
        %v402 = vsel %vm393, %v376, %v378
        %v403 = vsel %vm393, %v378, %v380
        %v404 = vsel %vm393, %v380, %v382
        %v405 = vsel %vm393, %v382, %v384
        %v406 = vsel %vm393, %v384, %v386
        %v407 = vsel %vm393, %v386, %v388
        %v408 = vsel %vm393, %v388, %v390
        %v409 = vsel %vm393, %v390, %v392
        %410 = vrot.lane.b32.xlu0 %v340, 126
        %v411 = vpop.permute.xlu0 %410
        %412 = vrot.lane.b32.xlu0 %v341, 126
        %v413 = vpop.permute.xlu0 %412
        %414 = vrot.lane.b32.xlu0 %v342, 126
        %v415 = vpop.permute.xlu0 %414
        %416 = vrot.lane.b32.xlu0 %v343, 126
        %v417 = vpop.permute.xlu0 %416
        %418 = vrot.lane.b32.xlu0 %v344, 126
        %v419 = vpop.permute.xlu0 %418
        %420 = vrot.lane.b32.xlu0 %v345, 126
        %v421 = vpop.permute.xlu0 %420
        %422 = vrot.lane.b32.xlu0 %v346, 126
        %v423 = vpop.permute.xlu0 %422
        %424 = vrot.lane.b32.xlu0 %v347, 126
        %v425 = vpop.permute.xlu0 %424
        %426 = vrot.lane.b32.xlu0 %v348, 126
        %v427 = vpop.permute.xlu0 %426
        %428 = vrot.lane.b32.xlu0 %v349, 126
        %v429 = vpop.permute.xlu0 %428
        %430 = vrot.lane.b32.xlu0 %v350, 126
        %v431 = vpop.permute.xlu0 %430
        %432 = vrot.lane.b32.xlu0 %v351, 126
        %v433 = vpop.permute.xlu0 %432
        %434 = vrot.lane.b32.xlu0 %v352, 126
        %v435 = vpop.permute.xlu0 %434
        %436 = vrot.lane.b32.xlu0 %v353, 126
        %v437 = vpop.permute.xlu0 %436
        %438 = vrot.lane.b32.xlu0 %v354, 126
        %v439 = vpop.permute.xlu0 %438
        %440 = vrot.lane.b32.xlu0 %v355, 126
        %v441 = vpop.permute.xlu0 %440
        %442 = vrot.lane.b32.xlu0 %v358, 126
        %v443 = vpop.permute.xlu0 %442
        %vm444 = vcmask 1031168
        %v445 = vsel %vm444, %v411, %v413
        %v446 = vsel %vm444, %v413, %v415
        %v447 = vsel %vm444, %v415, %v417
        %v448 = vsel %vm444, %v417, %v419
        %v449 = vsel %vm444, %v419, %v421
        %v450 = vsel %vm444, %v421, %v423
        %v451 = vsel %vm444, %v423, %v425
        %v452 = vsel %vm444, %v425, %v427
        %v453 = vsel %vm444, %v427, %v429
        %v454 = vsel %vm444, %v429, %v431
        %v455 = vsel %vm444, %v431, %v433
        %v456 = vsel %vm444, %v433, %v435
        %v457 = vsel %vm444, %v435, %v437
        %v458 = vsel %vm444, %v437, %v439
        %v459 = vsel %vm444, %v439, %v441
        %v460 = vsel %vm444, %v441, %v443
        %461 = vrot.lane.b32.xlu0 %v340, 125
        %v462 = vpop.permute.xlu0 %461
        %463 = vrot.lane.b32.xlu0 %v341, 125
        %v464 = vpop.permute.xlu0 %463
        %465 = vrot.lane.b32.xlu0 %v342, 125
        %v466 = vpop.permute.xlu0 %465
        %467 = vrot.lane.b32.xlu0 %v343, 125
        %v468 = vpop.permute.xlu0 %467
        %469 = vrot.lane.b32.xlu0 %v344, 125
        %v470 = vpop.permute.xlu0 %469
        %471 = vrot.lane.b32.xlu0 %v345, 125
        %v472 = vpop.permute.xlu0 %471
        %473 = vrot.lane.b32.xlu0 %v346, 125
        %v474 = vpop.permute.xlu0 %473
        %475 = vrot.lane.b32.xlu0 %v347, 125
        %v476 = vpop.permute.xlu0 %475
        %477 = vrot.lane.b32.xlu0 %v348, 125
        %v478 = vpop.permute.xlu0 %477
        %479 = vrot.lane.b32.xlu0 %v349, 125
        %v480 = vpop.permute.xlu0 %479
        %481 = vrot.lane.b32.xlu0 %v350, 125
        %v482 = vpop.permute.xlu0 %481
        %483 = vrot.lane.b32.xlu0 %v351, 125
        %v484 = vpop.permute.xlu0 %483
        %485 = vrot.lane.b32.xlu0 %v352, 125
        %v486 = vpop.permute.xlu0 %485
        %487 = vrot.lane.b32.xlu0 %v353, 125
        %v488 = vpop.permute.xlu0 %487
        %489 = vrot.lane.b32.xlu0 %v354, 125
        %v490 = vpop.permute.xlu0 %489
        %491 = vrot.lane.b32.xlu0 %v355, 125
        %v492 = vpop.permute.xlu0 %491
        %493 = vrot.lane.b32.xlu0 %v358, 125
        %v494 = vpop.permute.xlu0 %493
        %vm495 = vcmask 1022976
        %v496 = vsel %vm495, %v462, %v464
        %v497 = vsel %vm495, %v464, %v466
        %v498 = vsel %vm495, %v466, %v468
        %v499 = vsel %vm495, %v468, %v470
        %v500 = vsel %vm495, %v470, %v472
        %v501 = vsel %vm495, %v472, %v474
        %v502 = vsel %vm495, %v474, %v476
        %v503 = vsel %vm495, %v476, %v478
        %v504 = vsel %vm495, %v478, %v480
        %v505 = vsel %vm495, %v480, %v482
        %v506 = vsel %vm495, %v482, %v484
        %v507 = vsel %vm495, %v484, %v486
        %v508 = vsel %vm495, %v486, %v488
        %v509 = vsel %vm495, %v488, %v490
        %v510 = vsel %vm495, %v490, %v492
        %v511 = vsel %vm495, %v492, %v494
        %512 = vrot.lane.b32.xlu0 %v340, 124
        %v513 = vpop.permute.xlu0 %512
        %514 = vrot.lane.b32.xlu0 %v341, 124
        %v515 = vpop.permute.xlu0 %514
        %516 = vrot.lane.b32.xlu0 %v342, 124
        %v517 = vpop.permute.xlu0 %516
        %518 = vrot.lane.b32.xlu0 %v343, 124
        %v519 = vpop.permute.xlu0 %518
        %520 = vrot.lane.b32.xlu0 %v344, 124
        %v521 = vpop.permute.xlu0 %520
        %522 = vrot.lane.b32.xlu0 %v345, 124
        %v523 = vpop.permute.xlu0 %522
        %524 = vrot.lane.b32.xlu0 %v346, 124
        %v525 = vpop.permute.xlu0 %524
        %526 = vrot.lane.b32.xlu0 %v347, 124
        %v527 = vpop.permute.xlu0 %526
        %528 = vrot.lane.b32.xlu0 %v348, 124
        %v529 = vpop.permute.xlu0 %528
        %530 = vrot.lane.b32.xlu0 %v349, 124
        %v531 = vpop.permute.xlu0 %530
        %532 = vrot.lane.b32.xlu0 %v350, 124
        %v533 = vpop.permute.xlu0 %532
        %534 = vrot.lane.b32.xlu0 %v351, 124
        %v535 = vpop.permute.xlu0 %534
        %536 = vrot.lane.b32.xlu0 %v352, 124
        %v537 = vpop.permute.xlu0 %536
        %538 = vrot.lane.b32.xlu0 %v353, 124
        %v539 = vpop.permute.xlu0 %538
        %540 = vrot.lane.b32.xlu0 %v354, 124
        %v541 = vpop.permute.xlu0 %540
        %542 = vrot.lane.b32.xlu0 %v355, 124
        %v543 = vpop.permute.xlu0 %542
        %544 = vrot.lane.b32.xlu0 %v358, 124
        %v545 = vpop.permute.xlu0 %544
        %vm546 = vcmask 1014784
        %v547 = vsel %vm546, %v513, %v515
        %v548 = vsel %vm546, %v515, %v517
        %v549 = vsel %vm546, %v517, %v519
        %v550 = vsel %vm546, %v519, %v521
        %v551 = vsel %vm546, %v521, %v523
        %v552 = vsel %vm546, %v523, %v525
        %v553 = vsel %vm546, %v525, %v527
        %v554 = vsel %vm546, %v527, %v529
        %v555 = vsel %vm546, %v529, %v531
        %v556 = vsel %vm546, %v531, %v533
        %v557 = vsel %vm546, %v533, %v535
        %v558 = vsel %vm546, %v535, %v537
        %v559 = vsel %vm546, %v537, %v539
        %v560 = vsel %vm546, %v539, %v541
        %v561 = vsel %vm546, %v541, %v543
        %v562 = vsel %vm546, %v543, %v545
        %563 = vrot.lane.b32.xlu0 %v340, 123
        %v564 = vpop.permute.xlu0 %563
        %565 = vrot.lane.b32.xlu0 %v341, 123
        %v566 = vpop.permute.xlu0 %565
        %567 = vrot.lane.b32.xlu0 %v342, 123
        %v568 = vpop.permute.xlu0 %567
        %569 = vrot.lane.b32.xlu0 %v343, 123
        %v570 = vpop.permute.xlu0 %569
        %571 = vrot.lane.b32.xlu0 %v344, 123
        %v572 = vpop.permute.xlu0 %571
        %573 = vrot.lane.b32.xlu0 %v345, 123
        %v574 = vpop.permute.xlu0 %573
        %575 = vrot.lane.b32.xlu0 %v346, 123
        %v576 = vpop.permute.xlu0 %575
        %577 = vrot.lane.b32.xlu0 %v347, 123
        %v578 = vpop.permute.xlu0 %577
        %579 = vrot.lane.b32.xlu0 %v348, 123
        %v580 = vpop.permute.xlu0 %579
        %581 = vrot.lane.b32.xlu0 %v349, 123
        %v582 = vpop.permute.xlu0 %581
        %583 = vrot.lane.b32.xlu0 %v350, 123
        %v584 = vpop.permute.xlu0 %583
        %585 = vrot.lane.b32.xlu0 %v351, 123
        %v586 = vpop.permute.xlu0 %585
        %587 = vrot.lane.b32.xlu0 %v352, 123
        %v588 = vpop.permute.xlu0 %587
        %589 = vrot.lane.b32.xlu0 %v353, 123
        %v590 = vpop.permute.xlu0 %589
        %591 = vrot.lane.b32.xlu0 %v354, 123
        %v592 = vpop.permute.xlu0 %591
        %593 = vrot.lane.b32.xlu0 %v355, 123
        %v594 = vpop.permute.xlu0 %593
        %595 = vrot.lane.b32.xlu0 %v358, 123
        %v596 = vpop.permute.xlu0 %595
        %vm597 = vcmask 1006592
        %v598 = vsel %vm597, %v564, %v566
        %v599 = vsel %vm597, %v566, %v568
        %v600 = vsel %vm597, %v568, %v570
        %v601 = vsel %vm597, %v570, %v572
        %v602 = vsel %vm597, %v572, %v574
        %v603 = vsel %vm597, %v574, %v576
        %v604 = vsel %vm597, %v576, %v578
        %v605 = vsel %vm597, %v578, %v580
        %v606 = vsel %vm597, %v580, %v582
        %v607 = vsel %vm597, %v582, %v584
        %v608 = vsel %vm597, %v584, %v586
        %v609 = vsel %vm597, %v586, %v588
        %v610 = vsel %vm597, %v588, %v590
        %v611 = vsel %vm597, %v590, %v592
        %v612 = vsel %vm597, %v592, %v594
        %v613 = vsel %vm597, %v594, %v596
        %614 = vrot.lane.b32.xlu0 %v340, 122
        %v615 = vpop.permute.xlu0 %614
        %616 = vrot.lane.b32.xlu0 %v341, 122
        %v617 = vpop.permute.xlu0 %616
        %618 = vrot.lane.b32.xlu0 %v342, 122
        %v619 = vpop.permute.xlu0 %618
        %620 = vrot.lane.b32.xlu0 %v343, 122
        %v621 = vpop.permute.xlu0 %620
        %622 = vrot.lane.b32.xlu0 %v344, 122
        %v623 = vpop.permute.xlu0 %622
        %624 = vrot.lane.b32.xlu0 %v345, 122
        %v625 = vpop.permute.xlu0 %624
        %626 = vrot.lane.b32.xlu0 %v346, 122
        %v627 = vpop.permute.xlu0 %626
        %628 = vrot.lane.b32.xlu0 %v347, 122
        %v629 = vpop.permute.xlu0 %628
        %630 = vrot.lane.b32.xlu0 %v348, 122
        %v631 = vpop.permute.xlu0 %630
        %632 = vrot.lane.b32.xlu0 %v349, 122
        %v633 = vpop.permute.xlu0 %632
        %634 = vrot.lane.b32.xlu0 %v350, 122
        %v635 = vpop.permute.xlu0 %634
        %636 = vrot.lane.b32.xlu0 %v351, 122
        %v637 = vpop.permute.xlu0 %636
        %638 = vrot.lane.b32.xlu0 %v352, 122
        %v639 = vpop.permute.xlu0 %638
        %640 = vrot.lane.b32.xlu0 %v353, 122
        %v641 = vpop.permute.xlu0 %640
        %642 = vrot.lane.b32.xlu0 %v354, 122
        %v643 = vpop.permute.xlu0 %642
        %644 = vrot.lane.b32.xlu0 %v355, 122
        %v645 = vpop.permute.xlu0 %644
        %646 = vrot.lane.b32.xlu0 %v358, 122
        %v647 = vpop.permute.xlu0 %646
        %vm648 = vcmask 998400
        %v649 = vsel %vm648, %v615, %v617
        %v650 = vsel %vm648, %v617, %v619
        %v651 = vsel %vm648, %v619, %v621
        %v652 = vsel %vm648, %v621, %v623
        %v653 = vsel %vm648, %v623, %v625
        %v654 = vsel %vm648, %v625, %v627
        %v655 = vsel %vm648, %v627, %v629
        %v656 = vsel %vm648, %v629, %v631
        %v657 = vsel %vm648, %v631, %v633
        %v658 = vsel %vm648, %v633, %v635
        %v659 = vsel %vm648, %v635, %v637
        %v660 = vsel %vm648, %v637, %v639
        %v661 = vsel %vm648, %v639, %v641
        %v662 = vsel %vm648, %v641, %v643
        %v663 = vsel %vm648, %v643, %v645
        %v664 = vsel %vm648, %v645, %v647
        %665 = vrot.lane.b32.xlu0 %v340, 96
        %v666 = vpop.permute.xlu0 %665
        %667 = vrot.lane.b32.xlu0 %v341, 96
        %v668 = vpop.permute.xlu0 %667
        %669 = vrot.lane.b32.xlu0 %v342, 96
        %v670 = vpop.permute.xlu0 %669
        %671 = vrot.lane.b32.xlu0 %v343, 96
        %v672 = vpop.permute.xlu0 %671
        %673 = vrot.lane.b32.xlu0 %v344, 96
        %v674 = vpop.permute.xlu0 %673
        %675 = vrot.lane.b32.xlu0 %v345, 96
        %v676 = vpop.permute.xlu0 %675
        %677 = vrot.lane.b32.xlu0 %v346, 96
        %v678 = vpop.permute.xlu0 %677
        %679 = vrot.lane.b32.xlu0 %v347, 96
        %v680 = vpop.permute.xlu0 %679
        %681 = vrot.lane.b32.xlu0 %v348, 96
        %v682 = vpop.permute.xlu0 %681
        %683 = vrot.lane.b32.xlu0 %v349, 96
        %v684 = vpop.permute.xlu0 %683
        %685 = vrot.lane.b32.xlu0 %v350, 96
        %v686 = vpop.permute.xlu0 %685
        %687 = vrot.lane.b32.xlu0 %v351, 96
        %v688 = vpop.permute.xlu0 %687
        %689 = vrot.lane.b32.xlu0 %v352, 96
        %v690 = vpop.permute.xlu0 %689
        %691 = vrot.lane.b32.xlu0 %v353, 96
        %v692 = vpop.permute.xlu0 %691
        %693 = vrot.lane.b32.xlu0 %v354, 96
        %v694 = vpop.permute.xlu0 %693
        %695 = vrot.lane.b32.xlu0 %v355, 96
        %v696 = vpop.permute.xlu0 %695
        %697 = vrot.lane.b32.xlu0 %v358, 96
        %v698 = vpop.permute.xlu0 %697
        %vm699 = vcmask 785408
        %v700 = vsel %vm699, %v666, %v668
        %v701 = vsel %vm699, %v668, %v670
        %v702 = vsel %vm699, %v670, %v672
        %v703 = vsel %vm699, %v672, %v674
        %v704 = vsel %vm699, %v674, %v676
        %v705 = vsel %vm699, %v676, %v678
        %v706 = vsel %vm699, %v678, %v680
        %v707 = vsel %vm699, %v680, %v682
        %v708 = vsel %vm699, %v682, %v684
        %v709 = vsel %vm699, %v684, %v686
        %v710 = vsel %vm699, %v686, %v688
        %v711 = vsel %vm699, %v688, %v690
        %v712 = vsel %vm699, %v690, %v692
        %v713 = vsel %vm699, %v692, %v694
        %v714 = vsel %vm699, %v694, %v696
        %v715 = vsel %vm699, %v696, %v698
        %716 = vrot.lane.b32.xlu0 %v340, 95
        %v717 = vpop.permute.xlu0 %716
        %718 = vrot.lane.b32.xlu0 %v341, 95
        %v719 = vpop.permute.xlu0 %718
        %720 = vrot.lane.b32.xlu0 %v342, 95
        %v721 = vpop.permute.xlu0 %720
        %722 = vrot.lane.b32.xlu0 %v343, 95
        %v723 = vpop.permute.xlu0 %722
        %724 = vrot.lane.b32.xlu0 %v344, 95
        %v725 = vpop.permute.xlu0 %724
        %726 = vrot.lane.b32.xlu0 %v345, 95
        %v727 = vpop.permute.xlu0 %726
        %728 = vrot.lane.b32.xlu0 %v346, 95
        %v729 = vpop.permute.xlu0 %728
        %730 = vrot.lane.b32.xlu0 %v347, 95
        %v731 = vpop.permute.xlu0 %730
        %732 = vrot.lane.b32.xlu0 %v348, 95
        %v733 = vpop.permute.xlu0 %732
        %734 = vrot.lane.b32.xlu0 %v349, 95
        %v735 = vpop.permute.xlu0 %734
        %736 = vrot.lane.b32.xlu0 %v350, 95
        %v737 = vpop.permute.xlu0 %736
        %738 = vrot.lane.b32.xlu0 %v351, 95
        %v739 = vpop.permute.xlu0 %738
        %740 = vrot.lane.b32.xlu0 %v352, 95
        %v741 = vpop.permute.xlu0 %740
        %742 = vrot.lane.b32.xlu0 %v353, 95
        %v743 = vpop.permute.xlu0 %742
        %744 = vrot.lane.b32.xlu0 %v354, 95
        %v745 = vpop.permute.xlu0 %744
        %746 = vrot.lane.b32.xlu0 %v355, 95
        %v747 = vpop.permute.xlu0 %746
        %748 = vrot.lane.b32.xlu0 %v358, 95
        %v749 = vpop.permute.xlu0 %748
        %vm750 = vcmask 777216
        %v751 = vsel %vm750, %v717, %v719
        %v752 = vsel %vm750, %v719, %v721
        %v753 = vsel %vm750, %v721, %v723
        %v754 = vsel %vm750, %v723, %v725
        %v755 = vsel %vm750, %v725, %v727
        %v756 = vsel %vm750, %v727, %v729
        %v757 = vsel %vm750, %v729, %v731
        %v758 = vsel %vm750, %v731, %v733
        %v759 = vsel %vm750, %v733, %v735
        %v760 = vsel %vm750, %v735, %v737
        %v761 = vsel %vm750, %v737, %v739
        %v762 = vsel %vm750, %v739, %v741
        %v763 = vsel %vm750, %v741, %v743
        %v764 = vsel %vm750, %v743, %v745
        %v765 = vsel %vm750, %v745, %v747
        %v766 = vsel %vm750, %v747, %v749
        %767 = vrot.lane.b32.xlu0 %v340, 94
        %v768 = vpop.permute.xlu0 %767
        %769 = vrot.lane.b32.xlu0 %v341, 94
        %v770 = vpop.permute.xlu0 %769
        %771 = vrot.lane.b32.xlu0 %v342, 94
        %v772 = vpop.permute.xlu0 %771
        %773 = vrot.lane.b32.xlu0 %v343, 94
        %v774 = vpop.permute.xlu0 %773
        %775 = vrot.lane.b32.xlu0 %v344, 94
        %v776 = vpop.permute.xlu0 %775
        %777 = vrot.lane.b32.xlu0 %v345, 94
        %v778 = vpop.permute.xlu0 %777
        %779 = vrot.lane.b32.xlu0 %v346, 94
        %v780 = vpop.permute.xlu0 %779
        %781 = vrot.lane.b32.xlu0 %v347, 94
        %v782 = vpop.permute.xlu0 %781
        %783 = vrot.lane.b32.xlu0 %v348, 94
        %v784 = vpop.permute.xlu0 %783
        %785 = vrot.lane.b32.xlu0 %v349, 94
        %v786 = vpop.permute.xlu0 %785
        %787 = vrot.lane.b32.xlu0 %v350, 94
        %v788 = vpop.permute.xlu0 %787
        %789 = vrot.lane.b32.xlu0 %v351, 94
        %v790 = vpop.permute.xlu0 %789
        %791 = vrot.lane.b32.xlu0 %v352, 94
        %v792 = vpop.permute.xlu0 %791
        %793 = vrot.lane.b32.xlu0 %v353, 94
        %v794 = vpop.permute.xlu0 %793
        %795 = vrot.lane.b32.xlu0 %v354, 94
        %v796 = vpop.permute.xlu0 %795
        %797 = vrot.lane.b32.xlu0 %v355, 94
        %v798 = vpop.permute.xlu0 %797
        %799 = vrot.lane.b32.xlu0 %v358, 94
        %v800 = vpop.permute.xlu0 %799
        %vm801 = vcmask 769024
        %v802 = vsel %vm801, %v768, %v770
        %v803 = vsel %vm801, %v770, %v772
        %v804 = vsel %vm801, %v772, %v774
        %v805 = vsel %vm801, %v774, %v776
        %v806 = vsel %vm801, %v776, %v778
        %v807 = vsel %vm801, %v778, %v780
        %v808 = vsel %vm801, %v780, %v782
        %v809 = vsel %vm801, %v782, %v784
        %v810 = vsel %vm801, %v784, %v786
        %v811 = vsel %vm801, %v786, %v788
        %v812 = vsel %vm801, %v788, %v790
        %v813 = vsel %vm801, %v790, %v792
        %v814 = vsel %vm801, %v792, %v794
        %v815 = vsel %vm801, %v794, %v796
        %v816 = vsel %vm801, %v796, %v798
        %v817 = vsel %vm801, %v798, %v800
        %818 = vrot.lane.b32.xlu0 %v340, 93
        %v819 = vpop.permute.xlu0 %818
        %820 = vrot.lane.b32.xlu0 %v341, 93
        %v821 = vpop.permute.xlu0 %820
        %822 = vrot.lane.b32.xlu0 %v342, 93
        %v823 = vpop.permute.xlu0 %822
        %824 = vrot.lane.b32.xlu0 %v343, 93
        %v825 = vpop.permute.xlu0 %824
        %826 = vrot.lane.b32.xlu0 %v344, 93
        %v827 = vpop.permute.xlu0 %826
        %828 = vrot.lane.b32.xlu0 %v345, 93
        %v829 = vpop.permute.xlu0 %828
        %830 = vrot.lane.b32.xlu0 %v346, 93
        %v831 = vpop.permute.xlu0 %830
        %832 = vrot.lane.b32.xlu0 %v347, 93
        %v833 = vpop.permute.xlu0 %832
        %834 = vrot.lane.b32.xlu0 %v348, 93
        %v835 = vpop.permute.xlu0 %834
        %836 = vrot.lane.b32.xlu0 %v349, 93
        %v837 = vpop.permute.xlu0 %836
        %838 = vrot.lane.b32.xlu0 %v350, 93
        %v839 = vpop.permute.xlu0 %838
        %840 = vrot.lane.b32.xlu0 %v351, 93
        %v841 = vpop.permute.xlu0 %840
        %842 = vrot.lane.b32.xlu0 %v352, 93
        %v843 = vpop.permute.xlu0 %842
        %844 = vrot.lane.b32.xlu0 %v353, 93
        %v845 = vpop.permute.xlu0 %844
        %846 = vrot.lane.b32.xlu0 %v354, 93
        %v847 = vpop.permute.xlu0 %846
        %848 = vrot.lane.b32.xlu0 %v355, 93
        %v849 = vpop.permute.xlu0 %848
        %850 = vrot.lane.b32.xlu0 %v358, 93
        %v851 = vpop.permute.xlu0 %850
        %vm852 = vcmask 760832
        %v853 = vsel %vm852, %v819, %v821
        %v854 = vsel %vm852, %v821, %v823
        %v855 = vsel %vm852, %v823, %v825
        %v856 = vsel %vm852, %v825, %v827
        %v857 = vsel %vm852, %v827, %v829
        %v858 = vsel %vm852, %v829, %v831
        %v859 = vsel %vm852, %v831, %v833
        %v860 = vsel %vm852, %v833, %v835
        %v861 = vsel %vm852, %v835, %v837
        %v862 = vsel %vm852, %v837, %v839
        %v863 = vsel %vm852, %v839, %v841
        %v864 = vsel %vm852, %v841, %v843
        %v865 = vsel %vm852, %v843, %v845
        %v866 = vsel %vm852, %v845, %v847
        %v867 = vsel %vm852, %v847, %v849
        %v868 = vsel %vm852, %v849, %v851
        %869 = vrot.lane.b32.xlu0 %v340, 92
        %v870 = vpop.permute.xlu0 %869
        %871 = vrot.lane.b32.xlu0 %v341, 92
        %v872 = vpop.permute.xlu0 %871
        %873 = vrot.lane.b32.xlu0 %v342, 92
        %v874 = vpop.permute.xlu0 %873
        %875 = vrot.lane.b32.xlu0 %v343, 92
        %v876 = vpop.permute.xlu0 %875
        %877 = vrot.lane.b32.xlu0 %v344, 92
        %v878 = vpop.permute.xlu0 %877
        %879 = vrot.lane.b32.xlu0 %v345, 92
        %v880 = vpop.permute.xlu0 %879
        %881 = vrot.lane.b32.xlu0 %v346, 92
        %v882 = vpop.permute.xlu0 %881
        %883 = vrot.lane.b32.xlu0 %v347, 92
        %v884 = vpop.permute.xlu0 %883
        %885 = vrot.lane.b32.xlu0 %v348, 92
        %v886 = vpop.permute.xlu0 %885
        %887 = vrot.lane.b32.xlu0 %v349, 92
        %v888 = vpop.permute.xlu0 %887
        %889 = vrot.lane.b32.xlu0 %v350, 92
        %v890 = vpop.permute.xlu0 %889
        %891 = vrot.lane.b32.xlu0 %v351, 92
        %v892 = vpop.permute.xlu0 %891
        %893 = vrot.lane.b32.xlu0 %v352, 92
        %v894 = vpop.permute.xlu0 %893
        %895 = vrot.lane.b32.xlu0 %v353, 92
        %v896 = vpop.permute.xlu0 %895
        %897 = vrot.lane.b32.xlu0 %v354, 92
        %v898 = vpop.permute.xlu0 %897
        %899 = vrot.lane.b32.xlu0 %v355, 92
        %v900 = vpop.permute.xlu0 %899
        %901 = vrot.lane.b32.xlu0 %v358, 92
        %v902 = vpop.permute.xlu0 %901
        %vm903 = vcmask 752640
        %v904 = vsel %vm903, %v870, %v872
        %v905 = vsel %vm903, %v872, %v874
        %v906 = vsel %vm903, %v874, %v876
        %v907 = vsel %vm903, %v876, %v878
        %v908 = vsel %vm903, %v878, %v880
        %v909 = vsel %vm903, %v880, %v882
        %v910 = vsel %vm903, %v882, %v884
        %v911 = vsel %vm903, %v884, %v886
        %v912 = vsel %vm903, %v886, %v888
        %v913 = vsel %vm903, %v888, %v890
        %v914 = vsel %vm903, %v890, %v892
        %v915 = vsel %vm903, %v892, %v894
        %v916 = vsel %vm903, %v894, %v896
        %v917 = vsel %vm903, %v896, %v898
        %v918 = vsel %vm903, %v898, %v900
        %v919 = vsel %vm903, %v900, %v902
        %920 = vrot.lane.b32.xlu0 %v340, 91
        %v921 = vpop.permute.xlu0 %920
        %922 = vrot.lane.b32.xlu0 %v341, 91
        %v923 = vpop.permute.xlu0 %922
        %924 = vrot.lane.b32.xlu0 %v342, 91
        %v925 = vpop.permute.xlu0 %924
        %926 = vrot.lane.b32.xlu0 %v343, 91
        %v927 = vpop.permute.xlu0 %926
        %928 = vrot.lane.b32.xlu0 %v344, 91
        %v929 = vpop.permute.xlu0 %928
        %930 = vrot.lane.b32.xlu0 %v345, 91
        %v931 = vpop.permute.xlu0 %930
        %932 = vrot.lane.b32.xlu0 %v346, 91
        %v933 = vpop.permute.xlu0 %932
        %934 = vrot.lane.b32.xlu0 %v347, 91
        %v935 = vpop.permute.xlu0 %934
        %936 = vrot.lane.b32.xlu0 %v348, 91
        %v937 = vpop.permute.xlu0 %936
        %938 = vrot.lane.b32.xlu0 %v349, 91
        %v939 = vpop.permute.xlu0 %938
        %940 = vrot.lane.b32.xlu0 %v350, 91
        %v941 = vpop.permute.xlu0 %940
        %942 = vrot.lane.b32.xlu0 %v351, 91
        %v943 = vpop.permute.xlu0 %942
        %944 = vrot.lane.b32.xlu0 %v352, 91
        %v945 = vpop.permute.xlu0 %944
        %946 = vrot.lane.b32.xlu0 %v353, 91
        %v947 = vpop.permute.xlu0 %946
        %948 = vrot.lane.b32.xlu0 %v354, 91
        %v949 = vpop.permute.xlu0 %948
        %950 = vrot.lane.b32.xlu0 %v355, 91
        %v951 = vpop.permute.xlu0 %950
        %952 = vrot.lane.b32.xlu0 %v358, 91
        %v953 = vpop.permute.xlu0 %952
        %vm954 = vcmask 744448
        %v955 = vsel %vm954, %v921, %v923
        %v956 = vsel %vm954, %v923, %v925
        %v957 = vsel %vm954, %v925, %v927
        %v958 = vsel %vm954, %v927, %v929
        %v959 = vsel %vm954, %v929, %v931
        %v960 = vsel %vm954, %v931, %v933
        %v961 = vsel %vm954, %v933, %v935
        %v962 = vsel %vm954, %v935, %v937
        %v963 = vsel %vm954, %v937, %v939
        %v964 = vsel %vm954, %v939, %v941
        %v965 = vsel %vm954, %v941, %v943
        %v966 = vsel %vm954, %v943, %v945
        %v967 = vsel %vm954, %v945, %v947
        %v968 = vsel %vm954, %v947, %v949
        %v969 = vsel %vm954, %v949, %v951
        %v970 = vsel %vm954, %v951, %v953
        %971 = vrot.lane.b32.xlu0 %v340, 90
        %v972 = vpop.permute.xlu0 %971
        %973 = vrot.lane.b32.xlu0 %v341, 90
        %v974 = vpop.permute.xlu0 %973
        %975 = vrot.lane.b32.xlu0 %v342, 90
        %v976 = vpop.permute.xlu0 %975
        %977 = vrot.lane.b32.xlu0 %v343, 90
        %v978 = vpop.permute.xlu0 %977
        %979 = vrot.lane.b32.xlu0 %v344, 90
        %v980 = vpop.permute.xlu0 %979
        %981 = vrot.lane.b32.xlu0 %v345, 90
        %v982 = vpop.permute.xlu0 %981
        %983 = vrot.lane.b32.xlu0 %v346, 90
        %v984 = vpop.permute.xlu0 %983
        %985 = vrot.lane.b32.xlu0 %v347, 90
        %v986 = vpop.permute.xlu0 %985
        %987 = vrot.lane.b32.xlu0 %v348, 90
        %v988 = vpop.permute.xlu0 %987
        %989 = vrot.lane.b32.xlu0 %v349, 90
        %v990 = vpop.permute.xlu0 %989
        %991 = vrot.lane.b32.xlu0 %v350, 90
        %v992 = vpop.permute.xlu0 %991
        %993 = vrot.lane.b32.xlu0 %v351, 90
        %v994 = vpop.permute.xlu0 %993
        %995 = vrot.lane.b32.xlu0 %v352, 90
        %v996 = vpop.permute.xlu0 %995
        %997 = vrot.lane.b32.xlu0 %v353, 90
        %v998 = vpop.permute.xlu0 %997
        %999 = vrot.lane.b32.xlu0 %v354, 90
        %v1000 = vpop.permute.xlu0 %999
        %1001 = vrot.lane.b32.xlu0 %v355, 90
        %v1002 = vpop.permute.xlu0 %1001
        %1003 = vrot.lane.b32.xlu0 %v358, 90
        %v1004 = vpop.permute.xlu0 %1003
        %vm1005 = vcmask 736256
        %v1006 = vsel %vm1005, %v972, %v974
        %v1007 = vsel %vm1005, %v974, %v976
        %v1008 = vsel %vm1005, %v976, %v978
        %v1009 = vsel %vm1005, %v978, %v980
        %v1010 = vsel %vm1005, %v980, %v982
        %v1011 = vsel %vm1005, %v982, %v984
        %v1012 = vsel %vm1005, %v984, %v986
        %v1013 = vsel %vm1005, %v986, %v988
        %v1014 = vsel %vm1005, %v988, %v990
        %v1015 = vsel %vm1005, %v990, %v992
        %v1016 = vsel %vm1005, %v992, %v994
        %v1017 = vsel %vm1005, %v994, %v996
        %v1018 = vsel %vm1005, %v996, %v998
        %v1019 = vsel %vm1005, %v998, %v1000
        %v1020 = vsel %vm1005, %v1000, %v1002
        %v1021 = vsel %vm1005, %v1002, %v1004
        %1022 = vrot.lane.b32.xlu0 %v340, 64
        %v1023 = vpop.permute.xlu0 %1022
        %1024 = vrot.lane.b32.xlu0 %v341, 64
        %v1025 = vpop.permute.xlu0 %1024
        %1026 = vrot.lane.b32.xlu0 %v342, 64
        %v1027 = vpop.permute.xlu0 %1026
        %1028 = vrot.lane.b32.xlu0 %v343, 64
        %v1029 = vpop.permute.xlu0 %1028
        %1030 = vrot.lane.b32.xlu0 %v344, 64
        %v1031 = vpop.permute.xlu0 %1030
        %1032 = vrot.lane.b32.xlu0 %v345, 64
        %v1033 = vpop.permute.xlu0 %1032
        %1034 = vrot.lane.b32.xlu0 %v346, 64
        %v1035 = vpop.permute.xlu0 %1034
        %1036 = vrot.lane.b32.xlu0 %v347, 64
        %v1037 = vpop.permute.xlu0 %1036
        %1038 = vrot.lane.b32.xlu0 %v348, 64
        %v1039 = vpop.permute.xlu0 %1038
        %1040 = vrot.lane.b32.xlu0 %v349, 64
        %v1041 = vpop.permute.xlu0 %1040
        %1042 = vrot.lane.b32.xlu0 %v350, 64
        %v1043 = vpop.permute.xlu0 %1042
        %1044 = vrot.lane.b32.xlu0 %v351, 64
        %v1045 = vpop.permute.xlu0 %1044
        %1046 = vrot.lane.b32.xlu0 %v352, 64
        %v1047 = vpop.permute.xlu0 %1046
        %1048 = vrot.lane.b32.xlu0 %v353, 64
        %v1049 = vpop.permute.xlu0 %1048
        %1050 = vrot.lane.b32.xlu0 %v354, 64
        %v1051 = vpop.permute.xlu0 %1050
        %1052 = vrot.lane.b32.xlu0 %v355, 64
        %v1053 = vpop.permute.xlu0 %1052
        %1054 = vrot.lane.b32.xlu0 %v358, 64
        %v1055 = vpop.permute.xlu0 %1054
        %vm1056 = vcmask 523264
        %v1057 = vsel %vm1056, %v1023, %v1025
        %v1058 = vsel %vm1056, %v1025, %v1027
        %v1059 = vsel %vm1056, %v1027, %v1029
        %v1060 = vsel %vm1056, %v1029, %v1031
        %v1061 = vsel %vm1056, %v1031, %v1033
        %v1062 = vsel %vm1056, %v1033, %v1035
        %v1063 = vsel %vm1056, %v1035, %v1037
        %v1064 = vsel %vm1056, %v1037, %v1039
        %v1065 = vsel %vm1056, %v1039, %v1041
        %v1066 = vsel %vm1056, %v1041, %v1043
        %v1067 = vsel %vm1056, %v1043, %v1045
        %v1068 = vsel %vm1056, %v1045, %v1047
        %v1069 = vsel %vm1056, %v1047, %v1049
        %v1070 = vsel %vm1056, %v1049, %v1051
        %v1071 = vsel %vm1056, %v1051, %v1053
        %v1072 = vsel %vm1056, %v1053, %v1055
        %1073 = vrot.lane.b32.xlu0 %v340, 63
        %v1074 = vpop.permute.xlu0 %1073
        %1075 = vrot.lane.b32.xlu0 %v341, 63
        %v1076 = vpop.permute.xlu0 %1075
        %1077 = vrot.lane.b32.xlu0 %v342, 63
        %v1078 = vpop.permute.xlu0 %1077
        %1079 = vrot.lane.b32.xlu0 %v343, 63
        %v1080 = vpop.permute.xlu0 %1079
        %1081 = vrot.lane.b32.xlu0 %v344, 63
        %v1082 = vpop.permute.xlu0 %1081
        %1083 = vrot.lane.b32.xlu0 %v345, 63
        %v1084 = vpop.permute.xlu0 %1083
        %1085 = vrot.lane.b32.xlu0 %v346, 63
        %v1086 = vpop.permute.xlu0 %1085
        %1087 = vrot.lane.b32.xlu0 %v347, 63
        %v1088 = vpop.permute.xlu0 %1087
        %1089 = vrot.lane.b32.xlu0 %v348, 63
        %v1090 = vpop.permute.xlu0 %1089
        %1091 = vrot.lane.b32.xlu0 %v349, 63
        %v1092 = vpop.permute.xlu0 %1091
        %1093 = vrot.lane.b32.xlu0 %v350, 63
        %v1094 = vpop.permute.xlu0 %1093
        %1095 = vrot.lane.b32.xlu0 %v351, 63
        %v1096 = vpop.permute.xlu0 %1095
        %1097 = vrot.lane.b32.xlu0 %v352, 63
        %v1098 = vpop.permute.xlu0 %1097
        %1099 = vrot.lane.b32.xlu0 %v353, 63
        %v1100 = vpop.permute.xlu0 %1099
        %1101 = vrot.lane.b32.xlu0 %v354, 63
        %v1102 = vpop.permute.xlu0 %1101
        %1103 = vrot.lane.b32.xlu0 %v355, 63
        %v1104 = vpop.permute.xlu0 %1103
        %1105 = vrot.lane.b32.xlu0 %v358, 63
        %v1106 = vpop.permute.xlu0 %1105
        %vm1107 = vcmask 515072
        %v1108 = vsel %vm1107, %v1074, %v1076
        %v1109 = vsel %vm1107, %v1076, %v1078
        %v1110 = vsel %vm1107, %v1078, %v1080
        %v1111 = vsel %vm1107, %v1080, %v1082
        %v1112 = vsel %vm1107, %v1082, %v1084
        %v1113 = vsel %vm1107, %v1084, %v1086
        %v1114 = vsel %vm1107, %v1086, %v1088
        %v1115 = vsel %vm1107, %v1088, %v1090
        %v1116 = vsel %vm1107, %v1090, %v1092
        %v1117 = vsel %vm1107, %v1092, %v1094
        %v1118 = vsel %vm1107, %v1094, %v1096
        %v1119 = vsel %vm1107, %v1096, %v1098
        %v1120 = vsel %vm1107, %v1098, %v1100
        %v1121 = vsel %vm1107, %v1100, %v1102
        %v1122 = vsel %vm1107, %v1102, %v1104
        %v1123 = vsel %vm1107, %v1104, %v1106
        %vm1124 = vcmask 1043456
        %v1127 = vsel %vm1124, %v340, %v394
        %v1131 = vsel %vm1124, %v341, %v395
        %v1135 = vsel %vm1124, %v342, %v396
        %v1139 = vsel %vm1124, %v343, %v397
        %v1143 = vsel %vm1124, %v344, %v398
        %v1147 = vsel %vm1124, %v345, %v399
        %v1151 = vsel %vm1124, %v346, %v400
        %v1155 = vsel %vm1124, %v347, %v401
        %v1159 = vsel %vm1124, %v348, %v402
        %v1163 = vsel %vm1124, %v349, %v403
        %v1167 = vsel %vm1124, %v350, %v404
        %v1171 = vsel %vm1124, %v351, %v405
        %v1175 = vsel %vm1124, %v352, %v406
        %v1179 = vsel %vm1124, %v353, %v407
        %v1183 = vsel %vm1124, %v354, %v408
        %v1187 = vsel %vm1124, %v355, %v409
        %v1191 = vsel %vm1124, %v445, %v496
        %v1195 = vsel %vm1124, %v446, %v497
        %v1199 = vsel %vm1124, %v447, %v498
        %v1203 = vsel %vm1124, %v448, %v499
        %v1207 = vsel %vm1124, %v449, %v500
        %v1211 = vsel %vm1124, %v450, %v501
        %v1215 = vsel %vm1124, %v451, %v502
        %v1219 = vsel %vm1124, %v452, %v503
        %v1223 = vsel %vm1124, %v453, %v504
        %v1227 = vsel %vm1124, %v454, %v505
        %v1231 = vsel %vm1124, %v455, %v506
        %v1235 = vsel %vm1124, %v456, %v507
        %v1239 = vsel %vm1124, %v457, %v508
        %v1243 = vsel %vm1124, %v458, %v509
        %v1247 = vsel %vm1124, %v459, %v510
        %v1251 = vsel %vm1124, %v460, %v511
        %v1255 = vsel %vm1124, %v547, %v598
        %v1259 = vsel %vm1124, %v548, %v599
        %v1263 = vsel %vm1124, %v549, %v600
        %v1267 = vsel %vm1124, %v550, %v601
        %v1271 = vsel %vm1124, %v551, %v602
        %v1275 = vsel %vm1124, %v552, %v603
        %v1279 = vsel %vm1124, %v553, %v604
        %v1283 = vsel %vm1124, %v554, %v605
        %v1287 = vsel %vm1124, %v555, %v606
        %v1291 = vsel %vm1124, %v556, %v607
        %v1295 = vsel %vm1124, %v557, %v608
        %v1299 = vsel %vm1124, %v558, %v609
        %v1303 = vsel %vm1124, %v559, %v610
        %v1307 = vsel %vm1124, %v560, %v611
        %v1311 = vsel %vm1124, %v561, %v612
        %v1315 = vsel %vm1124, %v562, %v613
        %v1319 = vsel %vm1124, %v649, %v700
        %v1323 = vsel %vm1124, %v650, %v701
        %v1327 = vsel %vm1124, %v651, %v702
        %v1331 = vsel %vm1124, %v652, %v703
        %v1335 = vsel %vm1124, %v653, %v704
        %v1339 = vsel %vm1124, %v654, %v705
        %v1343 = vsel %vm1124, %v655, %v706
        %v1347 = vsel %vm1124, %v656, %v707
        %v1351 = vsel %vm1124, %v657, %v708
        %v1355 = vsel %vm1124, %v658, %v709
        %v1359 = vsel %vm1124, %v659, %v710
        %v1363 = vsel %vm1124, %v660, %v711
        %v1367 = vsel %vm1124, %v661, %v712
        %v1371 = vsel %vm1124, %v662, %v713
        %v1375 = vsel %vm1124, %v663, %v714
        %v1379 = vsel %vm1124, %v664, %v715
        %v1383 = vsel %vm1124, %v751, %v802
        %v1387 = vsel %vm1124, %v752, %v803
        %v1391 = vsel %vm1124, %v753, %v804
        %v1395 = vsel %vm1124, %v754, %v805
        %v1399 = vsel %vm1124, %v755, %v806
        %v1403 = vsel %vm1124, %v756, %v807
        %v1407 = vsel %vm1124, %v757, %v808
        %v1411 = vsel %vm1124, %v758, %v809
        %v1415 = vsel %vm1124, %v759, %v810
        %v1419 = vsel %vm1124, %v760, %v811
        %v1423 = vsel %vm1124, %v761, %v812
        %v1427 = vsel %vm1124, %v762, %v813
        %v1431 = vsel %vm1124, %v763, %v814
        %v1435 = vsel %vm1124, %v764, %v815
        %v1439 = vsel %vm1124, %v765, %v816
        %v1443 = vsel %vm1124, %v766, %v817
        %v1447 = vsel %vm1124, %v853, %v904
        %v1451 = vsel %vm1124, %v854, %v905
        %v1455 = vsel %vm1124, %v855, %v906
        %v1459 = vsel %vm1124, %v856, %v907
        %v1463 = vsel %vm1124, %v857, %v908
        %v1467 = vsel %vm1124, %v858, %v909
        %v1471 = vsel %vm1124, %v859, %v910
        %v1475 = vsel %vm1124, %v860, %v911
        %v1479 = vsel %vm1124, %v861, %v912
        %v1483 = vsel %vm1124, %v862, %v913
        %v1487 = vsel %vm1124, %v863, %v914
        %v1491 = vsel %vm1124, %v864, %v915
        %v1495 = vsel %vm1124, %v865, %v916
        %v1499 = vsel %vm1124, %v866, %v917
        %v1503 = vsel %vm1124, %v867, %v918
        %v1507 = vsel %vm1124, %v868, %v919
        %v1511 = vsel %vm1124, %v955, %v1006
        %v1515 = vsel %vm1124, %v956, %v1007
        %v1519 = vsel %vm1124, %v957, %v1008
        %v1523 = vsel %vm1124, %v958, %v1009
        %v1527 = vsel %vm1124, %v959, %v1010
        %v1531 = vsel %vm1124, %v960, %v1011
        %v1535 = vsel %vm1124, %v961, %v1012
        %v1539 = vsel %vm1124, %v962, %v1013
        %v1543 = vsel %vm1124, %v963, %v1014
        %v1547 = vsel %vm1124, %v964, %v1015
        %v1551 = vsel %vm1124, %v965, %v1016
        %v1555 = vsel %vm1124, %v966, %v1017
        %v1559 = vsel %vm1124, %v967, %v1018
        %v1563 = vsel %vm1124, %v968, %v1019
        %v1567 = vsel %vm1124, %v969, %v1020
        %v1571 = vsel %vm1124, %v970, %v1021
        %v1575 = vsel %vm1124, %v1057, %v1108
        %v1579 = vsel %vm1124, %v1058, %v1109
        %v1583 = vsel %vm1124, %v1059, %v1110
        %v1587 = vsel %vm1124, %v1060, %v1111
        %v1591 = vsel %vm1124, %v1061, %v1112
        %v1595 = vsel %vm1124, %v1062, %v1113
        %v1599 = vsel %vm1124, %v1063, %v1114
        %v1603 = vsel %vm1124, %v1064, %v1115
        %v1607 = vsel %vm1124, %v1065, %v1116
        %v1611 = vsel %vm1124, %v1066, %v1117
        %v1615 = vsel %vm1124, %v1067, %v1118
        %v1619 = vsel %vm1124, %v1068, %v1119
        %v1623 = vsel %vm1124, %v1069, %v1120
        %v1627 = vsel %vm1124, %v1070, %v1121
        %v1631 = vsel %vm1124, %v1071, %v1122
        %v1635 = vsel %vm1124, %v1072, %v1123
        %1637 = vrot.lane.b32.xlu0 %v340, 98
        %v1638 = vpop.permute.xlu0 %1637
        %1639 = vrot.lane.b32.xlu0 %v341, 98
        %v1640 = vpop.permute.xlu0 %1639
        %1641 = vrot.lane.b32.xlu0 %v342, 98
        %v1642 = vpop.permute.xlu0 %1641
        %1643 = vrot.lane.b32.xlu0 %v343, 98
        %v1644 = vpop.permute.xlu0 %1643
        %1645 = vrot.lane.b32.xlu0 %v344, 98
        %v1646 = vpop.permute.xlu0 %1645
        %1647 = vrot.lane.b32.xlu0 %v345, 98
        %v1648 = vpop.permute.xlu0 %1647
        %1649 = vrot.lane.b32.xlu0 %v346, 98
        %v1650 = vpop.permute.xlu0 %1649
        %1651 = vrot.lane.b32.xlu0 %v347, 98
        %v1652 = vpop.permute.xlu0 %1651
        %1653 = vrot.lane.b32.xlu0 %v348, 98
        %v1654 = vpop.permute.xlu0 %1653
        %1655 = vrot.lane.b32.xlu0 %v349, 98
        %v1656 = vpop.permute.xlu0 %1655
        %1657 = vrot.lane.b32.xlu0 %v350, 98
        %v1658 = vpop.permute.xlu0 %1657
        %1659 = vrot.lane.b32.xlu0 %v351, 98
        %v1660 = vpop.permute.xlu0 %1659
        %1661 = vrot.lane.b32.xlu0 %v352, 98
        %v1662 = vpop.permute.xlu0 %1661
        %1663 = vrot.lane.b32.xlu0 %v353, 98
        %v1664 = vpop.permute.xlu0 %1663
        %1665 = vrot.lane.b32.xlu0 %v354, 98
        %v1666 = vpop.permute.xlu0 %1665
        %1667 = vrot.lane.b32.xlu0 %v355, 98
        %v1668 = vpop.permute.xlu0 %1667
        %1669 = vrot.lane.b32.xlu0 %v358, 98
        %v1670 = vpop.permute.xlu0 %1669
        %vm1671 = vcmask 801792
        %v1672 = vsel %vm1671, %v1638, %v1640
        %v1673 = vsel %vm1671, %v1640, %v1642
        %v1674 = vsel %vm1671, %v1642, %v1644
        %v1675 = vsel %vm1671, %v1644, %v1646
        %v1676 = vsel %vm1671, %v1646, %v1648
        %v1677 = vsel %vm1671, %v1648, %v1650
        %v1678 = vsel %vm1671, %v1650, %v1652
        %v1679 = vsel %vm1671, %v1652, %v1654
        %v1680 = vsel %vm1671, %v1654, %v1656
        %v1681 = vsel %vm1671, %v1656, %v1658
        %v1682 = vsel %vm1671, %v1658, %v1660
        %v1683 = vsel %vm1671, %v1660, %v1662
        %v1684 = vsel %vm1671, %v1662, %v1664
        %v1685 = vsel %vm1671, %v1664, %v1666
        %v1686 = vsel %vm1671, %v1666, %v1668
        %v1687 = vsel %vm1671, %v1668, %v1670
        %1688 = vrot.lane.b32.xlu0 %v340, 97
        %v1689 = vpop.permute.xlu0 %1688
        %1690 = vrot.lane.b32.xlu0 %v341, 97
        %v1691 = vpop.permute.xlu0 %1690
        %1692 = vrot.lane.b32.xlu0 %v342, 97
        %v1693 = vpop.permute.xlu0 %1692
        %1694 = vrot.lane.b32.xlu0 %v343, 97
        %v1695 = vpop.permute.xlu0 %1694
        %1696 = vrot.lane.b32.xlu0 %v344, 97
        %v1697 = vpop.permute.xlu0 %1696
        %1698 = vrot.lane.b32.xlu0 %v345, 97
        %v1699 = vpop.permute.xlu0 %1698
        %1700 = vrot.lane.b32.xlu0 %v346, 97
        %v1701 = vpop.permute.xlu0 %1700
        %1702 = vrot.lane.b32.xlu0 %v347, 97
        %v1703 = vpop.permute.xlu0 %1702
        %1704 = vrot.lane.b32.xlu0 %v348, 97
        %v1705 = vpop.permute.xlu0 %1704
        %1706 = vrot.lane.b32.xlu0 %v349, 97
        %v1707 = vpop.permute.xlu0 %1706
        %1708 = vrot.lane.b32.xlu0 %v350, 97
        %v1709 = vpop.permute.xlu0 %1708
        %1710 = vrot.lane.b32.xlu0 %v351, 97
        %v1711 = vpop.permute.xlu0 %1710
        %1712 = vrot.lane.b32.xlu0 %v352, 97
        %v1713 = vpop.permute.xlu0 %1712
        %1714 = vrot.lane.b32.xlu0 %v353, 97
        %v1715 = vpop.permute.xlu0 %1714
        %1716 = vrot.lane.b32.xlu0 %v354, 97
        %v1717 = vpop.permute.xlu0 %1716
        %1718 = vrot.lane.b32.xlu0 %v355, 97
        %v1719 = vpop.permute.xlu0 %1718
        %1720 = vrot.lane.b32.xlu0 %v358, 97
        %v1721 = vpop.permute.xlu0 %1720
        %vm1722 = vcmask 793600
        %v1723 = vsel %vm1722, %v1689, %v1691
        %v1724 = vsel %vm1722, %v1691, %v1693
        %v1725 = vsel %vm1722, %v1693, %v1695
        %v1726 = vsel %vm1722, %v1695, %v1697
        %v1727 = vsel %vm1722, %v1697, %v1699
        %v1728 = vsel %vm1722, %v1699, %v1701
        %v1729 = vsel %vm1722, %v1701, %v1703
        %v1730 = vsel %vm1722, %v1703, %v1705
        %v1731 = vsel %vm1722, %v1705, %v1707
        %v1732 = vsel %vm1722, %v1707, %v1709
        %v1733 = vsel %vm1722, %v1709, %v1711
        %v1734 = vsel %vm1722, %v1711, %v1713
        %v1735 = vsel %vm1722, %v1713, %v1715
        %v1736 = vsel %vm1722, %v1715, %v1717
        %v1737 = vsel %vm1722, %v1717, %v1719
        %v1738 = vsel %vm1722, %v1719, %v1721
        %v1747 = vunpack.c.l.b16 %v299
        %v1748 = vunpack.c.h.b16 %v299
        %v1749 = vunpack.c.l.b16 %v300
        %v1750 = vunpack.c.h.b16 %v300
        %v1751 = vunpack.c.l.b16 %v301
        %v1752 = vunpack.c.h.b16 %v301
        %v1753 = vunpack.c.l.b16 %v302
        %v1754 = vunpack.c.h.b16 %v302
        %v1755 = vunpack.c.l.b16 %v303
        %v1756 = vunpack.c.h.b16 %v303
        %v1757 = vunpack.c.l.b16 %v304
        %v1758 = vunpack.c.h.b16 %v304
        %v1759 = vunpack.c.l.b16 %v305
        %v1760 = vunpack.c.h.b16 %v305
        %v1761 = vunpack.c.l.b16 %v306
        %v1762 = vunpack.c.h.b16 %v306
        %v1763 = vpack.c.b16 %v1747, %v1747
        %v1764 = vpack.c.b16 %v1748, %v1748
        %v1765 = vpack.c.b16 %v1749, %v1749
        %v1766 = vpack.c.b16 %v1750, %v1750
        %v1767 = vpack.c.b16 %v1751, %v1751
        %v1768 = vpack.c.b16 %v1752, %v1752
        %v1769 = vpack.c.b16 %v1753, %v1753
        %v1770 = vpack.c.b16 %v1754, %v1754
        %v1771 = vpack.c.b16 %v1755, %v1755
        %v1772 = vpack.c.b16 %v1756, %v1756
        %v1773 = vpack.c.b16 %v1757, %v1757
        %v1774 = vpack.c.b16 %v1758, %v1758
        %v1775 = vpack.c.b16 %v1759, %v1759
        %v1776 = vpack.c.b16 %v1760, %v1760
        %v1777 = vpack.c.b16 %v1761, %v1761
        %v1778 = vpack.c.b16 %v1762, %v1762
        %1779 = vrot.lane.b32.xlu0 %v1763, 66
        %v1780 = vpop.permute.xlu0 %1779
        %1781 = vrot.lane.b32.xlu0 %v1764, 66
        %v1782 = vpop.permute.xlu0 %1781
        %1783 = vrot.lane.b32.xlu0 %v1765, 66
        %v1784 = vpop.permute.xlu0 %1783
        %1785 = vrot.lane.b32.xlu0 %v1766, 66
        %v1786 = vpop.permute.xlu0 %1785
        %1787 = vrot.lane.b32.xlu0 %v1767, 66
        %v1788 = vpop.permute.xlu0 %1787
        %1789 = vrot.lane.b32.xlu0 %v1768, 66
        %v1790 = vpop.permute.xlu0 %1789
        %1791 = vrot.lane.b32.xlu0 %v1769, 66
        %v1792 = vpop.permute.xlu0 %1791
        %1793 = vrot.lane.b32.xlu0 %v1770, 66
        %v1794 = vpop.permute.xlu0 %1793
        %1795 = vrot.lane.b32.xlu0 %v1771, 66
        %v1796 = vpop.permute.xlu0 %1795
        %1797 = vrot.lane.b32.xlu0 %v1772, 66
        %v1798 = vpop.permute.xlu0 %1797
        %1799 = vrot.lane.b32.xlu0 %v1773, 66
        %v1800 = vpop.permute.xlu0 %1799
        %1801 = vrot.lane.b32.xlu0 %v1774, 66
        %v1802 = vpop.permute.xlu0 %1801
        %1803 = vrot.lane.b32.xlu0 %v1775, 66
        %v1804 = vpop.permute.xlu0 %1803
        %1805 = vrot.lane.b32.xlu0 %v1776, 66
        %v1806 = vpop.permute.xlu0 %1805
        %1807 = vrot.lane.b32.xlu0 %v1777, 66
        %v1808 = vpop.permute.xlu0 %1807
        %1809 = vrot.lane.b32.xlu0 %v1778, 66
        %v1810 = vpop.permute.xlu0 %1809
        %vm1811 = vcmask 539648
        %v1812 = vsel %vm1811, %v1780, %v1782
        %v1813 = vsel %vm1811, %v1782, %v1784
        %v1814 = vsel %vm1811, %v1784, %v1786
        %v1815 = vsel %vm1811, %v1786, %v1788
        %v1816 = vsel %vm1811, %v1788, %v1790
        %v1817 = vsel %vm1811, %v1790, %v1792
        %v1818 = vsel %vm1811, %v1792, %v1794
        %v1819 = vsel %vm1811, %v1794, %v1796
        %v1820 = vsel %vm1811, %v1796, %v1798
        %v1821 = vsel %vm1811, %v1798, %v1800
        %v1822 = vsel %vm1811, %v1800, %v1802
        %v1823 = vsel %vm1811, %v1802, %v1804
        %v1824 = vsel %vm1811, %v1804, %v1806
        %v1825 = vsel %vm1811, %v1806, %v1808
        %v1826 = vsel %vm1811, %v1808, %v1810
        %v1836 = vunpack.c.l.b16 %v307
        %v1837 = vunpack.c.h.b16 %v307
        %v1838 = vunpack.c.l.b16 %v308
        %v1839 = vunpack.c.h.b16 %v308
        %v1840 = vunpack.c.l.b16 %v309
        %v1841 = vunpack.c.h.b16 %v309
        %v1842 = vunpack.c.l.b16 %v310
        %v1843 = vunpack.c.h.b16 %v310
        %v1844 = vunpack.c.l.b16 %v311
        %v1845 = vunpack.c.h.b16 %v311
        %v1846 = vunpack.c.l.b16 %v312
        %v1847 = vunpack.c.h.b16 %v312
        %v1848 = vunpack.c.l.b16 %v313
        %v1849 = vunpack.c.h.b16 %v313
        %v1850 = vunpack.c.l.b16 %v314
        %v1851 = vunpack.c.h.b16 %v314
        %v1852 = vunpack.c.l.b16 %v315
        %v1853 = vpack.c.b16 %v1836, %v1836
        %v1854 = vpack.c.b16 %v1837, %v1837
        %v1855 = vpack.c.b16 %v1838, %v1838
        %v1856 = vpack.c.b16 %v1839, %v1839
        %v1857 = vpack.c.b16 %v1840, %v1840
        %v1858 = vpack.c.b16 %v1841, %v1841
        %v1859 = vpack.c.b16 %v1842, %v1842
        %v1860 = vpack.c.b16 %v1843, %v1843
        %v1861 = vpack.c.b16 %v1844, %v1844
        %v1862 = vpack.c.b16 %v1845, %v1845
        %v1863 = vpack.c.b16 %v1846, %v1846
        %v1864 = vpack.c.b16 %v1847, %v1847
        %v1865 = vpack.c.b16 %v1848, %v1848
        %v1866 = vpack.c.b16 %v1849, %v1849
        %v1867 = vpack.c.b16 %v1850, %v1850
        %v1868 = vpack.c.b16 %v1851, %v1851
        %v1869 = vpack.c.b16 %v1852, %v1852
        %1870 = vrot.lane.b32.xlu0 %v1853, 65
        %v1871 = vpop.permute.xlu0 %1870
        %1872 = vrot.lane.b32.xlu0 %v1854, 65
        %v1873 = vpop.permute.xlu0 %1872
        %1874 = vrot.lane.b32.xlu0 %v1855, 65
        %v1875 = vpop.permute.xlu0 %1874
        %1876 = vrot.lane.b32.xlu0 %v1856, 65
        %v1877 = vpop.permute.xlu0 %1876
        %1878 = vrot.lane.b32.xlu0 %v1857, 65
        %v1879 = vpop.permute.xlu0 %1878
        %1880 = vrot.lane.b32.xlu0 %v1858, 65
        %v1881 = vpop.permute.xlu0 %1880
        %1882 = vrot.lane.b32.xlu0 %v1859, 65
        %v1883 = vpop.permute.xlu0 %1882
        %1884 = vrot.lane.b32.xlu0 %v1860, 65
        %v1885 = vpop.permute.xlu0 %1884
        %1886 = vrot.lane.b32.xlu0 %v1861, 65
        %v1887 = vpop.permute.xlu0 %1886
        %1888 = vrot.lane.b32.xlu0 %v1862, 65
        %v1889 = vpop.permute.xlu0 %1888
        %1890 = vrot.lane.b32.xlu0 %v1863, 65
        %v1891 = vpop.permute.xlu0 %1890
        %1892 = vrot.lane.b32.xlu0 %v1864, 65
        %v1893 = vpop.permute.xlu0 %1892
        %1894 = vrot.lane.b32.xlu0 %v1865, 65
        %v1895 = vpop.permute.xlu0 %1894
        %1896 = vrot.lane.b32.xlu0 %v1866, 65
        %v1897 = vpop.permute.xlu0 %1896
        %1898 = vrot.lane.b32.xlu0 %v1867, 65
        %v1899 = vpop.permute.xlu0 %1898
        %1900 = vrot.lane.b32.xlu0 %v1868, 65
        %v1901 = vpop.permute.xlu0 %1900
        %1902 = vrot.lane.b32.xlu0 %v1869, 65
        %v1903 = vpop.permute.xlu0 %1902
        %vm1904 = vcmask 531456
        %v1905 = vsel %vm1904, %v1871, %v1873
        %v1906 = vsel %vm1904, %v1873, %v1875
        %v1907 = vsel %vm1904, %v1875, %v1877
        %v1908 = vsel %vm1904, %v1877, %v1879
        %v1909 = vsel %vm1904, %v1879, %v1881
        %v1910 = vsel %vm1904, %v1881, %v1883
        %v1911 = vsel %vm1904, %v1883, %v1885
        %v1912 = vsel %vm1904, %v1885, %v1887
        %v1913 = vsel %vm1904, %v1887, %v1889
        %v1914 = vsel %vm1904, %v1889, %v1891
        %v1915 = vsel %vm1904, %v1891, %v1893
        %v1916 = vsel %vm1904, %v1893, %v1895
        %v1917 = vsel %vm1904, %v1895, %v1897
        %v1918 = vsel %vm1904, %v1897, %v1899
        %v1919 = vsel %vm1904, %v1899, %v1901
        %v1920 = vsel %vm1904, %v1901, %v1903
        %1921 = vrot.lane.b32.xlu0 %v1853, 64
        %v1922 = vpop.permute.xlu0 %1921
        %1923 = vrot.lane.b32.xlu0 %v1854, 64
        %v1924 = vpop.permute.xlu0 %1923
        %1925 = vrot.lane.b32.xlu0 %v1855, 64
        %v1926 = vpop.permute.xlu0 %1925
        %1927 = vrot.lane.b32.xlu0 %v1856, 64
        %v1928 = vpop.permute.xlu0 %1927
        %1929 = vrot.lane.b32.xlu0 %v1857, 64
        %v1930 = vpop.permute.xlu0 %1929
        %1931 = vrot.lane.b32.xlu0 %v1858, 64
        %v1932 = vpop.permute.xlu0 %1931
        %1933 = vrot.lane.b32.xlu0 %v1859, 64
        %v1934 = vpop.permute.xlu0 %1933
        %1935 = vrot.lane.b32.xlu0 %v1860, 64
        %v1936 = vpop.permute.xlu0 %1935
        %1937 = vrot.lane.b32.xlu0 %v1861, 64
        %v1938 = vpop.permute.xlu0 %1937
        %1939 = vrot.lane.b32.xlu0 %v1862, 64
        %v1940 = vpop.permute.xlu0 %1939
        %1941 = vrot.lane.b32.xlu0 %v1863, 64
        %v1942 = vpop.permute.xlu0 %1941
        %1943 = vrot.lane.b32.xlu0 %v1864, 64
        %v1944 = vpop.permute.xlu0 %1943
        %1945 = vrot.lane.b32.xlu0 %v1865, 64
        %v1946 = vpop.permute.xlu0 %1945
        %1947 = vrot.lane.b32.xlu0 %v1866, 64
        %v1948 = vpop.permute.xlu0 %1947
        %1949 = vrot.lane.b32.xlu0 %v1867, 64
        %v1950 = vpop.permute.xlu0 %1949
        %1951 = vrot.lane.b32.xlu0 %v1868, 64
        %v1952 = vpop.permute.xlu0 %1951
        %1953 = vrot.lane.b32.xlu0 %v1869, 64
        %v1954 = vpop.permute.xlu0 %1953
        %v1955 = vsel %vm1056, %v1922, %v1924
        %v1956 = vsel %vm1056, %v1924, %v1926
        %v1957 = vsel %vm1056, %v1926, %v1928
        %v1958 = vsel %vm1056, %v1928, %v1930
        %v1959 = vsel %vm1056, %v1930, %v1932
        %v1960 = vsel %vm1056, %v1932, %v1934
        %v1961 = vsel %vm1056, %v1934, %v1936
        %v1962 = vsel %vm1056, %v1936, %v1938
        %v1963 = vsel %vm1056, %v1938, %v1940
        %v1964 = vsel %vm1056, %v1940, %v1942
        %v1965 = vsel %vm1056, %v1942, %v1944
        %v1966 = vsel %vm1056, %v1944, %v1946
        %v1967 = vsel %vm1056, %v1946, %v1948
        %v1968 = vsel %vm1056, %v1948, %v1950
        %v1969 = vsel %vm1056, %v1950, %v1952
        %v1970 = vsel %vm1056, %v1952, %v1954
        %1971 = vrot.lane.b32.xlu0 %v1853, 63
        %v1972 = vpop.permute.xlu0 %1971
        %1973 = vrot.lane.b32.xlu0 %v1854, 63
        %v1974 = vpop.permute.xlu0 %1973
        %1975 = vrot.lane.b32.xlu0 %v1855, 63
        %v1976 = vpop.permute.xlu0 %1975
        %1977 = vrot.lane.b32.xlu0 %v1856, 63
        %v1978 = vpop.permute.xlu0 %1977
        %1979 = vrot.lane.b32.xlu0 %v1857, 63
        %v1980 = vpop.permute.xlu0 %1979
        %1981 = vrot.lane.b32.xlu0 %v1858, 63
        %v1982 = vpop.permute.xlu0 %1981
        %1983 = vrot.lane.b32.xlu0 %v1859, 63
        %v1984 = vpop.permute.xlu0 %1983
        %1985 = vrot.lane.b32.xlu0 %v1860, 63
        %v1986 = vpop.permute.xlu0 %1985
        %1987 = vrot.lane.b32.xlu0 %v1861, 63
        %v1988 = vpop.permute.xlu0 %1987
        %1989 = vrot.lane.b32.xlu0 %v1862, 63
        %v1990 = vpop.permute.xlu0 %1989
        %1991 = vrot.lane.b32.xlu0 %v1863, 63
        %v1992 = vpop.permute.xlu0 %1991
        %1993 = vrot.lane.b32.xlu0 %v1864, 63
        %v1994 = vpop.permute.xlu0 %1993
        %1995 = vrot.lane.b32.xlu0 %v1865, 63
        %v1996 = vpop.permute.xlu0 %1995
        %1997 = vrot.lane.b32.xlu0 %v1866, 63
        %v1998 = vpop.permute.xlu0 %1997
        %1999 = vrot.lane.b32.xlu0 %v1867, 63
        %v2000 = vpop.permute.xlu0 %1999
        %2001 = vrot.lane.b32.xlu0 %v1868, 63
        %v2002 = vpop.permute.xlu0 %2001
        %2003 = vrot.lane.b32.xlu0 %v1869, 63
        %v2004 = vpop.permute.xlu0 %2003
        %v2005 = vsel %vm1107, %v1972, %v1974
        %v2006 = vsel %vm1107, %v1974, %v1976
        %v2007 = vsel %vm1107, %v1976, %v1978
        %v2008 = vsel %vm1107, %v1978, %v1980
        %v2009 = vsel %vm1107, %v1980, %v1982
        %v2010 = vsel %vm1107, %v1982, %v1984
        %v2011 = vsel %vm1107, %v1984, %v1986
        %v2012 = vsel %vm1107, %v1986, %v1988
        %v2013 = vsel %vm1107, %v1988, %v1990
        %v2014 = vsel %vm1107, %v1990, %v1992
        %v2015 = vsel %vm1107, %v1992, %v1994
        %v2016 = vsel %vm1107, %v1994, %v1996
        %v2017 = vsel %vm1107, %v1996, %v1998
        %v2018 = vsel %vm1107, %v1998, %v2000
        %v2019 = vsel %vm1107, %v2000, %v2002
        %v2020 = vsel %vm1107, %v2002, %v2004
        %v2023 = vsel %vm1124, %v358, %v392
        %v2026 = vsel %vm1124, %v443, %v494
        %v2028 = vsel %vm1124, %v547, %v1672
        %v2030 = vsel %vm1124, %v548, %v1673
        %v2032 = vsel %vm1124, %v549, %v1674
        %v2034 = vsel %vm1124, %v550, %v1675
        %v2036 = vsel %vm1124, %v551, %v1676
        %v2038 = vsel %vm1124, %v552, %v1677
        %v2040 = vsel %vm1124, %v553, %v1678
        %v2042 = vsel %vm1124, %v554, %v1679
        %v2044 = vsel %vm1124, %v555, %v1680
        %v2046 = vsel %vm1124, %v556, %v1681
        %v2048 = vsel %vm1124, %v557, %v1682
        %v2050 = vsel %vm1124, %v558, %v1683
        %v2052 = vsel %vm1124, %v559, %v1684
        %v2054 = vsel %vm1124, %v560, %v1685
        %v2056 = vsel %vm1124, %v561, %v1686
        %v2058 = vsel %vm1124, %v562, %v1687
        %v2061 = vsel %vm1124, %v545, %v1670
        %v2063 = vsel %vm1124, %v1723, %v700
        %v2065 = vsel %vm1124, %v1724, %v701
        %v2067 = vsel %vm1124, %v1725, %v702
        %v2069 = vsel %vm1124, %v1726, %v703
        %v2071 = vsel %vm1124, %v1727, %v704
        %v2073 = vsel %vm1124, %v1728, %v705
        %v2075 = vsel %vm1124, %v1729, %v706
        %v2077 = vsel %vm1124, %v1730, %v707
        %v2079 = vsel %vm1124, %v1731, %v708
        %v2081 = vsel %vm1124, %v1732, %v709
        %v2083 = vsel %vm1124, %v1733, %v710
        %v2085 = vsel %vm1124, %v1734, %v711
        %v2087 = vsel %vm1124, %v1735, %v712
        %v2089 = vsel %vm1124, %v1736, %v713
        %v2091 = vsel %vm1124, %v1737, %v714
        %v2093 = vsel %vm1124, %v1738, %v715
        %v2096 = vsel %vm1124, %v1721, %v698
        %v2099 = vsel %vm1124, %v749, %v800
        %v2102 = vsel %vm1124, %v851, %v902
        %v2105 = vsel %vm1124, %v1780, %v1871
        %v2108 = vsel %vm1124, %v1812, %v1905
        %v2111 = vsel %vm1124, %v1813, %v1906
        %v2114 = vsel %vm1124, %v1814, %v1907
        %v2117 = vsel %vm1124, %v1815, %v1908
        %v2120 = vsel %vm1124, %v1816, %v1909
        %v2123 = vsel %vm1124, %v1817, %v1910
        %v2126 = vsel %vm1124, %v1818, %v1911
        %v2129 = vsel %vm1124, %v1819, %v1912
        %v2132 = vsel %vm1124, %v1820, %v1913
        %v2135 = vsel %vm1124, %v1821, %v1914
        %v2138 = vsel %vm1124, %v1822, %v1915
        %v2141 = vsel %vm1124, %v1823, %v1916
        %v2144 = vsel %vm1124, %v1824, %v1917
        %v2147 = vsel %vm1124, %v1825, %v1918
        %v2150 = vsel %vm1124, %v1826, %v1919
        %v2153 = vsel %vm1124, %v1810, %v1920
        %v2156 = vsel %vm1124, %v1922, %v1972
        %v2159 = vsel %vm1124, %v1955, %v2005
        %v2162 = vsel %vm1124, %v1956, %v2006
        %v2165 = vsel %vm1124, %v1957, %v2007
        %v2168 = vsel %vm1124, %v1958, %v2008
        %v2171 = vsel %vm1124, %v1959, %v2009
        %v2174 = vsel %vm1124, %v1960, %v2010
        %v2177 = vsel %vm1124, %v1961, %v2011
        %v2180 = vsel %vm1124, %v1962, %v2012
        %v2183 = vsel %vm1124, %v1963, %v2013
        %v2186 = vsel %vm1124, %v1964, %v2014
        %v2189 = vsel %vm1124, %v1965, %v2015
        %v2192 = vsel %vm1124, %v1966, %v2016
        %v2195 = vsel %vm1124, %v1967, %v2017
        %v2198 = vsel %vm1124, %v1968, %v2018
        %v2201 = vsel %vm1124, %v1969, %v2019
        %v2204 = vsel %vm1124, %v1970, %v2020
        %2205 = vrot.lane.b32.xlu0 %v1853, 127
        %v2206 = vpop.permute.xlu0 %2205
        %2207 = vrot.lane.b32.xlu0 %v1854, 127
        %v2208 = vpop.permute.xlu0 %2207
        %2209 = vrot.lane.b32.xlu0 %v1855, 127
        %v2210 = vpop.permute.xlu0 %2209
        %2211 = vrot.lane.b32.xlu0 %v1856, 127
        %v2212 = vpop.permute.xlu0 %2211
        %2213 = vrot.lane.b32.xlu0 %v1857, 127
        %v2214 = vpop.permute.xlu0 %2213
        %2215 = vrot.lane.b32.xlu0 %v1858, 127
        %v2216 = vpop.permute.xlu0 %2215
        %2217 = vrot.lane.b32.xlu0 %v1859, 127
        %v2218 = vpop.permute.xlu0 %2217
        %2219 = vrot.lane.b32.xlu0 %v1860, 127
        %v2220 = vpop.permute.xlu0 %2219
        %2221 = vrot.lane.b32.xlu0 %v1861, 127
        %v2222 = vpop.permute.xlu0 %2221
        %2223 = vrot.lane.b32.xlu0 %v1862, 127
        %v2224 = vpop.permute.xlu0 %2223
        %2225 = vrot.lane.b32.xlu0 %v1863, 127
        %v2226 = vpop.permute.xlu0 %2225
        %2227 = vrot.lane.b32.xlu0 %v1864, 127
        %v2228 = vpop.permute.xlu0 %2227
        %2229 = vrot.lane.b32.xlu0 %v1865, 127
        %v2230 = vpop.permute.xlu0 %2229
        %2231 = vrot.lane.b32.xlu0 %v1866, 127
        %v2232 = vpop.permute.xlu0 %2231
        %2233 = vrot.lane.b32.xlu0 %v1867, 127
        %v2234 = vpop.permute.xlu0 %2233
        %2235 = vrot.lane.b32.xlu0 %v1868, 127
        %v2236 = vpop.permute.xlu0 %2235
        %2237 = vrot.lane.b32.xlu0 %v1869, 127
        %v2238 = vpop.permute.xlu0 %2237
        %v2239 = vsel %vm393, %v2206, %v2208
        %v2240 = vsel %vm393, %v2208, %v2210
        %v2241 = vsel %vm393, %v2210, %v2212
        %v2242 = vsel %vm393, %v2212, %v2214
        %v2243 = vsel %vm393, %v2214, %v2216
        %v2244 = vsel %vm393, %v2216, %v2218
        %v2245 = vsel %vm393, %v2218, %v2220
        %v2246 = vsel %vm393, %v2220, %v2222
        %v2247 = vsel %vm393, %v2222, %v2224
        %v2248 = vsel %vm393, %v2224, %v2226
        %v2249 = vsel %vm393, %v2226, %v2228
        %v2250 = vsel %vm393, %v2228, %v2230
        %v2251 = vsel %vm393, %v2230, %v2232
        %v2252 = vsel %vm393, %v2232, %v2234
        %v2253 = vsel %vm393, %v2234, %v2236
        %v2254 = vsel %vm393, %v2236, %v2238
        %2255 = vrot.lane.b32.xlu0 %v1853, 126
        %v2256 = vpop.permute.xlu0 %2255
        %2257 = vrot.lane.b32.xlu0 %v1854, 126
        %v2258 = vpop.permute.xlu0 %2257
        %2259 = vrot.lane.b32.xlu0 %v1855, 126
        %v2260 = vpop.permute.xlu0 %2259
        %2261 = vrot.lane.b32.xlu0 %v1856, 126
        %v2262 = vpop.permute.xlu0 %2261
        %2263 = vrot.lane.b32.xlu0 %v1857, 126
        %v2264 = vpop.permute.xlu0 %2263
        %2265 = vrot.lane.b32.xlu0 %v1858, 126
        %v2266 = vpop.permute.xlu0 %2265
        %2267 = vrot.lane.b32.xlu0 %v1859, 126
        %v2268 = vpop.permute.xlu0 %2267
        %2269 = vrot.lane.b32.xlu0 %v1860, 126
        %v2270 = vpop.permute.xlu0 %2269
        %2271 = vrot.lane.b32.xlu0 %v1861, 126
        %v2272 = vpop.permute.xlu0 %2271
        %2273 = vrot.lane.b32.xlu0 %v1862, 126
        %v2274 = vpop.permute.xlu0 %2273
        %2275 = vrot.lane.b32.xlu0 %v1863, 126
        %v2276 = vpop.permute.xlu0 %2275
        %2277 = vrot.lane.b32.xlu0 %v1864, 126
        %v2278 = vpop.permute.xlu0 %2277
        %2279 = vrot.lane.b32.xlu0 %v1865, 126
        %v2280 = vpop.permute.xlu0 %2279
        %2281 = vrot.lane.b32.xlu0 %v1866, 126
        %v2282 = vpop.permute.xlu0 %2281
        %2283 = vrot.lane.b32.xlu0 %v1867, 126
        %v2284 = vpop.permute.xlu0 %2283
        %2285 = vrot.lane.b32.xlu0 %v1868, 126
        %v2286 = vpop.permute.xlu0 %2285
        %2287 = vrot.lane.b32.xlu0 %v1869, 126
        %v2288 = vpop.permute.xlu0 %2287
        %v2289 = vsel %vm444, %v2256, %v2258
        %v2290 = vsel %vm444, %v2258, %v2260
        %v2291 = vsel %vm444, %v2260, %v2262
        %v2292 = vsel %vm444, %v2262, %v2264
        %v2293 = vsel %vm444, %v2264, %v2266
        %v2294 = vsel %vm444, %v2266, %v2268
        %v2295 = vsel %vm444, %v2268, %v2270
        %v2296 = vsel %vm444, %v2270, %v2272
        %v2297 = vsel %vm444, %v2272, %v2274
        %v2298 = vsel %vm444, %v2274, %v2276
        %v2299 = vsel %vm444, %v2276, %v2278
        %v2300 = vsel %vm444, %v2278, %v2280
        %v2301 = vsel %vm444, %v2280, %v2282
        %v2302 = vsel %vm444, %v2282, %v2284
        %v2303 = vsel %vm444, %v2284, %v2286
        %v2304 = vsel %vm444, %v2286, %v2288
        %2305 = vrot.lane.b32.xlu0 %v1853, 100
        %v2306 = vpop.permute.xlu0 %2305
        %2307 = vrot.lane.b32.xlu0 %v1854, 100
        %v2308 = vpop.permute.xlu0 %2307
        %2309 = vrot.lane.b32.xlu0 %v1855, 100
        %v2310 = vpop.permute.xlu0 %2309
        %2311 = vrot.lane.b32.xlu0 %v1856, 100
        %v2312 = vpop.permute.xlu0 %2311
        %2313 = vrot.lane.b32.xlu0 %v1857, 100
        %v2314 = vpop.permute.xlu0 %2313
        %2315 = vrot.lane.b32.xlu0 %v1858, 100
        %v2316 = vpop.permute.xlu0 %2315
        %2317 = vrot.lane.b32.xlu0 %v1859, 100
        %v2318 = vpop.permute.xlu0 %2317
        %2319 = vrot.lane.b32.xlu0 %v1860, 100
        %v2320 = vpop.permute.xlu0 %2319
        %2321 = vrot.lane.b32.xlu0 %v1861, 100
        %v2322 = vpop.permute.xlu0 %2321
        %2323 = vrot.lane.b32.xlu0 %v1862, 100
        %v2324 = vpop.permute.xlu0 %2323
        %2325 = vrot.lane.b32.xlu0 %v1863, 100
        %v2326 = vpop.permute.xlu0 %2325
        %2327 = vrot.lane.b32.xlu0 %v1864, 100
        %v2328 = vpop.permute.xlu0 %2327
        %2329 = vrot.lane.b32.xlu0 %v1865, 100
        %v2330 = vpop.permute.xlu0 %2329
        %2331 = vrot.lane.b32.xlu0 %v1866, 100
        %v2332 = vpop.permute.xlu0 %2331
        %2333 = vrot.lane.b32.xlu0 %v1867, 100
        %v2334 = vpop.permute.xlu0 %2333
        %2335 = vrot.lane.b32.xlu0 %v1868, 100
        %v2336 = vpop.permute.xlu0 %2335
        %2337 = vrot.lane.b32.xlu0 %v1869, 100
        %v2338 = vpop.permute.xlu0 %2337
        %vm2339 = vcmask 818176
        %v2340 = vsel %vm2339, %v2306, %v2308
        %v2341 = vsel %vm2339, %v2308, %v2310
        %v2342 = vsel %vm2339, %v2310, %v2312
        %v2343 = vsel %vm2339, %v2312, %v2314
        %v2344 = vsel %vm2339, %v2314, %v2316
        %v2345 = vsel %vm2339, %v2316, %v2318
        %v2346 = vsel %vm2339, %v2318, %v2320
        %v2347 = vsel %vm2339, %v2320, %v2322
        %v2348 = vsel %vm2339, %v2322, %v2324
        %v2349 = vsel %vm2339, %v2324, %v2326
        %v2350 = vsel %vm2339, %v2326, %v2328
        %v2351 = vsel %vm2339, %v2328, %v2330
        %v2352 = vsel %vm2339, %v2330, %v2332
        %v2353 = vsel %vm2339, %v2332, %v2334
        %v2354 = vsel %vm2339, %v2334, %v2336
        %v2355 = vsel %vm2339, %v2336, %v2338
        %2356 = vrot.lane.b32.xlu0 %v1853, 99
        %v2357 = vpop.permute.xlu0 %2356
        %2358 = vrot.lane.b32.xlu0 %v1854, 99
        %v2359 = vpop.permute.xlu0 %2358
        %2360 = vrot.lane.b32.xlu0 %v1855, 99
        %v2361 = vpop.permute.xlu0 %2360
        %2362 = vrot.lane.b32.xlu0 %v1856, 99
        %v2363 = vpop.permute.xlu0 %2362
        %2364 = vrot.lane.b32.xlu0 %v1857, 99
        %v2365 = vpop.permute.xlu0 %2364
        %2366 = vrot.lane.b32.xlu0 %v1858, 99
        %v2367 = vpop.permute.xlu0 %2366
        %2368 = vrot.lane.b32.xlu0 %v1859, 99
        %v2369 = vpop.permute.xlu0 %2368
        %2370 = vrot.lane.b32.xlu0 %v1860, 99
        %v2371 = vpop.permute.xlu0 %2370
        %2372 = vrot.lane.b32.xlu0 %v1861, 99
        %v2373 = vpop.permute.xlu0 %2372
        %2374 = vrot.lane.b32.xlu0 %v1862, 99
        %v2375 = vpop.permute.xlu0 %2374
        %2376 = vrot.lane.b32.xlu0 %v1863, 99
        %v2377 = vpop.permute.xlu0 %2376
        %2378 = vrot.lane.b32.xlu0 %v1864, 99
        %v2379 = vpop.permute.xlu0 %2378
        %2380 = vrot.lane.b32.xlu0 %v1865, 99
        %v2381 = vpop.permute.xlu0 %2380
        %2382 = vrot.lane.b32.xlu0 %v1866, 99
        %v2383 = vpop.permute.xlu0 %2382
        %2384 = vrot.lane.b32.xlu0 %v1867, 99
        %v2385 = vpop.permute.xlu0 %2384
        %2386 = vrot.lane.b32.xlu0 %v1868, 99
        %v2387 = vpop.permute.xlu0 %2386
        %2388 = vrot.lane.b32.xlu0 %v1869, 99
        %v2389 = vpop.permute.xlu0 %2388
        %vm2390 = vcmask 809984
        %v2391 = vsel %vm2390, %v2357, %v2359
        %v2392 = vsel %vm2390, %v2359, %v2361
        %v2393 = vsel %vm2390, %v2361, %v2363
        %v2394 = vsel %vm2390, %v2363, %v2365
        %v2395 = vsel %vm2390, %v2365, %v2367
        %v2396 = vsel %vm2390, %v2367, %v2369
        %v2397 = vsel %vm2390, %v2369, %v2371
        %v2398 = vsel %vm2390, %v2371, %v2373
        %v2399 = vsel %vm2390, %v2373, %v2375
        %v2400 = vsel %vm2390, %v2375, %v2377
        %v2401 = vsel %vm2390, %v2377, %v2379
        %v2402 = vsel %vm2390, %v2379, %v2381
        %v2403 = vsel %vm2390, %v2381, %v2383
        %v2404 = vsel %vm2390, %v2383, %v2385
        %v2405 = vsel %vm2390, %v2385, %v2387
        %v2406 = vsel %vm2390, %v2387, %v2389
        %2407 = vrot.lane.b32.xlu0 %v1853, 98
        %v2408 = vpop.permute.xlu0 %2407
        %2409 = vrot.lane.b32.xlu0 %v1854, 98
        %v2410 = vpop.permute.xlu0 %2409
        %2411 = vrot.lane.b32.xlu0 %v1855, 98
        %v2412 = vpop.permute.xlu0 %2411
        %2413 = vrot.lane.b32.xlu0 %v1856, 98
        %v2414 = vpop.permute.xlu0 %2413
        %2415 = vrot.lane.b32.xlu0 %v1857, 98
        %v2416 = vpop.permute.xlu0 %2415
        %2417 = vrot.lane.b32.xlu0 %v1858, 98
        %v2418 = vpop.permute.xlu0 %2417
        %2419 = vrot.lane.b32.xlu0 %v1859, 98
        %v2420 = vpop.permute.xlu0 %2419
        %2421 = vrot.lane.b32.xlu0 %v1860, 98
        %v2422 = vpop.permute.xlu0 %2421
        %2423 = vrot.lane.b32.xlu0 %v1861, 98
        %v2424 = vpop.permute.xlu0 %2423
        %2425 = vrot.lane.b32.xlu0 %v1862, 98
        %v2426 = vpop.permute.xlu0 %2425
        %2427 = vrot.lane.b32.xlu0 %v1863, 98
        %v2428 = vpop.permute.xlu0 %2427
        %2429 = vrot.lane.b32.xlu0 %v1864, 98
        %v2430 = vpop.permute.xlu0 %2429
        %2431 = vrot.lane.b32.xlu0 %v1865, 98
        %v2432 = vpop.permute.xlu0 %2431
        %2433 = vrot.lane.b32.xlu0 %v1866, 98
        %v2434 = vpop.permute.xlu0 %2433
        %2435 = vrot.lane.b32.xlu0 %v1867, 98
        %v2436 = vpop.permute.xlu0 %2435
        %2437 = vrot.lane.b32.xlu0 %v1868, 98
        %v2438 = vpop.permute.xlu0 %2437
        %2439 = vrot.lane.b32.xlu0 %v1869, 98
        %v2440 = vpop.permute.xlu0 %2439
        %v2441 = vsel %vm1671, %v2408, %v2410
        %v2442 = vsel %vm1671, %v2410, %v2412
        %v2443 = vsel %vm1671, %v2412, %v2414
        %v2444 = vsel %vm1671, %v2414, %v2416
        %v2445 = vsel %vm1671, %v2416, %v2418
        %v2446 = vsel %vm1671, %v2418, %v2420
        %v2447 = vsel %vm1671, %v2420, %v2422
        %v2448 = vsel %vm1671, %v2422, %v2424
        %v2449 = vsel %vm1671, %v2424, %v2426
        %v2450 = vsel %vm1671, %v2426, %v2428
        %v2451 = vsel %vm1671, %v2428, %v2430
        %v2452 = vsel %vm1671, %v2430, %v2432
        %v2453 = vsel %vm1671, %v2432, %v2434
        %v2454 = vsel %vm1671, %v2434, %v2436
        %v2455 = vsel %vm1671, %v2436, %v2438
        %v2456 = vsel %vm1671, %v2438, %v2440
        %2457 = vrot.lane.b32.xlu0 %v1853, 97
        %v2458 = vpop.permute.xlu0 %2457
        %2459 = vrot.lane.b32.xlu0 %v1854, 97
        %v2460 = vpop.permute.xlu0 %2459
        %2461 = vrot.lane.b32.xlu0 %v1855, 97
        %v2462 = vpop.permute.xlu0 %2461
        %2463 = vrot.lane.b32.xlu0 %v1856, 97
        %v2464 = vpop.permute.xlu0 %2463
        %2465 = vrot.lane.b32.xlu0 %v1857, 97
        %v2466 = vpop.permute.xlu0 %2465
        %2467 = vrot.lane.b32.xlu0 %v1858, 97
        %v2468 = vpop.permute.xlu0 %2467
        %2469 = vrot.lane.b32.xlu0 %v1859, 97
        %v2470 = vpop.permute.xlu0 %2469
        %2471 = vrot.lane.b32.xlu0 %v1860, 97
        %v2472 = vpop.permute.xlu0 %2471
        %2473 = vrot.lane.b32.xlu0 %v1861, 97
        %v2474 = vpop.permute.xlu0 %2473
        %2475 = vrot.lane.b32.xlu0 %v1862, 97
        %v2476 = vpop.permute.xlu0 %2475
        %2477 = vrot.lane.b32.xlu0 %v1863, 97
        %v2478 = vpop.permute.xlu0 %2477
        %2479 = vrot.lane.b32.xlu0 %v1864, 97
        %v2480 = vpop.permute.xlu0 %2479
        %2481 = vrot.lane.b32.xlu0 %v1865, 97
        %v2482 = vpop.permute.xlu0 %2481
        %2483 = vrot.lane.b32.xlu0 %v1866, 97
        %v2484 = vpop.permute.xlu0 %2483
        %2485 = vrot.lane.b32.xlu0 %v1867, 97
        %v2486 = vpop.permute.xlu0 %2485
        %2487 = vrot.lane.b32.xlu0 %v1868, 97
        %v2488 = vpop.permute.xlu0 %2487
        %2489 = vrot.lane.b32.xlu0 %v1869, 97
        %v2490 = vpop.permute.xlu0 %2489
        %v2491 = vsel %vm1722, %v2458, %v2460
        %v2492 = vsel %vm1722, %v2460, %v2462
        %v2493 = vsel %vm1722, %v2462, %v2464
        %v2494 = vsel %vm1722, %v2464, %v2466
        %v2495 = vsel %vm1722, %v2466, %v2468
        %v2496 = vsel %vm1722, %v2468, %v2470
        %v2497 = vsel %vm1722, %v2470, %v2472
        %v2498 = vsel %vm1722, %v2472, %v2474
        %v2499 = vsel %vm1722, %v2474, %v2476
        %v2500 = vsel %vm1722, %v2476, %v2478
        %v2501 = vsel %vm1722, %v2478, %v2480
        %v2502 = vsel %vm1722, %v2480, %v2482
        %v2503 = vsel %vm1722, %v2482, %v2484
        %v2504 = vsel %vm1722, %v2484, %v2486
        %v2505 = vsel %vm1722, %v2486, %v2488
        %v2506 = vsel %vm1722, %v2488, %v2490
        %2507 = vrot.lane.b32.xlu0 %v1853, 96
        %v2508 = vpop.permute.xlu0 %2507
        %2509 = vrot.lane.b32.xlu0 %v1854, 96
        %v2510 = vpop.permute.xlu0 %2509
        %2511 = vrot.lane.b32.xlu0 %v1855, 96
        %v2512 = vpop.permute.xlu0 %2511
        %2513 = vrot.lane.b32.xlu0 %v1856, 96
        %v2514 = vpop.permute.xlu0 %2513
        %2515 = vrot.lane.b32.xlu0 %v1857, 96
        %v2516 = vpop.permute.xlu0 %2515
        %2517 = vrot.lane.b32.xlu0 %v1858, 96
        %v2518 = vpop.permute.xlu0 %2517
        %2519 = vrot.lane.b32.xlu0 %v1859, 96
        %v2520 = vpop.permute.xlu0 %2519
        %2521 = vrot.lane.b32.xlu0 %v1860, 96
        %v2522 = vpop.permute.xlu0 %2521
        %2523 = vrot.lane.b32.xlu0 %v1861, 96
        %v2524 = vpop.permute.xlu0 %2523
        %2525 = vrot.lane.b32.xlu0 %v1862, 96
        %v2526 = vpop.permute.xlu0 %2525
        %2527 = vrot.lane.b32.xlu0 %v1863, 96
        %v2528 = vpop.permute.xlu0 %2527
        %2529 = vrot.lane.b32.xlu0 %v1864, 96
        %v2530 = vpop.permute.xlu0 %2529
        %2531 = vrot.lane.b32.xlu0 %v1865, 96
        %v2532 = vpop.permute.xlu0 %2531
        %2533 = vrot.lane.b32.xlu0 %v1866, 96
        %v2534 = vpop.permute.xlu0 %2533
        %2535 = vrot.lane.b32.xlu0 %v1867, 96
        %v2536 = vpop.permute.xlu0 %2535
        %2537 = vrot.lane.b32.xlu0 %v1868, 96
        %v2538 = vpop.permute.xlu0 %2537
        %2539 = vrot.lane.b32.xlu0 %v1869, 96
        %v2540 = vpop.permute.xlu0 %2539
        %v2541 = vsel %vm699, %v2508, %v2510
        %v2542 = vsel %vm699, %v2510, %v2512
        %v2543 = vsel %vm699, %v2512, %v2514
        %v2544 = vsel %vm699, %v2514, %v2516
        %v2545 = vsel %vm699, %v2516, %v2518
        %v2546 = vsel %vm699, %v2518, %v2520
        %v2547 = vsel %vm699, %v2520, %v2522
        %v2548 = vsel %vm699, %v2522, %v2524
        %v2549 = vsel %vm699, %v2524, %v2526
        %v2550 = vsel %vm699, %v2526, %v2528
        %v2551 = vsel %vm699, %v2528, %v2530
        %v2552 = vsel %vm699, %v2530, %v2532
        %v2553 = vsel %vm699, %v2532, %v2534
        %v2554 = vsel %vm699, %v2534, %v2536
        %v2555 = vsel %vm699, %v2536, %v2538
        %v2556 = vsel %vm699, %v2538, %v2540
        %2557 = vrot.lane.b32.xlu0 %v1853, 95
        %v2558 = vpop.permute.xlu0 %2557
        %2559 = vrot.lane.b32.xlu0 %v1854, 95
        %v2560 = vpop.permute.xlu0 %2559
        %2561 = vrot.lane.b32.xlu0 %v1855, 95
        %v2562 = vpop.permute.xlu0 %2561
        %2563 = vrot.lane.b32.xlu0 %v1856, 95
        %v2564 = vpop.permute.xlu0 %2563
        %2565 = vrot.lane.b32.xlu0 %v1857, 95
        %v2566 = vpop.permute.xlu0 %2565
        %2567 = vrot.lane.b32.xlu0 %v1858, 95
        %v2568 = vpop.permute.xlu0 %2567
        %2569 = vrot.lane.b32.xlu0 %v1859, 95
        %v2570 = vpop.permute.xlu0 %2569
        %2571 = vrot.lane.b32.xlu0 %v1860, 95
        %v2572 = vpop.permute.xlu0 %2571
        %2573 = vrot.lane.b32.xlu0 %v1861, 95
        %v2574 = vpop.permute.xlu0 %2573
        %2575 = vrot.lane.b32.xlu0 %v1862, 95
        %v2576 = vpop.permute.xlu0 %2575
        %2577 = vrot.lane.b32.xlu0 %v1863, 95
        %v2578 = vpop.permute.xlu0 %2577
        %2579 = vrot.lane.b32.xlu0 %v1864, 95
        %v2580 = vpop.permute.xlu0 %2579
        %2581 = vrot.lane.b32.xlu0 %v1865, 95
        %v2582 = vpop.permute.xlu0 %2581
        %2583 = vrot.lane.b32.xlu0 %v1866, 95
        %v2584 = vpop.permute.xlu0 %2583
        %2585 = vrot.lane.b32.xlu0 %v1867, 95
        %v2586 = vpop.permute.xlu0 %2585
        %2587 = vrot.lane.b32.xlu0 %v1868, 95
        %v2588 = vpop.permute.xlu0 %2587
        %2589 = vrot.lane.b32.xlu0 %v1869, 95
        %v2590 = vpop.permute.xlu0 %2589
        %v2591 = vsel %vm750, %v2558, %v2560
        %v2592 = vsel %vm750, %v2560, %v2562
        %v2593 = vsel %vm750, %v2562, %v2564
        %v2594 = vsel %vm750, %v2564, %v2566
        %v2595 = vsel %vm750, %v2566, %v2568
        %v2596 = vsel %vm750, %v2568, %v2570
        %v2597 = vsel %vm750, %v2570, %v2572
        %v2598 = vsel %vm750, %v2572, %v2574
        %v2599 = vsel %vm750, %v2574, %v2576
        %v2600 = vsel %vm750, %v2576, %v2578
        %v2601 = vsel %vm750, %v2578, %v2580
        %v2602 = vsel %vm750, %v2580, %v2582
        %v2603 = vsel %vm750, %v2582, %v2584
        %v2604 = vsel %vm750, %v2584, %v2586
        %v2605 = vsel %vm750, %v2586, %v2588
        %v2606 = vsel %vm750, %v2588, %v2590
        %2607 = vrot.lane.b32.xlu0 %v1853, 94
        %v2608 = vpop.permute.xlu0 %2607
        %2609 = vrot.lane.b32.xlu0 %v1854, 94
        %v2610 = vpop.permute.xlu0 %2609
        %2611 = vrot.lane.b32.xlu0 %v1855, 94
        %v2612 = vpop.permute.xlu0 %2611
        %2613 = vrot.lane.b32.xlu0 %v1856, 94
        %v2614 = vpop.permute.xlu0 %2613
        %2615 = vrot.lane.b32.xlu0 %v1857, 94
        %v2616 = vpop.permute.xlu0 %2615
        %2617 = vrot.lane.b32.xlu0 %v1858, 94
        %v2618 = vpop.permute.xlu0 %2617
        %2619 = vrot.lane.b32.xlu0 %v1859, 94
        %v2620 = vpop.permute.xlu0 %2619
        %2621 = vrot.lane.b32.xlu0 %v1860, 94
        %v2622 = vpop.permute.xlu0 %2621
        %2623 = vrot.lane.b32.xlu0 %v1861, 94
        %v2624 = vpop.permute.xlu0 %2623
        %2625 = vrot.lane.b32.xlu0 %v1862, 94
        %v2626 = vpop.permute.xlu0 %2625
        %2627 = vrot.lane.b32.xlu0 %v1863, 94
        %v2628 = vpop.permute.xlu0 %2627
        %2629 = vrot.lane.b32.xlu0 %v1864, 94
        %v2630 = vpop.permute.xlu0 %2629
        %2631 = vrot.lane.b32.xlu0 %v1865, 94
        %v2632 = vpop.permute.xlu0 %2631
        %2633 = vrot.lane.b32.xlu0 %v1866, 94
        %v2634 = vpop.permute.xlu0 %2633
        %2635 = vrot.lane.b32.xlu0 %v1867, 94
        %v2636 = vpop.permute.xlu0 %2635
        %2637 = vrot.lane.b32.xlu0 %v1868, 94
        %v2638 = vpop.permute.xlu0 %2637
        %2639 = vrot.lane.b32.xlu0 %v1869, 94
        %v2640 = vpop.permute.xlu0 %2639
        %v2641 = vsel %vm801, %v2608, %v2610
        %v2642 = vsel %vm801, %v2610, %v2612
        %v2643 = vsel %vm801, %v2612, %v2614
        %v2644 = vsel %vm801, %v2614, %v2616
        %v2645 = vsel %vm801, %v2616, %v2618
        %v2646 = vsel %vm801, %v2618, %v2620
        %v2647 = vsel %vm801, %v2620, %v2622
        %v2648 = vsel %vm801, %v2622, %v2624
        %v2649 = vsel %vm801, %v2624, %v2626
        %v2650 = vsel %vm801, %v2626, %v2628
        %v2651 = vsel %vm801, %v2628, %v2630
        %v2652 = vsel %vm801, %v2630, %v2632
        %v2653 = vsel %vm801, %v2632, %v2634
        %v2654 = vsel %vm801, %v2634, %v2636
        %v2655 = vsel %vm801, %v2636, %v2638
        %v2656 = vsel %vm801, %v2638, %v2640
        %2657 = vrot.lane.b32.xlu0 %v1853, 68
        %v2658 = vpop.permute.xlu0 %2657
        %2659 = vrot.lane.b32.xlu0 %v1854, 68
        %v2660 = vpop.permute.xlu0 %2659
        %2661 = vrot.lane.b32.xlu0 %v1855, 68
        %v2662 = vpop.permute.xlu0 %2661
        %2663 = vrot.lane.b32.xlu0 %v1856, 68
        %v2664 = vpop.permute.xlu0 %2663
        %2665 = vrot.lane.b32.xlu0 %v1857, 68
        %v2666 = vpop.permute.xlu0 %2665
        %2667 = vrot.lane.b32.xlu0 %v1858, 68
        %v2668 = vpop.permute.xlu0 %2667
        %2669 = vrot.lane.b32.xlu0 %v1859, 68
        %v2670 = vpop.permute.xlu0 %2669
        %2671 = vrot.lane.b32.xlu0 %v1860, 68
        %v2672 = vpop.permute.xlu0 %2671
        %2673 = vrot.lane.b32.xlu0 %v1861, 68
        %v2674 = vpop.permute.xlu0 %2673
        %2675 = vrot.lane.b32.xlu0 %v1862, 68
        %v2676 = vpop.permute.xlu0 %2675
        %2677 = vrot.lane.b32.xlu0 %v1863, 68
        %v2678 = vpop.permute.xlu0 %2677
        %2679 = vrot.lane.b32.xlu0 %v1864, 68
        %v2680 = vpop.permute.xlu0 %2679
        %2681 = vrot.lane.b32.xlu0 %v1865, 68
        %v2682 = vpop.permute.xlu0 %2681
        %2683 = vrot.lane.b32.xlu0 %v1866, 68
        %v2684 = vpop.permute.xlu0 %2683
        %2685 = vrot.lane.b32.xlu0 %v1867, 68
        %v2686 = vpop.permute.xlu0 %2685
        %2687 = vrot.lane.b32.xlu0 %v1868, 68
        %v2688 = vpop.permute.xlu0 %2687
        %2689 = vrot.lane.b32.xlu0 %v1869, 68
        %v2690 = vpop.permute.xlu0 %2689
        %vm2691 = vcmask 556032
        %v2692 = vsel %vm2691, %v2658, %v2660
        %v2693 = vsel %vm2691, %v2660, %v2662
        %v2694 = vsel %vm2691, %v2662, %v2664
        %v2695 = vsel %vm2691, %v2664, %v2666
        %v2696 = vsel %vm2691, %v2666, %v2668
        %v2697 = vsel %vm2691, %v2668, %v2670
        %v2698 = vsel %vm2691, %v2670, %v2672
        %v2699 = vsel %vm2691, %v2672, %v2674
        %v2700 = vsel %vm2691, %v2674, %v2676
        %v2701 = vsel %vm2691, %v2676, %v2678
        %v2702 = vsel %vm2691, %v2678, %v2680
        %v2703 = vsel %vm2691, %v2680, %v2682
        %v2704 = vsel %vm2691, %v2682, %v2684
        %v2705 = vsel %vm2691, %v2684, %v2686
        %v2706 = vsel %vm2691, %v2686, %v2688
        %v2707 = vsel %vm2691, %v2688, %v2690
        %2708 = vrot.lane.b32.xlu0 %v1853, 67
        %v2709 = vpop.permute.xlu0 %2708
        %2710 = vrot.lane.b32.xlu0 %v1854, 67
        %v2711 = vpop.permute.xlu0 %2710
        %2712 = vrot.lane.b32.xlu0 %v1855, 67
        %v2713 = vpop.permute.xlu0 %2712
        %2714 = vrot.lane.b32.xlu0 %v1856, 67
        %v2715 = vpop.permute.xlu0 %2714
        %2716 = vrot.lane.b32.xlu0 %v1857, 67
        %v2717 = vpop.permute.xlu0 %2716
        %2718 = vrot.lane.b32.xlu0 %v1858, 67
        %v2719 = vpop.permute.xlu0 %2718
        %2720 = vrot.lane.b32.xlu0 %v1859, 67
        %v2721 = vpop.permute.xlu0 %2720
        %2722 = vrot.lane.b32.xlu0 %v1860, 67
        %v2723 = vpop.permute.xlu0 %2722
        %2724 = vrot.lane.b32.xlu0 %v1861, 67
        %v2725 = vpop.permute.xlu0 %2724
        %2726 = vrot.lane.b32.xlu0 %v1862, 67
        %v2727 = vpop.permute.xlu0 %2726
        %2728 = vrot.lane.b32.xlu0 %v1863, 67
        %v2729 = vpop.permute.xlu0 %2728
        %2730 = vrot.lane.b32.xlu0 %v1864, 67
        %v2731 = vpop.permute.xlu0 %2730
        %2732 = vrot.lane.b32.xlu0 %v1865, 67
        %v2733 = vpop.permute.xlu0 %2732
        %2734 = vrot.lane.b32.xlu0 %v1866, 67
        %v2735 = vpop.permute.xlu0 %2734
        %2736 = vrot.lane.b32.xlu0 %v1867, 67
        %v2737 = vpop.permute.xlu0 %2736
        %2738 = vrot.lane.b32.xlu0 %v1868, 67
        %v2739 = vpop.permute.xlu0 %2738
        %2740 = vrot.lane.b32.xlu0 %v1869, 67
        %v2741 = vpop.permute.xlu0 %2740
        %vm2742 = vcmask 547840
        %v2743 = vsel %vm2742, %v2709, %v2711
        %v2744 = vsel %vm2742, %v2711, %v2713
        %v2745 = vsel %vm2742, %v2713, %v2715
        %v2746 = vsel %vm2742, %v2715, %v2717
        %v2747 = vsel %vm2742, %v2717, %v2719
        %v2748 = vsel %vm2742, %v2719, %v2721
        %v2749 = vsel %vm2742, %v2721, %v2723
        %v2750 = vsel %vm2742, %v2723, %v2725
        %v2751 = vsel %vm2742, %v2725, %v2727
        %v2752 = vsel %vm2742, %v2727, %v2729
        %v2753 = vsel %vm2742, %v2729, %v2731
        %v2754 = vsel %vm2742, %v2731, %v2733
        %v2755 = vsel %vm2742, %v2733, %v2735
        %v2756 = vsel %vm2742, %v2735, %v2737
        %v2757 = vsel %vm2742, %v2737, %v2739
        %v2758 = vsel %vm2742, %v2739, %v2741
        %2759 = vrot.lane.b32.xlu0 %v1853, 66
        %v2760 = vpop.permute.xlu0 %2759
        %2761 = vrot.lane.b32.xlu0 %v1854, 66
        %v2762 = vpop.permute.xlu0 %2761
        %2763 = vrot.lane.b32.xlu0 %v1855, 66
        %v2764 = vpop.permute.xlu0 %2763
        %2765 = vrot.lane.b32.xlu0 %v1856, 66
        %v2766 = vpop.permute.xlu0 %2765
        %2767 = vrot.lane.b32.xlu0 %v1857, 66
        %v2768 = vpop.permute.xlu0 %2767
        %2769 = vrot.lane.b32.xlu0 %v1858, 66
        %v2770 = vpop.permute.xlu0 %2769
        %2771 = vrot.lane.b32.xlu0 %v1859, 66
        %v2772 = vpop.permute.xlu0 %2771
        %2773 = vrot.lane.b32.xlu0 %v1860, 66
        %v2774 = vpop.permute.xlu0 %2773
        %2775 = vrot.lane.b32.xlu0 %v1861, 66
        %v2776 = vpop.permute.xlu0 %2775
        %2777 = vrot.lane.b32.xlu0 %v1862, 66
        %v2778 = vpop.permute.xlu0 %2777
        %2779 = vrot.lane.b32.xlu0 %v1863, 66
        %v2780 = vpop.permute.xlu0 %2779
        %2781 = vrot.lane.b32.xlu0 %v1864, 66
        %v2782 = vpop.permute.xlu0 %2781
        %2783 = vrot.lane.b32.xlu0 %v1865, 66
        %v2784 = vpop.permute.xlu0 %2783
        %2785 = vrot.lane.b32.xlu0 %v1866, 66
        %v2786 = vpop.permute.xlu0 %2785
        %2787 = vrot.lane.b32.xlu0 %v1867, 66
        %v2788 = vpop.permute.xlu0 %2787
        %2789 = vrot.lane.b32.xlu0 %v1868, 66
        %v2790 = vpop.permute.xlu0 %2789
        %2791 = vrot.lane.b32.xlu0 %v1869, 66
        %v2792 = vpop.permute.xlu0 %2791
        %v2793 = vsel %vm1811, %v2760, %v2762
        %v2794 = vsel %vm1811, %v2762, %v2764
        %v2795 = vsel %vm1811, %v2764, %v2766
        %v2796 = vsel %vm1811, %v2766, %v2768
        %v2797 = vsel %vm1811, %v2768, %v2770
        %v2798 = vsel %vm1811, %v2770, %v2772
        %v2799 = vsel %vm1811, %v2772, %v2774
        %v2800 = vsel %vm1811, %v2774, %v2776
        %v2801 = vsel %vm1811, %v2776, %v2778
        %v2802 = vsel %vm1811, %v2778, %v2780
        %v2803 = vsel %vm1811, %v2780, %v2782
        %v2804 = vsel %vm1811, %v2782, %v2784
        %v2805 = vsel %vm1811, %v2784, %v2786
        %v2806 = vsel %vm1811, %v2786, %v2788
        %v2807 = vsel %vm1811, %v2788, %v2790
        %v2808 = vsel %vm1811, %v2790, %v2792
        %v2811 = vsel %vm1124, %v1853, %v2239
        %v2814 = vsel %vm1124, %v1854, %v2240
        %v2817 = vsel %vm1124, %v1855, %v2241
        %v2820 = vsel %vm1124, %v1856, %v2242
        %v2823 = vsel %vm1124, %v1857, %v2243
        %v2826 = vsel %vm1124, %v1858, %v2244
        %v2829 = vsel %vm1124, %v1859, %v2245
        %v2832 = vsel %vm1124, %v1860, %v2246
        %v2835 = vsel %vm1124, %v1861, %v2247
        %v2838 = vsel %vm1124, %v1862, %v2248
        %v2841 = vsel %vm1124, %v1863, %v2249
        %v2844 = vsel %vm1124, %v1864, %v2250
        %v2847 = vsel %vm1124, %v1865, %v2251
        %v2850 = vsel %vm1124, %v1866, %v2252
        %v2853 = vsel %vm1124, %v1867, %v2253
        %v2856 = vsel %vm1124, %v1868, %v2254
        %v2859 = vsel %vm1124, %v1869, %v2238
        %v2862 = vsel %vm1124, %v2289, %v2340
        %v2865 = vsel %vm1124, %v2290, %v2341
        %v2868 = vsel %vm1124, %v2291, %v2342
        %v2871 = vsel %vm1124, %v2292, %v2343
        %v2874 = vsel %vm1124, %v2293, %v2344
        %v2877 = vsel %vm1124, %v2294, %v2345
        %v2880 = vsel %vm1124, %v2295, %v2346
        %v2883 = vsel %vm1124, %v2296, %v2347
        %v2886 = vsel %vm1124, %v2297, %v2348
        %v2889 = vsel %vm1124, %v2298, %v2349
        %v2892 = vsel %vm1124, %v2299, %v2350
        %v2895 = vsel %vm1124, %v2300, %v2351
        %v2898 = vsel %vm1124, %v2301, %v2352
        %v2901 = vsel %vm1124, %v2302, %v2353
        %v2904 = vsel %vm1124, %v2303, %v2354
        %v2907 = vsel %vm1124, %v2304, %v2355
        %v2910 = vsel %vm1124, %v2288, %v2338
        %v2913 = vsel %vm1124, %v2391, %v2441
        %v2916 = vsel %vm1124, %v2392, %v2442
        %v2919 = vsel %vm1124, %v2393, %v2443
        %v2922 = vsel %vm1124, %v2394, %v2444
        %v2925 = vsel %vm1124, %v2395, %v2445
        %v2928 = vsel %vm1124, %v2396, %v2446
        %v2931 = vsel %vm1124, %v2397, %v2447
        %v2934 = vsel %vm1124, %v2398, %v2448
        %v2937 = vsel %vm1124, %v2399, %v2449
        %v2940 = vsel %vm1124, %v2400, %v2450
        %v2943 = vsel %vm1124, %v2401, %v2451
        %v2946 = vsel %vm1124, %v2402, %v2452
        %v2949 = vsel %vm1124, %v2403, %v2453
        %v2952 = vsel %vm1124, %v2404, %v2454
        %v2955 = vsel %vm1124, %v2405, %v2455
        %v2958 = vsel %vm1124, %v2406, %v2456
        %v2961 = vsel %vm1124, %v2389, %v2440
        %v2964 = vsel %vm1124, %v2491, %v2541
        %v2967 = vsel %vm1124, %v2492, %v2542
        %v2970 = vsel %vm1124, %v2493, %v2543
        %v2973 = vsel %vm1124, %v2494, %v2544
        %v2976 = vsel %vm1124, %v2495, %v2545
        %v2979 = vsel %vm1124, %v2496, %v2546
        %v2982 = vsel %vm1124, %v2497, %v2547
        %v2985 = vsel %vm1124, %v2498, %v2548
        %v2988 = vsel %vm1124, %v2499, %v2549
        %v2991 = vsel %vm1124, %v2500, %v2550
        %v2994 = vsel %vm1124, %v2501, %v2551
        %v2997 = vsel %vm1124, %v2502, %v2552
        %v3000 = vsel %vm1124, %v2503, %v2553
        %v3003 = vsel %vm1124, %v2504, %v2554
        %v3006 = vsel %vm1124, %v2505, %v2555
        %v3009 = vsel %vm1124, %v2506, %v2556
        %v3012 = vsel %vm1124, %v2490, %v2540
        %v3015 = vsel %vm1124, %v2591, %v2641
        %v3018 = vsel %vm1124, %v2592, %v2642
        %v3021 = vsel %vm1124, %v2593, %v2643
        %v3024 = vsel %vm1124, %v2594, %v2644
        %v3027 = vsel %vm1124, %v2595, %v2645
        %v3030 = vsel %vm1124, %v2596, %v2646
        %v3033 = vsel %vm1124, %v2597, %v2647
        %v3036 = vsel %vm1124, %v2598, %v2648
        %v3039 = vsel %vm1124, %v2599, %v2649
        %v3042 = vsel %vm1124, %v2600, %v2650
        %v3045 = vsel %vm1124, %v2601, %v2651
        %v3048 = vsel %vm1124, %v2602, %v2652
        %v3051 = vsel %vm1124, %v2603, %v2653
        %v3054 = vsel %vm1124, %v2604, %v2654
        %v3057 = vsel %vm1124, %v2605, %v2655
        %v3060 = vsel %vm1124, %v2606, %v2656
        %v3063 = vsel %vm1124, %v2590, %v2640
        %v3066 = vsel %vm1124, %v2692, %v2743
        %v3069 = vsel %vm1124, %v2693, %v2744
        %v3072 = vsel %vm1124, %v2694, %v2745
        %v3075 = vsel %vm1124, %v2695, %v2746
        %v3078 = vsel %vm1124, %v2696, %v2747
        %v3081 = vsel %vm1124, %v2697, %v2748
        %v3084 = vsel %vm1124, %v2698, %v2749
        %v3087 = vsel %vm1124, %v2699, %v2750
        %v3090 = vsel %vm1124, %v2700, %v2751
        %v3093 = vsel %vm1124, %v2701, %v2752
        %v3096 = vsel %vm1124, %v2702, %v2753
        %v3099 = vsel %vm1124, %v2703, %v2754
        %v3102 = vsel %vm1124, %v2704, %v2755
        %v3105 = vsel %vm1124, %v2705, %v2756
        %v3108 = vsel %vm1124, %v2706, %v2757
        %v3111 = vsel %vm1124, %v2707, %v2758
        %v3114 = vsel %vm1124, %v2690, %v2741
        %v3116 = vsel %vm1124, %v2793, %v1905
        %v3118 = vsel %vm1124, %v2794, %v1906
        %v3120 = vsel %vm1124, %v2795, %v1907
        %v3122 = vsel %vm1124, %v2796, %v1908
        %v3124 = vsel %vm1124, %v2797, %v1909
        %v3126 = vsel %vm1124, %v2798, %v1910
        %v3128 = vsel %vm1124, %v2799, %v1911
        %v3130 = vsel %vm1124, %v2800, %v1912
        %v3132 = vsel %vm1124, %v2801, %v1913
        %v3134 = vsel %vm1124, %v2802, %v1914
        %v3136 = vsel %vm1124, %v2803, %v1915
        %v3138 = vsel %vm1124, %v2804, %v1916
        %v3140 = vsel %vm1124, %v2805, %v1917
        %v3142 = vsel %vm1124, %v2806, %v1918
        %v3144 = vsel %vm1124, %v2807, %v1919
        %v3146 = vsel %vm1124, %v2808, %v1920
        %v3149 = vsel %vm1124, %v2792, %v1903
        %v3152 = vsel %vm1124, %v1954, %v2004
        %3289 = vrot.lane.b32.xlu0 %v1127, 62
        %v3290 = vpop.permute.xlu0 %3289
        %3291 = vrot.lane.b32.xlu0 %v1131, 62
        %v3292 = vpop.permute.xlu0 %3291
        %3293 = vrot.lane.b32.xlu0 %v1135, 62
        %v3294 = vpop.permute.xlu0 %3293
        %3295 = vrot.lane.b32.xlu0 %v1139, 62
        %v3296 = vpop.permute.xlu0 %3295
        %3297 = vrot.lane.b32.xlu0 %v1143, 62
        %v3298 = vpop.permute.xlu0 %3297
        %3299 = vrot.lane.b32.xlu0 %v1147, 62
        %v3300 = vpop.permute.xlu0 %3299
        %3301 = vrot.lane.b32.xlu0 %v1151, 62
        %v3302 = vpop.permute.xlu0 %3301
        %3303 = vrot.lane.b32.xlu0 %v1155, 62
        %v3304 = vpop.permute.xlu0 %3303
        %3305 = vrot.lane.b32.xlu0 %v1159, 62
        %v3306 = vpop.permute.xlu0 %3305
        %3307 = vrot.lane.b32.xlu0 %v1163, 62
        %v3308 = vpop.permute.xlu0 %3307
        %3309 = vrot.lane.b32.xlu0 %v1167, 62
        %v3310 = vpop.permute.xlu0 %3309
        %3311 = vrot.lane.b32.xlu0 %v1171, 62
        %v3312 = vpop.permute.xlu0 %3311
        %3313 = vrot.lane.b32.xlu0 %v1175, 62
        %v3314 = vpop.permute.xlu0 %3313
        %3315 = vrot.lane.b32.xlu0 %v1179, 62
        %v3316 = vpop.permute.xlu0 %3315
        %3317 = vrot.lane.b32.xlu0 %v1183, 62
        %v3318 = vpop.permute.xlu0 %3317
        %3319 = vrot.lane.b32.xlu0 %v1187, 62
        %v3320 = vpop.permute.xlu0 %3319
        %3321 = vrot.lane.b32.xlu0 %v2023, 62
        %v3322 = vpop.permute.xlu0 %3321
        %3323 = vrot.lane.b32.xlu0 %v1191, 62
        %v3324 = vpop.permute.xlu0 %3323
        %3325 = vrot.lane.b32.xlu0 %v1195, 62
        %v3326 = vpop.permute.xlu0 %3325
        %3327 = vrot.lane.b32.xlu0 %v1199, 62
        %v3328 = vpop.permute.xlu0 %3327
        %3329 = vrot.lane.b32.xlu0 %v1203, 62
        %v3330 = vpop.permute.xlu0 %3329
        %3331 = vrot.lane.b32.xlu0 %v1207, 62
        %v3332 = vpop.permute.xlu0 %3331
        %3333 = vrot.lane.b32.xlu0 %v1211, 62
        %v3334 = vpop.permute.xlu0 %3333
        %3335 = vrot.lane.b32.xlu0 %v1215, 62
        %v3336 = vpop.permute.xlu0 %3335
        %3337 = vrot.lane.b32.xlu0 %v1219, 62
        %v3338 = vpop.permute.xlu0 %3337
        %3339 = vrot.lane.b32.xlu0 %v1223, 62
        %v3340 = vpop.permute.xlu0 %3339
        %3341 = vrot.lane.b32.xlu0 %v1227, 62
        %v3342 = vpop.permute.xlu0 %3341
        %3343 = vrot.lane.b32.xlu0 %v1231, 62
        %v3344 = vpop.permute.xlu0 %3343
        %3345 = vrot.lane.b32.xlu0 %v1235, 62
        %v3346 = vpop.permute.xlu0 %3345
        %3347 = vrot.lane.b32.xlu0 %v1239, 62
        %v3348 = vpop.permute.xlu0 %3347
        %3349 = vrot.lane.b32.xlu0 %v1243, 62
        %v3350 = vpop.permute.xlu0 %3349
        %3351 = vrot.lane.b32.xlu0 %v1247, 62
        %v3352 = vpop.permute.xlu0 %3351
        %3353 = vrot.lane.b32.xlu0 %v1251, 62
        %v3354 = vpop.permute.xlu0 %3353
        %3355 = vrot.lane.b32.xlu0 %v2026, 62
        %v3356 = vpop.permute.xlu0 %3355
        %3357 = vrot.lane.b32.xlu0 %v2028, 62
        %v3358 = vpop.permute.xlu0 %3357
        %3359 = vrot.lane.b32.xlu0 %v2030, 62
        %v3360 = vpop.permute.xlu0 %3359
        %3361 = vrot.lane.b32.xlu0 %v2032, 62
        %v3362 = vpop.permute.xlu0 %3361
        %3363 = vrot.lane.b32.xlu0 %v2034, 62
        %v3364 = vpop.permute.xlu0 %3363
        %3365 = vrot.lane.b32.xlu0 %v2036, 62
        %v3366 = vpop.permute.xlu0 %3365
        %3367 = vrot.lane.b32.xlu0 %v2038, 62
        %v3368 = vpop.permute.xlu0 %3367
        %3369 = vrot.lane.b32.xlu0 %v2040, 62
        %v3370 = vpop.permute.xlu0 %3369
        %3371 = vrot.lane.b32.xlu0 %v2042, 62
        %v3372 = vpop.permute.xlu0 %3371
        %3373 = vrot.lane.b32.xlu0 %v2044, 62
        %v3374 = vpop.permute.xlu0 %3373
        %3375 = vrot.lane.b32.xlu0 %v2046, 62
        %v3376 = vpop.permute.xlu0 %3375
        %3377 = vrot.lane.b32.xlu0 %v2048, 62
        %v3378 = vpop.permute.xlu0 %3377
        %3379 = vrot.lane.b32.xlu0 %v2050, 62
        %v3380 = vpop.permute.xlu0 %3379
        %3381 = vrot.lane.b32.xlu0 %v2052, 62
        %v3382 = vpop.permute.xlu0 %3381
        %3383 = vrot.lane.b32.xlu0 %v2054, 62
        %v3384 = vpop.permute.xlu0 %3383
        %3385 = vrot.lane.b32.xlu0 %v2056, 62
        %v3386 = vpop.permute.xlu0 %3385
        %3387 = vrot.lane.b32.xlu0 %v2058, 62
        %v3388 = vpop.permute.xlu0 %3387
        %3389 = vrot.lane.b32.xlu0 %v2061, 62
        %v3390 = vpop.permute.xlu0 %3389
        %3391 = vrot.lane.b32.xlu0 %v2063, 62
        %v3392 = vpop.permute.xlu0 %3391
        %3393 = vrot.lane.b32.xlu0 %v2065, 62
        %v3394 = vpop.permute.xlu0 %3393
        %3395 = vrot.lane.b32.xlu0 %v2067, 62
        %v3396 = vpop.permute.xlu0 %3395
        %3397 = vrot.lane.b32.xlu0 %v2069, 62
        %v3398 = vpop.permute.xlu0 %3397
        %3399 = vrot.lane.b32.xlu0 %v2071, 62
        %v3400 = vpop.permute.xlu0 %3399
        %3401 = vrot.lane.b32.xlu0 %v2073, 62
        %v3402 = vpop.permute.xlu0 %3401
        %3403 = vrot.lane.b32.xlu0 %v2075, 62
        %v3404 = vpop.permute.xlu0 %3403
        %3405 = vrot.lane.b32.xlu0 %v2077, 62
        %v3406 = vpop.permute.xlu0 %3405
        %3407 = vrot.lane.b32.xlu0 %v2079, 62
        %v3408 = vpop.permute.xlu0 %3407
        %3409 = vrot.lane.b32.xlu0 %v2081, 62
        %v3410 = vpop.permute.xlu0 %3409
        %3411 = vrot.lane.b32.xlu0 %v2083, 62
        %v3412 = vpop.permute.xlu0 %3411
        %3413 = vrot.lane.b32.xlu0 %v2085, 62
        %v3414 = vpop.permute.xlu0 %3413
        %3415 = vrot.lane.b32.xlu0 %v2087, 62
        %v3416 = vpop.permute.xlu0 %3415
        %3417 = vrot.lane.b32.xlu0 %v2089, 62
        %v3418 = vpop.permute.xlu0 %3417
        %3419 = vrot.lane.b32.xlu0 %v2091, 62
        %v3420 = vpop.permute.xlu0 %3419
        %3421 = vrot.lane.b32.xlu0 %v2093, 62
        %v3422 = vpop.permute.xlu0 %3421
        %3423 = vrot.lane.b32.xlu0 %v2096, 62
        %v3424 = vpop.permute.xlu0 %3423
        %3425 = vrot.lane.b32.xlu0 %v1383, 62
        %v3426 = vpop.permute.xlu0 %3425
        %3427 = vrot.lane.b32.xlu0 %v1387, 62
        %v3428 = vpop.permute.xlu0 %3427
        %3429 = vrot.lane.b32.xlu0 %v1391, 62
        %v3430 = vpop.permute.xlu0 %3429
        %3431 = vrot.lane.b32.xlu0 %v1395, 62
        %v3432 = vpop.permute.xlu0 %3431
        %3433 = vrot.lane.b32.xlu0 %v1399, 62
        %v3434 = vpop.permute.xlu0 %3433
        %3435 = vrot.lane.b32.xlu0 %v1403, 62
        %v3436 = vpop.permute.xlu0 %3435
        %3437 = vrot.lane.b32.xlu0 %v1407, 62
        %v3438 = vpop.permute.xlu0 %3437
        %3439 = vrot.lane.b32.xlu0 %v1411, 62
        %v3440 = vpop.permute.xlu0 %3439
        %3441 = vrot.lane.b32.xlu0 %v1415, 62
        %v3442 = vpop.permute.xlu0 %3441
        %3443 = vrot.lane.b32.xlu0 %v1419, 62
        %v3444 = vpop.permute.xlu0 %3443
        %3445 = vrot.lane.b32.xlu0 %v1423, 62
        %v3446 = vpop.permute.xlu0 %3445
        %3447 = vrot.lane.b32.xlu0 %v1427, 62
        %v3448 = vpop.permute.xlu0 %3447
        %3449 = vrot.lane.b32.xlu0 %v1431, 62
        %v3450 = vpop.permute.xlu0 %3449
        %3451 = vrot.lane.b32.xlu0 %v1435, 62
        %v3452 = vpop.permute.xlu0 %3451
        %3453 = vrot.lane.b32.xlu0 %v1439, 62
        %v3454 = vpop.permute.xlu0 %3453
        %3455 = vrot.lane.b32.xlu0 %v1443, 62
        %v3456 = vpop.permute.xlu0 %3455
        %3457 = vrot.lane.b32.xlu0 %v2099, 62
        %v3458 = vpop.permute.xlu0 %3457
        %3459 = vrot.lane.b32.xlu0 %v1447, 62
        %v3460 = vpop.permute.xlu0 %3459
        %3461 = vrot.lane.b32.xlu0 %v1451, 62
        %v3462 = vpop.permute.xlu0 %3461
        %3463 = vrot.lane.b32.xlu0 %v1455, 62
        %v3464 = vpop.permute.xlu0 %3463
        %3465 = vrot.lane.b32.xlu0 %v1459, 62
        %v3466 = vpop.permute.xlu0 %3465
        %3467 = vrot.lane.b32.xlu0 %v1463, 62
        %v3468 = vpop.permute.xlu0 %3467
        %3469 = vrot.lane.b32.xlu0 %v1467, 62
        %v3470 = vpop.permute.xlu0 %3469
        %3471 = vrot.lane.b32.xlu0 %v1471, 62
        %v3472 = vpop.permute.xlu0 %3471
        %3473 = vrot.lane.b32.xlu0 %v1475, 62
        %v3474 = vpop.permute.xlu0 %3473
        %3475 = vrot.lane.b32.xlu0 %v1479, 62
        %v3476 = vpop.permute.xlu0 %3475
        %3477 = vrot.lane.b32.xlu0 %v1483, 62
        %v3478 = vpop.permute.xlu0 %3477
        %3479 = vrot.lane.b32.xlu0 %v1487, 62
        %v3480 = vpop.permute.xlu0 %3479
        %3481 = vrot.lane.b32.xlu0 %v1491, 62
        %v3482 = vpop.permute.xlu0 %3481
        %3483 = vrot.lane.b32.xlu0 %v1495, 62
        %v3484 = vpop.permute.xlu0 %3483
        %3485 = vrot.lane.b32.xlu0 %v1499, 62
        %v3486 = vpop.permute.xlu0 %3485
        %3487 = vrot.lane.b32.xlu0 %v1503, 62
        %v3488 = vpop.permute.xlu0 %3487
        %3489 = vrot.lane.b32.xlu0 %v1507, 62
        %v3490 = vpop.permute.xlu0 %3489
        %3491 = vrot.lane.b32.xlu0 %v2102, 62
        %v3492 = vpop.permute.xlu0 %3491
        %3493 = vrot.lane.b32.xlu0 %v2105, 62
        %v3494 = vpop.permute.xlu0 %3493
        %3495 = vrot.lane.b32.xlu0 %v2108, 62
        %v3496 = vpop.permute.xlu0 %3495
        %3497 = vrot.lane.b32.xlu0 %v2111, 62
        %v3498 = vpop.permute.xlu0 %3497
        %3499 = vrot.lane.b32.xlu0 %v2114, 62
        %v3500 = vpop.permute.xlu0 %3499
        %3501 = vrot.lane.b32.xlu0 %v2117, 62
        %v3502 = vpop.permute.xlu0 %3501
        %3503 = vrot.lane.b32.xlu0 %v2120, 62
        %v3504 = vpop.permute.xlu0 %3503
        %3505 = vrot.lane.b32.xlu0 %v2123, 62
        %v3506 = vpop.permute.xlu0 %3505
        %3507 = vrot.lane.b32.xlu0 %v2126, 62
        %v3508 = vpop.permute.xlu0 %3507
        %3509 = vrot.lane.b32.xlu0 %v2129, 62
        %v3510 = vpop.permute.xlu0 %3509
        %3511 = vrot.lane.b32.xlu0 %v2132, 62
        %v3512 = vpop.permute.xlu0 %3511
        %3513 = vrot.lane.b32.xlu0 %v2135, 62
        %v3514 = vpop.permute.xlu0 %3513
        %3515 = vrot.lane.b32.xlu0 %v2138, 62
        %v3516 = vpop.permute.xlu0 %3515
        %3517 = vrot.lane.b32.xlu0 %v2141, 62
        %v3518 = vpop.permute.xlu0 %3517
        %3519 = vrot.lane.b32.xlu0 %v2144, 62
        %v3520 = vpop.permute.xlu0 %3519
        %3521 = vrot.lane.b32.xlu0 %v2147, 62
        %v3522 = vpop.permute.xlu0 %3521
        %3523 = vrot.lane.b32.xlu0 %v2150, 62
        %v3524 = vpop.permute.xlu0 %3523
        %3525 = vrot.lane.b32.xlu0 %v2153, 62
        %v3526 = vpop.permute.xlu0 %3525
        %3527 = vrot.lane.b32.xlu0 %v2156, 62
        %v3528 = vpop.permute.xlu0 %3527
        %3529 = vrot.lane.b32.xlu0 %v2159, 62
        %v3530 = vpop.permute.xlu0 %3529
        %3531 = vrot.lane.b32.xlu0 %v2162, 62
        %v3532 = vpop.permute.xlu0 %3531
        %3533 = vrot.lane.b32.xlu0 %v2165, 62
        %v3534 = vpop.permute.xlu0 %3533
        %3535 = vrot.lane.b32.xlu0 %v2168, 62
        %v3536 = vpop.permute.xlu0 %3535
        %3537 = vrot.lane.b32.xlu0 %v2171, 62
        %v3538 = vpop.permute.xlu0 %3537
        %3539 = vrot.lane.b32.xlu0 %v2174, 62
        %v3540 = vpop.permute.xlu0 %3539
        %3541 = vrot.lane.b32.xlu0 %v2177, 62
        %v3542 = vpop.permute.xlu0 %3541
        %3543 = vrot.lane.b32.xlu0 %v2180, 62
        %v3544 = vpop.permute.xlu0 %3543
        %3545 = vrot.lane.b32.xlu0 %v2183, 62
        %v3546 = vpop.permute.xlu0 %3545
        %3547 = vrot.lane.b32.xlu0 %v2186, 62
        %v3548 = vpop.permute.xlu0 %3547
        %3549 = vrot.lane.b32.xlu0 %v2189, 62
        %v3550 = vpop.permute.xlu0 %3549
        %3551 = vrot.lane.b32.xlu0 %v2192, 62
        %v3552 = vpop.permute.xlu0 %3551
        %3553 = vrot.lane.b32.xlu0 %v2195, 62
        %v3554 = vpop.permute.xlu0 %3553
        %3555 = vrot.lane.b32.xlu0 %v2198, 62
        %v3556 = vpop.permute.xlu0 %3555
        %3557 = vrot.lane.b32.xlu0 %v2201, 62
        %v3558 = vpop.permute.xlu0 %3557
        %3559 = vrot.lane.b32.xlu0 %v2204, 62
        %v3560 = vpop.permute.xlu0 %3559
        %vm3561 = vcmask 506880
        %v3562 = vsel %vm3561, %v3290, %v3292
        %v3563 = vsel %vm3561, %v3292, %v3294
        %v3564 = vsel %vm3561, %v3294, %v3296
        %v3565 = vsel %vm3561, %v3296, %v3298
        %v3566 = vsel %vm3561, %v3298, %v3300
        %v3567 = vsel %vm3561, %v3300, %v3302
        %v3568 = vsel %vm3561, %v3302, %v3304
        %v3569 = vsel %vm3561, %v3304, %v3306
        %v3570 = vsel %vm3561, %v3306, %v3308
        %v3571 = vsel %vm3561, %v3308, %v3310
        %v3572 = vsel %vm3561, %v3310, %v3312
        %v3573 = vsel %vm3561, %v3312, %v3314
        %v3574 = vsel %vm3561, %v3314, %v3316
        %v3575 = vsel %vm3561, %v3316, %v3318
        %v3576 = vsel %vm3561, %v3318, %v3320
        %v3577 = vsel %vm3561, %v3320, %v3322
        %v3578 = vsel %vm3561, %v3324, %v3326
        %v3579 = vsel %vm3561, %v3326, %v3328
        %v3580 = vsel %vm3561, %v3328, %v3330
        %v3581 = vsel %vm3561, %v3330, %v3332
        %v3582 = vsel %vm3561, %v3332, %v3334
        %v3583 = vsel %vm3561, %v3334, %v3336
        %v3584 = vsel %vm3561, %v3336, %v3338
        %v3585 = vsel %vm3561, %v3338, %v3340
        %v3586 = vsel %vm3561, %v3340, %v3342
        %v3587 = vsel %vm3561, %v3342, %v3344
        %v3588 = vsel %vm3561, %v3344, %v3346
        %v3589 = vsel %vm3561, %v3346, %v3348
        %v3590 = vsel %vm3561, %v3348, %v3350
        %v3591 = vsel %vm3561, %v3350, %v3352
        %v3592 = vsel %vm3561, %v3352, %v3354
        %v3593 = vsel %vm3561, %v3354, %v3356
        %v3594 = vsel %vm3561, %v3358, %v3360
        %v3595 = vsel %vm3561, %v3360, %v3362
        %v3596 = vsel %vm3561, %v3362, %v3364
        %v3597 = vsel %vm3561, %v3364, %v3366
        %v3598 = vsel %vm3561, %v3366, %v3368
        %v3599 = vsel %vm3561, %v3368, %v3370
        %v3600 = vsel %vm3561, %v3370, %v3372
        %v3601 = vsel %vm3561, %v3372, %v3374
        %v3602 = vsel %vm3561, %v3374, %v3376
        %v3603 = vsel %vm3561, %v3376, %v3378
        %v3604 = vsel %vm3561, %v3378, %v3380
        %v3605 = vsel %vm3561, %v3380, %v3382
        %v3606 = vsel %vm3561, %v3382, %v3384
        %v3607 = vsel %vm3561, %v3384, %v3386
        %v3608 = vsel %vm3561, %v3386, %v3388
        %v3609 = vsel %vm3561, %v3388, %v3390
        %v3610 = vsel %vm3561, %v3392, %v3394
        %v3611 = vsel %vm3561, %v3394, %v3396
        %v3612 = vsel %vm3561, %v3396, %v3398
        %v3613 = vsel %vm3561, %v3398, %v3400
        %v3614 = vsel %vm3561, %v3400, %v3402
        %v3615 = vsel %vm3561, %v3402, %v3404
        %v3616 = vsel %vm3561, %v3404, %v3406
        %v3617 = vsel %vm3561, %v3406, %v3408
        %v3618 = vsel %vm3561, %v3408, %v3410
        %v3619 = vsel %vm3561, %v3410, %v3412
        %v3620 = vsel %vm3561, %v3412, %v3414
        %v3621 = vsel %vm3561, %v3414, %v3416
        %v3622 = vsel %vm3561, %v3416, %v3418
        %v3623 = vsel %vm3561, %v3418, %v3420
        %v3624 = vsel %vm3561, %v3420, %v3422
        %v3625 = vsel %vm3561, %v3422, %v3424
        %v3626 = vsel %vm3561, %v3426, %v3428
        %v3627 = vsel %vm3561, %v3428, %v3430
        %v3628 = vsel %vm3561, %v3430, %v3432
        %v3629 = vsel %vm3561, %v3432, %v3434
        %v3630 = vsel %vm3561, %v3434, %v3436
        %v3631 = vsel %vm3561, %v3436, %v3438
        %v3632 = vsel %vm3561, %v3438, %v3440
        %v3633 = vsel %vm3561, %v3440, %v3442
        %v3634 = vsel %vm3561, %v3442, %v3444
        %v3635 = vsel %vm3561, %v3444, %v3446
        %v3636 = vsel %vm3561, %v3446, %v3448
        %v3637 = vsel %vm3561, %v3448, %v3450
        %v3638 = vsel %vm3561, %v3450, %v3452
        %v3639 = vsel %vm3561, %v3452, %v3454
        %v3640 = vsel %vm3561, %v3454, %v3456
        %v3641 = vsel %vm3561, %v3456, %v3458
        %v3642 = vsel %vm3561, %v3460, %v3462
        %v3643 = vsel %vm3561, %v3462, %v3464
        %v3644 = vsel %vm3561, %v3464, %v3466
        %v3645 = vsel %vm3561, %v3466, %v3468
        %v3646 = vsel %vm3561, %v3468, %v3470
        %v3647 = vsel %vm3561, %v3470, %v3472
        %v3648 = vsel %vm3561, %v3472, %v3474
        %v3649 = vsel %vm3561, %v3474, %v3476
        %v3650 = vsel %vm3561, %v3476, %v3478
        %v3651 = vsel %vm3561, %v3478, %v3480
        %v3652 = vsel %vm3561, %v3480, %v3482
        %v3653 = vsel %vm3561, %v3482, %v3484
        %v3654 = vsel %vm3561, %v3484, %v3486
        %v3655 = vsel %vm3561, %v3486, %v3488
        %v3656 = vsel %vm3561, %v3488, %v3490
        %v3657 = vsel %vm3561, %v3490, %v3492
        %v3658 = vsel %vm3561, %v3494, %v3496
        %v3659 = vsel %vm3561, %v3496, %v3498
        %v3660 = vsel %vm3561, %v3498, %v3500
        %v3661 = vsel %vm3561, %v3500, %v3502
        %v3662 = vsel %vm3561, %v3502, %v3504
        %v3663 = vsel %vm3561, %v3504, %v3506
        %v3664 = vsel %vm3561, %v3506, %v3508
        %v3665 = vsel %vm3561, %v3508, %v3510
        %v3666 = vsel %vm3561, %v3510, %v3512
        %v3667 = vsel %vm3561, %v3512, %v3514
        %v3668 = vsel %vm3561, %v3514, %v3516
        %v3669 = vsel %vm3561, %v3516, %v3518
        %v3670 = vsel %vm3561, %v3518, %v3520
        %v3671 = vsel %vm3561, %v3520, %v3522
        %v3672 = vsel %vm3561, %v3522, %v3524
        %v3673 = vsel %vm3561, %v3524, %v3526
        %v3674 = vsel %vm3561, %v3528, %v3530
        %v3675 = vsel %vm3561, %v3530, %v3532
        %v3676 = vsel %vm3561, %v3532, %v3534
        %v3677 = vsel %vm3561, %v3534, %v3536
        %v3678 = vsel %vm3561, %v3536, %v3538
        %v3679 = vsel %vm3561, %v3538, %v3540
        %v3680 = vsel %vm3561, %v3540, %v3542
        %v3681 = vsel %vm3561, %v3542, %v3544
        %v3682 = vsel %vm3561, %v3544, %v3546
        %v3683 = vsel %vm3561, %v3546, %v3548
        %v3684 = vsel %vm3561, %v3548, %v3550
        %v3685 = vsel %vm3561, %v3550, %v3552
        %v3686 = vsel %vm3561, %v3552, %v3554
        %v3687 = vsel %vm3561, %v3554, %v3556
        %v3688 = vsel %vm3561, %v3556, %v3558
        %v3689 = vsel %vm3561, %v3558, %v3560
        %3938 = vrot.lane.b32.xlu0 %v2811, 124
        %v3939 = vpop.permute.xlu0 %3938
        %3940 = vrot.lane.b32.xlu0 %v2814, 124
        %v3941 = vpop.permute.xlu0 %3940
        %3942 = vrot.lane.b32.xlu0 %v2817, 124
        %v3943 = vpop.permute.xlu0 %3942
        %3944 = vrot.lane.b32.xlu0 %v2820, 124
        %v3945 = vpop.permute.xlu0 %3944
        %3946 = vrot.lane.b32.xlu0 %v2823, 124
        %v3947 = vpop.permute.xlu0 %3946
        %3948 = vrot.lane.b32.xlu0 %v2826, 124
        %v3949 = vpop.permute.xlu0 %3948
        %3950 = vrot.lane.b32.xlu0 %v2829, 124
        %v3951 = vpop.permute.xlu0 %3950
        %3952 = vrot.lane.b32.xlu0 %v2832, 124
        %v3953 = vpop.permute.xlu0 %3952
        %3954 = vrot.lane.b32.xlu0 %v2835, 124
        %v3955 = vpop.permute.xlu0 %3954
        %3956 = vrot.lane.b32.xlu0 %v2838, 124
        %v3957 = vpop.permute.xlu0 %3956
        %3958 = vrot.lane.b32.xlu0 %v2841, 124
        %v3959 = vpop.permute.xlu0 %3958
        %3960 = vrot.lane.b32.xlu0 %v2844, 124
        %v3961 = vpop.permute.xlu0 %3960
        %3962 = vrot.lane.b32.xlu0 %v2847, 124
        %v3963 = vpop.permute.xlu0 %3962
        %3964 = vrot.lane.b32.xlu0 %v2850, 124
        %v3965 = vpop.permute.xlu0 %3964
        %3966 = vrot.lane.b32.xlu0 %v2853, 124
        %v3967 = vpop.permute.xlu0 %3966
        %3968 = vrot.lane.b32.xlu0 %v2856, 124
        %v3969 = vpop.permute.xlu0 %3968
        %3970 = vrot.lane.b32.xlu0 %v2859, 124
        %v3971 = vpop.permute.xlu0 %3970
        %3972 = vrot.lane.b32.xlu0 %v2862, 124
        %v3973 = vpop.permute.xlu0 %3972
        %3974 = vrot.lane.b32.xlu0 %v2865, 124
        %v3975 = vpop.permute.xlu0 %3974
        %3976 = vrot.lane.b32.xlu0 %v2868, 124
        %v3977 = vpop.permute.xlu0 %3976
        %3978 = vrot.lane.b32.xlu0 %v2871, 124
        %v3979 = vpop.permute.xlu0 %3978
        %3980 = vrot.lane.b32.xlu0 %v2874, 124
        %v3981 = vpop.permute.xlu0 %3980
        %3982 = vrot.lane.b32.xlu0 %v2877, 124
        %v3983 = vpop.permute.xlu0 %3982
        %3984 = vrot.lane.b32.xlu0 %v2880, 124
        %v3985 = vpop.permute.xlu0 %3984
        %3986 = vrot.lane.b32.xlu0 %v2883, 124
        %v3987 = vpop.permute.xlu0 %3986
        %3988 = vrot.lane.b32.xlu0 %v2886, 124
        %v3989 = vpop.permute.xlu0 %3988
        %3990 = vrot.lane.b32.xlu0 %v2889, 124
        %v3991 = vpop.permute.xlu0 %3990
        %3992 = vrot.lane.b32.xlu0 %v2892, 124
        %v3993 = vpop.permute.xlu0 %3992
        %3994 = vrot.lane.b32.xlu0 %v2895, 124
        %v3995 = vpop.permute.xlu0 %3994
        %3996 = vrot.lane.b32.xlu0 %v2898, 124
        %v3997 = vpop.permute.xlu0 %3996
        %3998 = vrot.lane.b32.xlu0 %v2901, 124
        %v3999 = vpop.permute.xlu0 %3998
        %4000 = vrot.lane.b32.xlu0 %v2904, 124
        %v4001 = vpop.permute.xlu0 %4000
        %4002 = vrot.lane.b32.xlu0 %v2907, 124
        %v4003 = vpop.permute.xlu0 %4002
        %4004 = vrot.lane.b32.xlu0 %v2910, 124
        %v4005 = vpop.permute.xlu0 %4004
        %4006 = vrot.lane.b32.xlu0 %v2913, 124
        %v4007 = vpop.permute.xlu0 %4006
        %4008 = vrot.lane.b32.xlu0 %v2916, 124
        %v4009 = vpop.permute.xlu0 %4008
        %4010 = vrot.lane.b32.xlu0 %v2919, 124
        %v4011 = vpop.permute.xlu0 %4010
        %4012 = vrot.lane.b32.xlu0 %v2922, 124
        %v4013 = vpop.permute.xlu0 %4012
        %4014 = vrot.lane.b32.xlu0 %v2925, 124
        %v4015 = vpop.permute.xlu0 %4014
        %4016 = vrot.lane.b32.xlu0 %v2928, 124
        %v4017 = vpop.permute.xlu0 %4016
        %4018 = vrot.lane.b32.xlu0 %v2931, 124
        %v4019 = vpop.permute.xlu0 %4018
        %4020 = vrot.lane.b32.xlu0 %v2934, 124
        %v4021 = vpop.permute.xlu0 %4020
        %4022 = vrot.lane.b32.xlu0 %v2937, 124
        %v4023 = vpop.permute.xlu0 %4022
        %4024 = vrot.lane.b32.xlu0 %v2940, 124
        %v4025 = vpop.permute.xlu0 %4024
        %4026 = vrot.lane.b32.xlu0 %v2943, 124
        %v4027 = vpop.permute.xlu0 %4026
        %4028 = vrot.lane.b32.xlu0 %v2946, 124
        %v4029 = vpop.permute.xlu0 %4028
        %4030 = vrot.lane.b32.xlu0 %v2949, 124
        %v4031 = vpop.permute.xlu0 %4030
        %4032 = vrot.lane.b32.xlu0 %v2952, 124
        %v4033 = vpop.permute.xlu0 %4032
        %4034 = vrot.lane.b32.xlu0 %v2955, 124
        %v4035 = vpop.permute.xlu0 %4034
        %4036 = vrot.lane.b32.xlu0 %v2958, 124
        %v4037 = vpop.permute.xlu0 %4036
        %4038 = vrot.lane.b32.xlu0 %v2961, 124
        %v4039 = vpop.permute.xlu0 %4038
        %4040 = vrot.lane.b32.xlu0 %v2964, 124
        %v4041 = vpop.permute.xlu0 %4040
        %4042 = vrot.lane.b32.xlu0 %v2967, 124
        %v4043 = vpop.permute.xlu0 %4042
        %4044 = vrot.lane.b32.xlu0 %v2970, 124
        %v4045 = vpop.permute.xlu0 %4044
        %4046 = vrot.lane.b32.xlu0 %v2973, 124
        %v4047 = vpop.permute.xlu0 %4046
        %4048 = vrot.lane.b32.xlu0 %v2976, 124
        %v4049 = vpop.permute.xlu0 %4048
        %4050 = vrot.lane.b32.xlu0 %v2979, 124
        %v4051 = vpop.permute.xlu0 %4050
        %4052 = vrot.lane.b32.xlu0 %v2982, 124
        %v4053 = vpop.permute.xlu0 %4052
        %4054 = vrot.lane.b32.xlu0 %v2985, 124
        %v4055 = vpop.permute.xlu0 %4054
        %4056 = vrot.lane.b32.xlu0 %v2988, 124
        %v4057 = vpop.permute.xlu0 %4056
        %4058 = vrot.lane.b32.xlu0 %v2991, 124
        %v4059 = vpop.permute.xlu0 %4058
        %4060 = vrot.lane.b32.xlu0 %v2994, 124
        %v4061 = vpop.permute.xlu0 %4060
        %4062 = vrot.lane.b32.xlu0 %v2997, 124
        %v4063 = vpop.permute.xlu0 %4062
        %4064 = vrot.lane.b32.xlu0 %v3000, 124
        %v4065 = vpop.permute.xlu0 %4064
        %4066 = vrot.lane.b32.xlu0 %v3003, 124
        %v4067 = vpop.permute.xlu0 %4066
        %4068 = vrot.lane.b32.xlu0 %v3006, 124
        %v4069 = vpop.permute.xlu0 %4068
        %4070 = vrot.lane.b32.xlu0 %v3009, 124
        %v4071 = vpop.permute.xlu0 %4070
        %4072 = vrot.lane.b32.xlu0 %v3012, 124
        %v4073 = vpop.permute.xlu0 %4072
        %4074 = vrot.lane.b32.xlu0 %v3015, 124
        %v4075 = vpop.permute.xlu0 %4074
        %4076 = vrot.lane.b32.xlu0 %v3018, 124
        %v4077 = vpop.permute.xlu0 %4076
        %4078 = vrot.lane.b32.xlu0 %v3021, 124
        %v4079 = vpop.permute.xlu0 %4078
        %4080 = vrot.lane.b32.xlu0 %v3024, 124
        %v4081 = vpop.permute.xlu0 %4080
        %4082 = vrot.lane.b32.xlu0 %v3027, 124
        %v4083 = vpop.permute.xlu0 %4082
        %4084 = vrot.lane.b32.xlu0 %v3030, 124
        %v4085 = vpop.permute.xlu0 %4084
        %4086 = vrot.lane.b32.xlu0 %v3033, 124
        %v4087 = vpop.permute.xlu0 %4086
        %4088 = vrot.lane.b32.xlu0 %v3036, 124
        %v4089 = vpop.permute.xlu0 %4088
        %4090 = vrot.lane.b32.xlu0 %v3039, 124
        %v4091 = vpop.permute.xlu0 %4090
        %4092 = vrot.lane.b32.xlu0 %v3042, 124
        %v4093 = vpop.permute.xlu0 %4092
        %4094 = vrot.lane.b32.xlu0 %v3045, 124
        %v4095 = vpop.permute.xlu0 %4094
        %4096 = vrot.lane.b32.xlu0 %v3048, 124
        %v4097 = vpop.permute.xlu0 %4096
        %4098 = vrot.lane.b32.xlu0 %v3051, 124
        %v4099 = vpop.permute.xlu0 %4098
        %4100 = vrot.lane.b32.xlu0 %v3054, 124
        %v4101 = vpop.permute.xlu0 %4100
        %4102 = vrot.lane.b32.xlu0 %v3057, 124
        %v4103 = vpop.permute.xlu0 %4102
        %4104 = vrot.lane.b32.xlu0 %v3060, 124
        %v4105 = vpop.permute.xlu0 %4104
        %4106 = vrot.lane.b32.xlu0 %v3063, 124
        %v4107 = vpop.permute.xlu0 %4106
        %4108 = vrot.lane.b32.xlu0 %v3066, 124
        %v4109 = vpop.permute.xlu0 %4108
        %4110 = vrot.lane.b32.xlu0 %v3069, 124
        %v4111 = vpop.permute.xlu0 %4110
        %4112 = vrot.lane.b32.xlu0 %v3072, 124
        %v4113 = vpop.permute.xlu0 %4112
        %4114 = vrot.lane.b32.xlu0 %v3075, 124
        %v4115 = vpop.permute.xlu0 %4114
        %4116 = vrot.lane.b32.xlu0 %v3078, 124
        %v4117 = vpop.permute.xlu0 %4116
        %4118 = vrot.lane.b32.xlu0 %v3081, 124
        %v4119 = vpop.permute.xlu0 %4118
        %4120 = vrot.lane.b32.xlu0 %v3084, 124
        %v4121 = vpop.permute.xlu0 %4120
        %4122 = vrot.lane.b32.xlu0 %v3087, 124
        %v4123 = vpop.permute.xlu0 %4122
        %4124 = vrot.lane.b32.xlu0 %v3090, 124
        %v4125 = vpop.permute.xlu0 %4124
        %4126 = vrot.lane.b32.xlu0 %v3093, 124
        %v4127 = vpop.permute.xlu0 %4126
        %4128 = vrot.lane.b32.xlu0 %v3096, 124
        %v4129 = vpop.permute.xlu0 %4128
        %4130 = vrot.lane.b32.xlu0 %v3099, 124
        %v4131 = vpop.permute.xlu0 %4130
        %4132 = vrot.lane.b32.xlu0 %v3102, 124
        %v4133 = vpop.permute.xlu0 %4132
        %4134 = vrot.lane.b32.xlu0 %v3105, 124
        %v4135 = vpop.permute.xlu0 %4134
        %4136 = vrot.lane.b32.xlu0 %v3108, 124
        %v4137 = vpop.permute.xlu0 %4136
        %4138 = vrot.lane.b32.xlu0 %v3111, 124
        %v4139 = vpop.permute.xlu0 %4138
        %4140 = vrot.lane.b32.xlu0 %v3114, 124
        %v4141 = vpop.permute.xlu0 %4140
        %4142 = vrot.lane.b32.xlu0 %v3116, 124
        %v4143 = vpop.permute.xlu0 %4142
        %4144 = vrot.lane.b32.xlu0 %v3118, 124
        %v4145 = vpop.permute.xlu0 %4144
        %4146 = vrot.lane.b32.xlu0 %v3120, 124
        %v4147 = vpop.permute.xlu0 %4146
        %4148 = vrot.lane.b32.xlu0 %v3122, 124
        %v4149 = vpop.permute.xlu0 %4148
        %4150 = vrot.lane.b32.xlu0 %v3124, 124
        %v4151 = vpop.permute.xlu0 %4150
        %4152 = vrot.lane.b32.xlu0 %v3126, 124
        %v4153 = vpop.permute.xlu0 %4152
        %4154 = vrot.lane.b32.xlu0 %v3128, 124
        %v4155 = vpop.permute.xlu0 %4154
        %4156 = vrot.lane.b32.xlu0 %v3130, 124
        %v4157 = vpop.permute.xlu0 %4156
        %4158 = vrot.lane.b32.xlu0 %v3132, 124
        %v4159 = vpop.permute.xlu0 %4158
        %4160 = vrot.lane.b32.xlu0 %v3134, 124
        %v4161 = vpop.permute.xlu0 %4160
        %4162 = vrot.lane.b32.xlu0 %v3136, 124
        %v4163 = vpop.permute.xlu0 %4162
        %4164 = vrot.lane.b32.xlu0 %v3138, 124
        %v4165 = vpop.permute.xlu0 %4164
        %4166 = vrot.lane.b32.xlu0 %v3140, 124
        %v4167 = vpop.permute.xlu0 %4166
        %4168 = vrot.lane.b32.xlu0 %v3142, 124
        %v4169 = vpop.permute.xlu0 %4168
        %4170 = vrot.lane.b32.xlu0 %v3144, 124
        %v4171 = vpop.permute.xlu0 %4170
        %4172 = vrot.lane.b32.xlu0 %v3146, 124
        %v4173 = vpop.permute.xlu0 %4172
        %4174 = vrot.lane.b32.xlu0 %v3149, 124
        %v4175 = vpop.permute.xlu0 %4174
        %4176 = vrot.lane.b32.xlu0 %v2159, 124
        %v4177 = vpop.permute.xlu0 %4176
        %4178 = vrot.lane.b32.xlu0 %v2162, 124
        %v4179 = vpop.permute.xlu0 %4178
        %4180 = vrot.lane.b32.xlu0 %v2165, 124
        %v4181 = vpop.permute.xlu0 %4180
        %4182 = vrot.lane.b32.xlu0 %v2168, 124
        %v4183 = vpop.permute.xlu0 %4182
        %4184 = vrot.lane.b32.xlu0 %v2171, 124
        %v4185 = vpop.permute.xlu0 %4184
        %4186 = vrot.lane.b32.xlu0 %v2174, 124
        %v4187 = vpop.permute.xlu0 %4186
        %4188 = vrot.lane.b32.xlu0 %v2177, 124
        %v4189 = vpop.permute.xlu0 %4188
        %4190 = vrot.lane.b32.xlu0 %v2180, 124
        %v4191 = vpop.permute.xlu0 %4190
        %4192 = vrot.lane.b32.xlu0 %v2183, 124
        %v4193 = vpop.permute.xlu0 %4192
        %4194 = vrot.lane.b32.xlu0 %v2186, 124
        %v4195 = vpop.permute.xlu0 %4194
        %4196 = vrot.lane.b32.xlu0 %v2189, 124
        %v4197 = vpop.permute.xlu0 %4196
        %4198 = vrot.lane.b32.xlu0 %v2192, 124
        %v4199 = vpop.permute.xlu0 %4198
        %4200 = vrot.lane.b32.xlu0 %v2195, 124
        %v4201 = vpop.permute.xlu0 %4200
        %4202 = vrot.lane.b32.xlu0 %v2198, 124
        %v4203 = vpop.permute.xlu0 %4202
        %4204 = vrot.lane.b32.xlu0 %v2201, 124
        %v4205 = vpop.permute.xlu0 %4204
        %4206 = vrot.lane.b32.xlu0 %v2204, 124
        %v4207 = vpop.permute.xlu0 %4206
        %4208 = vrot.lane.b32.xlu0 %v3152, 124
        %v4209 = vpop.permute.xlu0 %4208
        %v4210 = vsel %vm546, %v3939, %v3941
        %v4211 = vsel %vm546, %v3941, %v3943
        %v4212 = vsel %vm546, %v3943, %v3945
        %v4213 = vsel %vm546, %v3945, %v3947
        %v4214 = vsel %vm546, %v3947, %v3949
        %v4215 = vsel %vm546, %v3949, %v3951
        %v4216 = vsel %vm546, %v3951, %v3953
        %v4217 = vsel %vm546, %v3953, %v3955
        %v4218 = vsel %vm546, %v3955, %v3957
        %v4219 = vsel %vm546, %v3957, %v3959
        %v4220 = vsel %vm546, %v3959, %v3961
        %v4221 = vsel %vm546, %v3961, %v3963
        %v4222 = vsel %vm546, %v3963, %v3965
        %v4223 = vsel %vm546, %v3965, %v3967
        %v4224 = vsel %vm546, %v3967, %v3969
        %v4225 = vsel %vm546, %v3969, %v3971
        %v4226 = vsel %vm546, %v3973, %v3975
        %v4227 = vsel %vm546, %v3975, %v3977
        %v4228 = vsel %vm546, %v3977, %v3979
        %v4229 = vsel %vm546, %v3979, %v3981
        %v4230 = vsel %vm546, %v3981, %v3983
        %v4231 = vsel %vm546, %v3983, %v3985
        %v4232 = vsel %vm546, %v3985, %v3987
        %v4233 = vsel %vm546, %v3987, %v3989
        %v4234 = vsel %vm546, %v3989, %v3991
        %v4235 = vsel %vm546, %v3991, %v3993
        %v4236 = vsel %vm546, %v3993, %v3995
        %v4237 = vsel %vm546, %v3995, %v3997
        %v4238 = vsel %vm546, %v3997, %v3999
        %v4239 = vsel %vm546, %v3999, %v4001
        %v4240 = vsel %vm546, %v4001, %v4003
        %v4241 = vsel %vm546, %v4003, %v4005
        %v4242 = vsel %vm546, %v4007, %v4009
        %v4243 = vsel %vm546, %v4009, %v4011
        %v4244 = vsel %vm546, %v4011, %v4013
        %v4245 = vsel %vm546, %v4013, %v4015
        %v4246 = vsel %vm546, %v4015, %v4017
        %v4247 = vsel %vm546, %v4017, %v4019
        %v4248 = vsel %vm546, %v4019, %v4021
        %v4249 = vsel %vm546, %v4021, %v4023
        %v4250 = vsel %vm546, %v4023, %v4025
        %v4251 = vsel %vm546, %v4025, %v4027
        %v4252 = vsel %vm546, %v4027, %v4029
        %v4253 = vsel %vm546, %v4029, %v4031
        %v4254 = vsel %vm546, %v4031, %v4033
        %v4255 = vsel %vm546, %v4033, %v4035
        %v4256 = vsel %vm546, %v4035, %v4037
        %v4257 = vsel %vm546, %v4037, %v4039
        %v4258 = vsel %vm546, %v4041, %v4043
        %v4259 = vsel %vm546, %v4043, %v4045
        %v4260 = vsel %vm546, %v4045, %v4047
        %v4261 = vsel %vm546, %v4047, %v4049
        %v4262 = vsel %vm546, %v4049, %v4051
        %v4263 = vsel %vm546, %v4051, %v4053
        %v4264 = vsel %vm546, %v4053, %v4055
        %v4265 = vsel %vm546, %v4055, %v4057
        %v4266 = vsel %vm546, %v4057, %v4059
        %v4267 = vsel %vm546, %v4059, %v4061
        %v4268 = vsel %vm546, %v4061, %v4063
        %v4269 = vsel %vm546, %v4063, %v4065
        %v4270 = vsel %vm546, %v4065, %v4067
        %v4271 = vsel %vm546, %v4067, %v4069
        %v4272 = vsel %vm546, %v4069, %v4071
        %v4273 = vsel %vm546, %v4071, %v4073
        %v4274 = vsel %vm546, %v4075, %v4077
        %v4275 = vsel %vm546, %v4077, %v4079
        %v4276 = vsel %vm546, %v4079, %v4081
        %v4277 = vsel %vm546, %v4081, %v4083
        %v4278 = vsel %vm546, %v4083, %v4085
        %v4279 = vsel %vm546, %v4085, %v4087
        %v4280 = vsel %vm546, %v4087, %v4089
        %v4281 = vsel %vm546, %v4089, %v4091
        %v4282 = vsel %vm546, %v4091, %v4093
        %v4283 = vsel %vm546, %v4093, %v4095
        %v4284 = vsel %vm546, %v4095, %v4097
        %v4285 = vsel %vm546, %v4097, %v4099
        %v4286 = vsel %vm546, %v4099, %v4101
        %v4287 = vsel %vm546, %v4101, %v4103
        %v4288 = vsel %vm546, %v4103, %v4105
        %v4289 = vsel %vm546, %v4105, %v4107
        %v4290 = vsel %vm546, %v4109, %v4111
        %v4291 = vsel %vm546, %v4111, %v4113
        %v4292 = vsel %vm546, %v4113, %v4115
        %v4293 = vsel %vm546, %v4115, %v4117
        %v4294 = vsel %vm546, %v4117, %v4119
        %v4295 = vsel %vm546, %v4119, %v4121
        %v4296 = vsel %vm546, %v4121, %v4123
        %v4297 = vsel %vm546, %v4123, %v4125
        %v4298 = vsel %vm546, %v4125, %v4127
        %v4299 = vsel %vm546, %v4127, %v4129
        %v4300 = vsel %vm546, %v4129, %v4131
        %v4301 = vsel %vm546, %v4131, %v4133
        %v4302 = vsel %vm546, %v4133, %v4135
        %v4303 = vsel %vm546, %v4135, %v4137
        %v4304 = vsel %vm546, %v4137, %v4139
        %v4305 = vsel %vm546, %v4139, %v4141
        %v4306 = vsel %vm546, %v4143, %v4145
        %v4307 = vsel %vm546, %v4145, %v4147
        %v4308 = vsel %vm546, %v4147, %v4149
        %v4309 = vsel %vm546, %v4149, %v4151
        %v4310 = vsel %vm546, %v4151, %v4153
        %v4311 = vsel %vm546, %v4153, %v4155
        %v4312 = vsel %vm546, %v4155, %v4157
        %v4313 = vsel %vm546, %v4157, %v4159
        %v4314 = vsel %vm546, %v4159, %v4161
        %v4315 = vsel %vm546, %v4161, %v4163
        %v4316 = vsel %vm546, %v4163, %v4165
        %v4317 = vsel %vm546, %v4165, %v4167
        %v4318 = vsel %vm546, %v4167, %v4169
        %v4319 = vsel %vm546, %v4169, %v4171
        %v4320 = vsel %vm546, %v4171, %v4173
        %v4321 = vsel %vm546, %v4173, %v4175
        %v4322 = vsel %vm546, %v4177, %v4179
        %v4323 = vsel %vm546, %v4179, %v4181
        %v4324 = vsel %vm546, %v4181, %v4183
        %v4325 = vsel %vm546, %v4183, %v4185
        %v4326 = vsel %vm546, %v4185, %v4187
        %v4327 = vsel %vm546, %v4187, %v4189
        %v4328 = vsel %vm546, %v4189, %v4191
        %v4329 = vsel %vm546, %v4191, %v4193
        %v4330 = vsel %vm546, %v4193, %v4195
        %v4331 = vsel %vm546, %v4195, %v4197
        %v4332 = vsel %vm546, %v4197, %v4199
        %v4333 = vsel %vm546, %v4199, %v4201
        %v4334 = vsel %vm546, %v4201, %v4203
        %v4335 = vsel %vm546, %v4203, %v4205
        %v4336 = vsel %vm546, %v4205, %v4207
        %v4337 = vsel %vm546, %v4207, %v4209
        %4466 = vrot.lane.b32.xlu0 %v1853, 58
        %v4467 = vpop.permute.xlu0 %4466
        %4468 = vrot.lane.b32.xlu0 %v1854, 58
        %v4469 = vpop.permute.xlu0 %4468
        %4470 = vrot.lane.b32.xlu0 %v1855, 58
        %v4471 = vpop.permute.xlu0 %4470
        %4472 = vrot.lane.b32.xlu0 %v1856, 58
        %v4473 = vpop.permute.xlu0 %4472
        %4474 = vrot.lane.b32.xlu0 %v1857, 58
        %v4475 = vpop.permute.xlu0 %4474
        %4476 = vrot.lane.b32.xlu0 %v1858, 58
        %v4477 = vpop.permute.xlu0 %4476
        %4478 = vrot.lane.b32.xlu0 %v1859, 58
        %v4479 = vpop.permute.xlu0 %4478
        %4480 = vrot.lane.b32.xlu0 %v1860, 58
        %v4481 = vpop.permute.xlu0 %4480
        %4482 = vrot.lane.b32.xlu0 %v1861, 58
        %v4483 = vpop.permute.xlu0 %4482
        %4484 = vrot.lane.b32.xlu0 %v1862, 58
        %v4485 = vpop.permute.xlu0 %4484
        %4486 = vrot.lane.b32.xlu0 %v1863, 58
        %v4487 = vpop.permute.xlu0 %4486
        %4488 = vrot.lane.b32.xlu0 %v1864, 58
        %v4489 = vpop.permute.xlu0 %4488
        %4490 = vrot.lane.b32.xlu0 %v1865, 58
        %v4491 = vpop.permute.xlu0 %4490
        %4492 = vrot.lane.b32.xlu0 %v1866, 58
        %v4493 = vpop.permute.xlu0 %4492
        %4494 = vrot.lane.b32.xlu0 %v1867, 58
        %v4495 = vpop.permute.xlu0 %4494
        %4496 = vrot.lane.b32.xlu0 %v1868, 58
        %v4497 = vpop.permute.xlu0 %4496
        %4498 = vrot.lane.b32.xlu0 %v1869, 58
        %v4499 = vpop.permute.xlu0 %4498
        %vm4500 = vcmask 474112
        %v4501 = vsel %vm4500, %v4467, %v4469
        %v4502 = vsel %vm4500, %v4469, %v4471
        %v4503 = vsel %vm4500, %v4471, %v4473
        %v4504 = vsel %vm4500, %v4473, %v4475
        %v4505 = vsel %vm4500, %v4475, %v4477
        %v4506 = vsel %vm4500, %v4477, %v4479
        %v4507 = vsel %vm4500, %v4479, %v4481
        %v4508 = vsel %vm4500, %v4481, %v4483
        %v4509 = vsel %vm4500, %v4483, %v4485
        %v4510 = vsel %vm4500, %v4485, %v4487
        %v4511 = vsel %vm4500, %v4487, %v4489
        %v4512 = vsel %vm4500, %v4489, %v4491
        %v4513 = vsel %vm4500, %v4491, %v4493
        %v4514 = vsel %vm4500, %v4493, %v4495
        %v4515 = vsel %vm4500, %v4495, %v4497
        %v4516 = vsel %vm4500, %v4497, %v4499
        %v4517 = vld [vmem:[%s1] sm:$0xff]
        %v4518 = vld [vmem:[%s1 + $0x8] sm:$0xff]
        %v4519 = vld [vmem:[%s1 + $0x10] sm:$0xff]
        %v4520 = vld [vmem:[%s1 + $0x18] sm:$0xff]
        %v4521 = vld [vmem:[%s1 + $0x20] sm:$0xff]
        %v4522 = vld [vmem:[%s1 + $0x28] sm:$0xff]
        %v4523 = vld [vmem:[%s1 + $0x30] sm:$0xff]
        %v4524 = vld [vmem:[%s1 + $0x38] sm:$0xff]
        %v4525 = vld [vmem:[%s2] sm:$0xff]
        %v4526 = vld [vmem:[%s2 + $0x8] sm:$0xff]
        %v4527 = vld [vmem:[%s2 + $0x10] sm:$0xff]
        %v4528 = vld [vmem:[%s2 + $0x18] sm:$0xff]
        %4530 = vset.pattern.permute.xlu0 0
        %4531 = vperm.xlu0 %4530, %v4525
        %v4532 = vpop.permute.xlu0 %4531
        %4535 = vset.pattern.permute.xlu0 0
        %4536 = vperm.xlu0 %4535, %v4526
        %v4537 = vpop.permute.xlu0 %4536
        %4540 = vset.pattern.permute.xlu0 0
        %4541 = vperm.xlu0 %4540, %v4527
        %v4542 = vpop.permute.xlu0 %4541
        %4545 = vset.pattern.permute.xlu0 0
        %4546 = vperm.xlu0 %4545, %v4528
        %v4547 = vpop.permute.xlu0 %4546
        %v4557 = vunpack.c.l.b16 %v4517
        %v4558 = vunpack.c.h.b16 %v4517
        %v4559 = vunpack.c.l.b16 %v4518
        %v4560 = vunpack.c.h.b16 %v4518
        %v4561 = vunpack.c.l.b16 %v4519
        %v4562 = vunpack.c.h.b16 %v4519
        %v4563 = vunpack.c.l.b16 %v4520
        %v4564 = vunpack.c.h.b16 %v4520
        %v4565 = vunpack.c.l.b16 %v4521
        %v4566 = vunpack.c.h.b16 %v4521
        %v4567 = vunpack.c.l.b16 %v4522
        %v4568 = vunpack.c.h.b16 %v4522
        %v4569 = vunpack.c.l.b16 %v4523
        %v4570 = vunpack.c.h.b16 %v4523
        %v4571 = vunpack.c.l.b16 %v4524
        %v4572 = vunpack.c.h.b16 %v4524
        %v4573 = vpack.c.b16 %v4561, %v4557
        %v4574 = vpack.c.b16 %v4562, %v4558
        %v4575 = vpack.c.b16 %v4563, %v4559
        %v4576 = vpack.c.b16 %v4564, %v4560
        %v4577 = vpack.c.b16 %v4569, %v4565
        %v4578 = vpack.c.b16 %v4570, %v4566
        %v4579 = vpack.c.b16 %v4571, %v4567
        %v4580 = vpack.c.b16 %v4572, %v4568
        %vm4587 = vcmask 64512
        %v4589 = vsel %vm4587, %v4576, 0
        %v4592 = vsel %vm4587, %v4580, 0
        %v4595 = vsel %vm1124, %v4501, 0
        %v4598 = vsel %vm1124, %v4502, 0
        %v4601 = vsel %vm1124, %v4503, 0
        %v4604 = vsel %vm1124, %v4504, 0
        %v4607 = vsel %vm1124, %v4505, 0
        %v4610 = vsel %vm1124, %v4506, 0
        %v4613 = vsel %vm1124, %v4507, 0
        %v4616 = vsel %vm1124, %v4508, 0
        %v4619 = vsel %vm1124, %v4509, 0
        %v4622 = vsel %vm1124, %v4510, 0
        %v4625 = vsel %vm1124, %v4511, 0
        %v4628 = vsel %vm1124, %v4512, 0
        %v4631 = vsel %vm1124, %v4513, 0
        %v4634 = vsel %vm1124, %v4514, 0
        %v4637 = vsel %vm1124, %v4515, 0
        %v4640 = vsel %vm1124, %v4516, 0
        %4642 = vmatprep.subr.bf16.mxu0 %v1131
        %4643 = vmatpush1.bf16.msra.mxu0 %v1127
        %4644 = vmatprep.subr.bf16.mxu0 %v1195
        %4645 = vmatpush1.bf16.msra.mxu0 %v1191
        %4646 = vmatprep.subr.bf16.mxu0 %v1259
        %4647 = vmatpush1.bf16.msra.mxu0 %v1255
        %4648 = vmatprep.subr.bf16.mxu0 %v1323
        %4649 = vmatpush1.bf16.msra.mxu0 %v1319
        %4650 = vmatprep.subr.bf16.mxu0 %v1387
        %4651 = vmatpush1.bf16.msra.mxu0 %v1383
        %4652 = vmatprep.subr.bf16.mxu0 %v1451
        %4653 = vmatpush1.bf16.msra.mxu0 %v1447
        %4654 = vmatprep.subr.bf16.mxu0 %v1515
        %4655 = vmatpush1.bf16.msra.mxu0 %v1511
        %4656 = vmatprep.subr.bf16.mxu0 %v1579
        %4657 = vmatpush1.bf16.msra.mxu0 %v1575
        %4658 = vmatprep.subr.bf16.mxu0 %v3563
        %4659 = vmatpush1.bf16.msra.mxu0 %v3562
        %4660 = vmatprep.subr.bf16.mxu0 %v3579
        %4661 = vmatpush1.bf16.msra.mxu0 %v3578
        %4662 = vmatprep.subr.bf16.mxu0 %v3595
        %4663 = vmatpush1.bf16.msra.mxu0 %v3594
        %4664 = vmatprep.subr.bf16.mxu0 %v3611
        %4665 = vmatpush1.bf16.msra.mxu0 %v3610
        %4666 = vmatprep.subr.bf16.mxu0 %v3627
        %4667 = vmatpush1.bf16.msra.mxu0 %v3626
        %4668 = vmatprep.subr.bf16.mxu0 %v3643
        %4669 = vmatpush1.bf16.msra.mxu0 %v3642
        %4670 = vmatprep.subr.bf16.mxu0 %v3659
        %4671 = vmatpush1.bf16.msra.mxu0 %v3658
        %4672 = vmatprep.subr.bf16.mxu0 %v3675
        %4673 = vmatpush1.bf16.msra.mxu0 %v3674
        %4674 = vmatprep.mubr.bf16.mxu0 %v4574
        %4675 = vmatmul.mubr.bf16.gmra.mrb[0].mxu0 %v4573
        %v4676 = vpop.f32.mrb[0].mxu0
        %v4677 = vadd.f32 %v4532, %v4676
        %v4678 = vpop.f32.mrb[0].mxu0
        %v4679 = vadd.f32 %v4532, %v4678
        %v4680 = vpop.f32.mrb[0].mxu0
        %v4681 = vadd.f32 %v4537, %v4680
        %v4682 = vpop.f32.mrb[0].mxu0
        %v4683 = vadd.f32 %v4537, %v4682
        %4684 = vmatprep.mubr.bf16.mxu0 %v4578
        %4685 = vmatmul.mubr.bf16.gmra.mrb[0].mxu0 %v4577
        %v4686 = vpop.f32.mrb[0].mxu0
        %v4687 = vadd.f32 %v4542, %v4686
        %v4688 = vpop.f32.mrb[0].mxu0
        %v4689 = vadd.f32 %v4542, %v4688
        %v4690 = vpop.f32.mrb[0].mxu0
        %v4691 = vadd.f32 %v4547, %v4690
        %v4692 = vpop.f32.mrb[0].mxu0
        %v4693 = vadd.f32 %v4547, %v4692
        %4694 = vdwg.mxu0
        %4695 = vmatprep.subr.bf16.mxu0 %v4211
        %4696 = vmatpush1.bf16.msra.mxu0 %v4210
        %4697 = vmatprep.subr.bf16.mxu0 %v4227
        %4698 = vmatpush1.bf16.msra.mxu0 %v4226
        %4699 = vmatprep.subr.bf16.mxu0 %v4243
        %4700 = vmatpush1.bf16.msra.mxu0 %v4242
        %4701 = vmatprep.subr.bf16.mxu0 %v4259
        %4702 = vmatpush1.bf16.msra.mxu0 %v4258
        %4703 = vmatprep.subr.bf16.mxu0 %v4275
        %4704 = vmatpush1.bf16.msra.mxu0 %v4274
        %4705 = vmatprep.subr.bf16.mxu0 %v4291
        %4706 = vmatpush1.bf16.msra.mxu0 %v4290
        %4707 = vmatprep.subr.bf16.mxu0 %v4307
        %4708 = vmatpush1.bf16.msra.mxu0 %v4306
        %4709 = vmatprep.subr.bf16.mxu0 %v4323
        %4710 = vmatpush1.bf16.msra.mxu0 %v4322
        %4711 = vmatprep.subr.bf16.mxu0 %v4598
        %4712 = vmatpush1.bf16.msra.mxu0 %v4595
        %4713 = vmatprep.subr.bf16.mxu0 0
        %4714 = vmatpush1.bf16.msra.mxu0 0
        %4715 = vmatprep.subr.bf16.mxu0 0
        %4716 = vmatpush1.bf16.msra.mxu0 0
        %4717 = vmatprep.subr.bf16.mxu0 0
        %4718 = vmatpush1.bf16.msra.mxu0 0
        %4719 = vmatprep.subr.bf16.mxu0 0
        %4720 = vmatpush1.bf16.msra.mxu0 0
        %4721 = vmatprep.subr.bf16.mxu0 0
        %4722 = vmatpush1.bf16.msra.mxu0 0
        %4723 = vmatprep.subr.bf16.mxu0 0
        %4724 = vmatpush1.bf16.msra.mxu0 0
        %4725 = vmatprep.subr.bf16.mxu0 0
        %4726 = vmatpush1.bf16.msra.mxu0 0
        %4727 = vmatprep.mubr.bf16.mxu0 %v4589
        %4728 = vmatmul.mubr.bf16.gmra.mrb[0].mxu0 %v4575
        %v4729 = vpop.f32.mrb[0].mxu0
        %v4730 = vadd.f32 %v4677, %v4729
        %v4731 = vpop.f32.mrb[0].mxu0
        %v4732 = vadd.f32 %v4679, %v4731
        %v4733 = vpop.f32.mrb[0].mxu0
        %v4734 = vadd.f32 %v4681, %v4733
        %v4735 = vpop.f32.mrb[0].mxu0
        %v4736 = vadd.f32 %v4683, %v4735
        %4737 = vmatprep.mubr.bf16.mxu0 %v4592
        %4738 = vmatmul.mubr.bf16.gmra.mrb[0].mxu0 %v4579
        %v4739 = vpop.f32.mrb[0].mxu0
        %v4740 = vadd.f32 %v4687, %v4739
        %v4741 = vpop.f32.mrb[0].mxu0
        %v4742 = vadd.f32 %v4689, %v4741
        %v4743 = vpop.f32.mrb[0].mxu0
        %v4744 = vadd.f32 %v4691, %v4743
        %v4745 = vpop.f32.mrb[0].mxu0
        %v4746 = vadd.f32 %v4693, %v4745
        %4747 = vdwg.mxu0
        %4748 = vmatprep.subr.bf16.mxu0 %v1139
        %4749 = vmatpush1.bf16.msra.mxu0 %v1135
        %4750 = vmatprep.subr.bf16.mxu0 %v1203
        %4751 = vmatpush1.bf16.msra.mxu0 %v1199
        %4752 = vmatprep.subr.bf16.mxu0 %v1267
        %4753 = vmatpush1.bf16.msra.mxu0 %v1263
        %4754 = vmatprep.subr.bf16.mxu0 %v1331
        %4755 = vmatpush1.bf16.msra.mxu0 %v1327
        %4756 = vmatprep.subr.bf16.mxu0 %v1395
        %4757 = vmatpush1.bf16.msra.mxu0 %v1391
        %4758 = vmatprep.subr.bf16.mxu0 %v1459
        %4759 = vmatpush1.bf16.msra.mxu0 %v1455
        %4760 = vmatprep.subr.bf16.mxu0 %v1523
        %4761 = vmatpush1.bf16.msra.mxu0 %v1519
        %4762 = vmatprep.subr.bf16.mxu0 %v1587
        %4763 = vmatpush1.bf16.msra.mxu0 %v1583
        %4764 = vmatprep.subr.bf16.mxu0 %v3565
        %4765 = vmatpush1.bf16.msra.mxu0 %v3564
        %4766 = vmatprep.subr.bf16.mxu0 %v3581
        %4767 = vmatpush1.bf16.msra.mxu0 %v3580
        %4768 = vmatprep.subr.bf16.mxu0 %v3597
        %4769 = vmatpush1.bf16.msra.mxu0 %v3596
        %4770 = vmatprep.subr.bf16.mxu0 %v3613
        %4771 = vmatpush1.bf16.msra.mxu0 %v3612
        %4772 = vmatprep.subr.bf16.mxu0 %v3629
        %4773 = vmatpush1.bf16.msra.mxu0 %v3628
        %4774 = vmatprep.subr.bf16.mxu0 %v3645
        %4775 = vmatpush1.bf16.msra.mxu0 %v3644
        %4776 = vmatprep.subr.bf16.mxu0 %v3661
        %4777 = vmatpush1.bf16.msra.mxu0 %v3660
        %4778 = vmatprep.subr.bf16.mxu0 %v3677
        %4779 = vmatpush1.bf16.msra.mxu0 %v3676
        %4780 = vmatprep.mubr.bf16.mxu0 %v4574
        %4781 = vmatmul.mubr.bf16.gmra.mrb[0].mxu0 %v4573
        %v4782 = vpop.f32.mrb[0].mxu0
        %v4783 = vadd.f32 %v4532, %v4782
        %v4784 = vpop.f32.mrb[0].mxu0
        %v4785 = vadd.f32 %v4532, %v4784
        %v4786 = vpop.f32.mrb[0].mxu0
        %v4787 = vadd.f32 %v4537, %v4786
        %v4788 = vpop.f32.mrb[0].mxu0
        %v4789 = vadd.f32 %v4537, %v4788
        %4790 = vmatprep.mubr.bf16.mxu0 %v4578
        %4791 = vmatmul.mubr.bf16.gmra.mrb[0].mxu0 %v4577
        %v4792 = vpop.f32.mrb[0].mxu0
        %v4793 = vadd.f32 %v4542, %v4792
        %v4794 = vpop.f32.mrb[0].mxu0
        %v4795 = vadd.f32 %v4542, %v4794
        %v4796 = vpop.f32.mrb[0].mxu0
        %v4797 = vadd.f32 %v4547, %v4796
        %v4798 = vpop.f32.mrb[0].mxu0
        %v4799 = vadd.f32 %v4547, %v4798
        %4800 = vdwg.mxu0
        %4801 = vmatprep.subr.bf16.mxu0 %v4213
        %4802 = vmatpush1.bf16.msra.mxu0 %v4212
        %4803 = vmatprep.subr.bf16.mxu0 %v4229
        %4804 = vmatpush1.bf16.msra.mxu0 %v4228
        %4805 = vmatprep.subr.bf16.mxu0 %v4245
        %4806 = vmatpush1.bf16.msra.mxu0 %v4244
        %4807 = vmatprep.subr.bf16.mxu0 %v4261
        %4808 = vmatpush1.bf16.msra.mxu0 %v4260
        %4809 = vmatprep.subr.bf16.mxu0 %v4277
        %4810 = vmatpush1.bf16.msra.mxu0 %v4276
        %4811 = vmatprep.subr.bf16.mxu0 %v4293
        %4812 = vmatpush1.bf16.msra.mxu0 %v4292
        %4813 = vmatprep.subr.bf16.mxu0 %v4309
        %4814 = vmatpush1.bf16.msra.mxu0 %v4308
        %4815 = vmatprep.subr.bf16.mxu0 %v4325
        %4816 = vmatpush1.bf16.msra.mxu0 %v4324
        %4817 = vmatprep.subr.bf16.mxu0 %v4604
        %4818 = vmatpush1.bf16.msra.mxu0 %v4601
        %4819 = vmatprep.subr.bf16.mxu0 0
        %4820 = vmatpush1.bf16.msra.mxu0 0
        %4821 = vmatprep.subr.bf16.mxu0 0
        %4822 = vmatpush1.bf16.msra.mxu0 0
        %4823 = vmatprep.subr.bf16.mxu0 0
        %4824 = vmatpush1.bf16.msra.mxu0 0
        %4825 = vmatprep.subr.bf16.mxu0 0
        %4826 = vmatpush1.bf16.msra.mxu0 0
        %4827 = vmatprep.subr.bf16.mxu0 0
        %4828 = vmatpush1.bf16.msra.mxu0 0
        %4829 = vmatprep.subr.bf16.mxu0 0
        %4830 = vmatpush1.bf16.msra.mxu0 0
        %4831 = vmatprep.subr.bf16.mxu0 0
        %4832 = vmatpush1.bf16.msra.mxu0 0
        %4833 = vmatprep.mubr.bf16.mxu0 %v4589
        %4834 = vmatmul.mubr.bf16.gmra.mrb[0].mxu0 %v4575
        %v4835 = vpop.f32.mrb[0].mxu0
        %v4836 = vadd.f32 %v4783, %v4835
        %v4837 = vpop.f32.mrb[0].mxu0
        %v4838 = vadd.f32 %v4785, %v4837
        %v4839 = vpop.f32.mrb[0].mxu0
        %v4840 = vadd.f32 %v4787, %v4839
        %v4841 = vpop.f32.mrb[0].mxu0
        %v4842 = vadd.f32 %v4789, %v4841
        %4843 = vmatprep.mubr.bf16.mxu0 %v4592
        %4844 = vmatmul.mubr.bf16.gmra.mrb[0].mxu0 %v4579
        %v4845 = vpop.f32.mrb[0].mxu0
        %v4846 = vadd.f32 %v4793, %v4845
        %v4847 = vpop.f32.mrb[0].mxu0
        %v4848 = vadd.f32 %v4795, %v4847
        %v4849 = vpop.f32.mrb[0].mxu0
        %v4850 = vadd.f32 %v4797, %v4849
        %v4851 = vpop.f32.mrb[0].mxu0
        %v4852 = vadd.f32 %v4799, %v4851
        %4853 = vdwg.mxu0
        %4854 = vmatprep.subr.bf16.mxu0 %v1147
        %4855 = vmatpush1.bf16.msra.mxu0 %v1143
        %4856 = vmatprep.subr.bf16.mxu0 %v1211
        %4857 = vmatpush1.bf16.msra.mxu0 %v1207
        %4858 = vmatprep.subr.bf16.mxu0 %v1275
        %4859 = vmatpush1.bf16.msra.mxu0 %v1271
        %4860 = vmatprep.subr.bf16.mxu0 %v1339
        %4861 = vmatpush1.bf16.msra.mxu0 %v1335
        %4862 = vmatprep.subr.bf16.mxu0 %v1403
        %4863 = vmatpush1.bf16.msra.mxu0 %v1399
        %4864 = vmatprep.subr.bf16.mxu0 %v1467
        %4865 = vmatpush1.bf16.msra.mxu0 %v1463
        %4866 = vmatprep.subr.bf16.mxu0 %v1531
        %4867 = vmatpush1.bf16.msra.mxu0 %v1527
        %4868 = vmatprep.subr.bf16.mxu0 %v1595
        %4869 = vmatpush1.bf16.msra.mxu0 %v1591
        %4870 = vmatprep.subr.bf16.mxu0 %v3567
        %4871 = vmatpush1.bf16.msra.mxu0 %v3566
        %4872 = vmatprep.subr.bf16.mxu0 %v3583
        %4873 = vmatpush1.bf16.msra.mxu0 %v3582
        %4874 = vmatprep.subr.bf16.mxu0 %v3599
        %4875 = vmatpush1.bf16.msra.mxu0 %v3598
        %4876 = vmatprep.subr.bf16.mxu0 %v3615
        %4877 = vmatpush1.bf16.msra.mxu0 %v3614
        %4878 = vmatprep.subr.bf16.mxu0 %v3631
        %4879 = vmatpush1.bf16.msra.mxu0 %v3630
        %4880 = vmatprep.subr.bf16.mxu0 %v3647
        %4881 = vmatpush1.bf16.msra.mxu0 %v3646
        %4882 = vmatprep.subr.bf16.mxu0 %v3663
        %4883 = vmatpush1.bf16.msra.mxu0 %v3662
        %4884 = vmatprep.subr.bf16.mxu0 %v3679
        %4885 = vmatpush1.bf16.msra.mxu0 %v3678
        %4886 = vmatprep.mubr.bf16.mxu0 %v4574
        %4887 = vmatmul.mubr.bf16.gmra.mrb[0].mxu0 %v4573
        %v4888 = vpop.f32.mrb[0].mxu0
        %v4889 = vadd.f32 %v4532, %v4888
        %v4890 = vpop.f32.mrb[0].mxu0
        %v4891 = vadd.f32 %v4532, %v4890
        %v4892 = vpop.f32.mrb[0].mxu0
        %v4893 = vadd.f32 %v4537, %v4892
        %v4894 = vpop.f32.mrb[0].mxu0
        %v4895 = vadd.f32 %v4537, %v4894
        %4896 = vmatprep.mubr.bf16.mxu0 %v4578
        %4897 = vmatmul.mubr.bf16.gmra.mrb[0].mxu0 %v4577
        %v4898 = vpop.f32.mrb[0].mxu0
        %v4899 = vadd.f32 %v4542, %v4898
        %v4900 = vpop.f32.mrb[0].mxu0
        %v4901 = vadd.f32 %v4542, %v4900
        %v4902 = vpop.f32.mrb[0].mxu0
        %v4903 = vadd.f32 %v4547, %v4902
        %v4904 = vpop.f32.mrb[0].mxu0
        %v4905 = vadd.f32 %v4547, %v4904
        %4906 = vdwg.mxu0
        %4907 = vmatprep.subr.bf16.mxu0 %v4215
        %4908 = vmatpush1.bf16.msra.mxu0 %v4214
        %4909 = vmatprep.subr.bf16.mxu0 %v4231
        %4910 = vmatpush1.bf16.msra.mxu0 %v4230
        %4911 = vmatprep.subr.bf16.mxu0 %v4247
        %4912 = vmatpush1.bf16.msra.mxu0 %v4246
        %4913 = vmatprep.subr.bf16.mxu0 %v4263
        %4914 = vmatpush1.bf16.msra.mxu0 %v4262
        %4915 = vmatprep.subr.bf16.mxu0 %v4279
        %4916 = vmatpush1.bf16.msra.mxu0 %v4278
        %4917 = vmatprep.subr.bf16.mxu0 %v4295
        %4918 = vmatpush1.bf16.msra.mxu0 %v4294
        %4919 = vmatprep.subr.bf16.mxu0 %v4311
        %4920 = vmatpush1.bf16.msra.mxu0 %v4310
        %4921 = vmatprep.subr.bf16.mxu0 %v4327
        %4922 = vmatpush1.bf16.msra.mxu0 %v4326
        %4923 = vmatprep.subr.bf16.mxu0 %v4610
        %4924 = vmatpush1.bf16.msra.mxu0 %v4607
        %4925 = vmatprep.subr.bf16.mxu0 0
        %4926 = vmatpush1.bf16.msra.mxu0 0
        %4927 = vmatprep.subr.bf16.mxu0 0
        %4928 = vmatpush1.bf16.msra.mxu0 0
        %4929 = vmatprep.subr.bf16.mxu0 0
        %4930 = vmatpush1.bf16.msra.mxu0 0
        %4931 = vmatprep.subr.bf16.mxu0 0
        %4932 = vmatpush1.bf16.msra.mxu0 0
        %4933 = vmatprep.subr.bf16.mxu0 0
        %4934 = vmatpush1.bf16.msra.mxu0 0
        %4935 = vmatprep.subr.bf16.mxu0 0
        %4936 = vmatpush1.bf16.msra.mxu0 0
        %4937 = vmatprep.subr.bf16.mxu0 0
        %4938 = vmatpush1.bf16.msra.mxu0 0
        %4939 = vmatprep.mubr.bf16.mxu0 %v4589
        %4940 = vmatmul.mubr.bf16.gmra.mrb[0].mxu0 %v4575
        %v4941 = vpop.f32.mrb[0].mxu0
        %v4942 = vadd.f32 %v4889, %v4941
        %v4943 = vpop.f32.mrb[0].mxu0
        %v4944 = vadd.f32 %v4891, %v4943
        %v4945 = vpop.f32.mrb[0].mxu0
        %v4946 = vadd.f32 %v4893, %v4945
        %v4947 = vpop.f32.mrb[0].mxu0
        %v4948 = vadd.f32 %v4895, %v4947
        %4949 = vmatprep.mubr.bf16.mxu0 %v4592
        %4950 = vmatmul.mubr.bf16.gmra.mrb[0].mxu0 %v4579
        %v4951 = vpop.f32.mrb[0].mxu0
        %v4952 = vadd.f32 %v4899, %v4951
        %v4953 = vpop.f32.mrb[0].mxu0
        %v4954 = vadd.f32 %v4901, %v4953
        %v4955 = vpop.f32.mrb[0].mxu0
        %v4956 = vadd.f32 %v4903, %v4955
        %v4957 = vpop.f32.mrb[0].mxu0
        %v4958 = vadd.f32 %v4905, %v4957
        %4959 = vdwg.mxu0
        %4960 = vmatprep.subr.bf16.mxu0 %v1155
        %4961 = vmatpush1.bf16.msra.mxu0 %v1151
        %4962 = vmatprep.subr.bf16.mxu0 %v1219
        %4963 = vmatpush1.bf16.msra.mxu0 %v1215
        %4964 = vmatprep.subr.bf16.mxu0 %v1283
        %4965 = vmatpush1.bf16.msra.mxu0 %v1279
        %4966 = vmatprep.subr.bf16.mxu0 %v1347
        %4967 = vmatpush1.bf16.msra.mxu0 %v1343
        %4968 = vmatprep.subr.bf16.mxu0 %v1411
        %4969 = vmatpush1.bf16.msra.mxu0 %v1407
        %4970 = vmatprep.subr.bf16.mxu0 %v1475
        %4971 = vmatpush1.bf16.msra.mxu0 %v1471
        %4972 = vmatprep.subr.bf16.mxu0 %v1539
        %4973 = vmatpush1.bf16.msra.mxu0 %v1535
        %4974 = vmatprep.subr.bf16.mxu0 %v1603
        %4975 = vmatpush1.bf16.msra.mxu0 %v1599
        %4976 = vmatprep.subr.bf16.mxu0 %v3569
        %4977 = vmatpush1.bf16.msra.mxu0 %v3568
        %4978 = vmatprep.subr.bf16.mxu0 %v3585
        %4979 = vmatpush1.bf16.msra.mxu0 %v3584
        %4980 = vmatprep.subr.bf16.mxu0 %v3601
        %4981 = vmatpush1.bf16.msra.mxu0 %v3600
        %4982 = vmatprep.subr.bf16.mxu0 %v3617
        %4983 = vmatpush1.bf16.msra.mxu0 %v3616
        %4984 = vmatprep.subr.bf16.mxu0 %v3633
        %4985 = vmatpush1.bf16.msra.mxu0 %v3632
        %4986 = vmatprep.subr.bf16.mxu0 %v3649
        %4987 = vmatpush1.bf16.msra.mxu0 %v3648
        %4988 = vmatprep.subr.bf16.mxu0 %v3665
        %4989 = vmatpush1.bf16.msra.mxu0 %v3664
        %4990 = vmatprep.subr.bf16.mxu0 %v3681
        %4991 = vmatpush1.bf16.msra.mxu0 %v3680
        %4992 = vmatprep.mubr.bf16.mxu0 %v4574
        %4993 = vmatmul.mubr.bf16.gmra.mrb[0].mxu0 %v4573
        %v4994 = vpop.f32.mrb[0].mxu0
        %v4995 = vadd.f32 %v4532, %v4994
        %v4996 = vpop.f32.mrb[0].mxu0
        %v4997 = vadd.f32 %v4532, %v4996
        %v4998 = vpop.f32.mrb[0].mxu0
        %v4999 = vadd.f32 %v4537, %v4998
        %v5000 = vpop.f32.mrb[0].mxu0
        %v5001 = vadd.f32 %v4537, %v5000
        %5002 = vmatprep.mubr.bf16.mxu0 %v4578
        %5003 = vmatmul.mubr.bf16.gmra.mrb[0].mxu0 %v4577
        %v5004 = vpop.f32.mrb[0].mxu0
        %v5005 = vadd.f32 %v4542, %v5004
        %v5006 = vpop.f32.mrb[0].mxu0
        %v5007 = vadd.f32 %v4542, %v5006
        %v5008 = vpop.f32.mrb[0].mxu0
        %v5009 = vadd.f32 %v4547, %v5008
        %v5010 = vpop.f32.mrb[0].mxu0
        %v5011 = vadd.f32 %v4547, %v5010
        %5012 = vdwg.mxu0
        %5013 = vmatprep.subr.bf16.mxu0 %v4217
        %5014 = vmatpush1.bf16.msra.mxu0 %v4216
        %5015 = vmatprep.subr.bf16.mxu0 %v4233
        %5016 = vmatpush1.bf16.msra.mxu0 %v4232
        %5017 = vmatprep.subr.bf16.mxu0 %v4249
        %5018 = vmatpush1.bf16.msra.mxu0 %v4248
        %5019 = vmatprep.subr.bf16.mxu0 %v4265
        %5020 = vmatpush1.bf16.msra.mxu0 %v4264
        %5021 = vmatprep.subr.bf16.mxu0 %v4281
        %5022 = vmatpush1.bf16.msra.mxu0 %v4280
        %5023 = vmatprep.subr.bf16.mxu0 %v4297
        %5024 = vmatpush1.bf16.msra.mxu0 %v4296
        %5025 = vmatprep.subr.bf16.mxu0 %v4313
        %5026 = vmatpush1.bf16.msra.mxu0 %v4312
        %5027 = vmatprep.subr.bf16.mxu0 %v4329
        %5028 = vmatpush1.bf16.msra.mxu0 %v4328
        %5029 = vmatprep.subr.bf16.mxu0 %v4616
        %5030 = vmatpush1.bf16.msra.mxu0 %v4613
        %5031 = vmatprep.subr.bf16.mxu0 0
        %5032 = vmatpush1.bf16.msra.mxu0 0
        %5033 = vmatprep.subr.bf16.mxu0 0
        %5034 = vmatpush1.bf16.msra.mxu0 0
        %5035 = vmatprep.subr.bf16.mxu0 0
        %5036 = vmatpush1.bf16.msra.mxu0 0
        %5037 = vmatprep.subr.bf16.mxu0 0
        %5038 = vmatpush1.bf16.msra.mxu0 0
        %5039 = vmatprep.subr.bf16.mxu0 0
        %5040 = vmatpush1.bf16.msra.mxu0 0
        %5041 = vmatprep.subr.bf16.mxu0 0
        %5042 = vmatpush1.bf16.msra.mxu0 0
        %5043 = vmatprep.subr.bf16.mxu0 0
        %5044 = vmatpush1.bf16.msra.mxu0 0
        %5045 = vmatprep.mubr.bf16.mxu0 %v4589
        %5046 = vmatmul.mubr.bf16.gmra.mrb[0].mxu0 %v4575
        %v5047 = vpop.f32.mrb[0].mxu0
        %v5048 = vadd.f32 %v4995, %v5047
        %v5049 = vpop.f32.mrb[0].mxu0
        %v5050 = vadd.f32 %v4997, %v5049
        %v5051 = vpop.f32.mrb[0].mxu0
        %v5052 = vadd.f32 %v4999, %v5051
        %v5053 = vpop.f32.mrb[0].mxu0
        %v5054 = vadd.f32 %v5001, %v5053
        %5055 = vmatprep.mubr.bf16.mxu0 %v4592
        %5056 = vmatmul.mubr.bf16.gmra.mrb[0].mxu0 %v4579
        %v5057 = vpop.f32.mrb[0].mxu0
        %v5058 = vadd.f32 %v5005, %v5057
        %v5059 = vpop.f32.mrb[0].mxu0
        %v5060 = vadd.f32 %v5007, %v5059
        %v5061 = vpop.f32.mrb[0].mxu0
        %v5062 = vadd.f32 %v5009, %v5061
        %v5063 = vpop.f32.mrb[0].mxu0
        %v5064 = vadd.f32 %v5011, %v5063
        %5065 = vdwg.mxu0
        %5066 = vmatprep.subr.bf16.mxu0 %v1163
        %5067 = vmatpush1.bf16.msra.mxu0 %v1159
        %5068 = vmatprep.subr.bf16.mxu0 %v1227
        %5069 = vmatpush1.bf16.msra.mxu0 %v1223
        %5070 = vmatprep.subr.bf16.mxu0 %v1291
        %5071 = vmatpush1.bf16.msra.mxu0 %v1287
        %5072 = vmatprep.subr.bf16.mxu0 %v1355
        %5073 = vmatpush1.bf16.msra.mxu0 %v1351
        %5074 = vmatprep.subr.bf16.mxu0 %v1419
        %5075 = vmatpush1.bf16.msra.mxu0 %v1415
        %5076 = vmatprep.subr.bf16.mxu0 %v1483
        %5077 = vmatpush1.bf16.msra.mxu0 %v1479
        %5078 = vmatprep.subr.bf16.mxu0 %v1547
        %5079 = vmatpush1.bf16.msra.mxu0 %v1543
        %5080 = vmatprep.subr.bf16.mxu0 %v1611
        %5081 = vmatpush1.bf16.msra.mxu0 %v1607
        %5082 = vmatprep.subr.bf16.mxu0 %v3571
        %5083 = vmatpush1.bf16.msra.mxu0 %v3570
        %5084 = vmatprep.subr.bf16.mxu0 %v3587
        %5085 = vmatpush1.bf16.msra.mxu0 %v3586
        %5086 = vmatprep.subr.bf16.mxu0 %v3603
        %5087 = vmatpush1.bf16.msra.mxu0 %v3602
        %5088 = vmatprep.subr.bf16.mxu0 %v3619
        %5089 = vmatpush1.bf16.msra.mxu0 %v3618
        %5090 = vmatprep.subr.bf16.mxu0 %v3635
        %5091 = vmatpush1.bf16.msra.mxu0 %v3634
        %5092 = vmatprep.subr.bf16.mxu0 %v3651
        %5093 = vmatpush1.bf16.msra.mxu0 %v3650
        %5094 = vmatprep.subr.bf16.mxu0 %v3667
        %5095 = vmatpush1.bf16.msra.mxu0 %v3666
        %5096 = vmatprep.subr.bf16.mxu0 %v3683
        %5097 = vmatpush1.bf16.msra.mxu0 %v3682
        %5098 = vmatprep.mubr.bf16.mxu0 %v4574
        %5099 = vmatmul.mubr.bf16.gmra.mrb[0].mxu0 %v4573
        %v5100 = vpop.f32.mrb[0].mxu0
        %v5101 = vadd.f32 %v4532, %v5100
        %v5102 = vpop.f32.mrb[0].mxu0
        %v5103 = vadd.f32 %v4532, %v5102
        %v5104 = vpop.f32.mrb[0].mxu0
        %v5105 = vadd.f32 %v4537, %v5104
        %v5106 = vpop.f32.mrb[0].mxu0
        %v5107 = vadd.f32 %v4537, %v5106
        %5108 = vmatprep.mubr.bf16.mxu0 %v4578
        %5109 = vmatmul.mubr.bf16.gmra.mrb[0].mxu0 %v4577
        %v5110 = vpop.f32.mrb[0].mxu0
        %v5111 = vadd.f32 %v4542, %v5110
        %v5112 = vpop.f32.mrb[0].mxu0
        %v5113 = vadd.f32 %v4542, %v5112
        %v5114 = vpop.f32.mrb[0].mxu0
        %v5115 = vadd.f32 %v4547, %v5114
        %v5116 = vpop.f32.mrb[0].mxu0
        %v5117 = vadd.f32 %v4547, %v5116
        %5118 = vdwg.mxu0
        %5119 = vmatprep.subr.bf16.mxu0 %v4219
        %5120 = vmatpush1.bf16.msra.mxu0 %v4218
        %5121 = vmatprep.subr.bf16.mxu0 %v4235
        %5122 = vmatpush1.bf16.msra.mxu0 %v4234
        %5123 = vmatprep.subr.bf16.mxu0 %v4251
        %5124 = vmatpush1.bf16.msra.mxu0 %v4250
        %5125 = vmatprep.subr.bf16.mxu0 %v4267
        %5126 = vmatpush1.bf16.msra.mxu0 %v4266
        %5127 = vmatprep.subr.bf16.mxu0 %v4283
        %5128 = vmatpush1.bf16.msra.mxu0 %v4282
        %5129 = vmatprep.subr.bf16.mxu0 %v4299
        %5130 = vmatpush1.bf16.msra.mxu0 %v4298
        %5131 = vmatprep.subr.bf16.mxu0 %v4315
        %5132 = vmatpush1.bf16.msra.mxu0 %v4314
        %5133 = vmatprep.subr.bf16.mxu0 %v4331
        %5134 = vmatpush1.bf16.msra.mxu0 %v4330
        %5135 = vmatprep.subr.bf16.mxu0 %v4622
        %5136 = vmatpush1.bf16.msra.mxu0 %v4619
        %5137 = vmatprep.subr.bf16.mxu0 0
        %5138 = vmatpush1.bf16.msra.mxu0 0
        %5139 = vmatprep.subr.bf16.mxu0 0
        %5140 = vmatpush1.bf16.msra.mxu0 0
        %5141 = vmatprep.subr.bf16.mxu0 0
        %5142 = vmatpush1.bf16.msra.mxu0 0
        %5143 = vmatprep.subr.bf16.mxu0 0
        %5144 = vmatpush1.bf16.msra.mxu0 0
        %5145 = vmatprep.subr.bf16.mxu0 0
        %5146 = vmatpush1.bf16.msra.mxu0 0
        %5147 = vmatprep.subr.bf16.mxu0 0
        %5148 = vmatpush1.bf16.msra.mxu0 0
        %5149 = vmatprep.subr.bf16.mxu0 0
        %5150 = vmatpush1.bf16.msra.mxu0 0
        %5151 = vmatprep.mubr.bf16.mxu0 %v4589
        %5152 = vmatmul.mubr.bf16.gmra.mrb[0].mxu0 %v4575
        %v5153 = vpop.f32.mrb[0].mxu0
        %v5154 = vadd.f32 %v5101, %v5153
        %v5155 = vpop.f32.mrb[0].mxu0
        %v5156 = vadd.f32 %v5103, %v5155
        %v5157 = vpop.f32.mrb[0].mxu0
        %v5158 = vadd.f32 %v5105, %v5157
        %v5159 = vpop.f32.mrb[0].mxu0
        %v5160 = vadd.f32 %v5107, %v5159
        %5161 = vmatprep.mubr.bf16.mxu0 %v4592
        %5162 = vmatmul.mubr.bf16.gmra.mrb[0].mxu0 %v4579
        %v5163 = vpop.f32.mrb[0].mxu0
        %v5164 = vadd.f32 %v5111, %v5163
        %v5165 = vpop.f32.mrb[0].mxu0
        %v5166 = vadd.f32 %v5113, %v5165
        %v5167 = vpop.f32.mrb[0].mxu0
        %v5168 = vadd.f32 %v5115, %v5167
        %v5169 = vpop.f32.mrb[0].mxu0
        %v5170 = vadd.f32 %v5117, %v5169
        %5171 = vdwg.mxu0
        %5172 = vmatprep.subr.bf16.mxu0 %v1171
        %5173 = vmatpush1.bf16.msra.mxu0 %v1167
        %5174 = vmatprep.subr.bf16.mxu0 %v1235
        %5175 = vmatpush1.bf16.msra.mxu0 %v1231
        %5176 = vmatprep.subr.bf16.mxu0 %v1299
        %5177 = vmatpush1.bf16.msra.mxu0 %v1295
        %5178 = vmatprep.subr.bf16.mxu0 %v1363
        %5179 = vmatpush1.bf16.msra.mxu0 %v1359
        %5180 = vmatprep.subr.bf16.mxu0 %v1427
        %5181 = vmatpush1.bf16.msra.mxu0 %v1423
        %5182 = vmatprep.subr.bf16.mxu0 %v1491
        %5183 = vmatpush1.bf16.msra.mxu0 %v1487
        %5184 = vmatprep.subr.bf16.mxu0 %v1555
        %5185 = vmatpush1.bf16.msra.mxu0 %v1551
        %5186 = vmatprep.subr.bf16.mxu0 %v1619
        %5187 = vmatpush1.bf16.msra.mxu0 %v1615
        %5188 = vmatprep.subr.bf16.mxu0 %v3573
        %5189 = vmatpush1.bf16.msra.mxu0 %v3572
        %5190 = vmatprep.subr.bf16.mxu0 %v3589
        %5191 = vmatpush1.bf16.msra.mxu0 %v3588
        %5192 = vmatprep.subr.bf16.mxu0 %v3605
        %5193 = vmatpush1.bf16.msra.mxu0 %v3604
        %5194 = vmatprep.subr.bf16.mxu0 %v3621
        %5195 = vmatpush1.bf16.msra.mxu0 %v3620
        %5196 = vmatprep.subr.bf16.mxu0 %v3637
        %5197 = vmatpush1.bf16.msra.mxu0 %v3636
        %5198 = vmatprep.subr.bf16.mxu0 %v3653
        %5199 = vmatpush1.bf16.msra.mxu0 %v3652
        %5200 = vmatprep.subr.bf16.mxu0 %v3669
        %5201 = vmatpush1.bf16.msra.mxu0 %v3668
        %5202 = vmatprep.subr.bf16.mxu0 %v3685
        %5203 = vmatpush1.bf16.msra.mxu0 %v3684
        %5204 = vmatprep.mubr.bf16.mxu0 %v4574
        %5205 = vmatmul.mubr.bf16.gmra.mrb[0].mxu0 %v4573
        %v5206 = vpop.f32.mrb[0].mxu0
        %v5207 = vadd.f32 %v4532, %v5206
        %v5208 = vpop.f32.mrb[0].mxu0
        %v5209 = vadd.f32 %v4532, %v5208
        %v5210 = vpop.f32.mrb[0].mxu0
        %v5211 = vadd.f32 %v4537, %v5210
        %v5212 = vpop.f32.mrb[0].mxu0
        %v5213 = vadd.f32 %v4537, %v5212
        %5214 = vmatprep.mubr.bf16.mxu0 %v4578
        %5215 = vmatmul.mubr.bf16.gmra.mrb[0].mxu0 %v4577
        %v5216 = vpop.f32.mrb[0].mxu0
        %v5217 = vadd.f32 %v4542, %v5216
        %v5218 = vpop.f32.mrb[0].mxu0
        %v5219 = vadd.f32 %v4542, %v5218
        %v5220 = vpop.f32.mrb[0].mxu0
        %v5221 = vadd.f32 %v4547, %v5220
        %v5222 = vpop.f32.mrb[0].mxu0
        %v5223 = vadd.f32 %v4547, %v5222
        %5224 = vdwg.mxu0
        %5225 = vmatprep.subr.bf16.mxu0 %v4221
        %5226 = vmatpush1.bf16.msra.mxu0 %v4220
        %5227 = vmatprep.subr.bf16.mxu0 %v4237
        %5228 = vmatpush1.bf16.msra.mxu0 %v4236
        %5229 = vmatprep.subr.bf16.mxu0 %v4253
        %5230 = vmatpush1.bf16.msra.mxu0 %v4252
        %5231 = vmatprep.subr.bf16.mxu0 %v4269
        %5232 = vmatpush1.bf16.msra.mxu0 %v4268
        %5233 = vmatprep.subr.bf16.mxu0 %v4285
        %5234 = vmatpush1.bf16.msra.mxu0 %v4284
        %5235 = vmatprep.subr.bf16.mxu0 %v4301
        %5236 = vmatpush1.bf16.msra.mxu0 %v4300
        %5237 = vmatprep.subr.bf16.mxu0 %v4317
        %5238 = vmatpush1.bf16.msra.mxu0 %v4316
        %5239 = vmatprep.subr.bf16.mxu0 %v4333
        %5240 = vmatpush1.bf16.msra.mxu0 %v4332
        %5241 = vmatprep.subr.bf16.mxu0 %v4628
        %5242 = vmatpush1.bf16.msra.mxu0 %v4625
        %5243 = vmatprep.subr.bf16.mxu0 0
        %5244 = vmatpush1.bf16.msra.mxu0 0
        %5245 = vmatprep.subr.bf16.mxu0 0
        %5246 = vmatpush1.bf16.msra.mxu0 0
        %5247 = vmatprep.subr.bf16.mxu0 0
        %5248 = vmatpush1.bf16.msra.mxu0 0
        %5249 = vmatprep.subr.bf16.mxu0 0
        %5250 = vmatpush1.bf16.msra.mxu0 0
        %5251 = vmatprep.subr.bf16.mxu0 0
        %5252 = vmatpush1.bf16.msra.mxu0 0
        %5253 = vmatprep.subr.bf16.mxu0 0
        %5254 = vmatpush1.bf16.msra.mxu0 0
        %5255 = vmatprep.subr.bf16.mxu0 0
        %5256 = vmatpush1.bf16.msra.mxu0 0
        %5257 = vmatprep.mubr.bf16.mxu0 %v4589
        %5258 = vmatmul.mubr.bf16.gmra.mrb[0].mxu0 %v4575
        %v5259 = vpop.f32.mrb[0].mxu0
        %v5260 = vadd.f32 %v5207, %v5259
        %v5261 = vpop.f32.mrb[0].mxu0
        %v5262 = vadd.f32 %v5209, %v5261
        %v5263 = vpop.f32.mrb[0].mxu0
        %v5264 = vadd.f32 %v5211, %v5263
        %v5265 = vpop.f32.mrb[0].mxu0
        %v5266 = vadd.f32 %v5213, %v5265
        %5267 = vmatprep.mubr.bf16.mxu0 %v4592
        %5268 = vmatmul.mubr.bf16.gmra.mrb[0].mxu0 %v4579
        %v5269 = vpop.f32.mrb[0].mxu0
        %v5270 = vadd.f32 %v5217, %v5269
        %v5271 = vpop.f32.mrb[0].mxu0
        %v5272 = vadd.f32 %v5219, %v5271
        %v5273 = vpop.f32.mrb[0].mxu0
        %v5274 = vadd.f32 %v5221, %v5273
        %v5275 = vpop.f32.mrb[0].mxu0
        %v5276 = vadd.f32 %v5223, %v5275
        %5277 = vdwg.mxu0
        %5278 = vmatprep.subr.bf16.mxu0 %v1179
        %5279 = vmatpush1.bf16.msra.mxu0 %v1175
        %5280 = vmatprep.subr.bf16.mxu0 %v1243
        %5281 = vmatpush1.bf16.msra.mxu0 %v1239
        %5282 = vmatprep.subr.bf16.mxu0 %v1307
        %5283 = vmatpush1.bf16.msra.mxu0 %v1303
        %5284 = vmatprep.subr.bf16.mxu0 %v1371
        %5285 = vmatpush1.bf16.msra.mxu0 %v1367
        %5286 = vmatprep.subr.bf16.mxu0 %v1435
        %5287 = vmatpush1.bf16.msra.mxu0 %v1431
        %5288 = vmatprep.subr.bf16.mxu0 %v1499
        %5289 = vmatpush1.bf16.msra.mxu0 %v1495
        %5290 = vmatprep.subr.bf16.mxu0 %v1563
        %5291 = vmatpush1.bf16.msra.mxu0 %v1559
        %5292 = vmatprep.subr.bf16.mxu0 %v1627
        %5293 = vmatpush1.bf16.msra.mxu0 %v1623
        %5294 = vmatprep.subr.bf16.mxu0 %v3575
        %5295 = vmatpush1.bf16.msra.mxu0 %v3574
        %5296 = vmatprep.subr.bf16.mxu0 %v3591
        %5297 = vmatpush1.bf16.msra.mxu0 %v3590
        %5298 = vmatprep.subr.bf16.mxu0 %v3607
        %5299 = vmatpush1.bf16.msra.mxu0 %v3606
        %5300 = vmatprep.subr.bf16.mxu0 %v3623
        %5301 = vmatpush1.bf16.msra.mxu0 %v3622
        %5302 = vmatprep.subr.bf16.mxu0 %v3639
        %5303 = vmatpush1.bf16.msra.mxu0 %v3638
        %5304 = vmatprep.subr.bf16.mxu0 %v3655
        %5305 = vmatpush1.bf16.msra.mxu0 %v3654
        %5306 = vmatprep.subr.bf16.mxu0 %v3671
        %5307 = vmatpush1.bf16.msra.mxu0 %v3670
        %5308 = vmatprep.subr.bf16.mxu0 %v3687
        %5309 = vmatpush1.bf16.msra.mxu0 %v3686
        %5310 = vmatprep.mubr.bf16.mxu0 %v4574
        %5311 = vmatmul.mubr.bf16.gmra.mrb[0].mxu0 %v4573
        %v5312 = vpop.f32.mrb[0].mxu0
        %v5313 = vadd.f32 %v4532, %v5312
        %v5314 = vpop.f32.mrb[0].mxu0
        %v5315 = vadd.f32 %v4532, %v5314
        %v5316 = vpop.f32.mrb[0].mxu0
        %v5317 = vadd.f32 %v4537, %v5316
        %v5318 = vpop.f32.mrb[0].mxu0
        %v5319 = vadd.f32 %v4537, %v5318
        %5320 = vmatprep.mubr.bf16.mxu0 %v4578
        %5321 = vmatmul.mubr.bf16.gmra.mrb[0].mxu0 %v4577
        %v5322 = vpop.f32.mrb[0].mxu0
        %v5323 = vadd.f32 %v4542, %v5322
        %v5324 = vpop.f32.mrb[0].mxu0
        %v5325 = vadd.f32 %v4542, %v5324
        %v5326 = vpop.f32.mrb[0].mxu0
        %v5327 = vadd.f32 %v4547, %v5326
        %v5328 = vpop.f32.mrb[0].mxu0
        %v5329 = vadd.f32 %v4547, %v5328
        %5330 = vdwg.mxu0
        %5331 = vmatprep.subr.bf16.mxu0 %v4223
        %5332 = vmatpush1.bf16.msra.mxu0 %v4222
        %5333 = vmatprep.subr.bf16.mxu0 %v4239
        %5334 = vmatpush1.bf16.msra.mxu0 %v4238
        %5335 = vmatprep.subr.bf16.mxu0 %v4255
        %5336 = vmatpush1.bf16.msra.mxu0 %v4254
        %5337 = vmatprep.subr.bf16.mxu0 %v4271
        %5338 = vmatpush1.bf16.msra.mxu0 %v4270
        %5339 = vmatprep.subr.bf16.mxu0 %v4287
        %5340 = vmatpush1.bf16.msra.mxu0 %v4286
        %5341 = vmatprep.subr.bf16.mxu0 %v4303
        %5342 = vmatpush1.bf16.msra.mxu0 %v4302
        %5343 = vmatprep.subr.bf16.mxu0 %v4319
        %5344 = vmatpush1.bf16.msra.mxu0 %v4318
        %5345 = vmatprep.subr.bf16.mxu0 %v4335
        %5346 = vmatpush1.bf16.msra.mxu0 %v4334
        %5347 = vmatprep.subr.bf16.mxu0 %v4634
        %5348 = vmatpush1.bf16.msra.mxu0 %v4631
        %5349 = vmatprep.subr.bf16.mxu0 0
        %5350 = vmatpush1.bf16.msra.mxu0 0
        %5351 = vmatprep.subr.bf16.mxu0 0
        %5352 = vmatpush1.bf16.msra.mxu0 0
        %5353 = vmatprep.subr.bf16.mxu0 0
        %5354 = vmatpush1.bf16.msra.mxu0 0
        %5355 = vmatprep.subr.bf16.mxu0 0
        %5356 = vmatpush1.bf16.msra.mxu0 0
        %5357 = vmatprep.subr.bf16.mxu0 0
        %5358 = vmatpush1.bf16.msra.mxu0 0
        %5359 = vmatprep.subr.bf16.mxu0 0
        %5360 = vmatpush1.bf16.msra.mxu0 0
        %5361 = vmatprep.subr.bf16.mxu0 0
        %5362 = vmatpush1.bf16.msra.mxu0 0
        %5363 = vmatprep.mubr.bf16.mxu0 %v4589
        %5364 = vmatmul.mubr.bf16.gmra.mrb[0].mxu0 %v4575
        %v5365 = vpop.f32.mrb[0].mxu0
        %v5366 = vadd.f32 %v5313, %v5365
        %v5367 = vpop.f32.mrb[0].mxu0
        %v5368 = vadd.f32 %v5315, %v5367
        %v5369 = vpop.f32.mrb[0].mxu0
        %v5370 = vadd.f32 %v5317, %v5369
        %v5371 = vpop.f32.mrb[0].mxu0
        %v5372 = vadd.f32 %v5319, %v5371
        %5373 = vmatprep.mubr.bf16.mxu0 %v4592
        %5374 = vmatmul.mubr.bf16.gmra.mrb[0].mxu0 %v4579
        %v5375 = vpop.f32.mrb[0].mxu0
        %v5376 = vadd.f32 %v5323, %v5375
        %v5377 = vpop.f32.mrb[0].mxu0
        %v5378 = vadd.f32 %v5325, %v5377
        %v5379 = vpop.f32.mrb[0].mxu0
        %v5380 = vadd.f32 %v5327, %v5379
        %v5381 = vpop.f32.mrb[0].mxu0
        %v5382 = vadd.f32 %v5329, %v5381
        %5383 = vdwg.mxu0
        %5384 = vmatprep.subr.bf16.mxu0 %v1187
        %5385 = vmatpush1.bf16.msra.mxu0 %v1183
        %5386 = vmatprep.subr.bf16.mxu0 %v1251
        %5387 = vmatpush1.bf16.msra.mxu0 %v1247
        %5388 = vmatprep.subr.bf16.mxu0 %v1315
        %5389 = vmatpush1.bf16.msra.mxu0 %v1311
        %5390 = vmatprep.subr.bf16.mxu0 %v1379
        %5391 = vmatpush1.bf16.msra.mxu0 %v1375
        %5392 = vmatprep.subr.bf16.mxu0 %v1443
        %5393 = vmatpush1.bf16.msra.mxu0 %v1439
        %5394 = vmatprep.subr.bf16.mxu0 %v1507
        %5395 = vmatpush1.bf16.msra.mxu0 %v1503
        %5396 = vmatprep.subr.bf16.mxu0 %v1571
        %5397 = vmatpush1.bf16.msra.mxu0 %v1567
        %5398 = vmatprep.subr.bf16.mxu0 %v1635
        %5399 = vmatpush1.bf16.msra.mxu0 %v1631
        %5400 = vmatprep.subr.bf16.mxu0 %v3577
        %5401 = vmatpush1.bf16.msra.mxu0 %v3576
        %5402 = vmatprep.subr.bf16.mxu0 %v3593
        %5403 = vmatpush1.bf16.msra.mxu0 %v3592
        %5404 = vmatprep.subr.bf16.mxu0 %v3609
        %5405 = vmatpush1.bf16.msra.mxu0 %v3608
        %5406 = vmatprep.subr.bf16.mxu0 %v3625
        %5407 = vmatpush1.bf16.msra.mxu0 %v3624
        %5408 = vmatprep.subr.bf16.mxu0 %v3641
        %5409 = vmatpush1.bf16.msra.mxu0 %v3640
        %5410 = vmatprep.subr.bf16.mxu0 %v3657
        %5411 = vmatpush1.bf16.msra.mxu0 %v3656
        %5412 = vmatprep.subr.bf16.mxu0 %v3673
        %5413 = vmatpush1.bf16.msra.mxu0 %v3672
        %5414 = vmatprep.subr.bf16.mxu0 %v3689
        %5415 = vmatpush1.bf16.msra.mxu0 %v3688
        %5416 = vmatprep.mubr.bf16.mxu0 %v4574
        %5417 = vmatmul.mubr.bf16.gmra.mrb[0].mxu0 %v4573
        %v5418 = vpop.f32.mrb[0].mxu0
        %v5419 = vadd.f32 %v4532, %v5418
        %v5420 = vpop.f32.mrb[0].mxu0
        %v5421 = vadd.f32 %v4532, %v5420
        %v5422 = vpop.f32.mrb[0].mxu0
        %v5423 = vadd.f32 %v4537, %v5422
        %v5424 = vpop.f32.mrb[0].mxu0
        %v5425 = vadd.f32 %v4537, %v5424
        %5426 = vmatprep.mubr.bf16.mxu0 %v4578
        %5427 = vmatmul.mubr.bf16.gmra.mrb[0].mxu0 %v4577
        %v5428 = vpop.f32.mrb[0].mxu0
        %v5429 = vadd.f32 %v4542, %v5428
        %v5430 = vpop.f32.mrb[0].mxu0
        %v5431 = vadd.f32 %v4542, %v5430
        %v5432 = vpop.f32.mrb[0].mxu0
        %v5433 = vadd.f32 %v4547, %v5432
        %v5434 = vpop.f32.mrb[0].mxu0
        %v5435 = vadd.f32 %v4547, %v5434
        %5436 = vdwg.mxu0
        %5437 = vmatprep.subr.bf16.mxu0 %v4225
        %5438 = vmatpush1.bf16.msra.mxu0 %v4224
        %5439 = vmatprep.subr.bf16.mxu0 %v4241
        %5440 = vmatpush1.bf16.msra.mxu0 %v4240
        %5441 = vmatprep.subr.bf16.mxu0 %v4257
        %5442 = vmatpush1.bf16.msra.mxu0 %v4256
        %5443 = vmatprep.subr.bf16.mxu0 %v4273
        %5444 = vmatpush1.bf16.msra.mxu0 %v4272
        %5445 = vmatprep.subr.bf16.mxu0 %v4289
        %5446 = vmatpush1.bf16.msra.mxu0 %v4288
        %5447 = vmatprep.subr.bf16.mxu0 %v4305
        %5448 = vmatpush1.bf16.msra.mxu0 %v4304
        %5449 = vmatprep.subr.bf16.mxu0 %v4321
        %5450 = vmatpush1.bf16.msra.mxu0 %v4320
        %5451 = vmatprep.subr.bf16.mxu0 %v4337
        %5452 = vmatpush1.bf16.msra.mxu0 %v4336
        %5453 = vmatprep.subr.bf16.mxu0 %v4640
        %5454 = vmatpush1.bf16.msra.mxu0 %v4637
        %5455 = vmatprep.subr.bf16.mxu0 0
        %5456 = vmatpush1.bf16.msra.mxu0 0
        %5457 = vmatprep.subr.bf16.mxu0 0
        %5458 = vmatpush1.bf16.msra.mxu0 0
        %5459 = vmatprep.subr.bf16.mxu0 0
        %5460 = vmatpush1.bf16.msra.mxu0 0
        %5461 = vmatprep.subr.bf16.mxu0 0
        %5462 = vmatpush1.bf16.msra.mxu0 0
        %5463 = vmatprep.subr.bf16.mxu0 0
        %5464 = vmatpush1.bf16.msra.mxu0 0
        %5465 = vmatprep.subr.bf16.mxu0 0
        %5466 = vmatpush1.bf16.msra.mxu0 0
        %5467 = vmatprep.subr.bf16.mxu0 0
        %5468 = vmatpush1.bf16.msra.mxu0 0
        %5469 = vmatprep.mubr.bf16.mxu0 %v4589
        %5470 = vmatmul.mubr.bf16.gmra.mrb[0].mxu0 %v4575
        %v5471 = vpop.f32.mrb[0].mxu0
        %v5472 = vadd.f32 %v5419, %v5471
        %v5473 = vpop.f32.mrb[0].mxu0
        %v5474 = vadd.f32 %v5421, %v5473
        %v5475 = vpop.f32.mrb[0].mxu0
        %v5476 = vadd.f32 %v5423, %v5475
        %v5477 = vpop.f32.mrb[0].mxu0
        %v5478 = vadd.f32 %v5425, %v5477
        %5479 = vmatprep.mubr.bf16.mxu0 %v4592
        %5480 = vmatmul.mubr.bf16.gmra.mrb[0].mxu0 %v4579
        %v5481 = vpop.f32.mrb[0].mxu0
        %v5482 = vadd.f32 %v5429, %v5481
        %v5483 = vpop.f32.mrb[0].mxu0
        %v5484 = vadd.f32 %v5431, %v5483
        %v5485 = vpop.f32.mrb[0].mxu0
        %v5486 = vadd.f32 %v5433, %v5485
        %v5487 = vpop.f32.mrb[0].mxu0
        %v5488 = vadd.f32 %v5435, %v5487
        %5489 = vdwg.mxu0
        %v5490 = vmax.f32 %v4730, 0.0
        %v5491 = vmax.f32 %v4732, 0.0
        %v5492 = vmax.f32 %v4836, 0.0
        %v5493 = vmax.f32 %v4838, 0.0
        %v5494 = vmax.f32 %v4942, 0.0
        %v5495 = vmax.f32 %v4944, 0.0
        %v5496 = vmax.f32 %v5048, 0.0
        %v5497 = vmax.f32 %v5050, 0.0
        %v5498 = vmax.f32 %v5154, 0.0
        %v5499 = vmax.f32 %v5156, 0.0
        %v5500 = vmax.f32 %v5260, 0.0
        %v5501 = vmax.f32 %v5262, 0.0
        %v5502 = vmax.f32 %v5366, 0.0
        %v5503 = vmax.f32 %v5368, 0.0
        %v5504 = vmax.f32 %v5472, 0.0
        %v5505 = vmax.f32 %v5474, 0.0
        %v5506 = vmax.f32 %v4734, 0.0
        %v5507 = vmax.f32 %v4736, 0.0
        %v5508 = vmax.f32 %v4840, 0.0
        %v5509 = vmax.f32 %v4842, 0.0
        %v5510 = vmax.f32 %v4946, 0.0
        %v5511 = vmax.f32 %v4948, 0.0
        %v5512 = vmax.f32 %v5052, 0.0
        %v5513 = vmax.f32 %v5054, 0.0
        %v5514 = vmax.f32 %v5158, 0.0
        %v5515 = vmax.f32 %v5160, 0.0
        %v5516 = vmax.f32 %v5264, 0.0
        %v5517 = vmax.f32 %v5266, 0.0
        %v5518 = vmax.f32 %v5370, 0.0
        %v5519 = vmax.f32 %v5372, 0.0
        %v5520 = vmax.f32 %v5476, 0.0
        %v5521 = vmax.f32 %v5478, 0.0
        %v5522 = vmax.f32 %v4740, 0.0
        %v5523 = vmax.f32 %v4742, 0.0
        %v5524 = vmax.f32 %v4846, 0.0
        %v5525 = vmax.f32 %v4848, 0.0
        %v5526 = vmax.f32 %v4952, 0.0
        %v5527 = vmax.f32 %v4954, 0.0
        %v5528 = vmax.f32 %v5058, 0.0
        %v5529 = vmax.f32 %v5060, 0.0
        %v5530 = vmax.f32 %v5164, 0.0
        %v5531 = vmax.f32 %v5166, 0.0
        %v5532 = vmax.f32 %v5270, 0.0
        %v5533 = vmax.f32 %v5272, 0.0
        %v5534 = vmax.f32 %v5376, 0.0
        %v5535 = vmax.f32 %v5378, 0.0
        %v5536 = vmax.f32 %v5482, 0.0
        %v5537 = vmax.f32 %v5484, 0.0
        %v5538 = vmax.f32 %v4744, 0.0
        %v5539 = vmax.f32 %v4746, 0.0
        %v5540 = vmax.f32 %v4850, 0.0
        %v5541 = vmax.f32 %v4852, 0.0
        %v5542 = vmax.f32 %v4956, 0.0
        %v5543 = vmax.f32 %v4958, 0.0
        %v5544 = vmax.f32 %v5062, 0.0
        %v5545 = vmax.f32 %v5064, 0.0
        %v5546 = vmax.f32 %v5168, 0.0
        %v5547 = vmax.f32 %v5170, 0.0
        %v5548 = vmax.f32 %v5274, 0.0
        %v5549 = vmax.f32 %v5276, 0.0
        %v5550 = vmax.f32 %v5380, 0.0
        %v5551 = vmax.f32 %v5382, 0.0
        %v5552 = vmax.f32 %v5486, 0.0
        %v5553 = vmax.f32 %v5488, 0.0
        %v5554 = vmin.f32 %v5490, 6.0
        %v5555 = vmin.f32 %v5491, 6.0
        %v5556 = vmin.f32 %v5492, 6.0
        %v5557 = vmin.f32 %v5493, 6.0
        %v5558 = vmin.f32 %v5494, 6.0
        %v5559 = vmin.f32 %v5495, 6.0
        %v5560 = vmin.f32 %v5496, 6.0
        %v5561 = vmin.f32 %v5497, 6.0
        %v5562 = vmin.f32 %v5498, 6.0
        %v5563 = vmin.f32 %v5499, 6.0
        %v5564 = vmin.f32 %v5500, 6.0
        %v5565 = vmin.f32 %v5501, 6.0
        %v5566 = vmin.f32 %v5502, 6.0
        %v5567 = vmin.f32 %v5503, 6.0
        %v5568 = vmin.f32 %v5504, 6.0
        %v5569 = vmin.f32 %v5505, 6.0
        %v5570 = vmin.f32 %v5506, 6.0
        %v5571 = vmin.f32 %v5507, 6.0
        %v5572 = vmin.f32 %v5508, 6.0
        %v5573 = vmin.f32 %v5509, 6.0
        %v5574 = vmin.f32 %v5510, 6.0
        %v5575 = vmin.f32 %v5511, 6.0
        %v5576 = vmin.f32 %v5512, 6.0
        %v5577 = vmin.f32 %v5513, 6.0
        %v5578 = vmin.f32 %v5514, 6.0
        %v5579 = vmin.f32 %v5515, 6.0
        %v5580 = vmin.f32 %v5516, 6.0
        %v5581 = vmin.f32 %v5517, 6.0
        %v5582 = vmin.f32 %v5518, 6.0
        %v5583 = vmin.f32 %v5519, 6.0
        %v5584 = vmin.f32 %v5520, 6.0
        %v5585 = vmin.f32 %v5521, 6.0
        %v5586 = vmin.f32 %v5522, 6.0
        %v5587 = vmin.f32 %v5523, 6.0
        %v5588 = vmin.f32 %v5524, 6.0
        %v5589 = vmin.f32 %v5525, 6.0
        %v5590 = vmin.f32 %v5526, 6.0
        %v5591 = vmin.f32 %v5527, 6.0
        %v5592 = vmin.f32 %v5528, 6.0
        %v5593 = vmin.f32 %v5529, 6.0
        %v5594 = vmin.f32 %v5530, 6.0
        %v5595 = vmin.f32 %v5531, 6.0
        %v5596 = vmin.f32 %v5532, 6.0
        %v5597 = vmin.f32 %v5533, 6.0
        %v5598 = vmin.f32 %v5534, 6.0
        %v5599 = vmin.f32 %v5535, 6.0
        %v5600 = vmin.f32 %v5536, 6.0
        %v5601 = vmin.f32 %v5537, 6.0
        %v5602 = vmin.f32 %v5538, 6.0
        %v5603 = vmin.f32 %v5539, 6.0
        %v5604 = vmin.f32 %v5540, 6.0
        %v5605 = vmin.f32 %v5541, 6.0
        %v5606 = vmin.f32 %v5542, 6.0
        %v5607 = vmin.f32 %v5543, 6.0
        %v5608 = vmin.f32 %v5544, 6.0
        %v5609 = vmin.f32 %v5545, 6.0
        %v5610 = vmin.f32 %v5546, 6.0
        %v5611 = vmin.f32 %v5547, 6.0
        %v5612 = vmin.f32 %v5548, 6.0
        %v5613 = vmin.f32 %v5549, 6.0
        %v5614 = vmin.f32 %v5550, 6.0
        %v5615 = vmin.f32 %v5551, 6.0
        %v5616 = vmin.f32 %v5552, 6.0
        %v5617 = vmin.f32 %v5553, 6.0
        %v5618 = vpack.c.bf16 %v5570, %v5554
        %v5619 = vpack.c.bf16 %v5571, %v5555
        %v5620 = vpack.c.bf16 %v5572, %v5556
        %v5621 = vpack.c.bf16 %v5573, %v5557
        %v5622 = vpack.c.bf16 %v5574, %v5558
        %v5623 = vpack.c.bf16 %v5575, %v5559
        %v5624 = vpack.c.bf16 %v5576, %v5560
        %v5625 = vpack.c.bf16 %v5577, %v5561
        %v5626 = vpack.c.bf16 %v5578, %v5562
        %v5627 = vpack.c.bf16 %v5579, %v5563
        %v5628 = vpack.c.bf16 %v5580, %v5564
        %v5629 = vpack.c.bf16 %v5581, %v5565
        %v5630 = vpack.c.bf16 %v5582, %v5566
        %v5631 = vpack.c.bf16 %v5583, %v5567
        %v5632 = vpack.c.bf16 %v5584, %v5568
        %v5633 = vpack.c.bf16 %v5585, %v5569
        %v5634 = vpack.c.bf16 %v5602, %v5586
        %v5635 = vpack.c.bf16 %v5603, %v5587
        %v5636 = vpack.c.bf16 %v5604, %v5588
        %v5637 = vpack.c.bf16 %v5605, %v5589
        %v5638 = vpack.c.bf16 %v5606, %v5590
        %v5639 = vpack.c.bf16 %v5607, %v5591
        %v5640 = vpack.c.bf16 %v5608, %v5592
        %v5641 = vpack.c.bf16 %v5609, %v5593
        %v5642 = vpack.c.bf16 %v5610, %v5594
        %v5643 = vpack.c.bf16 %v5611, %v5595
        %v5644 = vpack.c.bf16 %v5612, %v5596
        %v5645 = vpack.c.bf16 %v5613, %v5597
        %v5646 = vpack.c.bf16 %v5614, %v5598
        %v5647 = vpack.c.bf16 %v5615, %v5599
        %v5648 = vpack.c.bf16 %v5616, %v5600
        %v5649 = vpack.c.bf16 %v5617, %v5601
        %5650 = vst [vmem:[#allocation3] sm:$0xff] %v5618
        %5651 = vst [vmem:[#allocation3 + $0x8] sm:$0xff] %v5619
        %5652 = vst [vmem:[#allocation3 + $0x10] sm:$0xff] %v5620
        %5653 = vst [vmem:[#allocation3 + $0x18] sm:$0xff] %v5621
        %5654 = vst [vmem:[#allocation3 + $0x20] sm:$0xff] %v5622
        %5655 = vst [vmem:[#allocation3 + $0x28] sm:$0xff] %v5623
        %5656 = vst [vmem:[#allocation3 + $0x30] sm:$0xff] %v5624
        %5657 = vst [vmem:[#allocation3 + $0x38] sm:$0xff] %v5625
        %5658 = vst [vmem:[#allocation3 + $0x40] sm:$0xff] %v5626
        %5659 = vst [vmem:[#allocation3 + $0x48] sm:$0xff] %v5627
        %5660 = vst [vmem:[#allocation3 + $0x50] sm:$0xff] %v5628
        %5661 = vst [vmem:[#allocation3 + $0x58] sm:$0xff] %v5629
        %5662 = vst [vmem:[#allocation3 + $0x60] sm:$0xff] %v5630
        %5663 = vst [vmem:[#allocation3 + $0x68] sm:$0xff] %v5631
        %5664 = vst [vmem:[#allocation3 + $0x70] sm:$0xff] %v5632
        %5665 = vst [vmem:[#allocation3 + $0x78] sm:$0xff] %v5633
        %5666 = vst [vmem:[#allocation3 + $0x88] sm:$0xff] %v5634
        %5667 = vst [vmem:[#allocation3 + $0x90] sm:$0xff] %v5635
        %5668 = vst [vmem:[#allocation3 + $0x98] sm:$0xff] %v5636
        %5669 = vst [vmem:[#allocation3 + $0xa0] sm:$0xff] %v5637
        %5670 = vst [vmem:[#allocation3 + $0xa8] sm:$0xff] %v5638
        %5671 = vst [vmem:[#allocation3 + $0xb0] sm:$0xff] %v5639
        %5672 = vst [vmem:[#allocation3 + $0xb8] sm:$0xff] %v5640
        %5673 = vst [vmem:[#allocation3 + $0xc0] sm:$0xff] %v5641
        %5674 = vst [vmem:[#allocation3 + $0xc8] sm:$0xff] %v5642
        %5675 = vst [vmem:[#allocation3 + $0xd0] sm:$0xff] %v5643
        %5676 = vst [vmem:[#allocation3 + $0xd8] sm:$0xff] %v5644
        %5677 = vst [vmem:[#allocation3 + $0xe0] sm:$0xff] %v5645
        %5678 = vst [vmem:[#allocation3 + $0xe8] sm:$0xff] %v5646
        %5679 = vst [vmem:[#allocation3 + $0xf0] sm:$0xff] %v5647
        %5680 = vst [vmem:[#allocation3 + $0xf8] sm:$0xff] %v5648
        %5681 = vst [vmem:[#allocation3 + $0x100] sm:$0xff] %v5649
        %v5682 = vld [vmem:[#allocation3] sm:$0xff]
        %v5683 = vld [vmem:[#allocation3 + $0x8] sm:$0xff]
        %v5684 = vld [vmem:[#allocation3 + $0x10] sm:$0xff]
        %v5685 = vld [vmem:[#allocation3 + $0x18] sm:$0xff]
        %v5686 = vld [vmem:[#allocation3 + $0x20] sm:$0xff]
        %v5687 = vld [vmem:[#allocation3 + $0x28] sm:$0xff]
        %v5688 = vld [vmem:[#allocation3 + $0x30] sm:$0xff]
        %v5689 = vld [vmem:[#allocation3 + $0x38] sm:$0xff]
        %v5690 = vld [vmem:[#allocation3 + $0x40] sm:$0xff]
        %v5691 = vld [vmem:[#allocation3 + $0x48] sm:$0xff]
        %v5692 = vld [vmem:[#allocation3 + $0x50] sm:$0xff]
        %v5693 = vld [vmem:[#allocation3 + $0x58] sm:$0xff]
        %v5694 = vld [vmem:[#allocation3 + $0x60] sm:$0xff]
        %v5695 = vld [vmem:[#allocation3 + $0x68] sm:$0xff]
        %v5696 = vld [vmem:[#allocation3 + $0x70] sm:$0xff]
        %v5697 = vld [vmem:[#allocation3 + $0x78] sm:$0xff]
        %v5698 = vld [vmem:[#allocation3 + $0x88] sm:$0xff]
        %v5699 = vld [vmem:[#allocation3 + $0x90] sm:$0xff]
        %v5700 = vld [vmem:[#allocation3 + $0x98] sm:$0xff]
        %v5701 = vld [vmem:[#allocation3 + $0xa0] sm:$0xff]
        %v5702 = vld [vmem:[#allocation3 + $0xa8] sm:$0xff]
        %v5703 = vld [vmem:[#allocation3 + $0xb0] sm:$0xff]
        %v5704 = vld [vmem:[#allocation3 + $0xb8] sm:$0xff]
        %v5705 = vld [vmem:[#allocation3 + $0xc0] sm:$0xff]
        %v5706 = vld [vmem:[#allocation3 + $0xc8] sm:$0xff]
        %v5707 = vld [vmem:[#allocation3 + $0xd0] sm:$0xff]
        %v5708 = vld [vmem:[#allocation3 + $0xd8] sm:$0xff]
        %v5709 = vld [vmem:[#allocation3 + $0xe0] sm:$0xff]
        %v5710 = vld [vmem:[#allocation3 + $0xe8] sm:$0xff]
        %v5711 = vld [vmem:[#allocation3 + $0xf0] sm:$0xff]
        %v5712 = vld [vmem:[#allocation3 + $0xf8] sm:$0xff]
        %v5713 = vld [vmem:[#allocation3 + $0x100] sm:$0xff]
        %v5714 = vld [vmem:[#allocation3] sm:$0xff]
        %v5715 = vld [vmem:[#allocation3 + $0x8] sm:$0xff]
        %v5716 = vld [vmem:[#allocation3 + $0x10] sm:$0xff]
        %v5717 = vld [vmem:[#allocation3 + $0x18] sm:$0xff]
        %v5718 = vld [vmem:[#allocation3 + $0x20] sm:$0xff]
        %v5719 = vld [vmem:[#allocation3 + $0x28] sm:$0xff]
        %v5720 = vld [vmem:[#allocation3 + $0x30] sm:$0xff]
        %v5721 = vld [vmem:[#allocation3 + $0x38] sm:$0xff]
        %v5722 = vld [vmem:[#allocation3 + $0x40] sm:$0xff]
        %v5723 = vld [vmem:[#allocation3 + $0x48] sm:$0xff]
        %v5724 = vld [vmem:[#allocation3 + $0x50] sm:$0xff]
        %v5725 = vld [vmem:[#allocation3 + $0x58] sm:$0xff]
        %v5726 = vld [vmem:[#allocation3 + $0x60] sm:$0xff]
        %v5727 = vld [vmem:[#allocation3 + $0x68] sm:$0xff]
        %v5728 = vld [vmem:[#allocation3 + $0x70] sm:$0xff]
        %v5729 = vld [vmem:[#allocation3 + $0x78] sm:$0xff]
        %v5730 = vld [vmem:[#allocation3 + $0x80] sm:$0xff]
        %v5731 = vld [vmem:[#allocation3 + $0x88] sm:$0xff]
        %v5732 = vld [vmem:[#allocation3 + $0x90] sm:$0xff]
        %v5733 = vld [vmem:[#allocation3 + $0x98] sm:$0xff]
        %v5734 = vld [vmem:[#allocation3 + $0xa0] sm:$0xff]
        %v5735 = vld [vmem:[#allocation3 + $0xa8] sm:$0xff]
        %v5736 = vld [vmem:[#allocation3 + $0xb0] sm:$0xff]
        %v5737 = vld [vmem:[#allocation3 + $0xb8] sm:$0xff]
        %v5738 = vld [vmem:[#allocation3 + $0xc0] sm:$0xff]
        %v5739 = vld [vmem:[#allocation3 + $0xc8] sm:$0xff]
        %v5740 = vld [vmem:[#allocation3 + $0xd0] sm:$0xff]
        %v5741 = vld [vmem:[#allocation3 + $0xd8] sm:$0xff]
        %v5742 = vld [vmem:[#allocation3 + $0xe0] sm:$0xff]
        %v5743 = vld [vmem:[#allocation3 + $0xe8] sm:$0xff]
        %v5744 = vld [vmem:[#allocation3 + $0xf0] sm:$0xff]
        %v5745 = vld [vmem:[#allocation3 + $0xf8] sm:$0xff]
        %v5746 = vld [vmem:[#allocation3 + $0x100] sm:$0xff]
        %v5747 = vld [vmem:[#allocation3 + $0x108] sm:$0xff]
        %5782 = vrot.lane.b32.xlu0 %v5714, 127
        %v5783 = vpop.permute.xlu0 %5782
        %5784 = vrot.lane.b32.xlu0 %v5715, 127
        %v5785 = vpop.permute.xlu0 %5784
        %5786 = vrot.lane.b32.xlu0 %v5716, 127
        %v5787 = vpop.permute.xlu0 %5786
        %5788 = vrot.lane.b32.xlu0 %v5717, 127
        %v5789 = vpop.permute.xlu0 %5788
        %5790 = vrot.lane.b32.xlu0 %v5718, 127
        %v5791 = vpop.permute.xlu0 %5790
        %5792 = vrot.lane.b32.xlu0 %v5719, 127
        %v5793 = vpop.permute.xlu0 %5792
        %5794 = vrot.lane.b32.xlu0 %v5720, 127
        %v5795 = vpop.permute.xlu0 %5794
        %5796 = vrot.lane.b32.xlu0 %v5721, 127
        %v5797 = vpop.permute.xlu0 %5796
        %5798 = vrot.lane.b32.xlu0 %v5722, 127
        %v5799 = vpop.permute.xlu0 %5798
        %5800 = vrot.lane.b32.xlu0 %v5723, 127
        %v5801 = vpop.permute.xlu0 %5800
        %5802 = vrot.lane.b32.xlu0 %v5724, 127
        %v5803 = vpop.permute.xlu0 %5802
        %5804 = vrot.lane.b32.xlu0 %v5725, 127
        %v5805 = vpop.permute.xlu0 %5804
        %5806 = vrot.lane.b32.xlu0 %v5726, 127
        %v5807 = vpop.permute.xlu0 %5806
        %5808 = vrot.lane.b32.xlu0 %v5727, 127
        %v5809 = vpop.permute.xlu0 %5808
        %5810 = vrot.lane.b32.xlu0 %v5728, 127
        %v5811 = vpop.permute.xlu0 %5810
        %5812 = vrot.lane.b32.xlu0 %v5729, 127
        %v5813 = vpop.permute.xlu0 %5812
        %5814 = vrot.lane.b32.xlu0 %v5730, 127
        %v5815 = vpop.permute.xlu0 %5814
        %5816 = vrot.lane.b32.xlu0 %v5731, 127
        %v5817 = vpop.permute.xlu0 %5816
        %5818 = vrot.lane.b32.xlu0 %v5732, 127
        %v5819 = vpop.permute.xlu0 %5818
        %5820 = vrot.lane.b32.xlu0 %v5733, 127
        %v5821 = vpop.permute.xlu0 %5820
        %5822 = vrot.lane.b32.xlu0 %v5734, 127
        %v5823 = vpop.permute.xlu0 %5822
        %5824 = vrot.lane.b32.xlu0 %v5735, 127
        %v5825 = vpop.permute.xlu0 %5824
        %5826 = vrot.lane.b32.xlu0 %v5736, 127
        %v5827 = vpop.permute.xlu0 %5826
        %5828 = vrot.lane.b32.xlu0 %v5737, 127
        %v5829 = vpop.permute.xlu0 %5828
        %5830 = vrot.lane.b32.xlu0 %v5738, 127
        %v5831 = vpop.permute.xlu0 %5830
        %5832 = vrot.lane.b32.xlu0 %v5739, 127
        %v5833 = vpop.permute.xlu0 %5832
        %5834 = vrot.lane.b32.xlu0 %v5740, 127
        %v5835 = vpop.permute.xlu0 %5834
        %5836 = vrot.lane.b32.xlu0 %v5741, 127
        %v5837 = vpop.permute.xlu0 %5836
        %5838 = vrot.lane.b32.xlu0 %v5742, 127
        %v5839 = vpop.permute.xlu0 %5838
        %5840 = vrot.lane.b32.xlu0 %v5743, 127
        %v5841 = vpop.permute.xlu0 %5840
        %5842 = vrot.lane.b32.xlu0 %v5744, 127
        %v5843 = vpop.permute.xlu0 %5842
        %5844 = vrot.lane.b32.xlu0 %v5745, 127
        %v5845 = vpop.permute.xlu0 %5844
        %5846 = vrot.lane.b32.xlu0 %v5746, 127
        %v5847 = vpop.permute.xlu0 %5846
        %5848 = vrot.lane.b32.xlu0 %v5747, 127
        %v5849 = vpop.permute.xlu0 %5848
        %v5850 = vsel %vm393, %v5783, %v5785
        %v5851 = vsel %vm393, %v5785, %v5787
        %v5852 = vsel %vm393, %v5787, %v5789
        %v5853 = vsel %vm393, %v5789, %v5791
        %v5854 = vsel %vm393, %v5791, %v5793
        %v5855 = vsel %vm393, %v5793, %v5795
        %v5856 = vsel %vm393, %v5795, %v5797
        %v5857 = vsel %vm393, %v5797, %v5799
        %v5858 = vsel %vm393, %v5799, %v5801
        %v5859 = vsel %vm393, %v5801, %v5803
        %v5860 = vsel %vm393, %v5803, %v5805
        %v5861 = vsel %vm393, %v5805, %v5807
        %v5862 = vsel %vm393, %v5807, %v5809
        %v5863 = vsel %vm393, %v5809, %v5811
        %v5864 = vsel %vm393, %v5811, %v5813
        %v5865 = vsel %vm393, %v5813, %v5815
        %v5866 = vsel %vm393, %v5817, %v5819
        %v5867 = vsel %vm393, %v5819, %v5821
        %v5868 = vsel %vm393, %v5821, %v5823
        %v5869 = vsel %vm393, %v5823, %v5825
        %v5870 = vsel %vm393, %v5825, %v5827
        %v5871 = vsel %vm393, %v5827, %v5829
        %v5872 = vsel %vm393, %v5829, %v5831
        %v5873 = vsel %vm393, %v5831, %v5833
        %v5874 = vsel %vm393, %v5833, %v5835
        %v5875 = vsel %vm393, %v5835, %v5837
        %v5876 = vsel %vm393, %v5837, %v5839
        %v5877 = vsel %vm393, %v5839, %v5841
        %v5878 = vsel %vm393, %v5841, %v5843
        %v5879 = vsel %vm393, %v5843, %v5845
        %v5880 = vsel %vm393, %v5845, %v5847
        %v5881 = vsel %vm393, %v5847, %v5849
        %v5914 = vmax.bf16 %v5682, %v5850
        %v5915 = vmax.bf16 %v5683, %v5851
        %v5916 = vmax.bf16 %v5684, %v5852
        %v5917 = vmax.bf16 %v5685, %v5853
        %v5918 = vmax.bf16 %v5686, %v5854
        %v5919 = vmax.bf16 %v5687, %v5855
        %v5920 = vmax.bf16 %v5688, %v5856
        %v5921 = vmax.bf16 %v5689, %v5857
        %v5922 = vmax.bf16 %v5690, %v5858
        %v5923 = vmax.bf16 %v5691, %v5859
        %v5924 = vmax.bf16 %v5692, %v5860
        %v5925 = vmax.bf16 %v5693, %v5861
        %v5926 = vmax.bf16 %v5694, %v5862
        %v5927 = vmax.bf16 %v5695, %v5863
        %v5928 = vmax.bf16 %v5696, %v5864
        %v5929 = vmax.bf16 %v5697, %v5865
        %v5930 = vmax.bf16 %v5698, %v5866
        %v5931 = vmax.bf16 %v5699, %v5867
        %v5932 = vmax.bf16 %v5700, %v5868
        %v5933 = vmax.bf16 %v5701, %v5869
        %v5934 = vmax.bf16 %v5702, %v5870
        %v5935 = vmax.bf16 %v5703, %v5871
        %v5936 = vmax.bf16 %v5704, %v5872
        %v5937 = vmax.bf16 %v5705, %v5873
        %v5938 = vmax.bf16 %v5706, %v5874
        %v5939 = vmax.bf16 %v5707, %v5875
        %v5940 = vmax.bf16 %v5708, %v5876
        %v5941 = vmax.bf16 %v5709, %v5877
        %v5942 = vmax.bf16 %v5710, %v5878
        %v5943 = vmax.bf16 %v5711, %v5879
        %v5944 = vmax.bf16 %v5712, %v5880
        %v5945 = vmax.bf16 %v5713, %v5881
        %v5948 = vmax.bf16 %v5714, %v5850
        %v5949 = vmax.bf16 %v5715, %v5851
        %v5950 = vmax.bf16 %v5716, %v5852
        %v5951 = vmax.bf16 %v5717, %v5853
        %v5952 = vmax.bf16 %v5718, %v5854
        %v5953 = vmax.bf16 %v5719, %v5855
        %v5954 = vmax.bf16 %v5720, %v5856
        %v5955 = vmax.bf16 %v5721, %v5857
        %v5956 = vmax.bf16 %v5722, %v5858
        %v5957 = vmax.bf16 %v5723, %v5859
        %v5958 = vmax.bf16 %v5724, %v5860
        %v5959 = vmax.bf16 %v5725, %v5861
        %v5960 = vmax.bf16 %v5726, %v5862
        %v5961 = vmax.bf16 %v5727, %v5863
        %v5962 = vmax.bf16 %v5728, %v5864
        %v5963 = vmax.bf16 %v5729, %v5865
        %v5964 = vmax.bf16 %v5730, %v5815
        %v5965 = vmax.bf16 %v5731, %v5866
        %v5966 = vmax.bf16 %v5732, %v5867
        %v5967 = vmax.bf16 %v5733, %v5868
        %v5968 = vmax.bf16 %v5734, %v5869
        %v5969 = vmax.bf16 %v5735, %v5870
        %v5970 = vmax.bf16 %v5736, %v5871
        %v5971 = vmax.bf16 %v5737, %v5872
        %v5972 = vmax.bf16 %v5738, %v5873
        %v5973 = vmax.bf16 %v5739, %v5874
        %v5974 = vmax.bf16 %v5740, %v5875
        %v5975 = vmax.bf16 %v5741, %v5876
        %v5976 = vmax.bf16 %v5742, %v5877
        %v5977 = vmax.bf16 %v5743, %v5878
        %v5978 = vmax.bf16 %v5744, %v5879
        %v5979 = vmax.bf16 %v5745, %v5880
        %v5980 = vmax.bf16 %v5746, %v5881
        %v5981 = vmax.bf16 %v5747, %v5849
        %6016 = vrot.lane.b32.xlu0 %v5948, 96
        %v6017 = vpop.permute.xlu0 %6016
        %6018 = vrot.lane.b32.xlu0 %v5949, 96
        %v6019 = vpop.permute.xlu0 %6018
        %6020 = vrot.lane.b32.xlu0 %v5950, 96
        %v6021 = vpop.permute.xlu0 %6020
        %6022 = vrot.lane.b32.xlu0 %v5951, 96
        %v6023 = vpop.permute.xlu0 %6022
        %6024 = vrot.lane.b32.xlu0 %v5952, 96
        %v6025 = vpop.permute.xlu0 %6024
        %6026 = vrot.lane.b32.xlu0 %v5953, 96
        %v6027 = vpop.permute.xlu0 %6026
        %6028 = vrot.lane.b32.xlu0 %v5954, 96
        %v6029 = vpop.permute.xlu0 %6028
        %6030 = vrot.lane.b32.xlu0 %v5955, 96
        %v6031 = vpop.permute.xlu0 %6030
        %6032 = vrot.lane.b32.xlu0 %v5956, 96
        %v6033 = vpop.permute.xlu0 %6032
        %6034 = vrot.lane.b32.xlu0 %v5957, 96
        %v6035 = vpop.permute.xlu0 %6034
        %6036 = vrot.lane.b32.xlu0 %v5958, 96
        %v6037 = vpop.permute.xlu0 %6036
        %6038 = vrot.lane.b32.xlu0 %v5959, 96
        %v6039 = vpop.permute.xlu0 %6038
        %6040 = vrot.lane.b32.xlu0 %v5960, 96
        %v6041 = vpop.permute.xlu0 %6040
        %6042 = vrot.lane.b32.xlu0 %v5961, 96
        %v6043 = vpop.permute.xlu0 %6042
        %6044 = vrot.lane.b32.xlu0 %v5962, 96
        %v6045 = vpop.permute.xlu0 %6044
        %6046 = vrot.lane.b32.xlu0 %v5963, 96
        %v6047 = vpop.permute.xlu0 %6046
        %6048 = vrot.lane.b32.xlu0 %v5964, 96
        %v6049 = vpop.permute.xlu0 %6048
        %6050 = vrot.lane.b32.xlu0 %v5965, 96
        %v6051 = vpop.permute.xlu0 %6050
        %6052 = vrot.lane.b32.xlu0 %v5966, 96
        %v6053 = vpop.permute.xlu0 %6052
        %6054 = vrot.lane.b32.xlu0 %v5967, 96
        %v6055 = vpop.permute.xlu0 %6054
        %6056 = vrot.lane.b32.xlu0 %v5968, 96
        %v6057 = vpop.permute.xlu0 %6056
        %6058 = vrot.lane.b32.xlu0 %v5969, 96
        %v6059 = vpop.permute.xlu0 %6058
        %6060 = vrot.lane.b32.xlu0 %v5970, 96
        %v6061 = vpop.permute.xlu0 %6060
        %6062 = vrot.lane.b32.xlu0 %v5971, 96
        %v6063 = vpop.permute.xlu0 %6062
        %6064 = vrot.lane.b32.xlu0 %v5972, 96
        %v6065 = vpop.permute.xlu0 %6064
        %6066 = vrot.lane.b32.xlu0 %v5973, 96
        %v6067 = vpop.permute.xlu0 %6066
        %6068 = vrot.lane.b32.xlu0 %v5974, 96
        %v6069 = vpop.permute.xlu0 %6068
        %6070 = vrot.lane.b32.xlu0 %v5975, 96
        %v6071 = vpop.permute.xlu0 %6070
        %6072 = vrot.lane.b32.xlu0 %v5976, 96
        %v6073 = vpop.permute.xlu0 %6072
        %6074 = vrot.lane.b32.xlu0 %v5977, 96
        %v6075 = vpop.permute.xlu0 %6074
        %6076 = vrot.lane.b32.xlu0 %v5978, 96
        %v6077 = vpop.permute.xlu0 %6076
        %6078 = vrot.lane.b32.xlu0 %v5979, 96
        %v6079 = vpop.permute.xlu0 %6078
        %6080 = vrot.lane.b32.xlu0 %v5980, 96
        %v6081 = vpop.permute.xlu0 %6080
        %6082 = vrot.lane.b32.xlu0 %v5981, 96
        %v6083 = vpop.permute.xlu0 %6082
        %v6084 = vsel %vm699, %v6017, %v6019
        %v6085 = vsel %vm699, %v6019, %v6021
        %v6086 = vsel %vm699, %v6021, %v6023
        %v6087 = vsel %vm699, %v6023, %v6025
        %v6088 = vsel %vm699, %v6025, %v6027
        %v6089 = vsel %vm699, %v6027, %v6029
        %v6090 = vsel %vm699, %v6029, %v6031
        %v6091 = vsel %vm699, %v6031, %v6033
        %v6092 = vsel %vm699, %v6033, %v6035
        %v6093 = vsel %vm699, %v6035, %v6037
        %v6094 = vsel %vm699, %v6037, %v6039
        %v6095 = vsel %vm699, %v6039, %v6041
        %v6096 = vsel %vm699, %v6041, %v6043
        %v6097 = vsel %vm699, %v6043, %v6045
        %v6098 = vsel %vm699, %v6045, %v6047
        %v6099 = vsel %vm699, %v6047, %v6049
        %v6100 = vsel %vm699, %v6051, %v6053
        %v6101 = vsel %vm699, %v6053, %v6055
        %v6102 = vsel %vm699, %v6055, %v6057
        %v6103 = vsel %vm699, %v6057, %v6059
        %v6104 = vsel %vm699, %v6059, %v6061
        %v6105 = vsel %vm699, %v6061, %v6063
        %v6106 = vsel %vm699, %v6063, %v6065
        %v6107 = vsel %vm699, %v6065, %v6067
        %v6108 = vsel %vm699, %v6067, %v6069
        %v6109 = vsel %vm699, %v6069, %v6071
        %v6110 = vsel %vm699, %v6071, %v6073
        %v6111 = vsel %vm699, %v6073, %v6075
        %v6112 = vsel %vm699, %v6075, %v6077
        %v6113 = vsel %vm699, %v6077, %v6079
        %v6114 = vsel %vm699, %v6079, %v6081
        %v6115 = vsel %vm699, %v6081, %v6083
        %v6148 = vmax.bf16 %v5914, %v6084
        %v6149 = vmax.bf16 %v5915, %v6085
        %v6150 = vmax.bf16 %v5916, %v6086
        %v6151 = vmax.bf16 %v5917, %v6087
        %v6152 = vmax.bf16 %v5918, %v6088
        %v6153 = vmax.bf16 %v5919, %v6089
        %v6154 = vmax.bf16 %v5920, %v6090
        %v6155 = vmax.bf16 %v5921, %v6091
        %v6156 = vmax.bf16 %v5922, %v6092
        %v6157 = vmax.bf16 %v5923, %v6093
        %v6158 = vmax.bf16 %v5924, %v6094
        %v6159 = vmax.bf16 %v5925, %v6095
        %v6160 = vmax.bf16 %v5926, %v6096
        %v6161 = vmax.bf16 %v5927, %v6097
        %v6162 = vmax.bf16 %v5928, %v6098
        %v6163 = vmax.bf16 %v5929, %v6099
        %v6164 = vmax.bf16 %v5930, %v6100
        %v6165 = vmax.bf16 %v5931, %v6101
        %v6166 = vmax.bf16 %v5932, %v6102
        %v6167 = vmax.bf16 %v5933, %v6103
        %v6168 = vmax.bf16 %v5934, %v6104
        %v6169 = vmax.bf16 %v5935, %v6105
        %v6170 = vmax.bf16 %v5936, %v6106
        %v6171 = vmax.bf16 %v5937, %v6107
        %v6172 = vmax.bf16 %v5938, %v6108
        %v6173 = vmax.bf16 %v5939, %v6109
        %v6174 = vmax.bf16 %v5940, %v6110
        %v6175 = vmax.bf16 %v5941, %v6111
        %v6176 = vmax.bf16 %v5942, %v6112
        %v6177 = vmax.bf16 %v5943, %v6113
        %v6178 = vmax.bf16 %v5944, %v6114
        %v6179 = vmax.bf16 %v5945, %v6115
        %6180 = vst [vmem:[#allocation4] sm:$0xff] %v6148
        %6181 = vst [vmem:[#allocation4 + $0x8] sm:$0xff] %v6149
        %6182 = vst [vmem:[#allocation4 + $0x10] sm:$0xff] %v6150
        %6183 = vst [vmem:[#allocation4 + $0x18] sm:$0xff] %v6151
        %6184 = vst [vmem:[#allocation4 + $0x20] sm:$0xff] %v6152
        %6185 = vst [vmem:[#allocation4 + $0x28] sm:$0xff] %v6153
        %6186 = vst [vmem:[#allocation4 + $0x30] sm:$0xff] %v6154
        %6187 = vst [vmem:[#allocation4 + $0x38] sm:$0xff] %v6155
        %6188 = vst [vmem:[#allocation4 + $0x40] sm:$0xff] %v6156
        %6189 = vst [vmem:[#allocation4 + $0x48] sm:$0xff] %v6157
        %6190 = vst [vmem:[#allocation4 + $0x50] sm:$0xff] %v6158
        %6191 = vst [vmem:[#allocation4 + $0x58] sm:$0xff] %v6159
        %6192 = vst [vmem:[#allocation4 + $0x60] sm:$0xff] %v6160
        %6193 = vst [vmem:[#allocation4 + $0x68] sm:$0xff] %v6161
        %6194 = vst [vmem:[#allocation4 + $0x70] sm:$0xff] %v6162
        %6195 = vst [vmem:[#allocation4 + $0x78] sm:$0xff] %v6163
        %6196 = vst [vmem:[#allocation4 + $0x98] sm:$0xff] %v6164
        %6197 = vst [vmem:[#allocation4 + $0xa0] sm:$0xff] %v6165
        %6198 = vst [vmem:[#allocation4 + $0xa8] sm:$0xff] %v6166
        %6199 = vst [vmem:[#allocation4 + $0xb0] sm:$0xff] %v6167
        %6200 = vst [vmem:[#allocation4 + $0xb8] sm:$0xff] %v6168
        %6201 = vst [vmem:[#allocation4 + $0xc0] sm:$0xff] %v6169
        %6202 = vst [vmem:[#allocation4 + $0xc8] sm:$0xff] %v6170
        %6203 = vst [vmem:[#allocation4 + $0xd0] sm:$0xff] %v6171
        %6204 = vst [vmem:[#allocation4 + $0xd8] sm:$0xff] %v6172
        %6205 = vst [vmem:[#allocation4 + $0xe0] sm:$0xff] %v6173
        %6206 = vst [vmem:[#allocation4 + $0xe8] sm:$0xff] %v6174
        %6207 = vst [vmem:[#allocation4 + $0xf0] sm:$0xff] %v6175
        %6208 = vst [vmem:[#allocation4 + $0xf8] sm:$0xff] %v6176
        %6209 = vst [vmem:[#allocation4 + $0x100] sm:$0xff] %v6177
        %6210 = vst [vmem:[#allocation4 + $0x108] sm:$0xff] %v6178
        %6211 = vst [vmem:[#allocation4 + $0x110] sm:$0xff] %v6179
        %v6212 = vld [vmem:[#allocation4] sm:$0xff]
        %v6213 = vld [vmem:[#allocation4 + $0x8] sm:$0xff]
        %v6214 = vld [vmem:[#allocation4 + $0x10] sm:$0xff]
        %v6215 = vld [vmem:[#allocation4 + $0x18] sm:$0xff]
        %v6216 = vld [vmem:[#allocation4 + $0x20] sm:$0xff]
        %v6217 = vld [vmem:[#allocation4 + $0x28] sm:$0xff]
        %v6218 = vld [vmem:[#allocation4 + $0x30] sm:$0xff]
        %v6219 = vld [vmem:[#allocation4 + $0x38] sm:$0xff]
        %v6220 = vld [vmem:[#allocation4 + $0x40] sm:$0xff]
        %v6221 = vld [vmem:[#allocation4 + $0x48] sm:$0xff]
        %v6222 = vld [vmem:[#allocation4 + $0x50] sm:$0xff]
        %v6223 = vld [vmem:[#allocation4 + $0x58] sm:$0xff]
        %v6224 = vld [vmem:[#allocation4 + $0x60] sm:$0xff]
        %v6225 = vld [vmem:[#allocation4 + $0x68] sm:$0xff]
        %v6226 = vld [vmem:[#allocation4 + $0x70] sm:$0xff]
        %v6227 = vld [vmem:[#allocation4 + $0x78] sm:$0xff]
        %v6228 = vld [vmem:[#allocation4 + $0x98] sm:$0xff]
        %v6229 = vld [vmem:[#allocation4 + $0xa0] sm:$0xff]
        %v6230 = vld [vmem:[#allocation4 + $0xa8] sm:$0xff]
        %v6231 = vld [vmem:[#allocation4 + $0xb0] sm:$0xff]
        %v6232 = vld [vmem:[#allocation4 + $0xb8] sm:$0xff]
        %v6233 = vld [vmem:[#allocation4 + $0xc0] sm:$0xff]
        %v6234 = vld [vmem:[#allocation4 + $0xc8] sm:$0xff]
        %v6235 = vld [vmem:[#allocation4 + $0xd0] sm:$0xff]
        %v6236 = vld [vmem:[#allocation4 + $0xd8] sm:$0xff]
        %v6237 = vld [vmem:[#allocation4 + $0xe0] sm:$0xff]
        %v6238 = vld [vmem:[#allocation4 + $0xe8] sm:$0xff]
        %v6239 = vld [vmem:[#allocation4 + $0xf0] sm:$0xff]
        %v6240 = vld [vmem:[#allocation4 + $0xf8] sm:$0xff]
        %v6241 = vld [vmem:[#allocation4 + $0x100] sm:$0xff]
        %v6242 = vld [vmem:[#allocation4 + $0x108] sm:$0xff]
        %v6243 = vld [vmem:[#allocation4 + $0x110] sm:$0xff]
        %v6244 = vld [vmem:[#allocation4 + $0x80] sm:$0xff]
        %v6245 = vld [vmem:[#allocation4 + $0x118] sm:$0xff]
        %v6246 = vld [vmem:[#allocation4 + $0x88] sm:$0xff]
        %v6247 = vld [vmem:[#allocation4 + $0x120] sm:$0xff]
        %v6248 = vld [vmem:[#allocation4 + $0x10] sm:$0xff]
        %v6249 = vld [vmem:[#allocation4 + $0x18] sm:$0xff]
        %v6250 = vld [vmem:[#allocation4 + $0x20] sm:$0xff]
        %v6251 = vld [vmem:[#allocation4 + $0x28] sm:$0xff]
        %v6252 = vld [vmem:[#allocation4 + $0x30] sm:$0xff]
        %v6253 = vld [vmem:[#allocation4 + $0x38] sm:$0xff]
        %v6254 = vld [vmem:[#allocation4 + $0x40] sm:$0xff]
        %v6255 = vld [vmem:[#allocation4 + $0x48] sm:$0xff]
        %v6256 = vld [vmem:[#allocation4 + $0x50] sm:$0xff]
        %v6257 = vld [vmem:[#allocation4 + $0x58] sm:$0xff]
        %v6258 = vld [vmem:[#allocation4 + $0x60] sm:$0xff]
        %v6259 = vld [vmem:[#allocation4 + $0x68] sm:$0xff]
        %v6260 = vld [vmem:[#allocation4 + $0x70] sm:$0xff]
        %v6261 = vld [vmem:[#allocation4 + $0x78] sm:$0xff]
        %v6262 = vld [vmem:[#allocation4 + $0x80] sm:$0xff]
        %v6263 = vld [vmem:[#allocation4 + $0x88] sm:$0xff]
        %v6264 = vld [vmem:[#allocation4 + $0x90] sm:$0xff]
        %v6265 = vld [vmem:[#allocation4 + $0xa8] sm:$0xff]
        %v6266 = vld [vmem:[#allocation4 + $0xb0] sm:$0xff]
        %v6267 = vld [vmem:[#allocation4 + $0xb8] sm:$0xff]
        %v6268 = vld [vmem:[#allocation4 + $0xc0] sm:$0xff]
        %v6269 = vld [vmem:[#allocation4 + $0xc8] sm:$0xff]
        %v6270 = vld [vmem:[#allocation4 + $0xd0] sm:$0xff]
        %v6271 = vld [vmem:[#allocation4 + $0xd8] sm:$0xff]
        %v6272 = vld [vmem:[#allocation4 + $0xe0] sm:$0xff]
        %v6273 = vld [vmem:[#allocation4 + $0xe8] sm:$0xff]
        %v6274 = vld [vmem:[#allocation4 + $0xf0] sm:$0xff]
        %v6275 = vld [vmem:[#allocation4 + $0xf8] sm:$0xff]
        %v6276 = vld [vmem:[#allocation4 + $0x100] sm:$0xff]
        %v6277 = vld [vmem:[#allocation4 + $0x108] sm:$0xff]
        %v6278 = vld [vmem:[#allocation4 + $0x110] sm:$0xff]
        %v6279 = vld [vmem:[#allocation4 + $0x118] sm:$0xff]
        %v6280 = vld [vmem:[#allocation4 + $0x120] sm:$0xff]
        %v6281 = vld [vmem:[#allocation4 + $0x128] sm:$0xff]
        %6316 = vrot.lane.b32.xlu0 %v6212, 126
        %v6317 = vpop.permute.xlu0 %6316
        %6318 = vrot.lane.b32.xlu0 %v6213, 126
        %v6319 = vpop.permute.xlu0 %6318
        %6320 = vrot.lane.b32.xlu0 %v6214, 126
        %v6321 = vpop.permute.xlu0 %6320
        %6322 = vrot.lane.b32.xlu0 %v6215, 126
        %v6323 = vpop.permute.xlu0 %6322
        %6324 = vrot.lane.b32.xlu0 %v6216, 126
        %v6325 = vpop.permute.xlu0 %6324
        %6326 = vrot.lane.b32.xlu0 %v6217, 126
        %v6327 = vpop.permute.xlu0 %6326
        %6328 = vrot.lane.b32.xlu0 %v6218, 126
        %v6329 = vpop.permute.xlu0 %6328
        %6330 = vrot.lane.b32.xlu0 %v6219, 126
        %v6331 = vpop.permute.xlu0 %6330
        %6332 = vrot.lane.b32.xlu0 %v6220, 126
        %v6333 = vpop.permute.xlu0 %6332
        %6334 = vrot.lane.b32.xlu0 %v6221, 126
        %v6335 = vpop.permute.xlu0 %6334
        %6336 = vrot.lane.b32.xlu0 %v6222, 126
        %v6337 = vpop.permute.xlu0 %6336
        %6338 = vrot.lane.b32.xlu0 %v6223, 126
        %v6339 = vpop.permute.xlu0 %6338
        %6340 = vrot.lane.b32.xlu0 %v6224, 126
        %v6341 = vpop.permute.xlu0 %6340
        %6342 = vrot.lane.b32.xlu0 %v6225, 126
        %v6343 = vpop.permute.xlu0 %6342
        %6344 = vrot.lane.b32.xlu0 %v6226, 126
        %v6345 = vpop.permute.xlu0 %6344
        %6346 = vrot.lane.b32.xlu0 %v6227, 126
        %v6347 = vpop.permute.xlu0 %6346
        %6348 = vrot.lane.b32.xlu0 %v6244, 126
        %v6349 = vpop.permute.xlu0 %6348
        %6350 = vrot.lane.b32.xlu0 %v6228, 126
        %v6351 = vpop.permute.xlu0 %6350
        %6352 = vrot.lane.b32.xlu0 %v6229, 126
        %v6353 = vpop.permute.xlu0 %6352
        %6354 = vrot.lane.b32.xlu0 %v6230, 126
        %v6355 = vpop.permute.xlu0 %6354
        %6356 = vrot.lane.b32.xlu0 %v6231, 126
        %v6357 = vpop.permute.xlu0 %6356
        %6358 = vrot.lane.b32.xlu0 %v6232, 126
        %v6359 = vpop.permute.xlu0 %6358
        %6360 = vrot.lane.b32.xlu0 %v6233, 126
        %v6361 = vpop.permute.xlu0 %6360
        %6362 = vrot.lane.b32.xlu0 %v6234, 126
        %v6363 = vpop.permute.xlu0 %6362
        %6364 = vrot.lane.b32.xlu0 %v6235, 126
        %v6365 = vpop.permute.xlu0 %6364
        %6366 = vrot.lane.b32.xlu0 %v6236, 126
        %v6367 = vpop.permute.xlu0 %6366
        %6368 = vrot.lane.b32.xlu0 %v6237, 126
        %v6369 = vpop.permute.xlu0 %6368
        %6370 = vrot.lane.b32.xlu0 %v6238, 126
        %v6371 = vpop.permute.xlu0 %6370
        %6372 = vrot.lane.b32.xlu0 %v6239, 126
        %v6373 = vpop.permute.xlu0 %6372
        %6374 = vrot.lane.b32.xlu0 %v6240, 126
        %v6375 = vpop.permute.xlu0 %6374
        %6376 = vrot.lane.b32.xlu0 %v6241, 126
        %v6377 = vpop.permute.xlu0 %6376
        %6378 = vrot.lane.b32.xlu0 %v6242, 126
        %v6379 = vpop.permute.xlu0 %6378
        %6380 = vrot.lane.b32.xlu0 %v6243, 126
        %v6381 = vpop.permute.xlu0 %6380
        %6382 = vrot.lane.b32.xlu0 %v6245, 126
        %v6383 = vpop.permute.xlu0 %6382
        %v6384 = vsel %vm444, %v6317, %v6319
        %v6385 = vsel %vm444, %v6319, %v6321
        %v6386 = vsel %vm444, %v6321, %v6323
        %v6387 = vsel %vm444, %v6323, %v6325
        %v6388 = vsel %vm444, %v6325, %v6327
        %v6389 = vsel %vm444, %v6327, %v6329
        %v6390 = vsel %vm444, %v6329, %v6331
        %v6391 = vsel %vm444, %v6331, %v6333
        %v6392 = vsel %vm444, %v6333, %v6335
        %v6393 = vsel %vm444, %v6335, %v6337
        %v6394 = vsel %vm444, %v6337, %v6339
        %v6395 = vsel %vm444, %v6339, %v6341
        %v6396 = vsel %vm444, %v6341, %v6343
        %v6397 = vsel %vm444, %v6343, %v6345
        %v6398 = vsel %vm444, %v6345, %v6347
        %v6399 = vsel %vm444, %v6347, %v6349
        %v6400 = vsel %vm444, %v6351, %v6353
        %v6401 = vsel %vm444, %v6353, %v6355
        %v6402 = vsel %vm444, %v6355, %v6357
        %v6403 = vsel %vm444, %v6357, %v6359
        %v6404 = vsel %vm444, %v6359, %v6361
        %v6405 = vsel %vm444, %v6361, %v6363
        %v6406 = vsel %vm444, %v6363, %v6365
        %v6407 = vsel %vm444, %v6365, %v6367
        %v6408 = vsel %vm444, %v6367, %v6369
        %v6409 = vsel %vm444, %v6369, %v6371
        %v6410 = vsel %vm444, %v6371, %v6373
        %v6411 = vsel %vm444, %v6373, %v6375
        %v6412 = vsel %vm444, %v6375, %v6377
        %v6413 = vsel %vm444, %v6377, %v6379
        %v6414 = vsel %vm444, %v6379, %v6381
        %v6415 = vsel %vm444, %v6381, %v6383
        %6448 = vrot.lane.b32.xlu0 %v6212, 124
        %v6449 = vpop.permute.xlu0 %6448
        %6450 = vrot.lane.b32.xlu0 %v6213, 124
        %v6451 = vpop.permute.xlu0 %6450
        %6452 = vrot.lane.b32.xlu0 %v6214, 124
        %v6453 = vpop.permute.xlu0 %6452
        %6454 = vrot.lane.b32.xlu0 %v6215, 124
        %v6455 = vpop.permute.xlu0 %6454
        %6456 = vrot.lane.b32.xlu0 %v6216, 124
        %v6457 = vpop.permute.xlu0 %6456
        %6458 = vrot.lane.b32.xlu0 %v6217, 124
        %v6459 = vpop.permute.xlu0 %6458
        %6460 = vrot.lane.b32.xlu0 %v6218, 124
        %v6461 = vpop.permute.xlu0 %6460
        %6462 = vrot.lane.b32.xlu0 %v6219, 124
        %v6463 = vpop.permute.xlu0 %6462
        %6464 = vrot.lane.b32.xlu0 %v6220, 124
        %v6465 = vpop.permute.xlu0 %6464
        %6466 = vrot.lane.b32.xlu0 %v6221, 124
        %v6467 = vpop.permute.xlu0 %6466
        %6468 = vrot.lane.b32.xlu0 %v6222, 124
        %v6469 = vpop.permute.xlu0 %6468
        %6470 = vrot.lane.b32.xlu0 %v6223, 124
        %v6471 = vpop.permute.xlu0 %6470
        %6472 = vrot.lane.b32.xlu0 %v6224, 124
        %v6473 = vpop.permute.xlu0 %6472
        %6474 = vrot.lane.b32.xlu0 %v6225, 124
        %v6475 = vpop.permute.xlu0 %6474
        %6476 = vrot.lane.b32.xlu0 %v6226, 124
        %v6477 = vpop.permute.xlu0 %6476
        %6478 = vrot.lane.b32.xlu0 %v6227, 124
        %v6479 = vpop.permute.xlu0 %6478
        %6480 = vrot.lane.b32.xlu0 %v6244, 124
        %v6481 = vpop.permute.xlu0 %6480
        %6482 = vrot.lane.b32.xlu0 %v6228, 124
        %v6483 = vpop.permute.xlu0 %6482
        %6484 = vrot.lane.b32.xlu0 %v6229, 124
        %v6485 = vpop.permute.xlu0 %6484
        %6486 = vrot.lane.b32.xlu0 %v6230, 124
        %v6487 = vpop.permute.xlu0 %6486
        %6488 = vrot.lane.b32.xlu0 %v6231, 124
        %v6489 = vpop.permute.xlu0 %6488
        %6490 = vrot.lane.b32.xlu0 %v6232, 124
        %v6491 = vpop.permute.xlu0 %6490
        %6492 = vrot.lane.b32.xlu0 %v6233, 124
        %v6493 = vpop.permute.xlu0 %6492
        %6494 = vrot.lane.b32.xlu0 %v6234, 124
        %v6495 = vpop.permute.xlu0 %6494
        %6496 = vrot.lane.b32.xlu0 %v6235, 124
        %v6497 = vpop.permute.xlu0 %6496
        %6498 = vrot.lane.b32.xlu0 %v6236, 124
        %v6499 = vpop.permute.xlu0 %6498
        %6500 = vrot.lane.b32.xlu0 %v6237, 124
        %v6501 = vpop.permute.xlu0 %6500
        %6502 = vrot.lane.b32.xlu0 %v6238, 124
        %v6503 = vpop.permute.xlu0 %6502
        %6504 = vrot.lane.b32.xlu0 %v6239, 124
        %v6505 = vpop.permute.xlu0 %6504
        %6506 = vrot.lane.b32.xlu0 %v6240, 124
        %v6507 = vpop.permute.xlu0 %6506
        %6508 = vrot.lane.b32.xlu0 %v6241, 124
        %v6509 = vpop.permute.xlu0 %6508
        %6510 = vrot.lane.b32.xlu0 %v6242, 124
        %v6511 = vpop.permute.xlu0 %6510
        %6512 = vrot.lane.b32.xlu0 %v6243, 124
        %v6513 = vpop.permute.xlu0 %6512
        %6514 = vrot.lane.b32.xlu0 %v6245, 124
        %v6515 = vpop.permute.xlu0 %6514
        %v6516 = vsel %vm546, %v6449, %v6451
        %v6517 = vsel %vm546, %v6451, %v6453
        %v6518 = vsel %vm546, %v6453, %v6455
        %v6519 = vsel %vm546, %v6455, %v6457
        %v6520 = vsel %vm546, %v6457, %v6459
        %v6521 = vsel %vm546, %v6459, %v6461
        %v6522 = vsel %vm546, %v6461, %v6463
        %v6523 = vsel %vm546, %v6463, %v6465
        %v6524 = vsel %vm546, %v6465, %v6467
        %v6525 = vsel %vm546, %v6467, %v6469
        %v6526 = vsel %vm546, %v6469, %v6471
        %v6527 = vsel %vm546, %v6471, %v6473
        %v6528 = vsel %vm546, %v6473, %v6475
        %v6529 = vsel %vm546, %v6475, %v6477
        %v6530 = vsel %vm546, %v6477, %v6479
        %v6531 = vsel %vm546, %v6479, %v6481
        %v6532 = vsel %vm546, %v6483, %v6485
        %v6533 = vsel %vm546, %v6485, %v6487
        %v6534 = vsel %vm546, %v6487, %v6489
        %v6535 = vsel %vm546, %v6489, %v6491
        %v6536 = vsel %vm546, %v6491, %v6493
        %v6537 = vsel %vm546, %v6493, %v6495
        %v6538 = vsel %vm546, %v6495, %v6497
        %v6539 = vsel %vm546, %v6497, %v6499
        %v6540 = vsel %vm546, %v6499, %v6501
        %v6541 = vsel %vm546, %v6501, %v6503
        %v6542 = vsel %vm546, %v6503, %v6505
        %v6543 = vsel %vm546, %v6505, %v6507
        %v6544 = vsel %vm546, %v6507, %v6509
        %v6545 = vsel %vm546, %v6509, %v6511
        %v6546 = vsel %vm546, %v6511, %v6513
        %v6547 = vsel %vm546, %v6513, %v6515
        %6580 = vrot.lane.b32.xlu0 %v6212, 122
        %v6581 = vpop.permute.xlu0 %6580
        %6582 = vrot.lane.b32.xlu0 %v6213, 122
        %v6583 = vpop.permute.xlu0 %6582
        %6584 = vrot.lane.b32.xlu0 %v6214, 122
        %v6585 = vpop.permute.xlu0 %6584
        %6586 = vrot.lane.b32.xlu0 %v6215, 122
        %v6587 = vpop.permute.xlu0 %6586
        %6588 = vrot.lane.b32.xlu0 %v6216, 122
        %v6589 = vpop.permute.xlu0 %6588
        %6590 = vrot.lane.b32.xlu0 %v6217, 122
        %v6591 = vpop.permute.xlu0 %6590
        %6592 = vrot.lane.b32.xlu0 %v6218, 122
        %v6593 = vpop.permute.xlu0 %6592
        %6594 = vrot.lane.b32.xlu0 %v6219, 122
        %v6595 = vpop.permute.xlu0 %6594
        %6596 = vrot.lane.b32.xlu0 %v6220, 122
        %v6597 = vpop.permute.xlu0 %6596
        %6598 = vrot.lane.b32.xlu0 %v6221, 122
        %v6599 = vpop.permute.xlu0 %6598
        %6600 = vrot.lane.b32.xlu0 %v6222, 122
        %v6601 = vpop.permute.xlu0 %6600
        %6602 = vrot.lane.b32.xlu0 %v6223, 122
        %v6603 = vpop.permute.xlu0 %6602
        %6604 = vrot.lane.b32.xlu0 %v6224, 122
        %v6605 = vpop.permute.xlu0 %6604
        %6606 = vrot.lane.b32.xlu0 %v6225, 122
        %v6607 = vpop.permute.xlu0 %6606
        %6608 = vrot.lane.b32.xlu0 %v6226, 122
        %v6609 = vpop.permute.xlu0 %6608
        %6610 = vrot.lane.b32.xlu0 %v6227, 122
        %v6611 = vpop.permute.xlu0 %6610
        %6612 = vrot.lane.b32.xlu0 %v6244, 122
        %v6613 = vpop.permute.xlu0 %6612
        %6614 = vrot.lane.b32.xlu0 %v6228, 122
        %v6615 = vpop.permute.xlu0 %6614
        %6616 = vrot.lane.b32.xlu0 %v6229, 122
        %v6617 = vpop.permute.xlu0 %6616
        %6618 = vrot.lane.b32.xlu0 %v6230, 122
        %v6619 = vpop.permute.xlu0 %6618
        %6620 = vrot.lane.b32.xlu0 %v6231, 122
        %v6621 = vpop.permute.xlu0 %6620
        %6622 = vrot.lane.b32.xlu0 %v6232, 122
        %v6623 = vpop.permute.xlu0 %6622
        %6624 = vrot.lane.b32.xlu0 %v6233, 122
        %v6625 = vpop.permute.xlu0 %6624
        %6626 = vrot.lane.b32.xlu0 %v6234, 122
        %v6627 = vpop.permute.xlu0 %6626
        %6628 = vrot.lane.b32.xlu0 %v6235, 122
        %v6629 = vpop.permute.xlu0 %6628
        %6630 = vrot.lane.b32.xlu0 %v6236, 122
        %v6631 = vpop.permute.xlu0 %6630
        %6632 = vrot.lane.b32.xlu0 %v6237, 122
        %v6633 = vpop.permute.xlu0 %6632
        %6634 = vrot.lane.b32.xlu0 %v6238, 122
        %v6635 = vpop.permute.xlu0 %6634
        %6636 = vrot.lane.b32.xlu0 %v6239, 122
        %v6637 = vpop.permute.xlu0 %6636
        %6638 = vrot.lane.b32.xlu0 %v6240, 122
        %v6639 = vpop.permute.xlu0 %6638
        %6640 = vrot.lane.b32.xlu0 %v6241, 122
        %v6641 = vpop.permute.xlu0 %6640
        %6642 = vrot.lane.b32.xlu0 %v6242, 122
        %v6643 = vpop.permute.xlu0 %6642
        %6644 = vrot.lane.b32.xlu0 %v6243, 122
        %v6645 = vpop.permute.xlu0 %6644
        %6646 = vrot.lane.b32.xlu0 %v6245, 122
        %v6647 = vpop.permute.xlu0 %6646
        %v6648 = vsel %vm648, %v6581, %v6583
        %v6649 = vsel %vm648, %v6583, %v6585
        %v6650 = vsel %vm648, %v6585, %v6587
        %v6651 = vsel %vm648, %v6587, %v6589
        %v6652 = vsel %vm648, %v6589, %v6591
        %v6653 = vsel %vm648, %v6591, %v6593
        %v6654 = vsel %vm648, %v6593, %v6595
        %v6655 = vsel %vm648, %v6595, %v6597
        %v6656 = vsel %vm648, %v6597, %v6599
        %v6657 = vsel %vm648, %v6599, %v6601
        %v6658 = vsel %vm648, %v6601, %v6603
        %v6659 = vsel %vm648, %v6603, %v6605
        %v6660 = vsel %vm648, %v6605, %v6607
        %v6661 = vsel %vm648, %v6607, %v6609
        %v6662 = vsel %vm648, %v6609, %v6611
        %v6663 = vsel %vm648, %v6611, %v6613
        %v6664 = vsel %vm648, %v6615, %v6617
        %v6665 = vsel %vm648, %v6617, %v6619
        %v6666 = vsel %vm648, %v6619, %v6621
        %v6667 = vsel %vm648, %v6621, %v6623
        %v6668 = vsel %vm648, %v6623, %v6625
        %v6669 = vsel %vm648, %v6625, %v6627
        %v6670 = vsel %vm648, %v6627, %v6629
        %v6671 = vsel %vm648, %v6629, %v6631
        %v6672 = vsel %vm648, %v6631, %v6633
        %v6673 = vsel %vm648, %v6633, %v6635
        %v6674 = vsel %vm648, %v6635, %v6637
        %v6675 = vsel %vm648, %v6637, %v6639
        %v6676 = vsel %vm648, %v6639, %v6641
        %v6677 = vsel %vm648, %v6641, %v6643
        %v6678 = vsel %vm648, %v6643, %v6645
        %v6679 = vsel %vm648, %v6645, %v6647
        %6712 = vrot.lane.b32.xlu0 %v6212, 120
        %v6713 = vpop.permute.xlu0 %6712
        %6714 = vrot.lane.b32.xlu0 %v6213, 120
        %v6715 = vpop.permute.xlu0 %6714
        %6716 = vrot.lane.b32.xlu0 %v6214, 120
        %v6717 = vpop.permute.xlu0 %6716
        %6718 = vrot.lane.b32.xlu0 %v6215, 120
        %v6719 = vpop.permute.xlu0 %6718
        %6720 = vrot.lane.b32.xlu0 %v6216, 120
        %v6721 = vpop.permute.xlu0 %6720
        %6722 = vrot.lane.b32.xlu0 %v6217, 120
        %v6723 = vpop.permute.xlu0 %6722
        %6724 = vrot.lane.b32.xlu0 %v6218, 120
        %v6725 = vpop.permute.xlu0 %6724
        %6726 = vrot.lane.b32.xlu0 %v6219, 120
        %v6727 = vpop.permute.xlu0 %6726
        %6728 = vrot.lane.b32.xlu0 %v6220, 120
        %v6729 = vpop.permute.xlu0 %6728
        %6730 = vrot.lane.b32.xlu0 %v6221, 120
        %v6731 = vpop.permute.xlu0 %6730
        %6732 = vrot.lane.b32.xlu0 %v6222, 120
        %v6733 = vpop.permute.xlu0 %6732
        %6734 = vrot.lane.b32.xlu0 %v6223, 120
        %v6735 = vpop.permute.xlu0 %6734
        %6736 = vrot.lane.b32.xlu0 %v6224, 120
        %v6737 = vpop.permute.xlu0 %6736
        %6738 = vrot.lane.b32.xlu0 %v6225, 120
        %v6739 = vpop.permute.xlu0 %6738
        %6740 = vrot.lane.b32.xlu0 %v6226, 120
        %v6741 = vpop.permute.xlu0 %6740
        %6742 = vrot.lane.b32.xlu0 %v6227, 120
        %v6743 = vpop.permute.xlu0 %6742
        %6744 = vrot.lane.b32.xlu0 %v6244, 120
        %v6745 = vpop.permute.xlu0 %6744
        %6746 = vrot.lane.b32.xlu0 %v6228, 120
        %v6747 = vpop.permute.xlu0 %6746
        %6748 = vrot.lane.b32.xlu0 %v6229, 120
        %v6749 = vpop.permute.xlu0 %6748
        %6750 = vrot.lane.b32.xlu0 %v6230, 120
        %v6751 = vpop.permute.xlu0 %6750
        %6752 = vrot.lane.b32.xlu0 %v6231, 120
        %v6753 = vpop.permute.xlu0 %6752
        %6754 = vrot.lane.b32.xlu0 %v6232, 120
        %v6755 = vpop.permute.xlu0 %6754
        %6756 = vrot.lane.b32.xlu0 %v6233, 120
        %v6757 = vpop.permute.xlu0 %6756
        %6758 = vrot.lane.b32.xlu0 %v6234, 120
        %v6759 = vpop.permute.xlu0 %6758
        %6760 = vrot.lane.b32.xlu0 %v6235, 120
        %v6761 = vpop.permute.xlu0 %6760
        %6762 = vrot.lane.b32.xlu0 %v6236, 120
        %v6763 = vpop.permute.xlu0 %6762
        %6764 = vrot.lane.b32.xlu0 %v6237, 120
        %v6765 = vpop.permute.xlu0 %6764
        %6766 = vrot.lane.b32.xlu0 %v6238, 120
        %v6767 = vpop.permute.xlu0 %6766
        %6768 = vrot.lane.b32.xlu0 %v6239, 120
        %v6769 = vpop.permute.xlu0 %6768
        %6770 = vrot.lane.b32.xlu0 %v6240, 120
        %v6771 = vpop.permute.xlu0 %6770
        %6772 = vrot.lane.b32.xlu0 %v6241, 120
        %v6773 = vpop.permute.xlu0 %6772
        %6774 = vrot.lane.b32.xlu0 %v6242, 120
        %v6775 = vpop.permute.xlu0 %6774
        %6776 = vrot.lane.b32.xlu0 %v6243, 120
        %v6777 = vpop.permute.xlu0 %6776
        %6778 = vrot.lane.b32.xlu0 %v6245, 120
        %v6779 = vpop.permute.xlu0 %6778
        %vm6780 = vcmask 982016
        %v6781 = vsel %vm6780, %v6713, %v6715
        %v6782 = vsel %vm6780, %v6715, %v6717
        %v6783 = vsel %vm6780, %v6717, %v6719
        %v6784 = vsel %vm6780, %v6719, %v6721
        %v6785 = vsel %vm6780, %v6721, %v6723
        %v6786 = vsel %vm6780, %v6723, %v6725
        %v6787 = vsel %vm6780, %v6725, %v6727
        %v6788 = vsel %vm6780, %v6727, %v6729
        %v6789 = vsel %vm6780, %v6729, %v6731
        %v6790 = vsel %vm6780, %v6731, %v6733
        %v6791 = vsel %vm6780, %v6733, %v6735
        %v6792 = vsel %vm6780, %v6735, %v6737
        %v6793 = vsel %vm6780, %v6737, %v6739
        %v6794 = vsel %vm6780, %v6739, %v6741
        %v6795 = vsel %vm6780, %v6741, %v6743
        %v6796 = vsel %vm6780, %v6743, %v6745
        %v6797 = vsel %vm6780, %v6747, %v6749
        %v6798 = vsel %vm6780, %v6749, %v6751
        %v6799 = vsel %vm6780, %v6751, %v6753
        %v6800 = vsel %vm6780, %v6753, %v6755
        %v6801 = vsel %vm6780, %v6755, %v6757
        %v6802 = vsel %vm6780, %v6757, %v6759
        %v6803 = vsel %vm6780, %v6759, %v6761
        %v6804 = vsel %vm6780, %v6761, %v6763
        %v6805 = vsel %vm6780, %v6763, %v6765
        %v6806 = vsel %vm6780, %v6765, %v6767
        %v6807 = vsel %vm6780, %v6767, %v6769
        %v6808 = vsel %vm6780, %v6769, %v6771
        %v6809 = vsel %vm6780, %v6771, %v6773
        %v6810 = vsel %vm6780, %v6773, %v6775
        %v6811 = vsel %vm6780, %v6775, %v6777
        %v6812 = vsel %vm6780, %v6777, %v6779
        %6845 = vrot.lane.b32.xlu0 %v6212, 64
        %v6846 = vpop.permute.xlu0 %6845
        %6847 = vrot.lane.b32.xlu0 %v6213, 64
        %v6848 = vpop.permute.xlu0 %6847
        %6849 = vrot.lane.b32.xlu0 %v6214, 64
        %v6850 = vpop.permute.xlu0 %6849
        %6851 = vrot.lane.b32.xlu0 %v6215, 64
        %v6852 = vpop.permute.xlu0 %6851
        %6853 = vrot.lane.b32.xlu0 %v6216, 64
        %v6854 = vpop.permute.xlu0 %6853
        %6855 = vrot.lane.b32.xlu0 %v6217, 64
        %v6856 = vpop.permute.xlu0 %6855
        %6857 = vrot.lane.b32.xlu0 %v6218, 64
        %v6858 = vpop.permute.xlu0 %6857
        %6859 = vrot.lane.b32.xlu0 %v6219, 64
        %v6860 = vpop.permute.xlu0 %6859
        %6861 = vrot.lane.b32.xlu0 %v6220, 64
        %v6862 = vpop.permute.xlu0 %6861
        %6863 = vrot.lane.b32.xlu0 %v6221, 64
        %v6864 = vpop.permute.xlu0 %6863
        %6865 = vrot.lane.b32.xlu0 %v6222, 64
        %v6866 = vpop.permute.xlu0 %6865
        %6867 = vrot.lane.b32.xlu0 %v6223, 64
        %v6868 = vpop.permute.xlu0 %6867
        %6869 = vrot.lane.b32.xlu0 %v6224, 64
        %v6870 = vpop.permute.xlu0 %6869
        %6871 = vrot.lane.b32.xlu0 %v6225, 64
        %v6872 = vpop.permute.xlu0 %6871
        %6873 = vrot.lane.b32.xlu0 %v6226, 64
        %v6874 = vpop.permute.xlu0 %6873
        %6875 = vrot.lane.b32.xlu0 %v6227, 64
        %v6876 = vpop.permute.xlu0 %6875
        %6877 = vrot.lane.b32.xlu0 %v6244, 64
        %v6878 = vpop.permute.xlu0 %6877
        %6879 = vrot.lane.b32.xlu0 %v6228, 64
        %v6880 = vpop.permute.xlu0 %6879
        %6881 = vrot.lane.b32.xlu0 %v6229, 64
        %v6882 = vpop.permute.xlu0 %6881
        %6883 = vrot.lane.b32.xlu0 %v6230, 64
        %v6884 = vpop.permute.xlu0 %6883
        %6885 = vrot.lane.b32.xlu0 %v6231, 64
        %v6886 = vpop.permute.xlu0 %6885
        %6887 = vrot.lane.b32.xlu0 %v6232, 64
        %v6888 = vpop.permute.xlu0 %6887
        %6889 = vrot.lane.b32.xlu0 %v6233, 64
        %v6890 = vpop.permute.xlu0 %6889
        %6891 = vrot.lane.b32.xlu0 %v6234, 64
        %v6892 = vpop.permute.xlu0 %6891
        %6893 = vrot.lane.b32.xlu0 %v6235, 64
        %v6894 = vpop.permute.xlu0 %6893
        %6895 = vrot.lane.b32.xlu0 %v6236, 64
        %v6896 = vpop.permute.xlu0 %6895
        %6897 = vrot.lane.b32.xlu0 %v6237, 64
        %v6898 = vpop.permute.xlu0 %6897
        %6899 = vrot.lane.b32.xlu0 %v6238, 64
        %v6900 = vpop.permute.xlu0 %6899
        %6901 = vrot.lane.b32.xlu0 %v6239, 64
        %v6902 = vpop.permute.xlu0 %6901
        %6903 = vrot.lane.b32.xlu0 %v6240, 64
        %v6904 = vpop.permute.xlu0 %6903
        %6905 = vrot.lane.b32.xlu0 %v6241, 64
        %v6906 = vpop.permute.xlu0 %6905
        %6907 = vrot.lane.b32.xlu0 %v6242, 64
        %v6908 = vpop.permute.xlu0 %6907
        %6909 = vrot.lane.b32.xlu0 %v6243, 64
        %v6910 = vpop.permute.xlu0 %6909
        %6911 = vrot.lane.b32.xlu0 %v6245, 64
        %v6912 = vpop.permute.xlu0 %6911
        %v6913 = vsel %vm1056, %v6846, %v6848
        %v6914 = vsel %vm1056, %v6848, %v6850
        %v6915 = vsel %vm1056, %v6850, %v6852
        %v6916 = vsel %vm1056, %v6852, %v6854
        %v6917 = vsel %vm1056, %v6854, %v6856
        %v6918 = vsel %vm1056, %v6856, %v6858
        %v6919 = vsel %vm1056, %v6858, %v6860
        %v6920 = vsel %vm1056, %v6860, %v6862
        %v6921 = vsel %vm1056, %v6862, %v6864
        %v6922 = vsel %vm1056, %v6864, %v6866
        %v6923 = vsel %vm1056, %v6866, %v6868
        %v6924 = vsel %vm1056, %v6868, %v6870
        %v6925 = vsel %vm1056, %v6870, %v6872
        %v6926 = vsel %vm1056, %v6872, %v6874
        %v6927 = vsel %vm1056, %v6874, %v6876
        %v6928 = vsel %vm1056, %v6876, %v6878
        %v6929 = vsel %vm1056, %v6880, %v6882
        %v6930 = vsel %vm1056, %v6882, %v6884
        %v6931 = vsel %vm1056, %v6884, %v6886
        %v6932 = vsel %vm1056, %v6886, %v6888
        %v6933 = vsel %vm1056, %v6888, %v6890
        %v6934 = vsel %vm1056, %v6890, %v6892
        %v6935 = vsel %vm1056, %v6892, %v6894
        %v6936 = vsel %vm1056, %v6894, %v6896
        %v6937 = vsel %vm1056, %v6896, %v6898
        %v6938 = vsel %vm1056, %v6898, %v6900
        %v6939 = vsel %vm1056, %v6900, %v6902
        %v6940 = vsel %vm1056, %v6902, %v6904
        %v6941 = vsel %vm1056, %v6904, %v6906
        %v6942 = vsel %vm1056, %v6906, %v6908
        %v6943 = vsel %vm1056, %v6908, %v6910
        %v6944 = vsel %vm1056, %v6910, %v6912
        %6977 = vrot.lane.b32.xlu0 %v6212, 62
        %v6978 = vpop.permute.xlu0 %6977
        %6979 = vrot.lane.b32.xlu0 %v6213, 62
        %v6980 = vpop.permute.xlu0 %6979
        %6981 = vrot.lane.b32.xlu0 %v6214, 62
        %v6982 = vpop.permute.xlu0 %6981
        %6983 = vrot.lane.b32.xlu0 %v6215, 62
        %v6984 = vpop.permute.xlu0 %6983
        %6985 = vrot.lane.b32.xlu0 %v6216, 62
        %v6986 = vpop.permute.xlu0 %6985
        %6987 = vrot.lane.b32.xlu0 %v6217, 62
        %v6988 = vpop.permute.xlu0 %6987
        %6989 = vrot.lane.b32.xlu0 %v6218, 62
        %v6990 = vpop.permute.xlu0 %6989
        %6991 = vrot.lane.b32.xlu0 %v6219, 62
        %v6992 = vpop.permute.xlu0 %6991
        %6993 = vrot.lane.b32.xlu0 %v6220, 62
        %v6994 = vpop.permute.xlu0 %6993
        %6995 = vrot.lane.b32.xlu0 %v6221, 62
        %v6996 = vpop.permute.xlu0 %6995
        %6997 = vrot.lane.b32.xlu0 %v6222, 62
        %v6998 = vpop.permute.xlu0 %6997
        %6999 = vrot.lane.b32.xlu0 %v6223, 62
        %v7000 = vpop.permute.xlu0 %6999
        %7001 = vrot.lane.b32.xlu0 %v6224, 62
        %v7002 = vpop.permute.xlu0 %7001
        %7003 = vrot.lane.b32.xlu0 %v6225, 62
        %v7004 = vpop.permute.xlu0 %7003
        %7005 = vrot.lane.b32.xlu0 %v6226, 62
        %v7006 = vpop.permute.xlu0 %7005
        %7007 = vrot.lane.b32.xlu0 %v6227, 62
        %v7008 = vpop.permute.xlu0 %7007
        %7009 = vrot.lane.b32.xlu0 %v6244, 62
        %v7010 = vpop.permute.xlu0 %7009
        %7011 = vrot.lane.b32.xlu0 %v6228, 62
        %v7012 = vpop.permute.xlu0 %7011
        %7013 = vrot.lane.b32.xlu0 %v6229, 62
        %v7014 = vpop.permute.xlu0 %7013
        %7015 = vrot.lane.b32.xlu0 %v6230, 62
        %v7016 = vpop.permute.xlu0 %7015
        %7017 = vrot.lane.b32.xlu0 %v6231, 62
        %v7018 = vpop.permute.xlu0 %7017
        %7019 = vrot.lane.b32.xlu0 %v6232, 62
        %v7020 = vpop.permute.xlu0 %7019
        %7021 = vrot.lane.b32.xlu0 %v6233, 62
        %v7022 = vpop.permute.xlu0 %7021
        %7023 = vrot.lane.b32.xlu0 %v6234, 62
        %v7024 = vpop.permute.xlu0 %7023
        %7025 = vrot.lane.b32.xlu0 %v6235, 62
        %v7026 = vpop.permute.xlu0 %7025
        %7027 = vrot.lane.b32.xlu0 %v6236, 62
        %v7028 = vpop.permute.xlu0 %7027
        %7029 = vrot.lane.b32.xlu0 %v6237, 62
        %v7030 = vpop.permute.xlu0 %7029
        %7031 = vrot.lane.b32.xlu0 %v6238, 62
        %v7032 = vpop.permute.xlu0 %7031
        %7033 = vrot.lane.b32.xlu0 %v6239, 62
        %v7034 = vpop.permute.xlu0 %7033
        %7035 = vrot.lane.b32.xlu0 %v6240, 62
        %v7036 = vpop.permute.xlu0 %7035
        %7037 = vrot.lane.b32.xlu0 %v6241, 62
        %v7038 = vpop.permute.xlu0 %7037
        %7039 = vrot.lane.b32.xlu0 %v6242, 62
        %v7040 = vpop.permute.xlu0 %7039
        %7041 = vrot.lane.b32.xlu0 %v6243, 62
        %v7042 = vpop.permute.xlu0 %7041
        %7043 = vrot.lane.b32.xlu0 %v6245, 62
        %v7044 = vpop.permute.xlu0 %7043
        %v7045 = vsel %vm3561, %v6978, %v6980
        %v7046 = vsel %vm3561, %v6980, %v6982
        %v7047 = vsel %vm3561, %v6982, %v6984
        %v7048 = vsel %vm3561, %v6984, %v6986
        %v7049 = vsel %vm3561, %v6986, %v6988
        %v7050 = vsel %vm3561, %v6988, %v6990
        %v7051 = vsel %vm3561, %v6990, %v6992
        %v7052 = vsel %vm3561, %v6992, %v6994
        %v7053 = vsel %vm3561, %v6994, %v6996
        %v7054 = vsel %vm3561, %v6996, %v6998
        %v7055 = vsel %vm3561, %v6998, %v7000
        %v7056 = vsel %vm3561, %v7000, %v7002
        %v7057 = vsel %vm3561, %v7002, %v7004
        %v7058 = vsel %vm3561, %v7004, %v7006
        %v7059 = vsel %vm3561, %v7006, %v7008
        %v7060 = vsel %vm3561, %v7008, %v7010
        %v7061 = vsel %vm3561, %v7012, %v7014
        %v7062 = vsel %vm3561, %v7014, %v7016
        %v7063 = vsel %vm3561, %v7016, %v7018
        %v7064 = vsel %vm3561, %v7018, %v7020
        %v7065 = vsel %vm3561, %v7020, %v7022
        %v7066 = vsel %vm3561, %v7022, %v7024
        %v7067 = vsel %vm3561, %v7024, %v7026
        %v7068 = vsel %vm3561, %v7026, %v7028
        %v7069 = vsel %vm3561, %v7028, %v7030
        %v7070 = vsel %vm3561, %v7030, %v7032
        %v7071 = vsel %vm3561, %v7032, %v7034
        %v7072 = vsel %vm3561, %v7034, %v7036
        %v7073 = vsel %vm3561, %v7036, %v7038
        %v7074 = vsel %vm3561, %v7038, %v7040
        %v7075 = vsel %vm3561, %v7040, %v7042
        %v7076 = vsel %vm3561, %v7042, %v7044
        %7109 = vrot.lane.b32.xlu0 %v6212, 60
        %v7110 = vpop.permute.xlu0 %7109
        %7111 = vrot.lane.b32.xlu0 %v6213, 60
        %v7112 = vpop.permute.xlu0 %7111
        %7113 = vrot.lane.b32.xlu0 %v6214, 60
        %v7114 = vpop.permute.xlu0 %7113
        %7115 = vrot.lane.b32.xlu0 %v6215, 60
        %v7116 = vpop.permute.xlu0 %7115
        %7117 = vrot.lane.b32.xlu0 %v6216, 60
        %v7118 = vpop.permute.xlu0 %7117
        %7119 = vrot.lane.b32.xlu0 %v6217, 60
        %v7120 = vpop.permute.xlu0 %7119
        %7121 = vrot.lane.b32.xlu0 %v6218, 60
        %v7122 = vpop.permute.xlu0 %7121
        %7123 = vrot.lane.b32.xlu0 %v6219, 60
        %v7124 = vpop.permute.xlu0 %7123
        %7125 = vrot.lane.b32.xlu0 %v6220, 60
        %v7126 = vpop.permute.xlu0 %7125
        %7127 = vrot.lane.b32.xlu0 %v6221, 60
        %v7128 = vpop.permute.xlu0 %7127
        %7129 = vrot.lane.b32.xlu0 %v6222, 60
        %v7130 = vpop.permute.xlu0 %7129
        %7131 = vrot.lane.b32.xlu0 %v6223, 60
        %v7132 = vpop.permute.xlu0 %7131
        %7133 = vrot.lane.b32.xlu0 %v6224, 60
        %v7134 = vpop.permute.xlu0 %7133
        %7135 = vrot.lane.b32.xlu0 %v6225, 60
        %v7136 = vpop.permute.xlu0 %7135
        %7137 = vrot.lane.b32.xlu0 %v6226, 60
        %v7138 = vpop.permute.xlu0 %7137
        %7139 = vrot.lane.b32.xlu0 %v6227, 60
        %v7140 = vpop.permute.xlu0 %7139
        %7141 = vrot.lane.b32.xlu0 %v6244, 60
        %v7142 = vpop.permute.xlu0 %7141
        %7143 = vrot.lane.b32.xlu0 %v6228, 60
        %v7144 = vpop.permute.xlu0 %7143
        %7145 = vrot.lane.b32.xlu0 %v6229, 60
        %v7146 = vpop.permute.xlu0 %7145
        %7147 = vrot.lane.b32.xlu0 %v6230, 60
        %v7148 = vpop.permute.xlu0 %7147
        %7149 = vrot.lane.b32.xlu0 %v6231, 60
        %v7150 = vpop.permute.xlu0 %7149
        %7151 = vrot.lane.b32.xlu0 %v6232, 60
        %v7152 = vpop.permute.xlu0 %7151
        %7153 = vrot.lane.b32.xlu0 %v6233, 60
        %v7154 = vpop.permute.xlu0 %7153
        %7155 = vrot.lane.b32.xlu0 %v6234, 60
        %v7156 = vpop.permute.xlu0 %7155
        %7157 = vrot.lane.b32.xlu0 %v6235, 60
        %v7158 = vpop.permute.xlu0 %7157
        %7159 = vrot.lane.b32.xlu0 %v6236, 60
        %v7160 = vpop.permute.xlu0 %7159
        %7161 = vrot.lane.b32.xlu0 %v6237, 60
        %v7162 = vpop.permute.xlu0 %7161
        %7163 = vrot.lane.b32.xlu0 %v6238, 60
        %v7164 = vpop.permute.xlu0 %7163
        %7165 = vrot.lane.b32.xlu0 %v6239, 60
        %v7166 = vpop.permute.xlu0 %7165
        %7167 = vrot.lane.b32.xlu0 %v6240, 60
        %v7168 = vpop.permute.xlu0 %7167
        %7169 = vrot.lane.b32.xlu0 %v6241, 60
        %v7170 = vpop.permute.xlu0 %7169
        %7171 = vrot.lane.b32.xlu0 %v6242, 60
        %v7172 = vpop.permute.xlu0 %7171
        %7173 = vrot.lane.b32.xlu0 %v6243, 60
        %v7174 = vpop.permute.xlu0 %7173
        %7175 = vrot.lane.b32.xlu0 %v6245, 60
        %v7176 = vpop.permute.xlu0 %7175
        %vm7177 = vcmask 490496
        %v7178 = vsel %vm7177, %v7110, %v7112
        %v7179 = vsel %vm7177, %v7112, %v7114
        %v7180 = vsel %vm7177, %v7114, %v7116
        %v7181 = vsel %vm7177, %v7116, %v7118
        %v7182 = vsel %vm7177, %v7118, %v7120
        %v7183 = vsel %vm7177, %v7120, %v7122
        %v7184 = vsel %vm7177, %v7122, %v7124
        %v7185 = vsel %vm7177, %v7124, %v7126
        %v7186 = vsel %vm7177, %v7126, %v7128
        %v7187 = vsel %vm7177, %v7128, %v7130
        %v7188 = vsel %vm7177, %v7130, %v7132
        %v7189 = vsel %vm7177, %v7132, %v7134
        %v7190 = vsel %vm7177, %v7134, %v7136
        %v7191 = vsel %vm7177, %v7136, %v7138
        %v7192 = vsel %vm7177, %v7138, %v7140
        %v7193 = vsel %vm7177, %v7140, %v7142
        %v7194 = vsel %vm7177, %v7144, %v7146
        %v7195 = vsel %vm7177, %v7146, %v7148
        %v7196 = vsel %vm7177, %v7148, %v7150
        %v7197 = vsel %vm7177, %v7150, %v7152
        %v7198 = vsel %vm7177, %v7152, %v7154
        %v7199 = vsel %vm7177, %v7154, %v7156
        %v7200 = vsel %vm7177, %v7156, %v7158
        %v7201 = vsel %vm7177, %v7158, %v7160
        %v7202 = vsel %vm7177, %v7160, %v7162
        %v7203 = vsel %vm7177, %v7162, %v7164
        %v7204 = vsel %vm7177, %v7164, %v7166
        %v7205 = vsel %vm7177, %v7166, %v7168
        %v7206 = vsel %vm7177, %v7168, %v7170
        %v7207 = vsel %vm7177, %v7170, %v7172
        %v7208 = vsel %vm7177, %v7172, %v7174
        %v7209 = vsel %vm7177, %v7174, %v7176
        %7242 = vrot.lane.b32.xlu0 %v6212, 58
        %v7243 = vpop.permute.xlu0 %7242
        %7244 = vrot.lane.b32.xlu0 %v6213, 58
        %v7245 = vpop.permute.xlu0 %7244
        %7246 = vrot.lane.b32.xlu0 %v6214, 58
        %v7247 = vpop.permute.xlu0 %7246
        %7248 = vrot.lane.b32.xlu0 %v6215, 58
        %v7249 = vpop.permute.xlu0 %7248
        %7250 = vrot.lane.b32.xlu0 %v6216, 58
        %v7251 = vpop.permute.xlu0 %7250
        %7252 = vrot.lane.b32.xlu0 %v6217, 58
        %v7253 = vpop.permute.xlu0 %7252
        %7254 = vrot.lane.b32.xlu0 %v6218, 58
        %v7255 = vpop.permute.xlu0 %7254
        %7256 = vrot.lane.b32.xlu0 %v6219, 58
        %v7257 = vpop.permute.xlu0 %7256
        %7258 = vrot.lane.b32.xlu0 %v6220, 58
        %v7259 = vpop.permute.xlu0 %7258
        %7260 = vrot.lane.b32.xlu0 %v6221, 58
        %v7261 = vpop.permute.xlu0 %7260
        %7262 = vrot.lane.b32.xlu0 %v6222, 58
        %v7263 = vpop.permute.xlu0 %7262
        %7264 = vrot.lane.b32.xlu0 %v6223, 58
        %v7265 = vpop.permute.xlu0 %7264
        %7266 = vrot.lane.b32.xlu0 %v6224, 58
        %v7267 = vpop.permute.xlu0 %7266
        %7268 = vrot.lane.b32.xlu0 %v6225, 58
        %v7269 = vpop.permute.xlu0 %7268
        %7270 = vrot.lane.b32.xlu0 %v6226, 58
        %v7271 = vpop.permute.xlu0 %7270
        %7272 = vrot.lane.b32.xlu0 %v6227, 58
        %v7273 = vpop.permute.xlu0 %7272
        %7274 = vrot.lane.b32.xlu0 %v6244, 58
        %v7275 = vpop.permute.xlu0 %7274
        %7276 = vrot.lane.b32.xlu0 %v6228, 58
        %v7277 = vpop.permute.xlu0 %7276
        %7278 = vrot.lane.b32.xlu0 %v6229, 58
        %v7279 = vpop.permute.xlu0 %7278
        %7280 = vrot.lane.b32.xlu0 %v6230, 58
        %v7281 = vpop.permute.xlu0 %7280
        %7282 = vrot.lane.b32.xlu0 %v6231, 58
        %v7283 = vpop.permute.xlu0 %7282
        %7284 = vrot.lane.b32.xlu0 %v6232, 58
        %v7285 = vpop.permute.xlu0 %7284
        %7286 = vrot.lane.b32.xlu0 %v6233, 58
        %v7287 = vpop.permute.xlu0 %7286
        %7288 = vrot.lane.b32.xlu0 %v6234, 58
        %v7289 = vpop.permute.xlu0 %7288
        %7290 = vrot.lane.b32.xlu0 %v6235, 58
        %v7291 = vpop.permute.xlu0 %7290
        %7292 = vrot.lane.b32.xlu0 %v6236, 58
        %v7293 = vpop.permute.xlu0 %7292
        %7294 = vrot.lane.b32.xlu0 %v6237, 58
        %v7295 = vpop.permute.xlu0 %7294
        %7296 = vrot.lane.b32.xlu0 %v6238, 58
        %v7297 = vpop.permute.xlu0 %7296
        %7298 = vrot.lane.b32.xlu0 %v6239, 58
        %v7299 = vpop.permute.xlu0 %7298
        %7300 = vrot.lane.b32.xlu0 %v6240, 58
        %v7301 = vpop.permute.xlu0 %7300
        %7302 = vrot.lane.b32.xlu0 %v6241, 58
        %v7303 = vpop.permute.xlu0 %7302
        %7304 = vrot.lane.b32.xlu0 %v6242, 58
        %v7305 = vpop.permute.xlu0 %7304
        %7306 = vrot.lane.b32.xlu0 %v6243, 58
        %v7307 = vpop.permute.xlu0 %7306
        %7308 = vrot.lane.b32.xlu0 %v6245, 58
        %v7309 = vpop.permute.xlu0 %7308
        %v7310 = vsel %vm4500, %v7243, %v7245
        %v7311 = vsel %vm4500, %v7245, %v7247
        %v7312 = vsel %vm4500, %v7247, %v7249
        %v7313 = vsel %vm4500, %v7249, %v7251
        %v7314 = vsel %vm4500, %v7251, %v7253
        %v7315 = vsel %vm4500, %v7253, %v7255
        %v7316 = vsel %vm4500, %v7255, %v7257
        %v7317 = vsel %vm4500, %v7257, %v7259
        %v7318 = vsel %vm4500, %v7259, %v7261
        %v7319 = vsel %vm4500, %v7261, %v7263
        %v7320 = vsel %vm4500, %v7263, %v7265
        %v7321 = vsel %vm4500, %v7265, %v7267
        %v7322 = vsel %vm4500, %v7267, %v7269
        %v7323 = vsel %vm4500, %v7269, %v7271
        %v7324 = vsel %vm4500, %v7271, %v7273
        %v7325 = vsel %vm4500, %v7273, %v7275
        %v7326 = vsel %vm4500, %v7277, %v7279
        %v7327 = vsel %vm4500, %v7279, %v7281
        %v7328 = vsel %vm4500, %v7281, %v7283
        %v7329 = vsel %vm4500, %v7283, %v7285
        %v7330 = vsel %vm4500, %v7285, %v7287
        %v7331 = vsel %vm4500, %v7287, %v7289
        %v7332 = vsel %vm4500, %v7289, %v7291
        %v7333 = vsel %vm4500, %v7291, %v7293
        %v7334 = vsel %vm4500, %v7293, %v7295
        %v7335 = vsel %vm4500, %v7295, %v7297
        %v7336 = vsel %vm4500, %v7297, %v7299
        %v7337 = vsel %vm4500, %v7299, %v7301
        %v7338 = vsel %vm4500, %v7301, %v7303
        %v7339 = vsel %vm4500, %v7303, %v7305
        %v7340 = vsel %vm4500, %v7305, %v7307
        %v7341 = vsel %vm4500, %v7307, %v7309
        %7374 = vrot.lane.b32.xlu0 %v6212, 56
        %v7375 = vpop.permute.xlu0 %7374
        %7376 = vrot.lane.b32.xlu0 %v6213, 56
        %v7377 = vpop.permute.xlu0 %7376
        %7378 = vrot.lane.b32.xlu0 %v6214, 56
        %v7379 = vpop.permute.xlu0 %7378
        %7380 = vrot.lane.b32.xlu0 %v6215, 56
        %v7381 = vpop.permute.xlu0 %7380
        %7382 = vrot.lane.b32.xlu0 %v6216, 56
        %v7383 = vpop.permute.xlu0 %7382
        %7384 = vrot.lane.b32.xlu0 %v6217, 56
        %v7385 = vpop.permute.xlu0 %7384
        %7386 = vrot.lane.b32.xlu0 %v6218, 56
        %v7387 = vpop.permute.xlu0 %7386
        %7388 = vrot.lane.b32.xlu0 %v6219, 56
        %v7389 = vpop.permute.xlu0 %7388
        %7390 = vrot.lane.b32.xlu0 %v6220, 56
        %v7391 = vpop.permute.xlu0 %7390
        %7392 = vrot.lane.b32.xlu0 %v6221, 56
        %v7393 = vpop.permute.xlu0 %7392
        %7394 = vrot.lane.b32.xlu0 %v6222, 56
        %v7395 = vpop.permute.xlu0 %7394
        %7396 = vrot.lane.b32.xlu0 %v6223, 56
        %v7397 = vpop.permute.xlu0 %7396
        %7398 = vrot.lane.b32.xlu0 %v6224, 56
        %v7399 = vpop.permute.xlu0 %7398
        %7400 = vrot.lane.b32.xlu0 %v6225, 56
        %v7401 = vpop.permute.xlu0 %7400
        %7402 = vrot.lane.b32.xlu0 %v6226, 56
        %v7403 = vpop.permute.xlu0 %7402
        %7404 = vrot.lane.b32.xlu0 %v6227, 56
        %v7405 = vpop.permute.xlu0 %7404
        %7406 = vrot.lane.b32.xlu0 %v6244, 56
        %v7407 = vpop.permute.xlu0 %7406
        %7408 = vrot.lane.b32.xlu0 %v6228, 56
        %v7409 = vpop.permute.xlu0 %7408
        %7410 = vrot.lane.b32.xlu0 %v6229, 56
        %v7411 = vpop.permute.xlu0 %7410
        %7412 = vrot.lane.b32.xlu0 %v6230, 56
        %v7413 = vpop.permute.xlu0 %7412
        %7414 = vrot.lane.b32.xlu0 %v6231, 56
        %v7415 = vpop.permute.xlu0 %7414
        %7416 = vrot.lane.b32.xlu0 %v6232, 56
        %v7417 = vpop.permute.xlu0 %7416
        %7418 = vrot.lane.b32.xlu0 %v6233, 56
        %v7419 = vpop.permute.xlu0 %7418
        %7420 = vrot.lane.b32.xlu0 %v6234, 56
        %v7421 = vpop.permute.xlu0 %7420
        %7422 = vrot.lane.b32.xlu0 %v6235, 56
        %v7423 = vpop.permute.xlu0 %7422
        %7424 = vrot.lane.b32.xlu0 %v6236, 56
        %v7425 = vpop.permute.xlu0 %7424
        %7426 = vrot.lane.b32.xlu0 %v6237, 56
        %v7427 = vpop.permute.xlu0 %7426
        %7428 = vrot.lane.b32.xlu0 %v6238, 56
        %v7429 = vpop.permute.xlu0 %7428
        %7430 = vrot.lane.b32.xlu0 %v6239, 56
        %v7431 = vpop.permute.xlu0 %7430
        %7432 = vrot.lane.b32.xlu0 %v6240, 56
        %v7433 = vpop.permute.xlu0 %7432
        %7434 = vrot.lane.b32.xlu0 %v6241, 56
        %v7435 = vpop.permute.xlu0 %7434
        %7436 = vrot.lane.b32.xlu0 %v6242, 56
        %v7437 = vpop.permute.xlu0 %7436
        %7438 = vrot.lane.b32.xlu0 %v6243, 56
        %v7439 = vpop.permute.xlu0 %7438
        %7440 = vrot.lane.b32.xlu0 %v6245, 56
        %v7441 = vpop.permute.xlu0 %7440
        %vm7442 = vcmask 457728
        %v7443 = vsel %vm7442, %v7375, %v7377
        %v7444 = vsel %vm7442, %v7377, %v7379
        %v7445 = vsel %vm7442, %v7379, %v7381
        %v7446 = vsel %vm7442, %v7381, %v7383
        %v7447 = vsel %vm7442, %v7383, %v7385
        %v7448 = vsel %vm7442, %v7385, %v7387
        %v7449 = vsel %vm7442, %v7387, %v7389
        %v7450 = vsel %vm7442, %v7389, %v7391
        %v7451 = vsel %vm7442, %v7391, %v7393
        %v7452 = vsel %vm7442, %v7393, %v7395
        %v7453 = vsel %vm7442, %v7395, %v7397
        %v7454 = vsel %vm7442, %v7397, %v7399
        %v7455 = vsel %vm7442, %v7399, %v7401
        %v7456 = vsel %vm7442, %v7401, %v7403
        %v7457 = vsel %vm7442, %v7403, %v7405
        %v7458 = vsel %vm7442, %v7405, %v7407
        %v7459 = vsel %vm7442, %v7409, %v7411
        %v7460 = vsel %vm7442, %v7411, %v7413
        %v7461 = vsel %vm7442, %v7413, %v7415
        %v7462 = vsel %vm7442, %v7415, %v7417
        %v7463 = vsel %vm7442, %v7417, %v7419
        %v7464 = vsel %vm7442, %v7419, %v7421
        %v7465 = vsel %vm7442, %v7421, %v7423
        %v7466 = vsel %vm7442, %v7423, %v7425
        %v7467 = vsel %vm7442, %v7425, %v7427
        %v7468 = vsel %vm7442, %v7427, %v7429
        %v7469 = vsel %vm7442, %v7429, %v7431
        %v7470 = vsel %vm7442, %v7431, %v7433
        %v7471 = vsel %vm7442, %v7433, %v7435
        %v7472 = vsel %vm7442, %v7435, %v7437
        %v7473 = vsel %vm7442, %v7437, %v7439
        %v7474 = vsel %vm7442, %v7439, %v7441
        %7509 = vrot.lane.b32.xlu0 %v6246, 126
        %v7510 = vpop.permute.xlu0 %7509
        %7511 = vrot.lane.b32.xlu0 %v6247, 126
        %v7512 = vpop.permute.xlu0 %7511
        %v7513 = vsel %vm444, %v6349, %v7510
        %v7514 = vsel %vm444, %v6383, %v7512
        %7517 = vrot.lane.b32.xlu0 %v6246, 124
        %v7518 = vpop.permute.xlu0 %7517
        %7519 = vrot.lane.b32.xlu0 %v6247, 124
        %v7520 = vpop.permute.xlu0 %7519
        %v7521 = vsel %vm546, %v6481, %v7518
        %v7522 = vsel %vm546, %v6515, %v7520
        %7525 = vrot.lane.b32.xlu0 %v6246, 122
        %v7526 = vpop.permute.xlu0 %7525
        %7527 = vrot.lane.b32.xlu0 %v6247, 122
        %v7528 = vpop.permute.xlu0 %7527
        %v7529 = vsel %vm648, %v6613, %v7526
        %v7530 = vsel %vm648, %v6647, %v7528
        %7533 = vrot.lane.b32.xlu0 %v6246, 120
        %v7534 = vpop.permute.xlu0 %7533
        %7535 = vrot.lane.b32.xlu0 %v6247, 120
        %v7536 = vpop.permute.xlu0 %7535
        %v7537 = vsel %vm6780, %v6745, %v7534
        %v7538 = vsel %vm6780, %v6779, %v7536
        %7541 = vrot.lane.b32.xlu0 %v6246, 64
        %v7542 = vpop.permute.xlu0 %7541
        %7543 = vrot.lane.b32.xlu0 %v6247, 64
        %v7544 = vpop.permute.xlu0 %7543
        %v7545 = vsel %vm1056, %v6878, %v7542
        %v7546 = vsel %vm1056, %v6912, %v7544
        %7549 = vrot.lane.b32.xlu0 %v6214, 66
        %v7550 = vpop.permute.xlu0 %7549
        %7551 = vrot.lane.b32.xlu0 %v6215, 66
        %v7552 = vpop.permute.xlu0 %7551
        %7553 = vrot.lane.b32.xlu0 %v6216, 66
        %v7554 = vpop.permute.xlu0 %7553
        %7555 = vrot.lane.b32.xlu0 %v6217, 66
        %v7556 = vpop.permute.xlu0 %7555
        %7557 = vrot.lane.b32.xlu0 %v6218, 66
        %v7558 = vpop.permute.xlu0 %7557
        %7559 = vrot.lane.b32.xlu0 %v6219, 66
        %v7560 = vpop.permute.xlu0 %7559
        %7561 = vrot.lane.b32.xlu0 %v6220, 66
        %v7562 = vpop.permute.xlu0 %7561
        %7563 = vrot.lane.b32.xlu0 %v6221, 66
        %v7564 = vpop.permute.xlu0 %7563
        %7565 = vrot.lane.b32.xlu0 %v6222, 66
        %v7566 = vpop.permute.xlu0 %7565
        %7567 = vrot.lane.b32.xlu0 %v6223, 66
        %v7568 = vpop.permute.xlu0 %7567
        %7569 = vrot.lane.b32.xlu0 %v6224, 66
        %v7570 = vpop.permute.xlu0 %7569
        %7571 = vrot.lane.b32.xlu0 %v6225, 66
        %v7572 = vpop.permute.xlu0 %7571
        %7573 = vrot.lane.b32.xlu0 %v6226, 66
        %v7574 = vpop.permute.xlu0 %7573
        %7575 = vrot.lane.b32.xlu0 %v6227, 66
        %v7576 = vpop.permute.xlu0 %7575
        %7577 = vrot.lane.b32.xlu0 %v6244, 66
        %v7578 = vpop.permute.xlu0 %7577
        %7579 = vrot.lane.b32.xlu0 %v6246, 66
        %v7580 = vpop.permute.xlu0 %7579
        %7581 = vrot.lane.b32.xlu0 %v6230, 66
        %v7582 = vpop.permute.xlu0 %7581
        %7583 = vrot.lane.b32.xlu0 %v6231, 66
        %v7584 = vpop.permute.xlu0 %7583
        %7585 = vrot.lane.b32.xlu0 %v6232, 66
        %v7586 = vpop.permute.xlu0 %7585
        %7587 = vrot.lane.b32.xlu0 %v6233, 66
        %v7588 = vpop.permute.xlu0 %7587
        %7589 = vrot.lane.b32.xlu0 %v6234, 66
        %v7590 = vpop.permute.xlu0 %7589
        %7591 = vrot.lane.b32.xlu0 %v6235, 66
        %v7592 = vpop.permute.xlu0 %7591
        %7593 = vrot.lane.b32.xlu0 %v6236, 66
        %v7594 = vpop.permute.xlu0 %7593
        %7595 = vrot.lane.b32.xlu0 %v6237, 66
        %v7596 = vpop.permute.xlu0 %7595
        %7597 = vrot.lane.b32.xlu0 %v6238, 66
        %v7598 = vpop.permute.xlu0 %7597
        %7599 = vrot.lane.b32.xlu0 %v6239, 66
        %v7600 = vpop.permute.xlu0 %7599
        %7601 = vrot.lane.b32.xlu0 %v6240, 66
        %v7602 = vpop.permute.xlu0 %7601
        %7603 = vrot.lane.b32.xlu0 %v6241, 66
        %v7604 = vpop.permute.xlu0 %7603
        %7605 = vrot.lane.b32.xlu0 %v6242, 66
        %v7606 = vpop.permute.xlu0 %7605
        %7607 = vrot.lane.b32.xlu0 %v6243, 66
        %v7608 = vpop.permute.xlu0 %7607
        %7609 = vrot.lane.b32.xlu0 %v6245, 66
        %v7610 = vpop.permute.xlu0 %7609
        %7611 = vrot.lane.b32.xlu0 %v6247, 66
        %v7612 = vpop.permute.xlu0 %7611
        %v7613 = vsel %vm1811, %v7550, %v7552
        %v7614 = vsel %vm1811, %v7552, %v7554
        %v7615 = vsel %vm1811, %v7554, %v7556
        %v7616 = vsel %vm1811, %v7556, %v7558
        %v7617 = vsel %vm1811, %v7558, %v7560
        %v7618 = vsel %vm1811, %v7560, %v7562
        %v7619 = vsel %vm1811, %v7562, %v7564
        %v7620 = vsel %vm1811, %v7564, %v7566
        %v7621 = vsel %vm1811, %v7566, %v7568
        %v7622 = vsel %vm1811, %v7568, %v7570
        %v7623 = vsel %vm1811, %v7570, %v7572
        %v7624 = vsel %vm1811, %v7572, %v7574
        %v7625 = vsel %vm1811, %v7574, %v7576
        %v7626 = vsel %vm1811, %v7576, %v7578
        %v7627 = vsel %vm1811, %v7578, %v7580
        %v7628 = vsel %vm1811, %v7582, %v7584
        %v7629 = vsel %vm1811, %v7584, %v7586
        %v7630 = vsel %vm1811, %v7586, %v7588
        %v7631 = vsel %vm1811, %v7588, %v7590
        %v7632 = vsel %vm1811, %v7590, %v7592
        %v7633 = vsel %vm1811, %v7592, %v7594
        %v7634 = vsel %vm1811, %v7594, %v7596
        %v7635 = vsel %vm1811, %v7596, %v7598
        %v7636 = vsel %vm1811, %v7598, %v7600
        %v7637 = vsel %vm1811, %v7600, %v7602
        %v7638 = vsel %vm1811, %v7602, %v7604
        %v7639 = vsel %vm1811, %v7604, %v7606
        %v7640 = vsel %vm1811, %v7606, %v7608
        %v7641 = vsel %vm1811, %v7608, %v7610
        %v7642 = vsel %vm1811, %v7610, %v7612
        %7677 = vrot.lane.b32.xlu0 %v6248, 64
        %v7678 = vpop.permute.xlu0 %7677
        %7679 = vrot.lane.b32.xlu0 %v6249, 64
        %v7680 = vpop.permute.xlu0 %7679
        %7681 = vrot.lane.b32.xlu0 %v6250, 64
        %v7682 = vpop.permute.xlu0 %7681
        %7683 = vrot.lane.b32.xlu0 %v6251, 64
        %v7684 = vpop.permute.xlu0 %7683
        %7685 = vrot.lane.b32.xlu0 %v6252, 64
        %v7686 = vpop.permute.xlu0 %7685
        %7687 = vrot.lane.b32.xlu0 %v6253, 64
        %v7688 = vpop.permute.xlu0 %7687
        %7689 = vrot.lane.b32.xlu0 %v6254, 64
        %v7690 = vpop.permute.xlu0 %7689
        %7691 = vrot.lane.b32.xlu0 %v6255, 64
        %v7692 = vpop.permute.xlu0 %7691
        %7693 = vrot.lane.b32.xlu0 %v6256, 64
        %v7694 = vpop.permute.xlu0 %7693
        %7695 = vrot.lane.b32.xlu0 %v6257, 64
        %v7696 = vpop.permute.xlu0 %7695
        %7697 = vrot.lane.b32.xlu0 %v6258, 64
        %v7698 = vpop.permute.xlu0 %7697
        %7699 = vrot.lane.b32.xlu0 %v6259, 64
        %v7700 = vpop.permute.xlu0 %7699
        %7701 = vrot.lane.b32.xlu0 %v6260, 64
        %v7702 = vpop.permute.xlu0 %7701
        %7703 = vrot.lane.b32.xlu0 %v6261, 64
        %v7704 = vpop.permute.xlu0 %7703
        %7705 = vrot.lane.b32.xlu0 %v6262, 64
        %v7706 = vpop.permute.xlu0 %7705
        %7707 = vrot.lane.b32.xlu0 %v6263, 64
        %v7708 = vpop.permute.xlu0 %7707
        %7709 = vrot.lane.b32.xlu0 %v6264, 64
        %v7710 = vpop.permute.xlu0 %7709
        %7711 = vrot.lane.b32.xlu0 %v6265, 64
        %v7712 = vpop.permute.xlu0 %7711
        %7713 = vrot.lane.b32.xlu0 %v6266, 64
        %v7714 = vpop.permute.xlu0 %7713
        %7715 = vrot.lane.b32.xlu0 %v6267, 64
        %v7716 = vpop.permute.xlu0 %7715
        %7717 = vrot.lane.b32.xlu0 %v6268, 64
        %v7718 = vpop.permute.xlu0 %7717
        %7719 = vrot.lane.b32.xlu0 %v6269, 64
        %v7720 = vpop.permute.xlu0 %7719
        %7721 = vrot.lane.b32.xlu0 %v6270, 64
        %v7722 = vpop.permute.xlu0 %7721
        %7723 = vrot.lane.b32.xlu0 %v6271, 64
        %v7724 = vpop.permute.xlu0 %7723
        %7725 = vrot.lane.b32.xlu0 %v6272, 64
        %v7726 = vpop.permute.xlu0 %7725
        %7727 = vrot.lane.b32.xlu0 %v6273, 64
        %v7728 = vpop.permute.xlu0 %7727
        %7729 = vrot.lane.b32.xlu0 %v6274, 64
        %v7730 = vpop.permute.xlu0 %7729
        %7731 = vrot.lane.b32.xlu0 %v6275, 64
        %v7732 = vpop.permute.xlu0 %7731
        %7733 = vrot.lane.b32.xlu0 %v6276, 64
        %v7734 = vpop.permute.xlu0 %7733
        %7735 = vrot.lane.b32.xlu0 %v6277, 64
        %v7736 = vpop.permute.xlu0 %7735
        %7737 = vrot.lane.b32.xlu0 %v6278, 64
        %v7738 = vpop.permute.xlu0 %7737
        %7739 = vrot.lane.b32.xlu0 %v6279, 64
        %v7740 = vpop.permute.xlu0 %7739
        %7741 = vrot.lane.b32.xlu0 %v6280, 64
        %v7742 = vpop.permute.xlu0 %7741
        %7743 = vrot.lane.b32.xlu0 %v6281, 64
        %v7744 = vpop.permute.xlu0 %7743
        %v7745 = vsel %vm1056, %v7678, %v7680
        %v7746 = vsel %vm1056, %v7680, %v7682
        %v7747 = vsel %vm1056, %v7682, %v7684
        %v7748 = vsel %vm1056, %v7684, %v7686
        %v7749 = vsel %vm1056, %v7686, %v7688
        %v7750 = vsel %vm1056, %v7688, %v7690
        %v7751 = vsel %vm1056, %v7690, %v7692
        %v7752 = vsel %vm1056, %v7692, %v7694
        %v7753 = vsel %vm1056, %v7694, %v7696
        %v7754 = vsel %vm1056, %v7696, %v7698
        %v7755 = vsel %vm1056, %v7698, %v7700
        %v7756 = vsel %vm1056, %v7700, %v7702
        %v7757 = vsel %vm1056, %v7702, %v7704
        %v7758 = vsel %vm1056, %v7704, %v7706
        %v7759 = vsel %vm1056, %v7706, %v7708
        %v7760 = vsel %vm1056, %v7708, %v7710
        %v7761 = vsel %vm1056, %v7712, %v7714
        %v7762 = vsel %vm1056, %v7714, %v7716
        %v7763 = vsel %vm1056, %v7716, %v7718
        %v7764 = vsel %vm1056, %v7718, %v7720
        %v7765 = vsel %vm1056, %v7720, %v7722
        %v7766 = vsel %vm1056, %v7722, %v7724
        %v7767 = vsel %vm1056, %v7724, %v7726
        %v7768 = vsel %vm1056, %v7726, %v7728
        %v7769 = vsel %vm1056, %v7728, %v7730
        %v7770 = vsel %vm1056, %v7730, %v7732
        %v7771 = vsel %vm1056, %v7732, %v7734
        %v7772 = vsel %vm1056, %v7734, %v7736
        %v7773 = vsel %vm1056, %v7736, %v7738
        %v7774 = vsel %vm1056, %v7738, %v7740
        %v7775 = vsel %vm1056, %v7740, %v7742
        %v7776 = vsel %vm1056, %v7742, %v7744
        %7777 = vrot.lane.b32.xlu0 %v6248, 62
        %v7778 = vpop.permute.xlu0 %7777
        %7779 = vrot.lane.b32.xlu0 %v6249, 62
        %v7780 = vpop.permute.xlu0 %7779
        %7781 = vrot.lane.b32.xlu0 %v6250, 62
        %v7782 = vpop.permute.xlu0 %7781
        %7783 = vrot.lane.b32.xlu0 %v6251, 62
        %v7784 = vpop.permute.xlu0 %7783
        %7785 = vrot.lane.b32.xlu0 %v6252, 62
        %v7786 = vpop.permute.xlu0 %7785
        %7787 = vrot.lane.b32.xlu0 %v6253, 62
        %v7788 = vpop.permute.xlu0 %7787
        %7789 = vrot.lane.b32.xlu0 %v6254, 62
        %v7790 = vpop.permute.xlu0 %7789
        %7791 = vrot.lane.b32.xlu0 %v6255, 62
        %v7792 = vpop.permute.xlu0 %7791
        %7793 = vrot.lane.b32.xlu0 %v6256, 62
        %v7794 = vpop.permute.xlu0 %7793
        %7795 = vrot.lane.b32.xlu0 %v6257, 62
        %v7796 = vpop.permute.xlu0 %7795
        %7797 = vrot.lane.b32.xlu0 %v6258, 62
        %v7798 = vpop.permute.xlu0 %7797
        %7799 = vrot.lane.b32.xlu0 %v6259, 62
        %v7800 = vpop.permute.xlu0 %7799
        %7801 = vrot.lane.b32.xlu0 %v6260, 62
        %v7802 = vpop.permute.xlu0 %7801
        %7803 = vrot.lane.b32.xlu0 %v6261, 62
        %v7804 = vpop.permute.xlu0 %7803
        %7805 = vrot.lane.b32.xlu0 %v6262, 62
        %v7806 = vpop.permute.xlu0 %7805
        %7807 = vrot.lane.b32.xlu0 %v6263, 62
        %v7808 = vpop.permute.xlu0 %7807
        %7809 = vrot.lane.b32.xlu0 %v6264, 62
        %v7810 = vpop.permute.xlu0 %7809
        %7811 = vrot.lane.b32.xlu0 %v6265, 62
        %v7812 = vpop.permute.xlu0 %7811
        %7813 = vrot.lane.b32.xlu0 %v6266, 62
        %v7814 = vpop.permute.xlu0 %7813
        %7815 = vrot.lane.b32.xlu0 %v6267, 62
        %v7816 = vpop.permute.xlu0 %7815
        %7817 = vrot.lane.b32.xlu0 %v6268, 62
        %v7818 = vpop.permute.xlu0 %7817
        %7819 = vrot.lane.b32.xlu0 %v6269, 62
        %v7820 = vpop.permute.xlu0 %7819
        %7821 = vrot.lane.b32.xlu0 %v6270, 62
        %v7822 = vpop.permute.xlu0 %7821
        %7823 = vrot.lane.b32.xlu0 %v6271, 62
        %v7824 = vpop.permute.xlu0 %7823
        %7825 = vrot.lane.b32.xlu0 %v6272, 62
        %v7826 = vpop.permute.xlu0 %7825
        %7827 = vrot.lane.b32.xlu0 %v6273, 62
        %v7828 = vpop.permute.xlu0 %7827
        %7829 = vrot.lane.b32.xlu0 %v6274, 62
        %v7830 = vpop.permute.xlu0 %7829
        %7831 = vrot.lane.b32.xlu0 %v6275, 62
        %v7832 = vpop.permute.xlu0 %7831
        %7833 = vrot.lane.b32.xlu0 %v6276, 62
        %v7834 = vpop.permute.xlu0 %7833
        %7835 = vrot.lane.b32.xlu0 %v6277, 62
        %v7836 = vpop.permute.xlu0 %7835
        %7837 = vrot.lane.b32.xlu0 %v6278, 62
        %v7838 = vpop.permute.xlu0 %7837
        %7839 = vrot.lane.b32.xlu0 %v6279, 62
        %v7840 = vpop.permute.xlu0 %7839
        %7841 = vrot.lane.b32.xlu0 %v6280, 62
        %v7842 = vpop.permute.xlu0 %7841
        %7843 = vrot.lane.b32.xlu0 %v6281, 62
        %v7844 = vpop.permute.xlu0 %7843
        %v7845 = vsel %vm3561, %v7778, %v7780
        %v7846 = vsel %vm3561, %v7780, %v7782
        %v7847 = vsel %vm3561, %v7782, %v7784
        %v7848 = vsel %vm3561, %v7784, %v7786
        %v7849 = vsel %vm3561, %v7786, %v7788
        %v7850 = vsel %vm3561, %v7788, %v7790
        %v7851 = vsel %vm3561, %v7790, %v7792
        %v7852 = vsel %vm3561, %v7792, %v7794
        %v7853 = vsel %vm3561, %v7794, %v7796
        %v7854 = vsel %vm3561, %v7796, %v7798
        %v7855 = vsel %vm3561, %v7798, %v7800
        %v7856 = vsel %vm3561, %v7800, %v7802
        %v7857 = vsel %vm3561, %v7802, %v7804
        %v7858 = vsel %vm3561, %v7804, %v7806
        %v7859 = vsel %vm3561, %v7806, %v7808
        %v7860 = vsel %vm3561, %v7808, %v7810
        %v7861 = vsel %vm3561, %v7812, %v7814
        %v7862 = vsel %vm3561, %v7814, %v7816
        %v7863 = vsel %vm3561, %v7816, %v7818
        %v7864 = vsel %vm3561, %v7818, %v7820
        %v7865 = vsel %vm3561, %v7820, %v7822
        %v7866 = vsel %vm3561, %v7822, %v7824
        %v7867 = vsel %vm3561, %v7824, %v7826
        %v7868 = vsel %vm3561, %v7826, %v7828
        %v7869 = vsel %vm3561, %v7828, %v7830
        %v7870 = vsel %vm3561, %v7830, %v7832
        %v7871 = vsel %vm3561, %v7832, %v7834
        %v7872 = vsel %vm3561, %v7834, %v7836
        %v7873 = vsel %vm3561, %v7836, %v7838
        %v7874 = vsel %vm3561, %v7838, %v7840
        %v7875 = vsel %vm3561, %v7840, %v7842
        %v7876 = vsel %vm3561, %v7842, %v7844
        %7877 = vrot.lane.b32.xlu0 %v6248, 60
        %v7878 = vpop.permute.xlu0 %7877
        %7879 = vrot.lane.b32.xlu0 %v6249, 60
        %v7880 = vpop.permute.xlu0 %7879
        %7881 = vrot.lane.b32.xlu0 %v6250, 60
        %v7882 = vpop.permute.xlu0 %7881
        %7883 = vrot.lane.b32.xlu0 %v6251, 60
        %v7884 = vpop.permute.xlu0 %7883
        %7885 = vrot.lane.b32.xlu0 %v6252, 60
        %v7886 = vpop.permute.xlu0 %7885
        %7887 = vrot.lane.b32.xlu0 %v6253, 60
        %v7888 = vpop.permute.xlu0 %7887
        %7889 = vrot.lane.b32.xlu0 %v6254, 60
        %v7890 = vpop.permute.xlu0 %7889
        %7891 = vrot.lane.b32.xlu0 %v6255, 60
        %v7892 = vpop.permute.xlu0 %7891
        %7893 = vrot.lane.b32.xlu0 %v6256, 60
        %v7894 = vpop.permute.xlu0 %7893
        %7895 = vrot.lane.b32.xlu0 %v6257, 60
        %v7896 = vpop.permute.xlu0 %7895
        %7897 = vrot.lane.b32.xlu0 %v6258, 60
        %v7898 = vpop.permute.xlu0 %7897
        %7899 = vrot.lane.b32.xlu0 %v6259, 60
        %v7900 = vpop.permute.xlu0 %7899
        %7901 = vrot.lane.b32.xlu0 %v6260, 60
        %v7902 = vpop.permute.xlu0 %7901
        %7903 = vrot.lane.b32.xlu0 %v6261, 60
        %v7904 = vpop.permute.xlu0 %7903
        %7905 = vrot.lane.b32.xlu0 %v6262, 60
        %v7906 = vpop.permute.xlu0 %7905
        %7907 = vrot.lane.b32.xlu0 %v6263, 60
        %v7908 = vpop.permute.xlu0 %7907
        %7909 = vrot.lane.b32.xlu0 %v6264, 60
        %v7910 = vpop.permute.xlu0 %7909
        %7911 = vrot.lane.b32.xlu0 %v6265, 60
        %v7912 = vpop.permute.xlu0 %7911
        %7913 = vrot.lane.b32.xlu0 %v6266, 60
        %v7914 = vpop.permute.xlu0 %7913
        %7915 = vrot.lane.b32.xlu0 %v6267, 60
        %v7916 = vpop.permute.xlu0 %7915
        %7917 = vrot.lane.b32.xlu0 %v6268, 60
        %v7918 = vpop.permute.xlu0 %7917
        %7919 = vrot.lane.b32.xlu0 %v6269, 60
        %v7920 = vpop.permute.xlu0 %7919
        %7921 = vrot.lane.b32.xlu0 %v6270, 60
        %v7922 = vpop.permute.xlu0 %7921
        %7923 = vrot.lane.b32.xlu0 %v6271, 60
        %v7924 = vpop.permute.xlu0 %7923
        %7925 = vrot.lane.b32.xlu0 %v6272, 60
        %v7926 = vpop.permute.xlu0 %7925
        %7927 = vrot.lane.b32.xlu0 %v6273, 60
        %v7928 = vpop.permute.xlu0 %7927
        %7929 = vrot.lane.b32.xlu0 %v6274, 60
        %v7930 = vpop.permute.xlu0 %7929
        %7931 = vrot.lane.b32.xlu0 %v6275, 60
        %v7932 = vpop.permute.xlu0 %7931
        %7933 = vrot.lane.b32.xlu0 %v6276, 60
        %v7934 = vpop.permute.xlu0 %7933
        %7935 = vrot.lane.b32.xlu0 %v6277, 60
        %v7936 = vpop.permute.xlu0 %7935
        %7937 = vrot.lane.b32.xlu0 %v6278, 60
        %v7938 = vpop.permute.xlu0 %7937
        %7939 = vrot.lane.b32.xlu0 %v6279, 60
        %v7940 = vpop.permute.xlu0 %7939
        %7941 = vrot.lane.b32.xlu0 %v6280, 60
        %v7942 = vpop.permute.xlu0 %7941
        %7943 = vrot.lane.b32.xlu0 %v6281, 60
        %v7944 = vpop.permute.xlu0 %7943
        %v7945 = vsel %vm7177, %v7878, %v7880
        %v7946 = vsel %vm7177, %v7880, %v7882
        %v7947 = vsel %vm7177, %v7882, %v7884
        %v7948 = vsel %vm7177, %v7884, %v7886
        %v7949 = vsel %vm7177, %v7886, %v7888
        %v7950 = vsel %vm7177, %v7888, %v7890
        %v7951 = vsel %vm7177, %v7890, %v7892
        %v7952 = vsel %vm7177, %v7892, %v7894
        %v7953 = vsel %vm7177, %v7894, %v7896
        %v7954 = vsel %vm7177, %v7896, %v7898
        %v7955 = vsel %vm7177, %v7898, %v7900
        %v7956 = vsel %vm7177, %v7900, %v7902
        %v7957 = vsel %vm7177, %v7902, %v7904
        %v7958 = vsel %vm7177, %v7904, %v7906
        %v7959 = vsel %vm7177, %v7906, %v7908
        %v7960 = vsel %vm7177, %v7908, %v7910
        %v7961 = vsel %vm7177, %v7912, %v7914
        %v7962 = vsel %vm7177, %v7914, %v7916
        %v7963 = vsel %vm7177, %v7916, %v7918
        %v7964 = vsel %vm7177, %v7918, %v7920
        %v7965 = vsel %vm7177, %v7920, %v7922
        %v7966 = vsel %vm7177, %v7922, %v7924
        %v7967 = vsel %vm7177, %v7924, %v7926
        %v7968 = vsel %vm7177, %v7926, %v7928
        %v7969 = vsel %vm7177, %v7928, %v7930
        %v7970 = vsel %vm7177, %v7930, %v7932
        %v7971 = vsel %vm7177, %v7932, %v7934
        %v7972 = vsel %vm7177, %v7934, %v7936
        %v7973 = vsel %vm7177, %v7936, %v7938
        %v7974 = vsel %vm7177, %v7938, %v7940
        %v7975 = vsel %vm7177, %v7940, %v7942
        %v7976 = vsel %vm7177, %v7942, %v7944
        %7977 = vrot.lane.b32.xlu0 %v6248, 58
        %v7978 = vpop.permute.xlu0 %7977
        %7979 = vrot.lane.b32.xlu0 %v6249, 58
        %v7980 = vpop.permute.xlu0 %7979
        %7981 = vrot.lane.b32.xlu0 %v6250, 58
        %v7982 = vpop.permute.xlu0 %7981
        %7983 = vrot.lane.b32.xlu0 %v6251, 58
        %v7984 = vpop.permute.xlu0 %7983
        %7985 = vrot.lane.b32.xlu0 %v6252, 58
        %v7986 = vpop.permute.xlu0 %7985
        %7987 = vrot.lane.b32.xlu0 %v6253, 58
        %v7988 = vpop.permute.xlu0 %7987
        %7989 = vrot.lane.b32.xlu0 %v6254, 58
        %v7990 = vpop.permute.xlu0 %7989
        %7991 = vrot.lane.b32.xlu0 %v6255, 58
        %v7992 = vpop.permute.xlu0 %7991
        %7993 = vrot.lane.b32.xlu0 %v6256, 58
        %v7994 = vpop.permute.xlu0 %7993
        %7995 = vrot.lane.b32.xlu0 %v6257, 58
        %v7996 = vpop.permute.xlu0 %7995
        %7997 = vrot.lane.b32.xlu0 %v6258, 58
        %v7998 = vpop.permute.xlu0 %7997
        %7999 = vrot.lane.b32.xlu0 %v6259, 58
        %v8000 = vpop.permute.xlu0 %7999
        %8001 = vrot.lane.b32.xlu0 %v6260, 58
        %v8002 = vpop.permute.xlu0 %8001
        %8003 = vrot.lane.b32.xlu0 %v6261, 58
        %v8004 = vpop.permute.xlu0 %8003
        %8005 = vrot.lane.b32.xlu0 %v6262, 58
        %v8006 = vpop.permute.xlu0 %8005
        %8007 = vrot.lane.b32.xlu0 %v6263, 58
        %v8008 = vpop.permute.xlu0 %8007
        %8009 = vrot.lane.b32.xlu0 %v6264, 58
        %v8010 = vpop.permute.xlu0 %8009
        %8011 = vrot.lane.b32.xlu0 %v6265, 58
        %v8012 = vpop.permute.xlu0 %8011
        %8013 = vrot.lane.b32.xlu0 %v6266, 58
        %v8014 = vpop.permute.xlu0 %8013
        %8015 = vrot.lane.b32.xlu0 %v6267, 58
        %v8016 = vpop.permute.xlu0 %8015
        %8017 = vrot.lane.b32.xlu0 %v6268, 58
        %v8018 = vpop.permute.xlu0 %8017
        %8019 = vrot.lane.b32.xlu0 %v6269, 58
        %v8020 = vpop.permute.xlu0 %8019
        %8021 = vrot.lane.b32.xlu0 %v6270, 58
        %v8022 = vpop.permute.xlu0 %8021
        %8023 = vrot.lane.b32.xlu0 %v6271, 58
        %v8024 = vpop.permute.xlu0 %8023
        %8025 = vrot.lane.b32.xlu0 %v6272, 58
        %v8026 = vpop.permute.xlu0 %8025
        %8027 = vrot.lane.b32.xlu0 %v6273, 58
        %v8028 = vpop.permute.xlu0 %8027
        %8029 = vrot.lane.b32.xlu0 %v6274, 58
        %v8030 = vpop.permute.xlu0 %8029
        %8031 = vrot.lane.b32.xlu0 %v6275, 58
        %v8032 = vpop.permute.xlu0 %8031
        %8033 = vrot.lane.b32.xlu0 %v6276, 58
        %v8034 = vpop.permute.xlu0 %8033
        %8035 = vrot.lane.b32.xlu0 %v6277, 58
        %v8036 = vpop.permute.xlu0 %8035
        %8037 = vrot.lane.b32.xlu0 %v6278, 58
        %v8038 = vpop.permute.xlu0 %8037
        %8039 = vrot.lane.b32.xlu0 %v6279, 58
        %v8040 = vpop.permute.xlu0 %8039
        %8041 = vrot.lane.b32.xlu0 %v6280, 58
        %v8042 = vpop.permute.xlu0 %8041
        %8043 = vrot.lane.b32.xlu0 %v6281, 58
        %v8044 = vpop.permute.xlu0 %8043
        %v8045 = vsel %vm4500, %v7978, %v7980
        %v8046 = vsel %vm4500, %v7980, %v7982
        %v8047 = vsel %vm4500, %v7982, %v7984
        %v8048 = vsel %vm4500, %v7984, %v7986
        %v8049 = vsel %vm4500, %v7986, %v7988
        %v8050 = vsel %vm4500, %v7988, %v7990
        %v8051 = vsel %vm4500, %v7990, %v7992
        %v8052 = vsel %vm4500, %v7992, %v7994
        %v8053 = vsel %vm4500, %v7994, %v7996
        %v8054 = vsel %vm4500, %v7996, %v7998
        %v8055 = vsel %vm4500, %v7998, %v8000
        %v8056 = vsel %vm4500, %v8000, %v8002
        %v8057 = vsel %vm4500, %v8002, %v8004
        %v8058 = vsel %vm4500, %v8004, %v8006
        %v8059 = vsel %vm4500, %v8006, %v8008
        %v8060 = vsel %vm4500, %v8008, %v8010
        %v8061 = vsel %vm4500, %v8012, %v8014
        %v8062 = vsel %vm4500, %v8014, %v8016
        %v8063 = vsel %vm4500, %v8016, %v8018
        %v8064 = vsel %vm4500, %v8018, %v8020
        %v8065 = vsel %vm4500, %v8020, %v8022
        %v8066 = vsel %vm4500, %v8022, %v8024
        %v8067 = vsel %vm4500, %v8024, %v8026
        %v8068 = vsel %vm4500, %v8026, %v8028
        %v8069 = vsel %vm4500, %v8028, %v8030
        %v8070 = vsel %vm4500, %v8030, %v8032
        %v8071 = vsel %vm4500, %v8032, %v8034
        %v8072 = vsel %vm4500, %v8034, %v8036
        %v8073 = vsel %vm4500, %v8036, %v8038
        %v8074 = vsel %vm4500, %v8038, %v8040
        %v8075 = vsel %vm4500, %v8040, %v8042
        %v8076 = vsel %vm4500, %v8042, %v8044
        %8077 = vrot.lane.b32.xlu0 %v6246, 62
        %v8078 = vpop.permute.xlu0 %8077
        %8079 = vrot.lane.b32.xlu0 %v6247, 62
        %v8080 = vpop.permute.xlu0 %8079
        %8081 = vrot.lane.b32.xlu0 %v6385, 62
        %v8082 = vpop.permute.xlu0 %8081
        %8083 = vrot.lane.b32.xlu0 %v6386, 62
        %v8084 = vpop.permute.xlu0 %8083
        %8085 = vrot.lane.b32.xlu0 %v6387, 62
        %v8086 = vpop.permute.xlu0 %8085
        %8087 = vrot.lane.b32.xlu0 %v6388, 62
        %v8088 = vpop.permute.xlu0 %8087
        %8089 = vrot.lane.b32.xlu0 %v6389, 62
        %v8090 = vpop.permute.xlu0 %8089
        %8091 = vrot.lane.b32.xlu0 %v6390, 62
        %v8092 = vpop.permute.xlu0 %8091
        %8093 = vrot.lane.b32.xlu0 %v6391, 62
        %v8094 = vpop.permute.xlu0 %8093
        %8095 = vrot.lane.b32.xlu0 %v6392, 62
        %v8096 = vpop.permute.xlu0 %8095
        %8097 = vrot.lane.b32.xlu0 %v6393, 62
        %v8098 = vpop.permute.xlu0 %8097
        %8099 = vrot.lane.b32.xlu0 %v6394, 62
        %v8100 = vpop.permute.xlu0 %8099
        %8101 = vrot.lane.b32.xlu0 %v6395, 62
        %v8102 = vpop.permute.xlu0 %8101
        %8103 = vrot.lane.b32.xlu0 %v6396, 62
        %v8104 = vpop.permute.xlu0 %8103
        %8105 = vrot.lane.b32.xlu0 %v6397, 62
        %v8106 = vpop.permute.xlu0 %8105
        %8107 = vrot.lane.b32.xlu0 %v6398, 62
        %v8108 = vpop.permute.xlu0 %8107
        %8109 = vrot.lane.b32.xlu0 %v6399, 62
        %v8110 = vpop.permute.xlu0 %8109
        %8111 = vrot.lane.b32.xlu0 %v7513, 62
        %v8112 = vpop.permute.xlu0 %8111
        %8113 = vrot.lane.b32.xlu0 %v7510, 62
        %v8114 = vpop.permute.xlu0 %8113
        %8115 = vrot.lane.b32.xlu0 %v6401, 62
        %v8116 = vpop.permute.xlu0 %8115
        %8117 = vrot.lane.b32.xlu0 %v6402, 62
        %v8118 = vpop.permute.xlu0 %8117
        %8119 = vrot.lane.b32.xlu0 %v6403, 62
        %v8120 = vpop.permute.xlu0 %8119
        %8121 = vrot.lane.b32.xlu0 %v6404, 62
        %v8122 = vpop.permute.xlu0 %8121
        %8123 = vrot.lane.b32.xlu0 %v6405, 62
        %v8124 = vpop.permute.xlu0 %8123
        %8125 = vrot.lane.b32.xlu0 %v6406, 62
        %v8126 = vpop.permute.xlu0 %8125
        %8127 = vrot.lane.b32.xlu0 %v6407, 62
        %v8128 = vpop.permute.xlu0 %8127
        %8129 = vrot.lane.b32.xlu0 %v6408, 62
        %v8130 = vpop.permute.xlu0 %8129
        %8131 = vrot.lane.b32.xlu0 %v6409, 62
        %v8132 = vpop.permute.xlu0 %8131
        %8133 = vrot.lane.b32.xlu0 %v6410, 62
        %v8134 = vpop.permute.xlu0 %8133
        %8135 = vrot.lane.b32.xlu0 %v6411, 62
        %v8136 = vpop.permute.xlu0 %8135
        %8137 = vrot.lane.b32.xlu0 %v6412, 62
        %v8138 = vpop.permute.xlu0 %8137
        %8139 = vrot.lane.b32.xlu0 %v6413, 62
        %v8140 = vpop.permute.xlu0 %8139
        %8141 = vrot.lane.b32.xlu0 %v6414, 62
        %v8142 = vpop.permute.xlu0 %8141
        %8143 = vrot.lane.b32.xlu0 %v6415, 62
        %v8144 = vpop.permute.xlu0 %8143
        %8145 = vrot.lane.b32.xlu0 %v7514, 62
        %v8146 = vpop.permute.xlu0 %8145
        %8147 = vrot.lane.b32.xlu0 %v7512, 62
        %v8148 = vpop.permute.xlu0 %8147
        %8149 = vrot.lane.b32.xlu0 %v6517, 62
        %v8150 = vpop.permute.xlu0 %8149
        %8151 = vrot.lane.b32.xlu0 %v6518, 62
        %v8152 = vpop.permute.xlu0 %8151
        %8153 = vrot.lane.b32.xlu0 %v6519, 62
        %v8154 = vpop.permute.xlu0 %8153
        %8155 = vrot.lane.b32.xlu0 %v6520, 62
        %v8156 = vpop.permute.xlu0 %8155
        %8157 = vrot.lane.b32.xlu0 %v6521, 62
        %v8158 = vpop.permute.xlu0 %8157
        %8159 = vrot.lane.b32.xlu0 %v6522, 62
        %v8160 = vpop.permute.xlu0 %8159
        %8161 = vrot.lane.b32.xlu0 %v6523, 62
        %v8162 = vpop.permute.xlu0 %8161
        %8163 = vrot.lane.b32.xlu0 %v6524, 62
        %v8164 = vpop.permute.xlu0 %8163
        %8165 = vrot.lane.b32.xlu0 %v6525, 62
        %v8166 = vpop.permute.xlu0 %8165
        %8167 = vrot.lane.b32.xlu0 %v6526, 62
        %v8168 = vpop.permute.xlu0 %8167
        %8169 = vrot.lane.b32.xlu0 %v6527, 62
        %v8170 = vpop.permute.xlu0 %8169
        %8171 = vrot.lane.b32.xlu0 %v6528, 62
        %v8172 = vpop.permute.xlu0 %8171
        %8173 = vrot.lane.b32.xlu0 %v6529, 62
        %v8174 = vpop.permute.xlu0 %8173
        %8175 = vrot.lane.b32.xlu0 %v6530, 62
        %v8176 = vpop.permute.xlu0 %8175
        %8177 = vrot.lane.b32.xlu0 %v6531, 62
        %v8178 = vpop.permute.xlu0 %8177
        %8179 = vrot.lane.b32.xlu0 %v7521, 62
        %v8180 = vpop.permute.xlu0 %8179
        %8181 = vrot.lane.b32.xlu0 %v7518, 62
        %v8182 = vpop.permute.xlu0 %8181
        %8183 = vrot.lane.b32.xlu0 %v6533, 62
        %v8184 = vpop.permute.xlu0 %8183
        %8185 = vrot.lane.b32.xlu0 %v6534, 62
        %v8186 = vpop.permute.xlu0 %8185
        %8187 = vrot.lane.b32.xlu0 %v6535, 62
        %v8188 = vpop.permute.xlu0 %8187
        %8189 = vrot.lane.b32.xlu0 %v6536, 62
        %v8190 = vpop.permute.xlu0 %8189
        %8191 = vrot.lane.b32.xlu0 %v6537, 62
        %v8192 = vpop.permute.xlu0 %8191
        %8193 = vrot.lane.b32.xlu0 %v6538, 62
        %v8194 = vpop.permute.xlu0 %8193
        %8195 = vrot.lane.b32.xlu0 %v6539, 62
        %v8196 = vpop.permute.xlu0 %8195
        %8197 = vrot.lane.b32.xlu0 %v6540, 62
        %v8198 = vpop.permute.xlu0 %8197
        %8199 = vrot.lane.b32.xlu0 %v6541, 62
        %v8200 = vpop.permute.xlu0 %8199
        %8201 = vrot.lane.b32.xlu0 %v6542, 62
        %v8202 = vpop.permute.xlu0 %8201
        %8203 = vrot.lane.b32.xlu0 %v6543, 62
        %v8204 = vpop.permute.xlu0 %8203
        %8205 = vrot.lane.b32.xlu0 %v6544, 62
        %v8206 = vpop.permute.xlu0 %8205
        %8207 = vrot.lane.b32.xlu0 %v6545, 62
        %v8208 = vpop.permute.xlu0 %8207
        %8209 = vrot.lane.b32.xlu0 %v6546, 62
        %v8210 = vpop.permute.xlu0 %8209
        %8211 = vrot.lane.b32.xlu0 %v6547, 62
        %v8212 = vpop.permute.xlu0 %8211
        %8213 = vrot.lane.b32.xlu0 %v7522, 62
        %v8214 = vpop.permute.xlu0 %8213
        %8215 = vrot.lane.b32.xlu0 %v7520, 62
        %v8216 = vpop.permute.xlu0 %8215
        %8217 = vrot.lane.b32.xlu0 %v6649, 62
        %v8218 = vpop.permute.xlu0 %8217
        %8219 = vrot.lane.b32.xlu0 %v6650, 62
        %v8220 = vpop.permute.xlu0 %8219
        %8221 = vrot.lane.b32.xlu0 %v6651, 62
        %v8222 = vpop.permute.xlu0 %8221
        %8223 = vrot.lane.b32.xlu0 %v6652, 62
        %v8224 = vpop.permute.xlu0 %8223
        %8225 = vrot.lane.b32.xlu0 %v6653, 62
        %v8226 = vpop.permute.xlu0 %8225
        %8227 = vrot.lane.b32.xlu0 %v6654, 62
        %v8228 = vpop.permute.xlu0 %8227
        %8229 = vrot.lane.b32.xlu0 %v6655, 62
        %v8230 = vpop.permute.xlu0 %8229
        %8231 = vrot.lane.b32.xlu0 %v6656, 62
        %v8232 = vpop.permute.xlu0 %8231
        %8233 = vrot.lane.b32.xlu0 %v6657, 62
        %v8234 = vpop.permute.xlu0 %8233
        %8235 = vrot.lane.b32.xlu0 %v6658, 62
        %v8236 = vpop.permute.xlu0 %8235
        %8237 = vrot.lane.b32.xlu0 %v6659, 62
        %v8238 = vpop.permute.xlu0 %8237
        %8239 = vrot.lane.b32.xlu0 %v6660, 62
        %v8240 = vpop.permute.xlu0 %8239
        %8241 = vrot.lane.b32.xlu0 %v6661, 62
        %v8242 = vpop.permute.xlu0 %8241
        %8243 = vrot.lane.b32.xlu0 %v6662, 62
        %v8244 = vpop.permute.xlu0 %8243
        %8245 = vrot.lane.b32.xlu0 %v6663, 62
        %v8246 = vpop.permute.xlu0 %8245
        %8247 = vrot.lane.b32.xlu0 %v7529, 62
        %v8248 = vpop.permute.xlu0 %8247
        %8249 = vrot.lane.b32.xlu0 %v7526, 62
        %v8250 = vpop.permute.xlu0 %8249
        %8251 = vrot.lane.b32.xlu0 %v6665, 62
        %v8252 = vpop.permute.xlu0 %8251
        %8253 = vrot.lane.b32.xlu0 %v6666, 62
        %v8254 = vpop.permute.xlu0 %8253
        %8255 = vrot.lane.b32.xlu0 %v6667, 62
        %v8256 = vpop.permute.xlu0 %8255
        %8257 = vrot.lane.b32.xlu0 %v6668, 62
        %v8258 = vpop.permute.xlu0 %8257
        %8259 = vrot.lane.b32.xlu0 %v6669, 62
        %v8260 = vpop.permute.xlu0 %8259
        %8261 = vrot.lane.b32.xlu0 %v6670, 62
        %v8262 = vpop.permute.xlu0 %8261
        %8263 = vrot.lane.b32.xlu0 %v6671, 62
        %v8264 = vpop.permute.xlu0 %8263
        %8265 = vrot.lane.b32.xlu0 %v6672, 62
        %v8266 = vpop.permute.xlu0 %8265
        %8267 = vrot.lane.b32.xlu0 %v6673, 62
        %v8268 = vpop.permute.xlu0 %8267
        %8269 = vrot.lane.b32.xlu0 %v6674, 62
        %v8270 = vpop.permute.xlu0 %8269
        %8271 = vrot.lane.b32.xlu0 %v6675, 62
        %v8272 = vpop.permute.xlu0 %8271
        %8273 = vrot.lane.b32.xlu0 %v6676, 62
        %v8274 = vpop.permute.xlu0 %8273
        %8275 = vrot.lane.b32.xlu0 %v6677, 62
        %v8276 = vpop.permute.xlu0 %8275
        %8277 = vrot.lane.b32.xlu0 %v6678, 62
        %v8278 = vpop.permute.xlu0 %8277
        %8279 = vrot.lane.b32.xlu0 %v6679, 62
        %v8280 = vpop.permute.xlu0 %8279
        %8281 = vrot.lane.b32.xlu0 %v7530, 62
        %v8282 = vpop.permute.xlu0 %8281
        %8283 = vrot.lane.b32.xlu0 %v7528, 62
        %v8284 = vpop.permute.xlu0 %8283
        %8285 = vrot.lane.b32.xlu0 %v7550, 62
        %v8286 = vpop.permute.xlu0 %8285
        %8287 = vrot.lane.b32.xlu0 %v7613, 62
        %v8288 = vpop.permute.xlu0 %8287
        %8289 = vrot.lane.b32.xlu0 %v7614, 62
        %v8290 = vpop.permute.xlu0 %8289
        %8291 = vrot.lane.b32.xlu0 %v7615, 62
        %v8292 = vpop.permute.xlu0 %8291
        %8293 = vrot.lane.b32.xlu0 %v7616, 62
        %v8294 = vpop.permute.xlu0 %8293
        %8295 = vrot.lane.b32.xlu0 %v7617, 62
        %v8296 = vpop.permute.xlu0 %8295
        %8297 = vrot.lane.b32.xlu0 %v7618, 62
        %v8298 = vpop.permute.xlu0 %8297
        %8299 = vrot.lane.b32.xlu0 %v7619, 62
        %v8300 = vpop.permute.xlu0 %8299
        %8301 = vrot.lane.b32.xlu0 %v7620, 62
        %v8302 = vpop.permute.xlu0 %8301
        %8303 = vrot.lane.b32.xlu0 %v7621, 62
        %v8304 = vpop.permute.xlu0 %8303
        %8305 = vrot.lane.b32.xlu0 %v7622, 62
        %v8306 = vpop.permute.xlu0 %8305
        %8307 = vrot.lane.b32.xlu0 %v7623, 62
        %v8308 = vpop.permute.xlu0 %8307
        %8309 = vrot.lane.b32.xlu0 %v7624, 62
        %v8310 = vpop.permute.xlu0 %8309
        %8311 = vrot.lane.b32.xlu0 %v7625, 62
        %v8312 = vpop.permute.xlu0 %8311
        %8313 = vrot.lane.b32.xlu0 %v7626, 62
        %v8314 = vpop.permute.xlu0 %8313
        %8315 = vrot.lane.b32.xlu0 %v7627, 62
        %v8316 = vpop.permute.xlu0 %8315
        %8317 = vrot.lane.b32.xlu0 %v7580, 62
        %v8318 = vpop.permute.xlu0 %8317
        %8319 = vrot.lane.b32.xlu0 %v7582, 62
        %v8320 = vpop.permute.xlu0 %8319
        %8321 = vrot.lane.b32.xlu0 %v7628, 62
        %v8322 = vpop.permute.xlu0 %8321
        %8323 = vrot.lane.b32.xlu0 %v7629, 62
        %v8324 = vpop.permute.xlu0 %8323
        %8325 = vrot.lane.b32.xlu0 %v7630, 62
        %v8326 = vpop.permute.xlu0 %8325
        %8327 = vrot.lane.b32.xlu0 %v7631, 62
        %v8328 = vpop.permute.xlu0 %8327
        %8329 = vrot.lane.b32.xlu0 %v7632, 62
        %v8330 = vpop.permute.xlu0 %8329
        %8331 = vrot.lane.b32.xlu0 %v7633, 62
        %v8332 = vpop.permute.xlu0 %8331
        %8333 = vrot.lane.b32.xlu0 %v7634, 62
        %v8334 = vpop.permute.xlu0 %8333
        %8335 = vrot.lane.b32.xlu0 %v7635, 62
        %v8336 = vpop.permute.xlu0 %8335
        %8337 = vrot.lane.b32.xlu0 %v7636, 62
        %v8338 = vpop.permute.xlu0 %8337
        %8339 = vrot.lane.b32.xlu0 %v7637, 62
        %v8340 = vpop.permute.xlu0 %8339
        %8341 = vrot.lane.b32.xlu0 %v7638, 62
        %v8342 = vpop.permute.xlu0 %8341
        %8343 = vrot.lane.b32.xlu0 %v7639, 62
        %v8344 = vpop.permute.xlu0 %8343
        %8345 = vrot.lane.b32.xlu0 %v7640, 62
        %v8346 = vpop.permute.xlu0 %8345
        %8347 = vrot.lane.b32.xlu0 %v7641, 62
        %v8348 = vpop.permute.xlu0 %8347
        %8349 = vrot.lane.b32.xlu0 %v7642, 62
        %v8350 = vpop.permute.xlu0 %8349
        %8351 = vrot.lane.b32.xlu0 %v7612, 62
        %v8352 = vpop.permute.xlu0 %8351
        %8353 = vrot.lane.b32.xlu0 %v7678, 62
        %v8354 = vpop.permute.xlu0 %8353
        %8355 = vrot.lane.b32.xlu0 %v7745, 62
        %v8356 = vpop.permute.xlu0 %8355
        %8357 = vrot.lane.b32.xlu0 %v7746, 62
        %v8358 = vpop.permute.xlu0 %8357
        %8359 = vrot.lane.b32.xlu0 %v7747, 62
        %v8360 = vpop.permute.xlu0 %8359
        %8361 = vrot.lane.b32.xlu0 %v7748, 62
        %v8362 = vpop.permute.xlu0 %8361
        %8363 = vrot.lane.b32.xlu0 %v7749, 62
        %v8364 = vpop.permute.xlu0 %8363
        %8365 = vrot.lane.b32.xlu0 %v7750, 62
        %v8366 = vpop.permute.xlu0 %8365
        %8367 = vrot.lane.b32.xlu0 %v7751, 62
        %v8368 = vpop.permute.xlu0 %8367
        %8369 = vrot.lane.b32.xlu0 %v7752, 62
        %v8370 = vpop.permute.xlu0 %8369
        %8371 = vrot.lane.b32.xlu0 %v7753, 62
        %v8372 = vpop.permute.xlu0 %8371
        %8373 = vrot.lane.b32.xlu0 %v7754, 62
        %v8374 = vpop.permute.xlu0 %8373
        %8375 = vrot.lane.b32.xlu0 %v7755, 62
        %v8376 = vpop.permute.xlu0 %8375
        %8377 = vrot.lane.b32.xlu0 %v7756, 62
        %v8378 = vpop.permute.xlu0 %8377
        %8379 = vrot.lane.b32.xlu0 %v7757, 62
        %v8380 = vpop.permute.xlu0 %8379
        %8381 = vrot.lane.b32.xlu0 %v7758, 62
        %v8382 = vpop.permute.xlu0 %8381
        %8383 = vrot.lane.b32.xlu0 %v7759, 62
        %v8384 = vpop.permute.xlu0 %8383
        %8385 = vrot.lane.b32.xlu0 %v7760, 62
        %v8386 = vpop.permute.xlu0 %8385
        %8387 = vrot.lane.b32.xlu0 %v7712, 62
        %v8388 = vpop.permute.xlu0 %8387
        %8389 = vrot.lane.b32.xlu0 %v7761, 62
        %v8390 = vpop.permute.xlu0 %8389
        %8391 = vrot.lane.b32.xlu0 %v7762, 62
        %v8392 = vpop.permute.xlu0 %8391
        %8393 = vrot.lane.b32.xlu0 %v7763, 62
        %v8394 = vpop.permute.xlu0 %8393
        %8395 = vrot.lane.b32.xlu0 %v7764, 62
        %v8396 = vpop.permute.xlu0 %8395
        %8397 = vrot.lane.b32.xlu0 %v7765, 62
        %v8398 = vpop.permute.xlu0 %8397
        %8399 = vrot.lane.b32.xlu0 %v7766, 62
        %v8400 = vpop.permute.xlu0 %8399
        %8401 = vrot.lane.b32.xlu0 %v7767, 62
        %v8402 = vpop.permute.xlu0 %8401
        %8403 = vrot.lane.b32.xlu0 %v7768, 62
        %v8404 = vpop.permute.xlu0 %8403
        %8405 = vrot.lane.b32.xlu0 %v7769, 62
        %v8406 = vpop.permute.xlu0 %8405
        %8407 = vrot.lane.b32.xlu0 %v7770, 62
        %v8408 = vpop.permute.xlu0 %8407
        %8409 = vrot.lane.b32.xlu0 %v7771, 62
        %v8410 = vpop.permute.xlu0 %8409
        %8411 = vrot.lane.b32.xlu0 %v7772, 62
        %v8412 = vpop.permute.xlu0 %8411
        %8413 = vrot.lane.b32.xlu0 %v7773, 62
        %v8414 = vpop.permute.xlu0 %8413
        %8415 = vrot.lane.b32.xlu0 %v7774, 62
        %v8416 = vpop.permute.xlu0 %8415
        %8417 = vrot.lane.b32.xlu0 %v7775, 62
        %v8418 = vpop.permute.xlu0 %8417
        %8419 = vrot.lane.b32.xlu0 %v7776, 62
        %v8420 = vpop.permute.xlu0 %8419
        %8421 = vrot.lane.b32.xlu0 %v7778, 62
        %v8422 = vpop.permute.xlu0 %8421
        %8423 = vrot.lane.b32.xlu0 %v7845, 62
        %v8424 = vpop.permute.xlu0 %8423
        %8425 = vrot.lane.b32.xlu0 %v7846, 62
        %v8426 = vpop.permute.xlu0 %8425
        %8427 = vrot.lane.b32.xlu0 %v7847, 62
        %v8428 = vpop.permute.xlu0 %8427
        %8429 = vrot.lane.b32.xlu0 %v7848, 62
        %v8430 = vpop.permute.xlu0 %8429
        %8431 = vrot.lane.b32.xlu0 %v7849, 62
        %v8432 = vpop.permute.xlu0 %8431
        %8433 = vrot.lane.b32.xlu0 %v7850, 62
        %v8434 = vpop.permute.xlu0 %8433
        %8435 = vrot.lane.b32.xlu0 %v7851, 62
        %v8436 = vpop.permute.xlu0 %8435
        %8437 = vrot.lane.b32.xlu0 %v7852, 62
        %v8438 = vpop.permute.xlu0 %8437
        %8439 = vrot.lane.b32.xlu0 %v7853, 62
        %v8440 = vpop.permute.xlu0 %8439
        %8441 = vrot.lane.b32.xlu0 %v7854, 62
        %v8442 = vpop.permute.xlu0 %8441
        %8443 = vrot.lane.b32.xlu0 %v7855, 62
        %v8444 = vpop.permute.xlu0 %8443
        %8445 = vrot.lane.b32.xlu0 %v7856, 62
        %v8446 = vpop.permute.xlu0 %8445
        %8447 = vrot.lane.b32.xlu0 %v7857, 62
        %v8448 = vpop.permute.xlu0 %8447
        %8449 = vrot.lane.b32.xlu0 %v7858, 62
        %v8450 = vpop.permute.xlu0 %8449
        %8451 = vrot.lane.b32.xlu0 %v7859, 62
        %v8452 = vpop.permute.xlu0 %8451
        %8453 = vrot.lane.b32.xlu0 %v7860, 62
        %v8454 = vpop.permute.xlu0 %8453
        %8455 = vrot.lane.b32.xlu0 %v7812, 62
        %v8456 = vpop.permute.xlu0 %8455
        %8457 = vrot.lane.b32.xlu0 %v7861, 62
        %v8458 = vpop.permute.xlu0 %8457
        %8459 = vrot.lane.b32.xlu0 %v7862, 62
        %v8460 = vpop.permute.xlu0 %8459
        %8461 = vrot.lane.b32.xlu0 %v7863, 62
        %v8462 = vpop.permute.xlu0 %8461
        %8463 = vrot.lane.b32.xlu0 %v7864, 62
        %v8464 = vpop.permute.xlu0 %8463
        %8465 = vrot.lane.b32.xlu0 %v7865, 62
        %v8466 = vpop.permute.xlu0 %8465
        %8467 = vrot.lane.b32.xlu0 %v7866, 62
        %v8468 = vpop.permute.xlu0 %8467
        %8469 = vrot.lane.b32.xlu0 %v7867, 62
        %v8470 = vpop.permute.xlu0 %8469
        %8471 = vrot.lane.b32.xlu0 %v7868, 62
        %v8472 = vpop.permute.xlu0 %8471
        %8473 = vrot.lane.b32.xlu0 %v7869, 62
        %v8474 = vpop.permute.xlu0 %8473
        %8475 = vrot.lane.b32.xlu0 %v7870, 62
        %v8476 = vpop.permute.xlu0 %8475
        %8477 = vrot.lane.b32.xlu0 %v7871, 62
        %v8478 = vpop.permute.xlu0 %8477
        %8479 = vrot.lane.b32.xlu0 %v7872, 62
        %v8480 = vpop.permute.xlu0 %8479
        %8481 = vrot.lane.b32.xlu0 %v7873, 62
        %v8482 = vpop.permute.xlu0 %8481
        %8483 = vrot.lane.b32.xlu0 %v7874, 62
        %v8484 = vpop.permute.xlu0 %8483
        %8485 = vrot.lane.b32.xlu0 %v7875, 62
        %v8486 = vpop.permute.xlu0 %8485
        %8487 = vrot.lane.b32.xlu0 %v7876, 62
        %v8488 = vpop.permute.xlu0 %8487
        %8489 = vrot.lane.b32.xlu0 %v7878, 62
        %v8490 = vpop.permute.xlu0 %8489
        %8491 = vrot.lane.b32.xlu0 %v7945, 62
        %v8492 = vpop.permute.xlu0 %8491
        %8493 = vrot.lane.b32.xlu0 %v7946, 62
        %v8494 = vpop.permute.xlu0 %8493
        %8495 = vrot.lane.b32.xlu0 %v7947, 62
        %v8496 = vpop.permute.xlu0 %8495
        %8497 = vrot.lane.b32.xlu0 %v7948, 62
        %v8498 = vpop.permute.xlu0 %8497
        %8499 = vrot.lane.b32.xlu0 %v7949, 62
        %v8500 = vpop.permute.xlu0 %8499
        %8501 = vrot.lane.b32.xlu0 %v7950, 62
        %v8502 = vpop.permute.xlu0 %8501
        %8503 = vrot.lane.b32.xlu0 %v7951, 62
        %v8504 = vpop.permute.xlu0 %8503
        %8505 = vrot.lane.b32.xlu0 %v7952, 62
        %v8506 = vpop.permute.xlu0 %8505
        %8507 = vrot.lane.b32.xlu0 %v7953, 62
        %v8508 = vpop.permute.xlu0 %8507
        %8509 = vrot.lane.b32.xlu0 %v7954, 62
        %v8510 = vpop.permute.xlu0 %8509
        %8511 = vrot.lane.b32.xlu0 %v7955, 62
        %v8512 = vpop.permute.xlu0 %8511
        %8513 = vrot.lane.b32.xlu0 %v7956, 62
        %v8514 = vpop.permute.xlu0 %8513
        %8515 = vrot.lane.b32.xlu0 %v7957, 62
        %v8516 = vpop.permute.xlu0 %8515
        %8517 = vrot.lane.b32.xlu0 %v7958, 62
        %v8518 = vpop.permute.xlu0 %8517
        %8519 = vrot.lane.b32.xlu0 %v7959, 62
        %v8520 = vpop.permute.xlu0 %8519
        %8521 = vrot.lane.b32.xlu0 %v7960, 62
        %v8522 = vpop.permute.xlu0 %8521
        %8523 = vrot.lane.b32.xlu0 %v7912, 62
        %v8524 = vpop.permute.xlu0 %8523
        %8525 = vrot.lane.b32.xlu0 %v7961, 62
        %v8526 = vpop.permute.xlu0 %8525
        %8527 = vrot.lane.b32.xlu0 %v7962, 62
        %v8528 = vpop.permute.xlu0 %8527
        %8529 = vrot.lane.b32.xlu0 %v7963, 62
        %v8530 = vpop.permute.xlu0 %8529
        %8531 = vrot.lane.b32.xlu0 %v7964, 62
        %v8532 = vpop.permute.xlu0 %8531
        %8533 = vrot.lane.b32.xlu0 %v7965, 62
        %v8534 = vpop.permute.xlu0 %8533
        %8535 = vrot.lane.b32.xlu0 %v7966, 62
        %v8536 = vpop.permute.xlu0 %8535
        %8537 = vrot.lane.b32.xlu0 %v7967, 62
        %v8538 = vpop.permute.xlu0 %8537
        %8539 = vrot.lane.b32.xlu0 %v7968, 62
        %v8540 = vpop.permute.xlu0 %8539
        %8541 = vrot.lane.b32.xlu0 %v7969, 62
        %v8542 = vpop.permute.xlu0 %8541
        %8543 = vrot.lane.b32.xlu0 %v7970, 62
        %v8544 = vpop.permute.xlu0 %8543
        %8545 = vrot.lane.b32.xlu0 %v7971, 62
        %v8546 = vpop.permute.xlu0 %8545
        %8547 = vrot.lane.b32.xlu0 %v7972, 62
        %v8548 = vpop.permute.xlu0 %8547
        %8549 = vrot.lane.b32.xlu0 %v7973, 62
        %v8550 = vpop.permute.xlu0 %8549
        %8551 = vrot.lane.b32.xlu0 %v7974, 62
        %v8552 = vpop.permute.xlu0 %8551
        %8553 = vrot.lane.b32.xlu0 %v7975, 62
        %v8554 = vpop.permute.xlu0 %8553
        %8555 = vrot.lane.b32.xlu0 %v7976, 62
        %v8556 = vpop.permute.xlu0 %8555
        %8557 = vrot.lane.b32.xlu0 %v7978, 62
        %v8558 = vpop.permute.xlu0 %8557
        %8559 = vrot.lane.b32.xlu0 %v8045, 62
        %v8560 = vpop.permute.xlu0 %8559
        %8561 = vrot.lane.b32.xlu0 %v8046, 62
        %v8562 = vpop.permute.xlu0 %8561
        %8563 = vrot.lane.b32.xlu0 %v8047, 62
        %v8564 = vpop.permute.xlu0 %8563
        %8565 = vrot.lane.b32.xlu0 %v8048, 62
        %v8566 = vpop.permute.xlu0 %8565
        %8567 = vrot.lane.b32.xlu0 %v8049, 62
        %v8568 = vpop.permute.xlu0 %8567
        %8569 = vrot.lane.b32.xlu0 %v8050, 62
        %v8570 = vpop.permute.xlu0 %8569
        %8571 = vrot.lane.b32.xlu0 %v8051, 62
        %v8572 = vpop.permute.xlu0 %8571
        %8573 = vrot.lane.b32.xlu0 %v8052, 62
        %v8574 = vpop.permute.xlu0 %8573
        %8575 = vrot.lane.b32.xlu0 %v8053, 62
        %v8576 = vpop.permute.xlu0 %8575
        %8577 = vrot.lane.b32.xlu0 %v8054, 62
        %v8578 = vpop.permute.xlu0 %8577
        %8579 = vrot.lane.b32.xlu0 %v8055, 62
        %v8580 = vpop.permute.xlu0 %8579
        %8581 = vrot.lane.b32.xlu0 %v8056, 62
        %v8582 = vpop.permute.xlu0 %8581
        %8583 = vrot.lane.b32.xlu0 %v8057, 62
        %v8584 = vpop.permute.xlu0 %8583
        %8585 = vrot.lane.b32.xlu0 %v8058, 62
        %v8586 = vpop.permute.xlu0 %8585
        %8587 = vrot.lane.b32.xlu0 %v8059, 62
        %v8588 = vpop.permute.xlu0 %8587
        %8589 = vrot.lane.b32.xlu0 %v8060, 62
        %v8590 = vpop.permute.xlu0 %8589
        %8591 = vrot.lane.b32.xlu0 %v8012, 62
        %v8592 = vpop.permute.xlu0 %8591
        %8593 = vrot.lane.b32.xlu0 %v8061, 62
        %v8594 = vpop.permute.xlu0 %8593
        %8595 = vrot.lane.b32.xlu0 %v8062, 62
        %v8596 = vpop.permute.xlu0 %8595
        %8597 = vrot.lane.b32.xlu0 %v8063, 62
        %v8598 = vpop.permute.xlu0 %8597
        %8599 = vrot.lane.b32.xlu0 %v8064, 62
        %v8600 = vpop.permute.xlu0 %8599
        %8601 = vrot.lane.b32.xlu0 %v8065, 62
        %v8602 = vpop.permute.xlu0 %8601
        %8603 = vrot.lane.b32.xlu0 %v8066, 62
        %v8604 = vpop.permute.xlu0 %8603
        %8605 = vrot.lane.b32.xlu0 %v8067, 62
        %v8606 = vpop.permute.xlu0 %8605
        %8607 = vrot.lane.b32.xlu0 %v8068, 62
        %v8608 = vpop.permute.xlu0 %8607
        %8609 = vrot.lane.b32.xlu0 %v8069, 62
        %v8610 = vpop.permute.xlu0 %8609
        %8611 = vrot.lane.b32.xlu0 %v8070, 62
        %v8612 = vpop.permute.xlu0 %8611
        %8613 = vrot.lane.b32.xlu0 %v8071, 62
        %v8614 = vpop.permute.xlu0 %8613
        %8615 = vrot.lane.b32.xlu0 %v8072, 62
        %v8616 = vpop.permute.xlu0 %8615
        %8617 = vrot.lane.b32.xlu0 %v8073, 62
        %v8618 = vpop.permute.xlu0 %8617
        %8619 = vrot.lane.b32.xlu0 %v8074, 62
        %v8620 = vpop.permute.xlu0 %8619
        %8621 = vrot.lane.b32.xlu0 %v8075, 62
        %v8622 = vpop.permute.xlu0 %8621
        %8623 = vrot.lane.b32.xlu0 %v8076, 62
        %v8624 = vpop.permute.xlu0 %8623
        %v8625 = vsel %vm3561, %v7010, %v8078
        %v8626 = vsel %vm3561, %v7044, %v8080
        %v8627 = vsel %vm3561, %v8082, %v8084
        %v8628 = vsel %vm3561, %v8084, %v8086
        %v8629 = vsel %vm3561, %v8086, %v8088
        %v8630 = vsel %vm3561, %v8088, %v8090
        %v8631 = vsel %vm3561, %v8090, %v8092
        %v8632 = vsel %vm3561, %v8092, %v8094
        %v8633 = vsel %vm3561, %v8094, %v8096
        %v8634 = vsel %vm3561, %v8096, %v8098
        %v8635 = vsel %vm3561, %v8098, %v8100
        %v8636 = vsel %vm3561, %v8100, %v8102
        %v8637 = vsel %vm3561, %v8102, %v8104
        %v8638 = vsel %vm3561, %v8104, %v8106
        %v8639 = vsel %vm3561, %v8106, %v8108
        %v8640 = vsel %vm3561, %v8108, %v8110
        %v8641 = vsel %vm3561, %v8110, %v8112
        %v8642 = vsel %vm3561, %v8112, %v8114
        %v8643 = vsel %vm3561, %v8116, %v8118
        %v8644 = vsel %vm3561, %v8118, %v8120
        %v8645 = vsel %vm3561, %v8120, %v8122
        %v8646 = vsel %vm3561, %v8122, %v8124
        %v8647 = vsel %vm3561, %v8124, %v8126
        %v8648 = vsel %vm3561, %v8126, %v8128
        %v8649 = vsel %vm3561, %v8128, %v8130
        %v8650 = vsel %vm3561, %v8130, %v8132
        %v8651 = vsel %vm3561, %v8132, %v8134
        %v8652 = vsel %vm3561, %v8134, %v8136
        %v8653 = vsel %vm3561, %v8136, %v8138
        %v8654 = vsel %vm3561, %v8138, %v8140
        %v8655 = vsel %vm3561, %v8140, %v8142
        %v8656 = vsel %vm3561, %v8142, %v8144
        %v8657 = vsel %vm3561, %v8144, %v8146
        %v8658 = vsel %vm3561, %v8146, %v8148
        %v8659 = vsel %vm3561, %v8150, %v8152
        %v8660 = vsel %vm3561, %v8152, %v8154
        %v8661 = vsel %vm3561, %v8154, %v8156
        %v8662 = vsel %vm3561, %v8156, %v8158
        %v8663 = vsel %vm3561, %v8158, %v8160
        %v8664 = vsel %vm3561, %v8160, %v8162
        %v8665 = vsel %vm3561, %v8162, %v8164
        %v8666 = vsel %vm3561, %v8164, %v8166
        %v8667 = vsel %vm3561, %v8166, %v8168
        %v8668 = vsel %vm3561, %v8168, %v8170
        %v8669 = vsel %vm3561, %v8170, %v8172
        %v8670 = vsel %vm3561, %v8172, %v8174
        %v8671 = vsel %vm3561, %v8174, %v8176
        %v8672 = vsel %vm3561, %v8176, %v8178
        %v8673 = vsel %vm3561, %v8178, %v8180
        %v8674 = vsel %vm3561, %v8180, %v8182
        %v8675 = vsel %vm3561, %v8184, %v8186
        %v8676 = vsel %vm3561, %v8186, %v8188
        %v8677 = vsel %vm3561, %v8188, %v8190
        %v8678 = vsel %vm3561, %v8190, %v8192
        %v8679 = vsel %vm3561, %v8192, %v8194
        %v8680 = vsel %vm3561, %v8194, %v8196
        %v8681 = vsel %vm3561, %v8196, %v8198
        %v8682 = vsel %vm3561, %v8198, %v8200
        %v8683 = vsel %vm3561, %v8200, %v8202
        %v8684 = vsel %vm3561, %v8202, %v8204
        %v8685 = vsel %vm3561, %v8204, %v8206
        %v8686 = vsel %vm3561, %v8206, %v8208
        %v8687 = vsel %vm3561, %v8208, %v8210
        %v8688 = vsel %vm3561, %v8210, %v8212
        %v8689 = vsel %vm3561, %v8212, %v8214
        %v8690 = vsel %vm3561, %v8214, %v8216
        %v8691 = vsel %vm3561, %v8218, %v8220
        %v8692 = vsel %vm3561, %v8220, %v8222
        %v8693 = vsel %vm3561, %v8222, %v8224
        %v8694 = vsel %vm3561, %v8224, %v8226
        %v8695 = vsel %vm3561, %v8226, %v8228
        %v8696 = vsel %vm3561, %v8228, %v8230
        %v8697 = vsel %vm3561, %v8230, %v8232
        %v8698 = vsel %vm3561, %v8232, %v8234
        %v8699 = vsel %vm3561, %v8234, %v8236
        %v8700 = vsel %vm3561, %v8236, %v8238
        %v8701 = vsel %vm3561, %v8238, %v8240
        %v8702 = vsel %vm3561, %v8240, %v8242
        %v8703 = vsel %vm3561, %v8242, %v8244
        %v8704 = vsel %vm3561, %v8244, %v8246
        %v8705 = vsel %vm3561, %v8246, %v8248
        %v8706 = vsel %vm3561, %v8248, %v8250
        %v8707 = vsel %vm3561, %v8252, %v8254
        %v8708 = vsel %vm3561, %v8254, %v8256
        %v8709 = vsel %vm3561, %v8256, %v8258
        %v8710 = vsel %vm3561, %v8258, %v8260
        %v8711 = vsel %vm3561, %v8260, %v8262
        %v8712 = vsel %vm3561, %v8262, %v8264
        %v8713 = vsel %vm3561, %v8264, %v8266
        %v8714 = vsel %vm3561, %v8266, %v8268
        %v8715 = vsel %vm3561, %v8268, %v8270
        %v8716 = vsel %vm3561, %v8270, %v8272
        %v8717 = vsel %vm3561, %v8272, %v8274
        %v8718 = vsel %vm3561, %v8274, %v8276
        %v8719 = vsel %vm3561, %v8276, %v8278
        %v8720 = vsel %vm3561, %v8278, %v8280
        %v8721 = vsel %vm3561, %v8280, %v8282
        %v8722 = vsel %vm3561, %v8282, %v8284
        %v8723 = vsel %vm3561, %v8286, %v8288
        %v8724 = vsel %vm3561, %v8288, %v8290
        %v8725 = vsel %vm3561, %v8290, %v8292
        %v8726 = vsel %vm3561, %v8292, %v8294
        %v8727 = vsel %vm3561, %v8294, %v8296
        %v8728 = vsel %vm3561, %v8296, %v8298
        %v8729 = vsel %vm3561, %v8298, %v8300
        %v8730 = vsel %vm3561, %v8300, %v8302
        %v8731 = vsel %vm3561, %v8302, %v8304
        %v8732 = vsel %vm3561, %v8304, %v8306
        %v8733 = vsel %vm3561, %v8306, %v8308
        %v8734 = vsel %vm3561, %v8308, %v8310
        %v8735 = vsel %vm3561, %v8310, %v8312
        %v8736 = vsel %vm3561, %v8312, %v8314
        %v8737 = vsel %vm3561, %v8314, %v8316
        %v8738 = vsel %vm3561, %v8316, %v8318
        %v8739 = vsel %vm3561, %v8320, %v8322
        %v8740 = vsel %vm3561, %v8322, %v8324
        %v8741 = vsel %vm3561, %v8324, %v8326
        %v8742 = vsel %vm3561, %v8326, %v8328
        %v8743 = vsel %vm3561, %v8328, %v8330
        %v8744 = vsel %vm3561, %v8330, %v8332
        %v8745 = vsel %vm3561, %v8332, %v8334
        %v8746 = vsel %vm3561, %v8334, %v8336
        %v8747 = vsel %vm3561, %v8336, %v8338
        %v8748 = vsel %vm3561, %v8338, %v8340
        %v8749 = vsel %vm3561, %v8340, %v8342
        %v8750 = vsel %vm3561, %v8342, %v8344
        %v8751 = vsel %vm3561, %v8344, %v8346
        %v8752 = vsel %vm3561, %v8346, %v8348
        %v8753 = vsel %vm3561, %v8348, %v8350
        %v8754 = vsel %vm3561, %v8350, %v8352
        %v8755 = vsel %vm3561, %v8354, %v8356
        %v8756 = vsel %vm3561, %v8356, %v8358
        %v8757 = vsel %vm3561, %v8358, %v8360
        %v8758 = vsel %vm3561, %v8360, %v8362
        %v8759 = vsel %vm3561, %v8362, %v8364
        %v8760 = vsel %vm3561, %v8364, %v8366
        %v8761 = vsel %vm3561, %v8366, %v8368
        %v8762 = vsel %vm3561, %v8368, %v8370
        %v8763 = vsel %vm3561, %v8370, %v8372
        %v8764 = vsel %vm3561, %v8372, %v8374
        %v8765 = vsel %vm3561, %v8374, %v8376
        %v8766 = vsel %vm3561, %v8376, %v8378
        %v8767 = vsel %vm3561, %v8378, %v8380
        %v8768 = vsel %vm3561, %v8380, %v8382
        %v8769 = vsel %vm3561, %v8382, %v8384
        %v8770 = vsel %vm3561, %v8384, %v8386
        %v8771 = vsel %vm3561, %v8388, %v8390
        %v8772 = vsel %vm3561, %v8390, %v8392
        %v8773 = vsel %vm3561, %v8392, %v8394
        %v8774 = vsel %vm3561, %v8394, %v8396
        %v8775 = vsel %vm3561, %v8396, %v8398
        %v8776 = vsel %vm3561, %v8398, %v8400
        %v8777 = vsel %vm3561, %v8400, %v8402
        %v8778 = vsel %vm3561, %v8402, %v8404
        %v8779 = vsel %vm3561, %v8404, %v8406
        %v8780 = vsel %vm3561, %v8406, %v8408
        %v8781 = vsel %vm3561, %v8408, %v8410
        %v8782 = vsel %vm3561, %v8410, %v8412
        %v8783 = vsel %vm3561, %v8412, %v8414
        %v8784 = vsel %vm3561, %v8414, %v8416
        %v8785 = vsel %vm3561, %v8416, %v8418
        %v8786 = vsel %vm3561, %v8418, %v8420
        %v8787 = vsel %vm3561, %v8422, %v8424
        %v8788 = vsel %vm3561, %v8424, %v8426
        %v8789 = vsel %vm3561, %v8426, %v8428
        %v8790 = vsel %vm3561, %v8428, %v8430
        %v8791 = vsel %vm3561, %v8430, %v8432
        %v8792 = vsel %vm3561, %v8432, %v8434
        %v8793 = vsel %vm3561, %v8434, %v8436
        %v8794 = vsel %vm3561, %v8436, %v8438
        %v8795 = vsel %vm3561, %v8438, %v8440
        %v8796 = vsel %vm3561, %v8440, %v8442
        %v8797 = vsel %vm3561, %v8442, %v8444
        %v8798 = vsel %vm3561, %v8444, %v8446
        %v8799 = vsel %vm3561, %v8446, %v8448
        %v8800 = vsel %vm3561, %v8448, %v8450
        %v8801 = vsel %vm3561, %v8450, %v8452
        %v8802 = vsel %vm3561, %v8452, %v8454
        %v8803 = vsel %vm3561, %v8456, %v8458
        %v8804 = vsel %vm3561, %v8458, %v8460
        %v8805 = vsel %vm3561, %v8460, %v8462
        %v8806 = vsel %vm3561, %v8462, %v8464
        %v8807 = vsel %vm3561, %v8464, %v8466
        %v8808 = vsel %vm3561, %v8466, %v8468
        %v8809 = vsel %vm3561, %v8468, %v8470
        %v8810 = vsel %vm3561, %v8470, %v8472
        %v8811 = vsel %vm3561, %v8472, %v8474
        %v8812 = vsel %vm3561, %v8474, %v8476
        %v8813 = vsel %vm3561, %v8476, %v8478
        %v8814 = vsel %vm3561, %v8478, %v8480
        %v8815 = vsel %vm3561, %v8480, %v8482
        %v8816 = vsel %vm3561, %v8482, %v8484
        %v8817 = vsel %vm3561, %v8484, %v8486
        %v8818 = vsel %vm3561, %v8486, %v8488
        %v8819 = vsel %vm3561, %v8490, %v8492
        %v8820 = vsel %vm3561, %v8492, %v8494
        %v8821 = vsel %vm3561, %v8494, %v8496
        %v8822 = vsel %vm3561, %v8496, %v8498
        %v8823 = vsel %vm3561, %v8498, %v8500
        %v8824 = vsel %vm3561, %v8500, %v8502
        %v8825 = vsel %vm3561, %v8502, %v8504
        %v8826 = vsel %vm3561, %v8504, %v8506
        %v8827 = vsel %vm3561, %v8506, %v8508
        %v8828 = vsel %vm3561, %v8508, %v8510
        %v8829 = vsel %vm3561, %v8510, %v8512
        %v8830 = vsel %vm3561, %v8512, %v8514
        %v8831 = vsel %vm3561, %v8514, %v8516
        %v8832 = vsel %vm3561, %v8516, %v8518
        %v8833 = vsel %vm3561, %v8518, %v8520
        %v8834 = vsel %vm3561, %v8520, %v8522
        %v8835 = vsel %vm3561, %v8524, %v8526
        %v8836 = vsel %vm3561, %v8526, %v8528
        %v8837 = vsel %vm3561, %v8528, %v8530
        %v8838 = vsel %vm3561, %v8530, %v8532
        %v8839 = vsel %vm3561, %v8532, %v8534
        %v8840 = vsel %vm3561, %v8534, %v8536
        %v8841 = vsel %vm3561, %v8536, %v8538
        %v8842 = vsel %vm3561, %v8538, %v8540
        %v8843 = vsel %vm3561, %v8540, %v8542
        %v8844 = vsel %vm3561, %v8542, %v8544
        %v8845 = vsel %vm3561, %v8544, %v8546
        %v8846 = vsel %vm3561, %v8546, %v8548
        %v8847 = vsel %vm3561, %v8548, %v8550
        %v8848 = vsel %vm3561, %v8550, %v8552
        %v8849 = vsel %vm3561, %v8552, %v8554
        %v8850 = vsel %vm3561, %v8554, %v8556
        %v8851 = vsel %vm3561, %v8558, %v8560
        %v8852 = vsel %vm3561, %v8560, %v8562
        %v8853 = vsel %vm3561, %v8562, %v8564
        %v8854 = vsel %vm3561, %v8564, %v8566
        %v8855 = vsel %vm3561, %v8566, %v8568
        %v8856 = vsel %vm3561, %v8568, %v8570
        %v8857 = vsel %vm3561, %v8570, %v8572
        %v8858 = vsel %vm3561, %v8572, %v8574
        %v8859 = vsel %vm3561, %v8574, %v8576
        %v8860 = vsel %vm3561, %v8576, %v8578
        %v8861 = vsel %vm3561, %v8578, %v8580
        %v8862 = vsel %vm3561, %v8580, %v8582
        %v8863 = vsel %vm3561, %v8582, %v8584
        %v8864 = vsel %vm3561, %v8584, %v8586
        %v8865 = vsel %vm3561, %v8586, %v8588
        %v8866 = vsel %vm3561, %v8588, %v8590
        %v8867 = vsel %vm3561, %v8592, %v8594
        %v8868 = vsel %vm3561, %v8594, %v8596
        %v8869 = vsel %vm3561, %v8596, %v8598
        %v8870 = vsel %vm3561, %v8598, %v8600
        %v8871 = vsel %vm3561, %v8600, %v8602
        %v8872 = vsel %vm3561, %v8602, %v8604
        %v8873 = vsel %vm3561, %v8604, %v8606
        %v8874 = vsel %vm3561, %v8606, %v8608
        %v8875 = vsel %vm3561, %v8608, %v8610
        %v8876 = vsel %vm3561, %v8610, %v8612
        %v8877 = vsel %vm3561, %v8612, %v8614
        %v8878 = vsel %vm3561, %v8614, %v8616
        %v8879 = vsel %vm3561, %v8616, %v8618
        %v8880 = vsel %vm3561, %v8618, %v8620
        %v8881 = vsel %vm3561, %v8620, %v8622
        %v8882 = vsel %vm3561, %v8622, %v8624
        %v9141 = vld [vmem:[#allocation9] sm:$0xff]
        %v9142 = vld [vmem:[#allocation9 + $0x8] sm:$0xff]
        %v9143 = vld [vmem:[#allocation9 + $0x10] sm:$0xff]
        %v9144 = vld [vmem:[#allocation9 + $0x18] sm:$0xf]
        %v9145 = vld [vmem:[#allocation9 + $0x1c] sm:$0xff]
        %v9146 = vld [vmem:[#allocation9 + $0x24] sm:$0xff]
        %v9147 = vld [vmem:[#allocation9 + $0x2c] sm:$0xff]
        %v9148 = vld [vmem:[#allocation9 + $0x34] sm:$0xf]
        %v9149 = vld [vmem:[#allocation9 + $0x38] sm:$0xff]
        %v9150 = vld [vmem:[#allocation9 + $0x40] sm:$0xff]
        %v9151 = vld [vmem:[#allocation9 + $0x48] sm:$0xff]
        %v9152 = vld [vmem:[#allocation9 + $0x50] sm:$0xf]
        %v9153 = vld [vmem:[#allocation9 + $0x54] sm:$0xff]
        %v9154 = vld [vmem:[#allocation9 + $0x5c] sm:$0xff]
        %v9155 = vld [vmem:[#allocation9 + $0x64] sm:$0xff]
        %v9156 = vld [vmem:[#allocation9 + $0x6c] sm:$0xf]
        %v9157 = vld [vmem:[%s4] sm:$0xff]
        %v9158 = vld [vmem:[%s4 + $0x8] sm:$0xff]
        %v9159 = vld [vmem:[%s4 + $0x10] sm:$0xff]
        %v9160 = vld [vmem:[%s4 + $0x18] sm:$0xff]
        %9162 = vset.pattern.permute.xlu0 0
        %9163 = vperm.xlu0 %9162, %v9157
        %v9164 = vpop.permute.xlu0 %9163
        %9167 = vset.pattern.permute.xlu0 0
        %9168 = vperm.xlu0 %9167, %v9158
        %v9169 = vpop.permute.xlu0 %9168
        %9172 = vset.pattern.permute.xlu0 0
        %9173 = vperm.xlu0 %9172, %v9159
        %v9174 = vpop.permute.xlu0 %9173
        %9177 = vset.pattern.permute.xlu0 0
        %9178 = vperm.xlu0 %9177, %v9160
        %v9179 = vpop.permute.xlu0 %9178
        %v9197 = vunpack.c.l.b16 %v9141
        %v9198 = vunpack.c.h.b16 %v9141
        %v9199 = vunpack.c.l.b16 %v9142
        %v9200 = vunpack.c.h.b16 %v9142
        %v9201 = vunpack.c.l.b16 %v9143
        %v9202 = vunpack.c.h.b16 %v9143
        %v9203 = vunpack.c.l.b16 %v9144
        %v9204 = vunpack.c.l.b16 %v9145
        %v9205 = vunpack.c.h.b16 %v9145
        %v9206 = vunpack.c.l.b16 %v9146
        %v9207 = vunpack.c.h.b16 %v9146
        %v9208 = vunpack.c.l.b16 %v9147
        %v9209 = vunpack.c.h.b16 %v9147
        %v9210 = vunpack.c.l.b16 %v9148
        %v9211 = vunpack.c.l.b16 %v9149
        %v9212 = vunpack.c.h.b16 %v9149
        %v9213 = vunpack.c.l.b16 %v9150
        %v9214 = vunpack.c.h.b16 %v9150
        %v9215 = vunpack.c.l.b16 %v9151
        %v9216 = vunpack.c.h.b16 %v9151
        %v9217 = vunpack.c.l.b16 %v9152
        %v9218 = vunpack.c.l.b16 %v9153
        %v9219 = vunpack.c.h.b16 %v9153
        %v9220 = vunpack.c.l.b16 %v9154
        %v9221 = vunpack.c.h.b16 %v9154
        %v9222 = vunpack.c.l.b16 %v9155
        %v9223 = vunpack.c.h.b16 %v9155
        %v9224 = vunpack.c.l.b16 %v9156
        %v9225 = vpack.c.b16 %v9204, %v9197
        %v9226 = vpack.c.b16 %v9205, %v9198
        %v9227 = vpack.c.b16 %v9206, %v9199
        %v9228 = vpack.c.b16 %v9207, %v9200
        %v9229 = vpack.c.b16 %v9208, %v9201
        %v9230 = vpack.c.b16 %v9209, %v9202
        %v9231 = vpack.c.b16 %v9210, %v9203
        %v9232 = vpack.c.b16 %v9218, %v9211
        %v9233 = vpack.c.b16 %v9219, %v9212
        %v9234 = vpack.c.b16 %v9220, %v9213
        %v9235 = vpack.c.b16 %v9221, %v9214
        %v9236 = vpack.c.b16 %v9222, %v9215
        %v9237 = vpack.c.b16 %v9223, %v9216
        %v9238 = vpack.c.b16 %v9224, %v9217
        %vm9251 = vcmask 261120
        %v9253 = vsel %vm9251, %v9231, 0
        %v9256 = vsel %vm9251, %v9238, 0
        %9258 = vmatprep.subr.bf16.mxu0 %v6213
        %9259 = vmatpush1.bf16.msra.mxu0 %v6212
        %9260 = vmatprep.subr.bf16.mxu0 %v6229
        %9261 = vmatpush1.bf16.msra.mxu0 %v6228
        %9262 = vmatprep.subr.bf16.mxu0 %v6385
        %9263 = vmatpush1.bf16.msra.mxu0 %v6384
        %9264 = vmatprep.subr.bf16.mxu0 %v6401
        %9265 = vmatpush1.bf16.msra.mxu0 %v6400
        %9266 = vmatprep.subr.bf16.mxu0 %v6517
        %9267 = vmatpush1.bf16.msra.mxu0 %v6516
        %9268 = vmatprep.subr.bf16.mxu0 %v6533
        %9269 = vmatpush1.bf16.msra.mxu0 %v6532
        %9270 = vmatprep.subr.bf16.mxu0 %v6649
        %9271 = vmatpush1.bf16.msra.mxu0 %v6648
        %9272 = vmatprep.subr.bf16.mxu0 %v6665
        %9273 = vmatpush1.bf16.msra.mxu0 %v6664
        %9274 = vmatprep.subr.bf16.mxu0 %v6782
        %9275 = vmatpush1.bf16.msra.mxu0 %v6781
        %9276 = vmatprep.subr.bf16.mxu0 %v6798
        %9277 = vmatpush1.bf16.msra.mxu0 %v6797
        %9278 = vmatprep.subr.bf16.mxu0 %v6914
        %9279 = vmatpush1.bf16.msra.mxu0 %v6913
        %9280 = vmatprep.subr.bf16.mxu0 %v6930
        %9281 = vmatpush1.bf16.msra.mxu0 %v6929
        %9282 = vmatprep.subr.bf16.mxu0 %v7046
        %9283 = vmatpush1.bf16.msra.mxu0 %v7045
        %9284 = vmatprep.subr.bf16.mxu0 %v7062
        %9285 = vmatpush1.bf16.msra.mxu0 %v7061
        %9286 = vmatprep.subr.bf16.mxu0 %v7179
        %9287 = vmatpush1.bf16.msra.mxu0 %v7178
        %9288 = vmatprep.subr.bf16.mxu0 %v7195
        %9289 = vmatpush1.bf16.msra.mxu0 %v7194
        %9290 = vmatprep.mubr.bf16.mxu0 %v9226
        %9291 = vmatmul.mubr.bf16.gmra.mrb[0].mxu0 %v9225
        %v9292 = vpop.f32.mrb[0].mxu0
        %v9293 = vadd.f32 %v9164, %v9292
        %v9294 = vpop.f32.mrb[0].mxu0
        %v9295 = vadd.f32 %v9164, %v9294
        %v9296 = vpop.f32.mrb[0].mxu0
        %v9297 = vadd.f32 %v9169, %v9296
        %v9298 = vpop.f32.mrb[0].mxu0
        %v9299 = vadd.f32 %v9169, %v9298
        %9300 = vmatprep.mubr.bf16.mxu0 %v9233
        %9301 = vmatmul.mubr.bf16.gmra.mrb[0].mxu0 %v9232
        %v9302 = vpop.f32.mrb[0].mxu0
        %v9303 = vadd.f32 %v9174, %v9302
        %v9304 = vpop.f32.mrb[0].mxu0
        %v9305 = vadd.f32 %v9174, %v9304
        %v9306 = vpop.f32.mrb[0].mxu0
        %v9307 = vadd.f32 %v9179, %v9306
        %v9308 = vpop.f32.mrb[0].mxu0
        %v9309 = vadd.f32 %v9179, %v9308
        %9310 = vdwg.mxu0
        %9311 = vmatprep.subr.bf16.mxu0 %v7311
        %9312 = vmatpush1.bf16.msra.mxu0 %v7310
        %9313 = vmatprep.subr.bf16.mxu0 %v7327
        %9314 = vmatpush1.bf16.msra.mxu0 %v7326
        %9315 = vmatprep.subr.bf16.mxu0 %v7444
        %9316 = vmatpush1.bf16.msra.mxu0 %v7443
        %9317 = vmatprep.subr.bf16.mxu0 %v7460
        %9318 = vmatpush1.bf16.msra.mxu0 %v7459
        %9319 = vmatprep.subr.bf16.mxu0 %v6214
        %9320 = vmatpush1.bf16.msra.mxu0 %v6213
        %9321 = vmatprep.subr.bf16.mxu0 %v6230
        %9322 = vmatpush1.bf16.msra.mxu0 %v6229
        %9323 = vmatprep.subr.bf16.mxu0 %v6386
        %9324 = vmatpush1.bf16.msra.mxu0 %v6385
        %9325 = vmatprep.subr.bf16.mxu0 %v6402
        %9326 = vmatpush1.bf16.msra.mxu0 %v6401
        %9327 = vmatprep.subr.bf16.mxu0 %v6518
        %9328 = vmatpush1.bf16.msra.mxu0 %v6517
        %9329 = vmatprep.subr.bf16.mxu0 %v6534
        %9330 = vmatpush1.bf16.msra.mxu0 %v6533
        %9331 = vmatprep.subr.bf16.mxu0 %v6650
        %9332 = vmatpush1.bf16.msra.mxu0 %v6649
        %9333 = vmatprep.subr.bf16.mxu0 %v6666
        %9334 = vmatpush1.bf16.msra.mxu0 %v6665
        %9335 = vmatprep.subr.bf16.mxu0 %v6783
        %9336 = vmatpush1.bf16.msra.mxu0 %v6782
        %9337 = vmatprep.subr.bf16.mxu0 %v6799
        %9338 = vmatpush1.bf16.msra.mxu0 %v6798
        %9339 = vmatprep.subr.bf16.mxu0 %v6915
        %9340 = vmatpush1.bf16.msra.mxu0 %v6914
        %9341 = vmatprep.subr.bf16.mxu0 %v6931
        %9342 = vmatpush1.bf16.msra.mxu0 %v6930
        %9343 = vmatprep.mubr.bf16.mxu0 %v9228
        %9344 = vmatmul.mubr.bf16.gmra.mrb[0].mxu0 %v9227
        %v9345 = vpop.f32.mrb[0].mxu0
        %v9346 = vadd.f32 %v9293, %v9345
        %v9347 = vpop.f32.mrb[0].mxu0
        %v9348 = vadd.f32 %v9295, %v9347
        %v9349 = vpop.f32.mrb[0].mxu0
        %v9350 = vadd.f32 %v9297, %v9349
        %v9351 = vpop.f32.mrb[0].mxu0
        %v9352 = vadd.f32 %v9299, %v9351
        %9353 = vmatprep.mubr.bf16.mxu0 %v9235
        %9354 = vmatmul.mubr.bf16.gmra.mrb[0].mxu0 %v9234
        %v9355 = vpop.f32.mrb[0].mxu0
        %v9356 = vadd.f32 %v9303, %v9355
        %v9357 = vpop.f32.mrb[0].mxu0
        %v9358 = vadd.f32 %v9305, %v9357
        %v9359 = vpop.f32.mrb[0].mxu0
        %v9360 = vadd.f32 %v9307, %v9359
        %v9361 = vpop.f32.mrb[0].mxu0
        %v9362 = vadd.f32 %v9309, %v9361
        %9363 = vdwg.mxu0
        %9364 = vmatprep.subr.bf16.mxu0 %v7047
        %9365 = vmatpush1.bf16.msra.mxu0 %v7046
        %9366 = vmatprep.subr.bf16.mxu0 %v7063
        %9367 = vmatpush1.bf16.msra.mxu0 %v7062
        %9368 = vmatprep.subr.bf16.mxu0 %v8628
        %9369 = vmatpush1.bf16.msra.mxu0 %v8627
        %9370 = vmatprep.subr.bf16.mxu0 %v8644
        %9371 = vmatpush1.bf16.msra.mxu0 %v8643
        %9372 = vmatprep.subr.bf16.mxu0 %v8660
        %9373 = vmatpush1.bf16.msra.mxu0 %v8659
        %9374 = vmatprep.subr.bf16.mxu0 %v8676
        %9375 = vmatpush1.bf16.msra.mxu0 %v8675
        %9376 = vmatprep.subr.bf16.mxu0 %v8692
        %9377 = vmatpush1.bf16.msra.mxu0 %v8691
        %9378 = vmatprep.subr.bf16.mxu0 %v8708
        %9379 = vmatpush1.bf16.msra.mxu0 %v8707
        %9380 = vmatprep.subr.bf16.mxu0 %v8724
        %9381 = vmatpush1.bf16.msra.mxu0 %v8723
        %9382 = vmatprep.subr.bf16.mxu0 %v8740
        %9383 = vmatpush1.bf16.msra.mxu0 %v8739
        %9384 = vmatprep.subr.bf16.mxu0 %v8756
        %9385 = vmatpush1.bf16.msra.mxu0 %v8755
        %9386 = vmatprep.subr.bf16.mxu0 %v8772
        %9387 = vmatpush1.bf16.msra.mxu0 %v8771
        %9388 = vmatprep.subr.bf16.mxu0 %v8788
        %9389 = vmatpush1.bf16.msra.mxu0 %v8787
        %9390 = vmatprep.subr.bf16.mxu0 %v8804
        %9391 = vmatpush1.bf16.msra.mxu0 %v8803
        %9392 = vmatprep.subr.bf16.mxu0 %v8820
        %9393 = vmatpush1.bf16.msra.mxu0 %v8819
        %9394 = vmatprep.subr.bf16.mxu0 %v8836
        %9395 = vmatpush1.bf16.msra.mxu0 %v8835
        %9396 = vmatprep.mubr.bf16.mxu0 %v9230
        %9397 = vmatmul.mubr.bf16.gmra.mrb[0].mxu0 %v9229
        %v9398 = vpop.f32.mrb[0].mxu0
        %v9399 = vadd.f32 %v9346, %v9398
        %v9400 = vpop.f32.mrb[0].mxu0
        %v9401 = vadd.f32 %v9348, %v9400
        %v9402 = vpop.f32.mrb[0].mxu0
        %v9403 = vadd.f32 %v9350, %v9402
        %v9404 = vpop.f32.mrb[0].mxu0
        %v9405 = vadd.f32 %v9352, %v9404
        %9406 = vmatprep.mubr.bf16.mxu0 %v9237
        %9407 = vmatmul.mubr.bf16.gmra.mrb[0].mxu0 %v9236
        %v9408 = vpop.f32.mrb[0].mxu0
        %v9409 = vadd.f32 %v9356, %v9408
        %v9410 = vpop.f32.mrb[0].mxu0
        %v9411 = vadd.f32 %v9358, %v9410
        %v9412 = vpop.f32.mrb[0].mxu0
        %v9413 = vadd.f32 %v9360, %v9412
        %v9414 = vpop.f32.mrb[0].mxu0
        %v9415 = vadd.f32 %v9362, %v9414
        %9416 = vdwg.mxu0
        %9417 = vmatprep.subr.bf16.mxu0 %v8852
        %9418 = vmatpush1.bf16.msra.mxu0 %v8851
        %9419 = vmatprep.subr.bf16.mxu0 %v8868
        %9420 = vmatpush1.bf16.msra.mxu0 %v8867
        %9421 = vmatprep.subr.bf16.mxu0 0
        %9422 = vmatpush1.bf16.msra.mxu0 0
        %9423 = vmatprep.subr.bf16.mxu0 0
        %9424 = vmatpush1.bf16.msra.mxu0 0
        %9425 = vmatprep.subr.bf16.mxu0 0
        %9426 = vmatpush1.bf16.msra.mxu0 0
        %9427 = vmatprep.subr.bf16.mxu0 0
        %9428 = vmatpush1.bf16.msra.mxu0 0
        %9429 = vmatprep.subr.bf16.mxu0 0
        %9430 = vmatpush1.bf16.msra.mxu0 0
        %9431 = vmatprep.subr.bf16.mxu0 0
        %9432 = vmatpush1.bf16.msra.mxu0 0
        %9433 = vmatprep.subr.bf16.mxu0 0
        %9434 = vmatpush1.bf16.msra.mxu0 0
        %9435 = vmatprep.subr.bf16.mxu0 0
        %9436 = vmatpush1.bf16.msra.mxu0 0
        %9437 = vmatprep.subr.bf16.mxu0 0
        %9438 = vmatpush1.bf16.msra.mxu0 0
        %9439 = vmatprep.subr.bf16.mxu0 0
        %9440 = vmatpush1.bf16.msra.mxu0 0
        %9441 = vmatprep.subr.bf16.mxu0 0
        %9442 = vmatpush1.bf16.msra.mxu0 0
        %9443 = vmatprep.subr.bf16.mxu0 0
        %9444 = vmatpush1.bf16.msra.mxu0 0
        %9445 = vmatprep.subr.bf16.mxu0 0
        %9446 = vmatpush1.bf16.msra.mxu0 0
        %9447 = vmatprep.subr.bf16.mxu0 0
        %9448 = vmatpush1.bf16.msra.mxu0 0
        %9449 = vmatprep.mubr.bf16.mxu0 0
        %9450 = vmatmul.mubr.bf16.gmra.mrb[0].mxu0 %v9253
        %v9451 = vpop.f32.mrb[0].mxu0
        %v9452 = vadd.f32 %v9399, %v9451
        %v9453 = vpop.f32.mrb[0].mxu0
        %v9454 = vadd.f32 %v9401, %v9453
        %v9455 = vpop.f32.mrb[0].mxu0
        %v9456 = vadd.f32 %v9403, %v9455
        %v9457 = vpop.f32.mrb[0].mxu0
        %v9458 = vadd.f32 %v9405, %v9457
        %9459 = vmatprep.mubr.bf16.mxu0 0
        %9460 = vmatmul.mubr.bf16.gmra.mrb[0].mxu0 %v9256
        %v9461 = vpop.f32.mrb[0].mxu0
        %v9462 = vadd.f32 %v9409, %v9461
        %v9463 = vpop.f32.mrb[0].mxu0
        %v9464 = vadd.f32 %v9411, %v9463
        %v9465 = vpop.f32.mrb[0].mxu0
        %v9466 = vadd.f32 %v9413, %v9465
        %v9467 = vpop.f32.mrb[0].mxu0
        %v9468 = vadd.f32 %v9415, %v9467
        %9469 = vdwg.mxu0
        %9470 = vmatprep.subr.bf16.mxu0 %v6215
        %9471 = vmatpush1.bf16.msra.mxu0 %v6214
        %9472 = vmatprep.subr.bf16.mxu0 %v6231
        %9473 = vmatpush1.bf16.msra.mxu0 %v6230
        %9474 = vmatprep.subr.bf16.mxu0 %v6387
        %9475 = vmatpush1.bf16.msra.mxu0 %v6386
        %9476 = vmatprep.subr.bf16.mxu0 %v6403
        %9477 = vmatpush1.bf16.msra.mxu0 %v6402
        %9478 = vmatprep.subr.bf16.mxu0 %v6519
        %9479 = vmatpush1.bf16.msra.mxu0 %v6518
        %9480 = vmatprep.subr.bf16.mxu0 %v6535
        %9481 = vmatpush1.bf16.msra.mxu0 %v6534
        %9482 = vmatprep.subr.bf16.mxu0 %v6651
        %9483 = vmatpush1.bf16.msra.mxu0 %v6650
        %9484 = vmatprep.subr.bf16.mxu0 %v6667
        %9485 = vmatpush1.bf16.msra.mxu0 %v6666
        %9486 = vmatprep.subr.bf16.mxu0 %v6784
        %9487 = vmatpush1.bf16.msra.mxu0 %v6783
        %9488 = vmatprep.subr.bf16.mxu0 %v6800
        %9489 = vmatpush1.bf16.msra.mxu0 %v6799
        %9490 = vmatprep.subr.bf16.mxu0 %v6916
        %9491 = vmatpush1.bf16.msra.mxu0 %v6915
        %9492 = vmatprep.subr.bf16.mxu0 %v6932
        %9493 = vmatpush1.bf16.msra.mxu0 %v6931
        %9494 = vmatprep.subr.bf16.mxu0 %v7048
        %9495 = vmatpush1.bf16.msra.mxu0 %v7047
        %9496 = vmatprep.subr.bf16.mxu0 %v7064
        %9497 = vmatpush1.bf16.msra.mxu0 %v7063
        %9498 = vmatprep.subr.bf16.mxu0 %v7181
        %9499 = vmatpush1.bf16.msra.mxu0 %v7180
        %9500 = vmatprep.subr.bf16.mxu0 %v7197
        %9501 = vmatpush1.bf16.msra.mxu0 %v7196
        %9502 = vmatprep.mubr.bf16.mxu0 %v9226
        %9503 = vmatmul.mubr.bf16.gmra.mrb[0].mxu0 %v9225
        %v9504 = vpop.f32.mrb[0].mxu0
        %v9505 = vadd.f32 %v9164, %v9504
        %v9506 = vpop.f32.mrb[0].mxu0
        %v9507 = vadd.f32 %v9164, %v9506
        %v9508 = vpop.f32.mrb[0].mxu0
        %v9509 = vadd.f32 %v9169, %v9508
        %v9510 = vpop.f32.mrb[0].mxu0
        %v9511 = vadd.f32 %v9169, %v9510
        %9512 = vmatprep.mubr.bf16.mxu0 %v9233
        %9513 = vmatmul.mubr.bf16.gmra.mrb[0].mxu0 %v9232
        %v9514 = vpop.f32.mrb[0].mxu0
        %v9515 = vadd.f32 %v9174, %v9514
        %v9516 = vpop.f32.mrb[0].mxu0
        %v9517 = vadd.f32 %v9174, %v9516
        %v9518 = vpop.f32.mrb[0].mxu0
        %v9519 = vadd.f32 %v9179, %v9518
        %v9520 = vpop.f32.mrb[0].mxu0
        %v9521 = vadd.f32 %v9179, %v9520
        %9522 = vdwg.mxu0
        %9523 = vmatprep.subr.bf16.mxu0 %v7313
        %9524 = vmatpush1.bf16.msra.mxu0 %v7312
        %9525 = vmatprep.subr.bf16.mxu0 %v7329
        %9526 = vmatpush1.bf16.msra.mxu0 %v7328
        %9527 = vmatprep.subr.bf16.mxu0 %v7446
        %9528 = vmatpush1.bf16.msra.mxu0 %v7445
        %9529 = vmatprep.subr.bf16.mxu0 %v7462
        %9530 = vmatpush1.bf16.msra.mxu0 %v7461
        %9531 = vmatprep.subr.bf16.mxu0 %v6216
        %9532 = vmatpush1.bf16.msra.mxu0 %v6215
        %9533 = vmatprep.subr.bf16.mxu0 %v6232
        %9534 = vmatpush1.bf16.msra.mxu0 %v6231
        %9535 = vmatprep.subr.bf16.mxu0 %v6388
        %9536 = vmatpush1.bf16.msra.mxu0 %v6387
        %9537 = vmatprep.subr.bf16.mxu0 %v6404
        %9538 = vmatpush1.bf16.msra.mxu0 %v6403
        %9539 = vmatprep.subr.bf16.mxu0 %v6520
        %9540 = vmatpush1.bf16.msra.mxu0 %v6519
        %9541 = vmatprep.subr.bf16.mxu0 %v6536
        %9542 = vmatpush1.bf16.msra.mxu0 %v6535
        %9543 = vmatprep.subr.bf16.mxu0 %v6652
        %9544 = vmatpush1.bf16.msra.mxu0 %v6651
        %9545 = vmatprep.subr.bf16.mxu0 %v6668
        %9546 = vmatpush1.bf16.msra.mxu0 %v6667
        %9547 = vmatprep.subr.bf16.mxu0 %v6785
        %9548 = vmatpush1.bf16.msra.mxu0 %v6784
        %9549 = vmatprep.subr.bf16.mxu0 %v6801
        %9550 = vmatpush1.bf16.msra.mxu0 %v6800
        %9551 = vmatprep.subr.bf16.mxu0 %v6917
        %9552 = vmatpush1.bf16.msra.mxu0 %v6916
        %9553 = vmatprep.subr.bf16.mxu0 %v6933
        %9554 = vmatpush1.bf16.msra.mxu0 %v6932
        %9555 = vmatprep.mubr.bf16.mxu0 %v9228
        %9556 = vmatmul.mubr.bf16.gmra.mrb[0].mxu0 %v9227
        %v9557 = vpop.f32.mrb[0].mxu0
        %v9558 = vadd.f32 %v9505, %v9557
        %v9559 = vpop.f32.mrb[0].mxu0
        %v9560 = vadd.f32 %v9507, %v9559
        %v9561 = vpop.f32.mrb[0].mxu0
        %v9562 = vadd.f32 %v9509, %v9561
        %v9563 = vpop.f32.mrb[0].mxu0
        %v9564 = vadd.f32 %v9511, %v9563
        %9565 = vmatprep.mubr.bf16.mxu0 %v9235
        %9566 = vmatmul.mubr.bf16.gmra.mrb[0].mxu0 %v9234
        %v9567 = vpop.f32.mrb[0].mxu0
        %v9568 = vadd.f32 %v9515, %v9567
        %v9569 = vpop.f32.mrb[0].mxu0
        %v9570 = vadd.f32 %v9517, %v9569
        %v9571 = vpop.f32.mrb[0].mxu0
        %v9572 = vadd.f32 %v9519, %v9571
        %v9573 = vpop.f32.mrb[0].mxu0
        %v9574 = vadd.f32 %v9521, %v9573
        %9575 = vdwg.mxu0
        %9576 = vmatprep.subr.bf16.mxu0 %v7049
        %9577 = vmatpush1.bf16.msra.mxu0 %v7048
        %9578 = vmatprep.subr.bf16.mxu0 %v7065
        %9579 = vmatpush1.bf16.msra.mxu0 %v7064
        %9580 = vmatprep.subr.bf16.mxu0 %v8630
        %9581 = vmatpush1.bf16.msra.mxu0 %v8629
        %9582 = vmatprep.subr.bf16.mxu0 %v8646
        %9583 = vmatpush1.bf16.msra.mxu0 %v8645
        %9584 = vmatprep.subr.bf16.mxu0 %v8662
        %9585 = vmatpush1.bf16.msra.mxu0 %v8661
        %9586 = vmatprep.subr.bf16.mxu0 %v8678
        %9587 = vmatpush1.bf16.msra.mxu0 %v8677
        %9588 = vmatprep.subr.bf16.mxu0 %v8694
        %9589 = vmatpush1.bf16.msra.mxu0 %v8693
        %9590 = vmatprep.subr.bf16.mxu0 %v8710
        %9591 = vmatpush1.bf16.msra.mxu0 %v8709
        %9592 = vmatprep.subr.bf16.mxu0 %v8726
        %9593 = vmatpush1.bf16.msra.mxu0 %v8725
        %9594 = vmatprep.subr.bf16.mxu0 %v8742
        %9595 = vmatpush1.bf16.msra.mxu0 %v8741
        %9596 = vmatprep.subr.bf16.mxu0 %v8758
        %9597 = vmatpush1.bf16.msra.mxu0 %v8757
        %9598 = vmatprep.subr.bf16.mxu0 %v8774
        %9599 = vmatpush1.bf16.msra.mxu0 %v8773
        %9600 = vmatprep.subr.bf16.mxu0 %v8790
        %9601 = vmatpush1.bf16.msra.mxu0 %v8789
        %9602 = vmatprep.subr.bf16.mxu0 %v8806
        %9603 = vmatpush1.bf16.msra.mxu0 %v8805
        %9604 = vmatprep.subr.bf16.mxu0 %v8822
        %9605 = vmatpush1.bf16.msra.mxu0 %v8821
        %9606 = vmatprep.subr.bf16.mxu0 %v8838
        %9607 = vmatpush1.bf16.msra.mxu0 %v8837
        %9608 = vmatprep.mubr.bf16.mxu0 %v9230
        %9609 = vmatmul.mubr.bf16.gmra.mrb[0].mxu0 %v9229
        %v9610 = vpop.f32.mrb[0].mxu0
        %v9611 = vadd.f32 %v9558, %v9610
        %v9612 = vpop.f32.mrb[0].mxu0
        %v9613 = vadd.f32 %v9560, %v9612
        %v9614 = vpop.f32.mrb[0].mxu0
        %v9615 = vadd.f32 %v9562, %v9614
        %v9616 = vpop.f32.mrb[0].mxu0
        %v9617 = vadd.f32 %v9564, %v9616
        %9618 = vmatprep.mubr.bf16.mxu0 %v9237
        %9619 = vmatmul.mubr.bf16.gmra.mrb[0].mxu0 %v9236
        %v9620 = vpop.f32.mrb[0].mxu0
        %v9621 = vadd.f32 %v9568, %v9620
        %v9622 = vpop.f32.mrb[0].mxu0
        %v9623 = vadd.f32 %v9570, %v9622
        %v9624 = vpop.f32.mrb[0].mxu0
        %v9625 = vadd.f32 %v9572, %v9624
        %v9626 = vpop.f32.mrb[0].mxu0
        %v9627 = vadd.f32 %v9574, %v9626
        %9628 = vdwg.mxu0
        %9629 = vmatprep.subr.bf16.mxu0 %v8854
        %9630 = vmatpush1.bf16.msra.mxu0 %v8853
        %9631 = vmatprep.subr.bf16.mxu0 %v8870
        %9632 = vmatpush1.bf16.msra.mxu0 %v8869
        %9633 = vmatprep.subr.bf16.mxu0 0
        %9634 = vmatpush1.bf16.msra.mxu0 0
        %9635 = vmatprep.subr.bf16.mxu0 0
        %9636 = vmatpush1.bf16.msra.mxu0 0
        %9637 = vmatprep.subr.bf16.mxu0 0
        %9638 = vmatpush1.bf16.msra.mxu0 0
        %9639 = vmatprep.subr.bf16.mxu0 0
        %9640 = vmatpush1.bf16.msra.mxu0 0
        %9641 = vmatprep.subr.bf16.mxu0 0
        %9642 = vmatpush1.bf16.msra.mxu0 0
        %9643 = vmatprep.subr.bf16.mxu0 0
        %9644 = vmatpush1.bf16.msra.mxu0 0
        %9645 = vmatprep.subr.bf16.mxu0 0
        %9646 = vmatpush1.bf16.msra.mxu0 0
        %9647 = vmatprep.subr.bf16.mxu0 0
        %9648 = vmatpush1.bf16.msra.mxu0 0
        %9649 = vmatprep.subr.bf16.mxu0 0
        %9650 = vmatpush1.bf16.msra.mxu0 0
        %9651 = vmatprep.subr.bf16.mxu0 0
        %9652 = vmatpush1.bf16.msra.mxu0 0
        %9653 = vmatprep.subr.bf16.mxu0 0
        %9654 = vmatpush1.bf16.msra.mxu0 0
        %9655 = vmatprep.subr.bf16.mxu0 0
        %9656 = vmatpush1.bf16.msra.mxu0 0
        %9657 = vmatprep.subr.bf16.mxu0 0
        %9658 = vmatpush1.bf16.msra.mxu0 0
        %9659 = vmatprep.subr.bf16.mxu0 0
        %9660 = vmatpush1.bf16.msra.mxu0 0
        %9661 = vmatprep.mubr.bf16.mxu0 0
        %9662 = vmatmul.mubr.bf16.gmra.mrb[0].mxu0 %v9253
        %v9663 = vpop.f32.mrb[0].mxu0
        %v9664 = vadd.f32 %v9611, %v9663
        %v9665 = vpop.f32.mrb[0].mxu0
        %v9666 = vadd.f32 %v9613, %v9665
        %v9667 = vpop.f32.mrb[0].mxu0
        %v9668 = vadd.f32 %v9615, %v9667
        %v9669 = vpop.f32.mrb[0].mxu0
        %v9670 = vadd.f32 %v9617, %v9669
        %9671 = vmatprep.mubr.bf16.mxu0 0
        %9672 = vmatmul.mubr.bf16.gmra.mrb[0].mxu0 %v9256
        %v9673 = vpop.f32.mrb[0].mxu0
        %v9674 = vadd.f32 %v9621, %v9673
        %v9675 = vpop.f32.mrb[0].mxu0
        %v9676 = vadd.f32 %v9623, %v9675
        %v9677 = vpop.f32.mrb[0].mxu0
        %v9678 = vadd.f32 %v9625, %v9677
        %v9679 = vpop.f32.mrb[0].mxu0
        %v9680 = vadd.f32 %v9627, %v9679
        %9681 = vdwg.mxu0
        %9682 = vmatprep.subr.bf16.mxu0 %v6217
        %9683 = vmatpush1.bf16.msra.mxu0 %v6216
        %9684 = vmatprep.subr.bf16.mxu0 %v6233
        %9685 = vmatpush1.bf16.msra.mxu0 %v6232
        %9686 = vmatprep.subr.bf16.mxu0 %v6389
        %9687 = vmatpush1.bf16.msra.mxu0 %v6388
        %9688 = vmatprep.subr.bf16.mxu0 %v6405
        %9689 = vmatpush1.bf16.msra.mxu0 %v6404
        %9690 = vmatprep.subr.bf16.mxu0 %v6521
        %9691 = vmatpush1.bf16.msra.mxu0 %v6520
        %9692 = vmatprep.subr.bf16.mxu0 %v6537
        %9693 = vmatpush1.bf16.msra.mxu0 %v6536
        %9694 = vmatprep.subr.bf16.mxu0 %v6653
        %9695 = vmatpush1.bf16.msra.mxu0 %v6652
        %9696 = vmatprep.subr.bf16.mxu0 %v6669
        %9697 = vmatpush1.bf16.msra.mxu0 %v6668
        %9698 = vmatprep.subr.bf16.mxu0 %v6786
        %9699 = vmatpush1.bf16.msra.mxu0 %v6785
        %9700 = vmatprep.subr.bf16.mxu0 %v6802
        %9701 = vmatpush1.bf16.msra.mxu0 %v6801
        %9702 = vmatprep.subr.bf16.mxu0 %v6918
        %9703 = vmatpush1.bf16.msra.mxu0 %v6917
        %9704 = vmatprep.subr.bf16.mxu0 %v6934
        %9705 = vmatpush1.bf16.msra.mxu0 %v6933
        %9706 = vmatprep.subr.bf16.mxu0 %v7050
        %9707 = vmatpush1.bf16.msra.mxu0 %v7049
        %9708 = vmatprep.subr.bf16.mxu0 %v7066
        %9709 = vmatpush1.bf16.msra.mxu0 %v7065
        %9710 = vmatprep.subr.bf16.mxu0 %v7183
        %9711 = vmatpush1.bf16.msra.mxu0 %v7182
        %9712 = vmatprep.subr.bf16.mxu0 %v7199
        %9713 = vmatpush1.bf16.msra.mxu0 %v7198
        %9714 = vmatprep.mubr.bf16.mxu0 %v9226
        %9715 = vmatmul.mubr.bf16.gmra.mrb[0].mxu0 %v9225
        %v9716 = vpop.f32.mrb[0].mxu0
        %v9717 = vadd.f32 %v9164, %v9716
        %v9718 = vpop.f32.mrb[0].mxu0
        %v9719 = vadd.f32 %v9164, %v9718
        %v9720 = vpop.f32.mrb[0].mxu0
        %v9721 = vadd.f32 %v9169, %v9720
        %v9722 = vpop.f32.mrb[0].mxu0
        %v9723 = vadd.f32 %v9169, %v9722
        %9724 = vmatprep.mubr.bf16.mxu0 %v9233
        %9725 = vmatmul.mubr.bf16.gmra.mrb[0].mxu0 %v9232
        %v9726 = vpop.f32.mrb[0].mxu0
        %v9727 = vadd.f32 %v9174, %v9726
        %v9728 = vpop.f32.mrb[0].mxu0
        %v9729 = vadd.f32 %v9174, %v9728
        %v9730 = vpop.f32.mrb[0].mxu0
        %v9731 = vadd.f32 %v9179, %v9730
        %v9732 = vpop.f32.mrb[0].mxu0
        %v9733 = vadd.f32 %v9179, %v9732
        %9734 = vdwg.mxu0
        %9735 = vmatprep.subr.bf16.mxu0 %v7315
        %9736 = vmatpush1.bf16.msra.mxu0 %v7314
        %9737 = vmatprep.subr.bf16.mxu0 %v7331
        %9738 = vmatpush1.bf16.msra.mxu0 %v7330
        %9739 = vmatprep.subr.bf16.mxu0 %v7448
        %9740 = vmatpush1.bf16.msra.mxu0 %v7447
        %9741 = vmatprep.subr.bf16.mxu0 %v7464
        %9742 = vmatpush1.bf16.msra.mxu0 %v7463
        %9743 = vmatprep.subr.bf16.mxu0 %v6218
        %9744 = vmatpush1.bf16.msra.mxu0 %v6217
        %9745 = vmatprep.subr.bf16.mxu0 %v6234
        %9746 = vmatpush1.bf16.msra.mxu0 %v6233
        %9747 = vmatprep.subr.bf16.mxu0 %v6390
        %9748 = vmatpush1.bf16.msra.mxu0 %v6389
        %9749 = vmatprep.subr.bf16.mxu0 %v6406
        %9750 = vmatpush1.bf16.msra.mxu0 %v6405
        %9751 = vmatprep.subr.bf16.mxu0 %v6522
        %9752 = vmatpush1.bf16.msra.mxu0 %v6521
        %9753 = vmatprep.subr.bf16.mxu0 %v6538
        %9754 = vmatpush1.bf16.msra.mxu0 %v6537
        %9755 = vmatprep.subr.bf16.mxu0 %v6654
        %9756 = vmatpush1.bf16.msra.mxu0 %v6653
        %9757 = vmatprep.subr.bf16.mxu0 %v6670
        %9758 = vmatpush1.bf16.msra.mxu0 %v6669
        %9759 = vmatprep.subr.bf16.mxu0 %v6787
        %9760 = vmatpush1.bf16.msra.mxu0 %v6786
        %9761 = vmatprep.subr.bf16.mxu0 %v6803
        %9762 = vmatpush1.bf16.msra.mxu0 %v6802
        %9763 = vmatprep.subr.bf16.mxu0 %v6919
        %9764 = vmatpush1.bf16.msra.mxu0 %v6918
        %9765 = vmatprep.subr.bf16.mxu0 %v6935
        %9766 = vmatpush1.bf16.msra.mxu0 %v6934
        %9767 = vmatprep.mubr.bf16.mxu0 %v9228
        %9768 = vmatmul.mubr.bf16.gmra.mrb[0].mxu0 %v9227
        %v9769 = vpop.f32.mrb[0].mxu0
        %v9770 = vadd.f32 %v9717, %v9769
        %v9771 = vpop.f32.mrb[0].mxu0
        %v9772 = vadd.f32 %v9719, %v9771
        %v9773 = vpop.f32.mrb[0].mxu0
        %v9774 = vadd.f32 %v9721, %v9773
        %v9775 = vpop.f32.mrb[0].mxu0
        %v9776 = vadd.f32 %v9723, %v9775
        %9777 = vmatprep.mubr.bf16.mxu0 %v9235
        %9778 = vmatmul.mubr.bf16.gmra.mrb[0].mxu0 %v9234
        %v9779 = vpop.f32.mrb[0].mxu0
        %v9780 = vadd.f32 %v9727, %v9779
        %v9781 = vpop.f32.mrb[0].mxu0
        %v9782 = vadd.f32 %v9729, %v9781
        %v9783 = vpop.f32.mrb[0].mxu0
        %v9784 = vadd.f32 %v9731, %v9783
        %v9785 = vpop.f32.mrb[0].mxu0
        %v9786 = vadd.f32 %v9733, %v9785
        %9787 = vdwg.mxu0
        %9788 = vmatprep.subr.bf16.mxu0 %v7051
        %9789 = vmatpush1.bf16.msra.mxu0 %v7050
        %9790 = vmatprep.subr.bf16.mxu0 %v7067
        %9791 = vmatpush1.bf16.msra.mxu0 %v7066
        %9792 = vmatprep.subr.bf16.mxu0 %v8632
        %9793 = vmatpush1.bf16.msra.mxu0 %v8631
        %9794 = vmatprep.subr.bf16.mxu0 %v8648
        %9795 = vmatpush1.bf16.msra.mxu0 %v8647
        %9796 = vmatprep.subr.bf16.mxu0 %v8664
        %9797 = vmatpush1.bf16.msra.mxu0 %v8663
        %9798 = vmatprep.subr.bf16.mxu0 %v8680
        %9799 = vmatpush1.bf16.msra.mxu0 %v8679
        %9800 = vmatprep.subr.bf16.mxu0 %v8696
        %9801 = vmatpush1.bf16.msra.mxu0 %v8695
        %9802 = vmatprep.subr.bf16.mxu0 %v8712
        %9803 = vmatpush1.bf16.msra.mxu0 %v8711
        %9804 = vmatprep.subr.bf16.mxu0 %v8728
        %9805 = vmatpush1.bf16.msra.mxu0 %v8727
        %9806 = vmatprep.subr.bf16.mxu0 %v8744
        %9807 = vmatpush1.bf16.msra.mxu0 %v8743
        %9808 = vmatprep.subr.bf16.mxu0 %v8760
        %9809 = vmatpush1.bf16.msra.mxu0 %v8759
        %9810 = vmatprep.subr.bf16.mxu0 %v8776
        %9811 = vmatpush1.bf16.msra.mxu0 %v8775
        %9812 = vmatprep.subr.bf16.mxu0 %v8792
        %9813 = vmatpush1.bf16.msra.mxu0 %v8791
        %9814 = vmatprep.subr.bf16.mxu0 %v8808
        %9815 = vmatpush1.bf16.msra.mxu0 %v8807
        %9816 = vmatprep.subr.bf16.mxu0 %v8824
        %9817 = vmatpush1.bf16.msra.mxu0 %v8823
        %9818 = vmatprep.subr.bf16.mxu0 %v8840
        %9819 = vmatpush1.bf16.msra.mxu0 %v8839
        %9820 = vmatprep.mubr.bf16.mxu0 %v9230
        %9821 = vmatmul.mubr.bf16.gmra.mrb[0].mxu0 %v9229
        %v9822 = vpop.f32.mrb[0].mxu0
        %v9823 = vadd.f32 %v9770, %v9822
        %v9824 = vpop.f32.mrb[0].mxu0
        %v9825 = vadd.f32 %v9772, %v9824
        %v9826 = vpop.f32.mrb[0].mxu0
        %v9827 = vadd.f32 %v9774, %v9826
        %v9828 = vpop.f32.mrb[0].mxu0
        %v9829 = vadd.f32 %v9776, %v9828
        %9830 = vmatprep.mubr.bf16.mxu0 %v9237
        %9831 = vmatmul.mubr.bf16.gmra.mrb[0].mxu0 %v9236
        %v9832 = vpop.f32.mrb[0].mxu0
        %v9833 = vadd.f32 %v9780, %v9832
        %v9834 = vpop.f32.mrb[0].mxu0
        %v9835 = vadd.f32 %v9782, %v9834
        %v9836 = vpop.f32.mrb[0].mxu0
        %v9837 = vadd.f32 %v9784, %v9836
        %v9838 = vpop.f32.mrb[0].mxu0
        %v9839 = vadd.f32 %v9786, %v9838
        %9840 = vdwg.mxu0
        %9841 = vmatprep.subr.bf16.mxu0 %v8856
        %9842 = vmatpush1.bf16.msra.mxu0 %v8855
        %9843 = vmatprep.subr.bf16.mxu0 %v8872
        %9844 = vmatpush1.bf16.msra.mxu0 %v8871
        %9845 = vmatprep.subr.bf16.mxu0 0
        %9846 = vmatpush1.bf16.msra.mxu0 0
        %9847 = vmatprep.subr.bf16.mxu0 0
        %9848 = vmatpush1.bf16.msra.mxu0 0
        %9849 = vmatprep.subr.bf16.mxu0 0
        %9850 = vmatpush1.bf16.msra.mxu0 0
        %9851 = vmatprep.subr.bf16.mxu0 0
        %9852 = vmatpush1.bf16.msra.mxu0 0
        %9853 = vmatprep.subr.bf16.mxu0 0
        %9854 = vmatpush1.bf16.msra.mxu0 0
        %9855 = vmatprep.subr.bf16.mxu0 0
        %9856 = vmatpush1.bf16.msra.mxu0 0
        %9857 = vmatprep.subr.bf16.mxu0 0
        %9858 = vmatpush1.bf16.msra.mxu0 0
        %9859 = vmatprep.subr.bf16.mxu0 0
        %9860 = vmatpush1.bf16.msra.mxu0 0
        %9861 = vmatprep.subr.bf16.mxu0 0
        %9862 = vmatpush1.bf16.msra.mxu0 0
        %9863 = vmatprep.subr.bf16.mxu0 0
        %9864 = vmatpush1.bf16.msra.mxu0 0
        %9865 = vmatprep.subr.bf16.mxu0 0
        %9866 = vmatpush1.bf16.msra.mxu0 0
        %9867 = vmatprep.subr.bf16.mxu0 0
        %9868 = vmatpush1.bf16.msra.mxu0 0
        %9869 = vmatprep.subr.bf16.mxu0 0
        %9870 = vmatpush1.bf16.msra.mxu0 0
        %9871 = vmatprep.subr.bf16.mxu0 0
        %9872 = vmatpush1.bf16.msra.mxu0 0
        %9873 = vmatprep.mubr.bf16.mxu0 0
        %9874 = vmatmul.mubr.bf16.gmra.mrb[0].mxu0 %v9253
        %v9875 = vpop.f32.mrb[0].mxu0
        %v9876 = vadd.f32 %v9823, %v9875
        %v9877 = vpop.f32.mrb[0].mxu0
        %v9878 = vadd.f32 %v9825, %v9877
        %v9879 = vpop.f32.mrb[0].mxu0
        %v9880 = vadd.f32 %v9827, %v9879
        %v9881 = vpop.f32.mrb[0].mxu0
        %v9882 = vadd.f32 %v9829, %v9881
        %9883 = vmatprep.mubr.bf16.mxu0 0
        %9884 = vmatmul.mubr.bf16.gmra.mrb[0].mxu0 %v9256
        %v9885 = vpop.f32.mrb[0].mxu0
        %v9886 = vadd.f32 %v9833, %v9885
        %v9887 = vpop.f32.mrb[0].mxu0
        %v9888 = vadd.f32 %v9835, %v9887
        %v9889 = vpop.f32.mrb[0].mxu0
        %v9890 = vadd.f32 %v9837, %v9889
        %v9891 = vpop.f32.mrb[0].mxu0
        %v9892 = vadd.f32 %v9839, %v9891
        %9893 = vdwg.mxu0
        %9894 = vmatprep.subr.bf16.mxu0 %v6219
        %9895 = vmatpush1.bf16.msra.mxu0 %v6218
        %9896 = vmatprep.subr.bf16.mxu0 %v6235
        %9897 = vmatpush1.bf16.msra.mxu0 %v6234
        %9898 = vmatprep.subr.bf16.mxu0 %v6391
        %9899 = vmatpush1.bf16.msra.mxu0 %v6390
        %9900 = vmatprep.subr.bf16.mxu0 %v6407
        %9901 = vmatpush1.bf16.msra.mxu0 %v6406
        %9902 = vmatprep.subr.bf16.mxu0 %v6523
        %9903 = vmatpush1.bf16.msra.mxu0 %v6522
        %9904 = vmatprep.subr.bf16.mxu0 %v6539
        %9905 = vmatpush1.bf16.msra.mxu0 %v6538
        %9906 = vmatprep.subr.bf16.mxu0 %v6655
        %9907 = vmatpush1.bf16.msra.mxu0 %v6654
        %9908 = vmatprep.subr.bf16.mxu0 %v6671
        %9909 = vmatpush1.bf16.msra.mxu0 %v6670
        %9910 = vmatprep.subr.bf16.mxu0 %v6788
        %9911 = vmatpush1.bf16.msra.mxu0 %v6787
        %9912 = vmatprep.subr.bf16.mxu0 %v6804
        %9913 = vmatpush1.bf16.msra.mxu0 %v6803
        %9914 = vmatprep.subr.bf16.mxu0 %v6920
        %9915 = vmatpush1.bf16.msra.mxu0 %v6919
        %9916 = vmatprep.subr.bf16.mxu0 %v6936
        %9917 = vmatpush1.bf16.msra.mxu0 %v6935
        %9918 = vmatprep.subr.bf16.mxu0 %v7052
        %9919 = vmatpush1.bf16.msra.mxu0 %v7051
        %9920 = vmatprep.subr.bf16.mxu0 %v7068
        %9921 = vmatpush1.bf16.msra.mxu0 %v7067
        %9922 = vmatprep.subr.bf16.mxu0 %v7185
        %9923 = vmatpush1.bf16.msra.mxu0 %v7184
        %9924 = vmatprep.subr.bf16.mxu0 %v7201
        %9925 = vmatpush1.bf16.msra.mxu0 %v7200
        %9926 = vmatprep.mubr.bf16.mxu0 %v9226
        %9927 = vmatmul.mubr.bf16.gmra.mrb[0].mxu0 %v9225
        %v9928 = vpop.f32.mrb[0].mxu0
        %v9929 = vadd.f32 %v9164, %v9928
        %v9930 = vpop.f32.mrb[0].mxu0
        %v9931 = vadd.f32 %v9164, %v9930
        %v9932 = vpop.f32.mrb[0].mxu0
        %v9933 = vadd.f32 %v9169, %v9932
        %v9934 = vpop.f32.mrb[0].mxu0
        %v9935 = vadd.f32 %v9169, %v9934
        %9936 = vmatprep.mubr.bf16.mxu0 %v9233
        %9937 = vmatmul.mubr.bf16.gmra.mrb[0].mxu0 %v9232
        %v9938 = vpop.f32.mrb[0].mxu0
        %v9939 = vadd.f32 %v9174, %v9938
        %v9940 = vpop.f32.mrb[0].mxu0
        %v9941 = vadd.f32 %v9174, %v9940
        %v9942 = vpop.f32.mrb[0].mxu0
        %v9943 = vadd.f32 %v9179, %v9942
        %v9944 = vpop.f32.mrb[0].mxu0
        %v9945 = vadd.f32 %v9179, %v9944
        %9946 = vdwg.mxu0
        %9947 = vmatprep.subr.bf16.mxu0 %v7317
        %9948 = vmatpush1.bf16.msra.mxu0 %v7316
        %9949 = vmatprep.subr.bf16.mxu0 %v7333
        %9950 = vmatpush1.bf16.msra.mxu0 %v7332
        %9951 = vmatprep.subr.bf16.mxu0 %v7450
        %9952 = vmatpush1.bf16.msra.mxu0 %v7449
        %9953 = vmatprep.subr.bf16.mxu0 %v7466
        %9954 = vmatpush1.bf16.msra.mxu0 %v7465
        %9955 = vmatprep.subr.bf16.mxu0 %v6220
        %9956 = vmatpush1.bf16.msra.mxu0 %v6219
        %9957 = vmatprep.subr.bf16.mxu0 %v6236
        %9958 = vmatpush1.bf16.msra.mxu0 %v6235
        %9959 = vmatprep.subr.bf16.mxu0 %v6392
        %9960 = vmatpush1.bf16.msra.mxu0 %v6391
        %9961 = vmatprep.subr.bf16.mxu0 %v6408
        %9962 = vmatpush1.bf16.msra.mxu0 %v6407
        %9963 = vmatprep.subr.bf16.mxu0 %v6524
        %9964 = vmatpush1.bf16.msra.mxu0 %v6523
        %9965 = vmatprep.subr.bf16.mxu0 %v6540
        %9966 = vmatpush1.bf16.msra.mxu0 %v6539
        %9967 = vmatprep.subr.bf16.mxu0 %v6656
        %9968 = vmatpush1.bf16.msra.mxu0 %v6655
        %9969 = vmatprep.subr.bf16.mxu0 %v6672
        %9970 = vmatpush1.bf16.msra.mxu0 %v6671
        %9971 = vmatprep.subr.bf16.mxu0 %v6789
        %9972 = vmatpush1.bf16.msra.mxu0 %v6788
        %9973 = vmatprep.subr.bf16.mxu0 %v6805
        %9974 = vmatpush1.bf16.msra.mxu0 %v6804
        %9975 = vmatprep.subr.bf16.mxu0 %v6921
        %9976 = vmatpush1.bf16.msra.mxu0 %v6920
        %9977 = vmatprep.subr.bf16.mxu0 %v6937
        %9978 = vmatpush1.bf16.msra.mxu0 %v6936
        %9979 = vmatprep.mubr.bf16.mxu0 %v9228
        %9980 = vmatmul.mubr.bf16.gmra.mrb[0].mxu0 %v9227
        %v9981 = vpop.f32.mrb[0].mxu0
        %v9982 = vadd.f32 %v9929, %v9981
        %v9983 = vpop.f32.mrb[0].mxu0
        %v9984 = vadd.f32 %v9931, %v9983
        %v9985 = vpop.f32.mrb[0].mxu0
        %v9986 = vadd.f32 %v9933, %v9985
        %v9987 = vpop.f32.mrb[0].mxu0
        %v9988 = vadd.f32 %v9935, %v9987
        %9989 = vmatprep.mubr.bf16.mxu0 %v9235
        %9990 = vmatmul.mubr.bf16.gmra.mrb[0].mxu0 %v9234
        %v9991 = vpop.f32.mrb[0].mxu0
        %v9992 = vadd.f32 %v9939, %v9991
        %v9993 = vpop.f32.mrb[0].mxu0
        %v9994 = vadd.f32 %v9941, %v9993
        %v9995 = vpop.f32.mrb[0].mxu0
        %v9996 = vadd.f32 %v9943, %v9995
        %v9997 = vpop.f32.mrb[0].mxu0
        %v9998 = vadd.f32 %v9945, %v9997
        %9999 = vdwg.mxu0
        %10000 = vmatprep.subr.bf16.mxu0 %v7053
        %10001 = vmatpush1.bf16.msra.mxu0 %v7052
        %10002 = vmatprep.subr.bf16.mxu0 %v7069
        %10003 = vmatpush1.bf16.msra.mxu0 %v7068
        %10004 = vmatprep.subr.bf16.mxu0 %v8634
        %10005 = vmatpush1.bf16.msra.mxu0 %v8633
        %10006 = vmatprep.subr.bf16.mxu0 %v8650
        %10007 = vmatpush1.bf16.msra.mxu0 %v8649
        %10008 = vmatprep.subr.bf16.mxu0 %v8666
        %10009 = vmatpush1.bf16.msra.mxu0 %v8665
        %10010 = vmatprep.subr.bf16.mxu0 %v8682
        %10011 = vmatpush1.bf16.msra.mxu0 %v8681
        %10012 = vmatprep.subr.bf16.mxu0 %v8698
        %10013 = vmatpush1.bf16.msra.mxu0 %v8697
        %10014 = vmatprep.subr.bf16.mxu0 %v8714
        %10015 = vmatpush1.bf16.msra.mxu0 %v8713
        %10016 = vmatprep.subr.bf16.mxu0 %v8730
        %10017 = vmatpush1.bf16.msra.mxu0 %v8729
        %10018 = vmatprep.subr.bf16.mxu0 %v8746
        %10019 = vmatpush1.bf16.msra.mxu0 %v8745
        %10020 = vmatprep.subr.bf16.mxu0 %v8762
        %10021 = vmatpush1.bf16.msra.mxu0 %v8761
        %10022 = vmatprep.subr.bf16.mxu0 %v8778
        %10023 = vmatpush1.bf16.msra.mxu0 %v8777
        %10024 = vmatprep.subr.bf16.mxu0 %v8794
        %10025 = vmatpush1.bf16.msra.mxu0 %v8793
        %10026 = vmatprep.subr.bf16.mxu0 %v8810
        %10027 = vmatpush1.bf16.msra.mxu0 %v8809
        %10028 = vmatprep.subr.bf16.mxu0 %v8826
        %10029 = vmatpush1.bf16.msra.mxu0 %v8825
        %10030 = vmatprep.subr.bf16.mxu0 %v8842
        %10031 = vmatpush1.bf16.msra.mxu0 %v8841
        %10032 = vmatprep.mubr.bf16.mxu0 %v9230
        %10033 = vmatmul.mubr.bf16.gmra.mrb[0].mxu0 %v9229
        %v10034 = vpop.f32.mrb[0].mxu0
        %v10035 = vadd.f32 %v9982, %v10034
        %v10036 = vpop.f32.mrb[0].mxu0
        %v10037 = vadd.f32 %v9984, %v10036
        %v10038 = vpop.f32.mrb[0].mxu0
        %v10039 = vadd.f32 %v9986, %v10038
        %v10040 = vpop.f32.mrb[0].mxu0
        %v10041 = vadd.f32 %v9988, %v10040
        %10042 = vmatprep.mubr.bf16.mxu0 %v9237
        %10043 = vmatmul.mubr.bf16.gmra.mrb[0].mxu0 %v9236
        %v10044 = vpop.f32.mrb[0].mxu0
        %v10045 = vadd.f32 %v9992, %v10044
        %v10046 = vpop.f32.mrb[0].mxu0
        %v10047 = vadd.f32 %v9994, %v10046
        %v10048 = vpop.f32.mrb[0].mxu0
        %v10049 = vadd.f32 %v9996, %v10048
        %v10050 = vpop.f32.mrb[0].mxu0
        %v10051 = vadd.f32 %v9998, %v10050
        %10052 = vdwg.mxu0
        %10053 = vmatprep.subr.bf16.mxu0 %v8858
        %10054 = vmatpush1.bf16.msra.mxu0 %v8857
        %10055 = vmatprep.subr.bf16.mxu0 %v8874
        %10056 = vmatpush1.bf16.msra.mxu0 %v8873
        %10057 = vmatprep.subr.bf16.mxu0 0
        %10058 = vmatpush1.bf16.msra.mxu0 0
        %10059 = vmatprep.subr.bf16.mxu0 0
        %10060 = vmatpush1.bf16.msra.mxu0 0
        %10061 = vmatprep.subr.bf16.mxu0 0
        %10062 = vmatpush1.bf16.msra.mxu0 0
        %10063 = vmatprep.subr.bf16.mxu0 0
        %10064 = vmatpush1.bf16.msra.mxu0 0
        %10065 = vmatprep.subr.bf16.mxu0 0
        %10066 = vmatpush1.bf16.msra.mxu0 0
        %10067 = vmatprep.subr.bf16.mxu0 0
        %10068 = vmatpush1.bf16.msra.mxu0 0
        %10069 = vmatprep.subr.bf16.mxu0 0
        %10070 = vmatpush1.bf16.msra.mxu0 0
        %10071 = vmatprep.subr.bf16.mxu0 0
        %10072 = vmatpush1.bf16.msra.mxu0 0
        %10073 = vmatprep.subr.bf16.mxu0 0
        %10074 = vmatpush1.bf16.msra.mxu0 0
        %10075 = vmatprep.subr.bf16.mxu0 0
        %10076 = vmatpush1.bf16.msra.mxu0 0
        %10077 = vmatprep.subr.bf16.mxu0 0
        %10078 = vmatpush1.bf16.msra.mxu0 0
        %10079 = vmatprep.subr.bf16.mxu0 0
        %10080 = vmatpush1.bf16.msra.mxu0 0
        %10081 = vmatprep.subr.bf16.mxu0 0
        %10082 = vmatpush1.bf16.msra.mxu0 0
        %10083 = vmatprep.subr.bf16.mxu0 0
        %10084 = vmatpush1.bf16.msra.mxu0 0
        %10085 = vmatprep.mubr.bf16.mxu0 0
        %10086 = vmatmul.mubr.bf16.gmra.mrb[0].mxu0 %v9253
        %v10087 = vpop.f32.mrb[0].mxu0
        %v10088 = vadd.f32 %v10035, %v10087
        %v10089 = vpop.f32.mrb[0].mxu0
        %v10090 = vadd.f32 %v10037, %v10089
        %v10091 = vpop.f32.mrb[0].mxu0
        %v10092 = vadd.f32 %v10039, %v10091
        %v10093 = vpop.f32.mrb[0].mxu0
        %v10094 = vadd.f32 %v10041, %v10093
        %10095 = vmatprep.mubr.bf16.mxu0 0
        %10096 = vmatmul.mubr.bf16.gmra.mrb[0].mxu0 %v9256
        %v10097 = vpop.f32.mrb[0].mxu0
        %v10098 = vadd.f32 %v10045, %v10097
        %v10099 = vpop.f32.mrb[0].mxu0
        %v10100 = vadd.f32 %v10047, %v10099
        %v10101 = vpop.f32.mrb[0].mxu0
        %v10102 = vadd.f32 %v10049, %v10101
        %v10103 = vpop.f32.mrb[0].mxu0
        %v10104 = vadd.f32 %v10051, %v10103
        %10105 = vdwg.mxu0
        %10106 = vmatprep.subr.bf16.mxu0 %v6221
        %10107 = vmatpush1.bf16.msra.mxu0 %v6220
        %10108 = vmatprep.subr.bf16.mxu0 %v6237
        %10109 = vmatpush1.bf16.msra.mxu0 %v6236
        %10110 = vmatprep.subr.bf16.mxu0 %v6393
        %10111 = vmatpush1.bf16.msra.mxu0 %v6392
        %10112 = vmatprep.subr.bf16.mxu0 %v6409
        %10113 = vmatpush1.bf16.msra.mxu0 %v6408
        %10114 = vmatprep.subr.bf16.mxu0 %v6525
        %10115 = vmatpush1.bf16.msra.mxu0 %v6524
        %10116 = vmatprep.subr.bf16.mxu0 %v6541
        %10117 = vmatpush1.bf16.msra.mxu0 %v6540
        %10118 = vmatprep.subr.bf16.mxu0 %v6657
        %10119 = vmatpush1.bf16.msra.mxu0 %v6656
        %10120 = vmatprep.subr.bf16.mxu0 %v6673
        %10121 = vmatpush1.bf16.msra.mxu0 %v6672
        %10122 = vmatprep.subr.bf16.mxu0 %v6790
        %10123 = vmatpush1.bf16.msra.mxu0 %v6789
        %10124 = vmatprep.subr.bf16.mxu0 %v6806
        %10125 = vmatpush1.bf16.msra.mxu0 %v6805
        %10126 = vmatprep.subr.bf16.mxu0 %v6922
        %10127 = vmatpush1.bf16.msra.mxu0 %v6921
        %10128 = vmatprep.subr.bf16.mxu0 %v6938
        %10129 = vmatpush1.bf16.msra.mxu0 %v6937
        %10130 = vmatprep.subr.bf16.mxu0 %v7054
        %10131 = vmatpush1.bf16.msra.mxu0 %v7053
        %10132 = vmatprep.subr.bf16.mxu0 %v7070
        %10133 = vmatpush1.bf16.msra.mxu0 %v7069
        %10134 = vmatprep.subr.bf16.mxu0 %v7187
        %10135 = vmatpush1.bf16.msra.mxu0 %v7186
        %10136 = vmatprep.subr.bf16.mxu0 %v7203
        %10137 = vmatpush1.bf16.msra.mxu0 %v7202
        %10138 = vmatprep.mubr.bf16.mxu0 %v9226
        %10139 = vmatmul.mubr.bf16.gmra.mrb[0].mxu0 %v9225
        %v10140 = vpop.f32.mrb[0].mxu0
        %v10141 = vadd.f32 %v9164, %v10140
        %v10142 = vpop.f32.mrb[0].mxu0
        %v10143 = vadd.f32 %v9164, %v10142
        %v10144 = vpop.f32.mrb[0].mxu0
        %v10145 = vadd.f32 %v9169, %v10144
        %v10146 = vpop.f32.mrb[0].mxu0
        %v10147 = vadd.f32 %v9169, %v10146
        %10148 = vmatprep.mubr.bf16.mxu0 %v9233
        %10149 = vmatmul.mubr.bf16.gmra.mrb[0].mxu0 %v9232
        %v10150 = vpop.f32.mrb[0].mxu0
        %v10151 = vadd.f32 %v9174, %v10150
        %v10152 = vpop.f32.mrb[0].mxu0
        %v10153 = vadd.f32 %v9174, %v10152
        %v10154 = vpop.f32.mrb[0].mxu0
        %v10155 = vadd.f32 %v9179, %v10154
        %v10156 = vpop.f32.mrb[0].mxu0
        %v10157 = vadd.f32 %v9179, %v10156
        %10158 = vdwg.mxu0
        %10159 = vmatprep.subr.bf16.mxu0 %v7319
        %10160 = vmatpush1.bf16.msra.mxu0 %v7318
        %10161 = vmatprep.subr.bf16.mxu0 %v7335
        %10162 = vmatpush1.bf16.msra.mxu0 %v7334
        %10163 = vmatprep.subr.bf16.mxu0 %v7452
        %10164 = vmatpush1.bf16.msra.mxu0 %v7451
        %10165 = vmatprep.subr.bf16.mxu0 %v7468
        %10166 = vmatpush1.bf16.msra.mxu0 %v7467
        %10167 = vmatprep.subr.bf16.mxu0 %v6222
        %10168 = vmatpush1.bf16.msra.mxu0 %v6221
        %10169 = vmatprep.subr.bf16.mxu0 %v6238
        %10170 = vmatpush1.bf16.msra.mxu0 %v6237
        %10171 = vmatprep.subr.bf16.mxu0 %v6394
        %10172 = vmatpush1.bf16.msra.mxu0 %v6393
        %10173 = vmatprep.subr.bf16.mxu0 %v6410
        %10174 = vmatpush1.bf16.msra.mxu0 %v6409
        %10175 = vmatprep.subr.bf16.mxu0 %v6526
        %10176 = vmatpush1.bf16.msra.mxu0 %v6525
        %10177 = vmatprep.subr.bf16.mxu0 %v6542
        %10178 = vmatpush1.bf16.msra.mxu0 %v6541
        %10179 = vmatprep.subr.bf16.mxu0 %v6658
        %10180 = vmatpush1.bf16.msra.mxu0 %v6657
        %10181 = vmatprep.subr.bf16.mxu0 %v6674
        %10182 = vmatpush1.bf16.msra.mxu0 %v6673
        %10183 = vmatprep.subr.bf16.mxu0 %v6791
        %10184 = vmatpush1.bf16.msra.mxu0 %v6790
        %10185 = vmatprep.subr.bf16.mxu0 %v6807
        %10186 = vmatpush1.bf16.msra.mxu0 %v6806
        %10187 = vmatprep.subr.bf16.mxu0 %v6923
        %10188 = vmatpush1.bf16.msra.mxu0 %v6922
        %10189 = vmatprep.subr.bf16.mxu0 %v6939
        %10190 = vmatpush1.bf16.msra.mxu0 %v6938
        %10191 = vmatprep.mubr.bf16.mxu0 %v9228
        %10192 = vmatmul.mubr.bf16.gmra.mrb[0].mxu0 %v9227
        %v10193 = vpop.f32.mrb[0].mxu0
        %v10194 = vadd.f32 %v10141, %v10193
        %v10195 = vpop.f32.mrb[0].mxu0
        %v10196 = vadd.f32 %v10143, %v10195
        %v10197 = vpop.f32.mrb[0].mxu0
        %v10198 = vadd.f32 %v10145, %v10197
        %v10199 = vpop.f32.mrb[0].mxu0
        %v10200 = vadd.f32 %v10147, %v10199
        %10201 = vmatprep.mubr.bf16.mxu0 %v9235
        %10202 = vmatmul.mubr.bf16.gmra.mrb[0].mxu0 %v9234
        %v10203 = vpop.f32.mrb[0].mxu0
        %v10204 = vadd.f32 %v10151, %v10203
        %v10205 = vpop.f32.mrb[0].mxu0
        %v10206 = vadd.f32 %v10153, %v10205
        %v10207 = vpop.f32.mrb[0].mxu0
        %v10208 = vadd.f32 %v10155, %v10207
        %v10209 = vpop.f32.mrb[0].mxu0
        %v10210 = vadd.f32 %v10157, %v10209
        %10211 = vdwg.mxu0
        %10212 = vmatprep.subr.bf16.mxu0 %v7055
        %10213 = vmatpush1.bf16.msra.mxu0 %v7054
        %10214 = vmatprep.subr.bf16.mxu0 %v7071
        %10215 = vmatpush1.bf16.msra.mxu0 %v7070
        %10216 = vmatprep.subr.bf16.mxu0 %v8636
        %10217 = vmatpush1.bf16.msra.mxu0 %v8635
        %10218 = vmatprep.subr.bf16.mxu0 %v8652
        %10219 = vmatpush1.bf16.msra.mxu0 %v8651
        %10220 = vmatprep.subr.bf16.mxu0 %v8668
        %10221 = vmatpush1.bf16.msra.mxu0 %v8667
        %10222 = vmatprep.subr.bf16.mxu0 %v8684
        %10223 = vmatpush1.bf16.msra.mxu0 %v8683
        %10224 = vmatprep.subr.bf16.mxu0 %v8700
        %10225 = vmatpush1.bf16.msra.mxu0 %v8699
        %10226 = vmatprep.subr.bf16.mxu0 %v8716
        %10227 = vmatpush1.bf16.msra.mxu0 %v8715
        %10228 = vmatprep.subr.bf16.mxu0 %v8732
        %10229 = vmatpush1.bf16.msra.mxu0 %v8731
        %10230 = vmatprep.subr.bf16.mxu0 %v8748
        %10231 = vmatpush1.bf16.msra.mxu0 %v8747
        %10232 = vmatprep.subr.bf16.mxu0 %v8764
        %10233 = vmatpush1.bf16.msra.mxu0 %v8763
        %10234 = vmatprep.subr.bf16.mxu0 %v8780
        %10235 = vmatpush1.bf16.msra.mxu0 %v8779
        %10236 = vmatprep.subr.bf16.mxu0 %v8796
        %10237 = vmatpush1.bf16.msra.mxu0 %v8795
        %10238 = vmatprep.subr.bf16.mxu0 %v8812
        %10239 = vmatpush1.bf16.msra.mxu0 %v8811
        %10240 = vmatprep.subr.bf16.mxu0 %v8828
        %10241 = vmatpush1.bf16.msra.mxu0 %v8827
        %10242 = vmatprep.subr.bf16.mxu0 %v8844
        %10243 = vmatpush1.bf16.msra.mxu0 %v8843
        %10244 = vmatprep.mubr.bf16.mxu0 %v9230
        %10245 = vmatmul.mubr.bf16.gmra.mrb[0].mxu0 %v9229
        %v10246 = vpop.f32.mrb[0].mxu0
        %v10247 = vadd.f32 %v10194, %v10246
        %v10248 = vpop.f32.mrb[0].mxu0
        %v10249 = vadd.f32 %v10196, %v10248
        %v10250 = vpop.f32.mrb[0].mxu0
        %v10251 = vadd.f32 %v10198, %v10250
        %v10252 = vpop.f32.mrb[0].mxu0
        %v10253 = vadd.f32 %v10200, %v10252
        %10254 = vmatprep.mubr.bf16.mxu0 %v9237
        %10255 = vmatmul.mubr.bf16.gmra.mrb[0].mxu0 %v9236
        %v10256 = vpop.f32.mrb[0].mxu0
        %v10257 = vadd.f32 %v10204, %v10256
        %v10258 = vpop.f32.mrb[0].mxu0
        %v10259 = vadd.f32 %v10206, %v10258
        %v10260 = vpop.f32.mrb[0].mxu0
        %v10261 = vadd.f32 %v10208, %v10260
        %v10262 = vpop.f32.mrb[0].mxu0
        %v10263 = vadd.f32 %v10210, %v10262
        %10264 = vdwg.mxu0
        %10265 = vmatprep.subr.bf16.mxu0 %v8860
        %10266 = vmatpush1.bf16.msra.mxu0 %v8859
        %10267 = vmatprep.subr.bf16.mxu0 %v8876
        %10268 = vmatpush1.bf16.msra.mxu0 %v8875
        %10269 = vmatprep.subr.bf16.mxu0 0
        %10270 = vmatpush1.bf16.msra.mxu0 0
        %10271 = vmatprep.subr.bf16.mxu0 0
        %10272 = vmatpush1.bf16.msra.mxu0 0
        %10273 = vmatprep.subr.bf16.mxu0 0
        %10274 = vmatpush1.bf16.msra.mxu0 0
        %10275 = vmatprep.subr.bf16.mxu0 0
        %10276 = vmatpush1.bf16.msra.mxu0 0
        %10277 = vmatprep.subr.bf16.mxu0 0
        %10278 = vmatpush1.bf16.msra.mxu0 0
        %10279 = vmatprep.subr.bf16.mxu0 0
        %10280 = vmatpush1.bf16.msra.mxu0 0
        %10281 = vmatprep.subr.bf16.mxu0 0
        %10282 = vmatpush1.bf16.msra.mxu0 0
        %10283 = vmatprep.subr.bf16.mxu0 0
        %10284 = vmatpush1.bf16.msra.mxu0 0
        %10285 = vmatprep.subr.bf16.mxu0 0
        %10286 = vmatpush1.bf16.msra.mxu0 0
        %10287 = vmatprep.subr.bf16.mxu0 0
        %10288 = vmatpush1.bf16.msra.mxu0 0
        %10289 = vmatprep.subr.bf16.mxu0 0
        %10290 = vmatpush1.bf16.msra.mxu0 0
        %10291 = vmatprep.subr.bf16.mxu0 0
        %10292 = vmatpush1.bf16.msra.mxu0 0
        %10293 = vmatprep.subr.bf16.mxu0 0
        %10294 = vmatpush1.bf16.msra.mxu0 0
        %10295 = vmatprep.subr.bf16.mxu0 0
        %10296 = vmatpush1.bf16.msra.mxu0 0
        %10297 = vmatprep.mubr.bf16.mxu0 0
        %10298 = vmatmul.mubr.bf16.gmra.mrb[0].mxu0 %v9253
        %v10299 = vpop.f32.mrb[0].mxu0
        %v10300 = vadd.f32 %v10247, %v10299
        %v10301 = vpop.f32.mrb[0].mxu0
        %v10302 = vadd.f32 %v10249, %v10301
        %v10303 = vpop.f32.mrb[0].mxu0
        %v10304 = vadd.f32 %v10251, %v10303
        %v10305 = vpop.f32.mrb[0].mxu0
        %v10306 = vadd.f32 %v10253, %v10305
        %10307 = vmatprep.mubr.bf16.mxu0 0
        %10308 = vmatmul.mubr.bf16.gmra.mrb[0].mxu0 %v9256
        %v10309 = vpop.f32.mrb[0].mxu0
        %v10310 = vadd.f32 %v10257, %v10309
        %v10311 = vpop.f32.mrb[0].mxu0
        %v10312 = vadd.f32 %v10259, %v10311
        %v10313 = vpop.f32.mrb[0].mxu0
        %v10314 = vadd.f32 %v10261, %v10313
        %v10315 = vpop.f32.mrb[0].mxu0
        %v10316 = vadd.f32 %v10263, %v10315
        %10317 = vdwg.mxu0
        %10318 = vmatprep.subr.bf16.mxu0 %v6223
        %10319 = vmatpush1.bf16.msra.mxu0 %v6222
        %10320 = vmatprep.subr.bf16.mxu0 %v6239
        %10321 = vmatpush1.bf16.msra.mxu0 %v6238
        %10322 = vmatprep.subr.bf16.mxu0 %v6395
        %10323 = vmatpush1.bf16.msra.mxu0 %v6394
        %10324 = vmatprep.subr.bf16.mxu0 %v6411
        %10325 = vmatpush1.bf16.msra.mxu0 %v6410
        %10326 = vmatprep.subr.bf16.mxu0 %v6527
        %10327 = vmatpush1.bf16.msra.mxu0 %v6526
        %10328 = vmatprep.subr.bf16.mxu0 %v6543
        %10329 = vmatpush1.bf16.msra.mxu0 %v6542
        %10330 = vmatprep.subr.bf16.mxu0 %v6659
        %10331 = vmatpush1.bf16.msra.mxu0 %v6658
        %10332 = vmatprep.subr.bf16.mxu0 %v6675
        %10333 = vmatpush1.bf16.msra.mxu0 %v6674
        %10334 = vmatprep.subr.bf16.mxu0 %v6792
        %10335 = vmatpush1.bf16.msra.mxu0 %v6791
        %10336 = vmatprep.subr.bf16.mxu0 %v6808
        %10337 = vmatpush1.bf16.msra.mxu0 %v6807
        %10338 = vmatprep.subr.bf16.mxu0 %v6924
        %10339 = vmatpush1.bf16.msra.mxu0 %v6923
        %10340 = vmatprep.subr.bf16.mxu0 %v6940
        %10341 = vmatpush1.bf16.msra.mxu0 %v6939
        %10342 = vmatprep.subr.bf16.mxu0 %v7056
        %10343 = vmatpush1.bf16.msra.mxu0 %v7055
        %10344 = vmatprep.subr.bf16.mxu0 %v7072
        %10345 = vmatpush1.bf16.msra.mxu0 %v7071
        %10346 = vmatprep.subr.bf16.mxu0 %v7189
        %10347 = vmatpush1.bf16.msra.mxu0 %v7188
        %10348 = vmatprep.subr.bf16.mxu0 %v7205
        %10349 = vmatpush1.bf16.msra.mxu0 %v7204
        %10350 = vmatprep.mubr.bf16.mxu0 %v9226
        %10351 = vmatmul.mubr.bf16.gmra.mrb[0].mxu0 %v9225
        %v10352 = vpop.f32.mrb[0].mxu0
        %v10353 = vadd.f32 %v9164, %v10352
        %v10354 = vpop.f32.mrb[0].mxu0
        %v10355 = vadd.f32 %v9164, %v10354
        %v10356 = vpop.f32.mrb[0].mxu0
        %v10357 = vadd.f32 %v9169, %v10356
        %v10358 = vpop.f32.mrb[0].mxu0
        %v10359 = vadd.f32 %v9169, %v10358
        %10360 = vmatprep.mubr.bf16.mxu0 %v9233
        %10361 = vmatmul.mubr.bf16.gmra.mrb[0].mxu0 %v9232
        %v10362 = vpop.f32.mrb[0].mxu0
        %v10363 = vadd.f32 %v9174, %v10362
        %v10364 = vpop.f32.mrb[0].mxu0
        %v10365 = vadd.f32 %v9174, %v10364
        %v10366 = vpop.f32.mrb[0].mxu0
        %v10367 = vadd.f32 %v9179, %v10366
        %v10368 = vpop.f32.mrb[0].mxu0
        %v10369 = vadd.f32 %v9179, %v10368
        %10370 = vdwg.mxu0
        %10371 = vmatprep.subr.bf16.mxu0 %v7321
        %10372 = vmatpush1.bf16.msra.mxu0 %v7320
        %10373 = vmatprep.subr.bf16.mxu0 %v7337
        %10374 = vmatpush1.bf16.msra.mxu0 %v7336
        %10375 = vmatprep.subr.bf16.mxu0 %v7454
        %10376 = vmatpush1.bf16.msra.mxu0 %v7453
        %10377 = vmatprep.subr.bf16.mxu0 %v7470
        %10378 = vmatpush1.bf16.msra.mxu0 %v7469
        %10379 = vmatprep.subr.bf16.mxu0 %v6224
        %10380 = vmatpush1.bf16.msra.mxu0 %v6223
        %10381 = vmatprep.subr.bf16.mxu0 %v6240
        %10382 = vmatpush1.bf16.msra.mxu0 %v6239
        %10383 = vmatprep.subr.bf16.mxu0 %v6396
        %10384 = vmatpush1.bf16.msra.mxu0 %v6395
        %10385 = vmatprep.subr.bf16.mxu0 %v6412
        %10386 = vmatpush1.bf16.msra.mxu0 %v6411
        %10387 = vmatprep.subr.bf16.mxu0 %v6528
        %10388 = vmatpush1.bf16.msra.mxu0 %v6527
        %10389 = vmatprep.subr.bf16.mxu0 %v6544
        %10390 = vmatpush1.bf16.msra.mxu0 %v6543
        %10391 = vmatprep.subr.bf16.mxu0 %v6660
        %10392 = vmatpush1.bf16.msra.mxu0 %v6659
        %10393 = vmatprep.subr.bf16.mxu0 %v6676
        %10394 = vmatpush1.bf16.msra.mxu0 %v6675
        %10395 = vmatprep.subr.bf16.mxu0 %v6793
        %10396 = vmatpush1.bf16.msra.mxu0 %v6792
        %10397 = vmatprep.subr.bf16.mxu0 %v6809
        %10398 = vmatpush1.bf16.msra.mxu0 %v6808
        %10399 = vmatprep.subr.bf16.mxu0 %v6925
        %10400 = vmatpush1.bf16.msra.mxu0 %v6924
        %10401 = vmatprep.subr.bf16.mxu0 %v6941
        %10402 = vmatpush1.bf16.msra.mxu0 %v6940
        %10403 = vmatprep.mubr.bf16.mxu0 %v9228
        %10404 = vmatmul.mubr.bf16.gmra.mrb[0].mxu0 %v9227
        %v10405 = vpop.f32.mrb[0].mxu0
        %v10406 = vadd.f32 %v10353, %v10405
        %v10407 = vpop.f32.mrb[0].mxu0
        %v10408 = vadd.f32 %v10355, %v10407
        %v10409 = vpop.f32.mrb[0].mxu0
        %v10410 = vadd.f32 %v10357, %v10409
        %v10411 = vpop.f32.mrb[0].mxu0
        %v10412 = vadd.f32 %v10359, %v10411
        %10413 = vmatprep.mubr.bf16.mxu0 %v9235
        %10414 = vmatmul.mubr.bf16.gmra.mrb[0].mxu0 %v9234
        %v10415 = vpop.f32.mrb[0].mxu0
        %v10416 = vadd.f32 %v10363, %v10415
        %v10417 = vpop.f32.mrb[0].mxu0
        %v10418 = vadd.f32 %v10365, %v10417
        %v10419 = vpop.f32.mrb[0].mxu0
        %v10420 = vadd.f32 %v10367, %v10419
        %v10421 = vpop.f32.mrb[0].mxu0
        %v10422 = vadd.f32 %v10369, %v10421
        %10423 = vdwg.mxu0
        %10424 = vmatprep.subr.bf16.mxu0 %v7057
        %10425 = vmatpush1.bf16.msra.mxu0 %v7056
        %10426 = vmatprep.subr.bf16.mxu0 %v7073
        %10427 = vmatpush1.bf16.msra.mxu0 %v7072
        %10428 = vmatprep.subr.bf16.mxu0 %v8638
        %10429 = vmatpush1.bf16.msra.mxu0 %v8637
        %10430 = vmatprep.subr.bf16.mxu0 %v8654
        %10431 = vmatpush1.bf16.msra.mxu0 %v8653
        %10432 = vmatprep.subr.bf16.mxu0 %v8670
        %10433 = vmatpush1.bf16.msra.mxu0 %v8669
        %10434 = vmatprep.subr.bf16.mxu0 %v8686
        %10435 = vmatpush1.bf16.msra.mxu0 %v8685
        %10436 = vmatprep.subr.bf16.mxu0 %v8702
        %10437 = vmatpush1.bf16.msra.mxu0 %v8701
        %10438 = vmatprep.subr.bf16.mxu0 %v8718
        %10439 = vmatpush1.bf16.msra.mxu0 %v8717
        %10440 = vmatprep.subr.bf16.mxu0 %v8734
        %10441 = vmatpush1.bf16.msra.mxu0 %v8733
        %10442 = vmatprep.subr.bf16.mxu0 %v8750
        %10443 = vmatpush1.bf16.msra.mxu0 %v8749
        %10444 = vmatprep.subr.bf16.mxu0 %v8766
        %10445 = vmatpush1.bf16.msra.mxu0 %v8765
        %10446 = vmatprep.subr.bf16.mxu0 %v8782
        %10447 = vmatpush1.bf16.msra.mxu0 %v8781
        %10448 = vmatprep.subr.bf16.mxu0 %v8798
        %10449 = vmatpush1.bf16.msra.mxu0 %v8797
        %10450 = vmatprep.subr.bf16.mxu0 %v8814
        %10451 = vmatpush1.bf16.msra.mxu0 %v8813
        %10452 = vmatprep.subr.bf16.mxu0 %v8830
        %10453 = vmatpush1.bf16.msra.mxu0 %v8829
        %10454 = vmatprep.subr.bf16.mxu0 %v8846
        %10455 = vmatpush1.bf16.msra.mxu0 %v8845
        %10456 = vmatprep.mubr.bf16.mxu0 %v9230
        %10457 = vmatmul.mubr.bf16.gmra.mrb[0].mxu0 %v9229
        %v10458 = vpop.f32.mrb[0].mxu0
        %v10459 = vadd.f32 %v10406, %v10458
        %v10460 = vpop.f32.mrb[0].mxu0
        %v10461 = vadd.f32 %v10408, %v10460
        %v10462 = vpop.f32.mrb[0].mxu0
        %v10463 = vadd.f32 %v10410, %v10462
        %v10464 = vpop.f32.mrb[0].mxu0
        %v10465 = vadd.f32 %v10412, %v10464
        %10466 = vmatprep.mubr.bf16.mxu0 %v9237
        %10467 = vmatmul.mubr.bf16.gmra.mrb[0].mxu0 %v9236
        %v10468 = vpop.f32.mrb[0].mxu0
        %v10469 = vadd.f32 %v10416, %v10468
        %v10470 = vpop.f32.mrb[0].mxu0
        %v10471 = vadd.f32 %v10418, %v10470
        %v10472 = vpop.f32.mrb[0].mxu0
        %v10473 = vadd.f32 %v10420, %v10472
        %v10474 = vpop.f32.mrb[0].mxu0
        %v10475 = vadd.f32 %v10422, %v10474
        %10476 = vdwg.mxu0
        %10477 = vmatprep.subr.bf16.mxu0 %v8862
        %10478 = vmatpush1.bf16.msra.mxu0 %v8861
        %10479 = vmatprep.subr.bf16.mxu0 %v8878
        %10480 = vmatpush1.bf16.msra.mxu0 %v8877
        %10481 = vmatprep.subr.bf16.mxu0 0
        %10482 = vmatpush1.bf16.msra.mxu0 0
        %10483 = vmatprep.subr.bf16.mxu0 0
        %10484 = vmatpush1.bf16.msra.mxu0 0
        %10485 = vmatprep.subr.bf16.mxu0 0
        %10486 = vmatpush1.bf16.msra.mxu0 0
        %10487 = vmatprep.subr.bf16.mxu0 0
        %10488 = vmatpush1.bf16.msra.mxu0 0
        %10489 = vmatprep.subr.bf16.mxu0 0
        %10490 = vmatpush1.bf16.msra.mxu0 0
        %10491 = vmatprep.subr.bf16.mxu0 0
        %10492 = vmatpush1.bf16.msra.mxu0 0
        %10493 = vmatprep.subr.bf16.mxu0 0
        %10494 = vmatpush1.bf16.msra.mxu0 0
        %10495 = vmatprep.subr.bf16.mxu0 0
        %10496 = vmatpush1.bf16.msra.mxu0 0
        %10497 = vmatprep.subr.bf16.mxu0 0
        %10498 = vmatpush1.bf16.msra.mxu0 0
        %10499 = vmatprep.subr.bf16.mxu0 0
        %10500 = vmatpush1.bf16.msra.mxu0 0
        %10501 = vmatprep.subr.bf16.mxu0 0
        %10502 = vmatpush1.bf16.msra.mxu0 0
        %10503 = vmatprep.subr.bf16.mxu0 0
        %10504 = vmatpush1.bf16.msra.mxu0 0
        %10505 = vmatprep.subr.bf16.mxu0 0
        %10506 = vmatpush1.bf16.msra.mxu0 0
        %10507 = vmatprep.subr.bf16.mxu0 0
        %10508 = vmatpush1.bf16.msra.mxu0 0
        %10509 = vmatprep.mubr.bf16.mxu0 0
        %10510 = vmatmul.mubr.bf16.gmra.mrb[0].mxu0 %v9253
        %v10511 = vpop.f32.mrb[0].mxu0
        %v10512 = vadd.f32 %v10459, %v10511
        %v10513 = vpop.f32.mrb[0].mxu0
        %v10514 = vadd.f32 %v10461, %v10513
        %v10515 = vpop.f32.mrb[0].mxu0
        %v10516 = vadd.f32 %v10463, %v10515
        %v10517 = vpop.f32.mrb[0].mxu0
        %v10518 = vadd.f32 %v10465, %v10517
        %10519 = vmatprep.mubr.bf16.mxu0 0
        %10520 = vmatmul.mubr.bf16.gmra.mrb[0].mxu0 %v9256
        %v10521 = vpop.f32.mrb[0].mxu0
        %v10522 = vadd.f32 %v10469, %v10521
        %v10523 = vpop.f32.mrb[0].mxu0
        %v10524 = vadd.f32 %v10471, %v10523
        %v10525 = vpop.f32.mrb[0].mxu0
        %v10526 = vadd.f32 %v10473, %v10525
        %v10527 = vpop.f32.mrb[0].mxu0
        %v10528 = vadd.f32 %v10475, %v10527
        %10529 = vdwg.mxu0
        %10530 = vmatprep.subr.bf16.mxu0 %v6225
        %10531 = vmatpush1.bf16.msra.mxu0 %v6224
        %10532 = vmatprep.subr.bf16.mxu0 %v6241
        %10533 = vmatpush1.bf16.msra.mxu0 %v6240
        %10534 = vmatprep.subr.bf16.mxu0 %v6397
        %10535 = vmatpush1.bf16.msra.mxu0 %v6396
        %10536 = vmatprep.subr.bf16.mxu0 %v6413
        %10537 = vmatpush1.bf16.msra.mxu0 %v6412
        %10538 = vmatprep.subr.bf16.mxu0 %v6529
        %10539 = vmatpush1.bf16.msra.mxu0 %v6528
        %10540 = vmatprep.subr.bf16.mxu0 %v6545
        %10541 = vmatpush1.bf16.msra.mxu0 %v6544
        %10542 = vmatprep.subr.bf16.mxu0 %v6661
        %10543 = vmatpush1.bf16.msra.mxu0 %v6660
        %10544 = vmatprep.subr.bf16.mxu0 %v6677
        %10545 = vmatpush1.bf16.msra.mxu0 %v6676
        %10546 = vmatprep.subr.bf16.mxu0 %v6794
        %10547 = vmatpush1.bf16.msra.mxu0 %v6793
        %10548 = vmatprep.subr.bf16.mxu0 %v6810
        %10549 = vmatpush1.bf16.msra.mxu0 %v6809
        %10550 = vmatprep.subr.bf16.mxu0 %v6926
        %10551 = vmatpush1.bf16.msra.mxu0 %v6925
        %10552 = vmatprep.subr.bf16.mxu0 %v6942
        %10553 = vmatpush1.bf16.msra.mxu0 %v6941
        %10554 = vmatprep.subr.bf16.mxu0 %v7058
        %10555 = vmatpush1.bf16.msra.mxu0 %v7057
        %10556 = vmatprep.subr.bf16.mxu0 %v7074
        %10557 = vmatpush1.bf16.msra.mxu0 %v7073
        %10558 = vmatprep.subr.bf16.mxu0 %v7191
        %10559 = vmatpush1.bf16.msra.mxu0 %v7190
        %10560 = vmatprep.subr.bf16.mxu0 %v7207
        %10561 = vmatpush1.bf16.msra.mxu0 %v7206
        %10562 = vmatprep.mubr.bf16.mxu0 %v9226
        %10563 = vmatmul.mubr.bf16.gmra.mrb[0].mxu0 %v9225
        %v10564 = vpop.f32.mrb[0].mxu0
        %v10565 = vadd.f32 %v9164, %v10564
        %v10566 = vpop.f32.mrb[0].mxu0
        %v10567 = vadd.f32 %v9164, %v10566
        %v10568 = vpop.f32.mrb[0].mxu0
        %v10569 = vadd.f32 %v9169, %v10568
        %v10570 = vpop.f32.mrb[0].mxu0
        %v10571 = vadd.f32 %v9169, %v10570
        %10572 = vmatprep.mubr.bf16.mxu0 %v9233
        %10573 = vmatmul.mubr.bf16.gmra.mrb[0].mxu0 %v9232
        %v10574 = vpop.f32.mrb[0].mxu0
        %v10575 = vadd.f32 %v9174, %v10574
        %v10576 = vpop.f32.mrb[0].mxu0
        %v10577 = vadd.f32 %v9174, %v10576
        %v10578 = vpop.f32.mrb[0].mxu0
        %v10579 = vadd.f32 %v9179, %v10578
        %v10580 = vpop.f32.mrb[0].mxu0
        %v10581 = vadd.f32 %v9179, %v10580
        %10582 = vdwg.mxu0
        %10583 = vmatprep.subr.bf16.mxu0 %v7323
        %10584 = vmatpush1.bf16.msra.mxu0 %v7322
        %10585 = vmatprep.subr.bf16.mxu0 %v7339
        %10586 = vmatpush1.bf16.msra.mxu0 %v7338
        %10587 = vmatprep.subr.bf16.mxu0 %v7456
        %10588 = vmatpush1.bf16.msra.mxu0 %v7455
        %10589 = vmatprep.subr.bf16.mxu0 %v7472
        %10590 = vmatpush1.bf16.msra.mxu0 %v7471
        %10591 = vmatprep.subr.bf16.mxu0 %v6226
        %10592 = vmatpush1.bf16.msra.mxu0 %v6225
        %10593 = vmatprep.subr.bf16.mxu0 %v6242
        %10594 = vmatpush1.bf16.msra.mxu0 %v6241
        %10595 = vmatprep.subr.bf16.mxu0 %v6398
        %10596 = vmatpush1.bf16.msra.mxu0 %v6397
        %10597 = vmatprep.subr.bf16.mxu0 %v6414
        %10598 = vmatpush1.bf16.msra.mxu0 %v6413
        %10599 = vmatprep.subr.bf16.mxu0 %v6530
        %10600 = vmatpush1.bf16.msra.mxu0 %v6529
        %10601 = vmatprep.subr.bf16.mxu0 %v6546
        %10602 = vmatpush1.bf16.msra.mxu0 %v6545
        %10603 = vmatprep.subr.bf16.mxu0 %v6662
        %10604 = vmatpush1.bf16.msra.mxu0 %v6661
        %10605 = vmatprep.subr.bf16.mxu0 %v6678
        %10606 = vmatpush1.bf16.msra.mxu0 %v6677
        %10607 = vmatprep.subr.bf16.mxu0 %v6795
        %10608 = vmatpush1.bf16.msra.mxu0 %v6794
        %10609 = vmatprep.subr.bf16.mxu0 %v6811
        %10610 = vmatpush1.bf16.msra.mxu0 %v6810
        %10611 = vmatprep.subr.bf16.mxu0 %v6927
        %10612 = vmatpush1.bf16.msra.mxu0 %v6926
        %10613 = vmatprep.subr.bf16.mxu0 %v6943
        %10614 = vmatpush1.bf16.msra.mxu0 %v6942
        %10615 = vmatprep.mubr.bf16.mxu0 %v9228
        %10616 = vmatmul.mubr.bf16.gmra.mrb[0].mxu0 %v9227
        %v10617 = vpop.f32.mrb[0].mxu0
        %v10618 = vadd.f32 %v10565, %v10617
        %v10619 = vpop.f32.mrb[0].mxu0
        %v10620 = vadd.f32 %v10567, %v10619
        %v10621 = vpop.f32.mrb[0].mxu0
        %v10622 = vadd.f32 %v10569, %v10621
        %v10623 = vpop.f32.mrb[0].mxu0
        %v10624 = vadd.f32 %v10571, %v10623
        %10625 = vmatprep.mubr.bf16.mxu0 %v9235
        %10626 = vmatmul.mubr.bf16.gmra.mrb[0].mxu0 %v9234
        %v10627 = vpop.f32.mrb[0].mxu0
        %v10628 = vadd.f32 %v10575, %v10627
        %v10629 = vpop.f32.mrb[0].mxu0
        %v10630 = vadd.f32 %v10577, %v10629
        %v10631 = vpop.f32.mrb[0].mxu0
        %v10632 = vadd.f32 %v10579, %v10631
        %v10633 = vpop.f32.mrb[0].mxu0
        %v10634 = vadd.f32 %v10581, %v10633
        %10635 = vdwg.mxu0
        %10636 = vmatprep.subr.bf16.mxu0 %v7059
        %10637 = vmatpush1.bf16.msra.mxu0 %v7058
        %10638 = vmatprep.subr.bf16.mxu0 %v7075
        %10639 = vmatpush1.bf16.msra.mxu0 %v7074
        %10640 = vmatprep.subr.bf16.mxu0 %v8640
        %10641 = vmatpush1.bf16.msra.mxu0 %v8639
        %10642 = vmatprep.subr.bf16.mxu0 %v8656
        %10643 = vmatpush1.bf16.msra.mxu0 %v8655
        %10644 = vmatprep.subr.bf16.mxu0 %v8672
        %10645 = vmatpush1.bf16.msra.mxu0 %v8671
        %10646 = vmatprep.subr.bf16.mxu0 %v8688
        %10647 = vmatpush1.bf16.msra.mxu0 %v8687
        %10648 = vmatprep.subr.bf16.mxu0 %v8704
        %10649 = vmatpush1.bf16.msra.mxu0 %v8703
        %10650 = vmatprep.subr.bf16.mxu0 %v8720
        %10651 = vmatpush1.bf16.msra.mxu0 %v8719
        %10652 = vmatprep.subr.bf16.mxu0 %v8736
        %10653 = vmatpush1.bf16.msra.mxu0 %v8735
        %10654 = vmatprep.subr.bf16.mxu0 %v8752
        %10655 = vmatpush1.bf16.msra.mxu0 %v8751
        %10656 = vmatprep.subr.bf16.mxu0 %v8768
        %10657 = vmatpush1.bf16.msra.mxu0 %v8767
        %10658 = vmatprep.subr.bf16.mxu0 %v8784
        %10659 = vmatpush1.bf16.msra.mxu0 %v8783
        %10660 = vmatprep.subr.bf16.mxu0 %v8800
        %10661 = vmatpush1.bf16.msra.mxu0 %v8799
        %10662 = vmatprep.subr.bf16.mxu0 %v8816
        %10663 = vmatpush1.bf16.msra.mxu0 %v8815
        %10664 = vmatprep.subr.bf16.mxu0 %v8832
        %10665 = vmatpush1.bf16.msra.mxu0 %v8831
        %10666 = vmatprep.subr.bf16.mxu0 %v8848
        %10667 = vmatpush1.bf16.msra.mxu0 %v8847
        %10668 = vmatprep.mubr.bf16.mxu0 %v9230
        %10669 = vmatmul.mubr.bf16.gmra.mrb[0].mxu0 %v9229
        %v10670 = vpop.f32.mrb[0].mxu0
        %v10671 = vadd.f32 %v10618, %v10670
        %v10672 = vpop.f32.mrb[0].mxu0
        %v10673 = vadd.f32 %v10620, %v10672
        %v10674 = vpop.f32.mrb[0].mxu0
        %v10675 = vadd.f32 %v10622, %v10674
        %v10676 = vpop.f32.mrb[0].mxu0
        %v10677 = vadd.f32 %v10624, %v10676
        %10678 = vmatprep.mubr.bf16.mxu0 %v9237
        %10679 = vmatmul.mubr.bf16.gmra.mrb[0].mxu0 %v9236
        %v10680 = vpop.f32.mrb[0].mxu0
        %v10681 = vadd.f32 %v10628, %v10680
        %v10682 = vpop.f32.mrb[0].mxu0
        %v10683 = vadd.f32 %v10630, %v10682
        %v10684 = vpop.f32.mrb[0].mxu0
        %v10685 = vadd.f32 %v10632, %v10684
        %v10686 = vpop.f32.mrb[0].mxu0
        %v10687 = vadd.f32 %v10634, %v10686
        %10688 = vdwg.mxu0
        %10689 = vmatprep.subr.bf16.mxu0 %v8864
        %10690 = vmatpush1.bf16.msra.mxu0 %v8863
        %10691 = vmatprep.subr.bf16.mxu0 %v8880
        %10692 = vmatpush1.bf16.msra.mxu0 %v8879
        %10693 = vmatprep.subr.bf16.mxu0 0
        %10694 = vmatpush1.bf16.msra.mxu0 0
        %10695 = vmatprep.subr.bf16.mxu0 0
        %10696 = vmatpush1.bf16.msra.mxu0 0
        %10697 = vmatprep.subr.bf16.mxu0 0
        %10698 = vmatpush1.bf16.msra.mxu0 0
        %10699 = vmatprep.subr.bf16.mxu0 0
        %10700 = vmatpush1.bf16.msra.mxu0 0
        %10701 = vmatprep.subr.bf16.mxu0 0
        %10702 = vmatpush1.bf16.msra.mxu0 0
        %10703 = vmatprep.subr.bf16.mxu0 0
        %10704 = vmatpush1.bf16.msra.mxu0 0
        %10705 = vmatprep.subr.bf16.mxu0 0
        %10706 = vmatpush1.bf16.msra.mxu0 0
        %10707 = vmatprep.subr.bf16.mxu0 0
        %10708 = vmatpush1.bf16.msra.mxu0 0
        %10709 = vmatprep.subr.bf16.mxu0 0
        %10710 = vmatpush1.bf16.msra.mxu0 0
        %10711 = vmatprep.subr.bf16.mxu0 0
        %10712 = vmatpush1.bf16.msra.mxu0 0
        %10713 = vmatprep.subr.bf16.mxu0 0
        %10714 = vmatpush1.bf16.msra.mxu0 0
        %10715 = vmatprep.subr.bf16.mxu0 0
        %10716 = vmatpush1.bf16.msra.mxu0 0
        %10717 = vmatprep.subr.bf16.mxu0 0
        %10718 = vmatpush1.bf16.msra.mxu0 0
        %10719 = vmatprep.subr.bf16.mxu0 0
        %10720 = vmatpush1.bf16.msra.mxu0 0
        %10721 = vmatprep.mubr.bf16.mxu0 0
        %10722 = vmatmul.mubr.bf16.gmra.mrb[0].mxu0 %v9253
        %v10723 = vpop.f32.mrb[0].mxu0
        %v10724 = vadd.f32 %v10671, %v10723
        %v10725 = vpop.f32.mrb[0].mxu0
        %v10726 = vadd.f32 %v10673, %v10725
        %v10727 = vpop.f32.mrb[0].mxu0
        %v10728 = vadd.f32 %v10675, %v10727
        %v10729 = vpop.f32.mrb[0].mxu0
        %v10730 = vadd.f32 %v10677, %v10729
        %10731 = vmatprep.mubr.bf16.mxu0 0
        %10732 = vmatmul.mubr.bf16.gmra.mrb[0].mxu0 %v9256
        %v10733 = vpop.f32.mrb[0].mxu0
        %v10734 = vadd.f32 %v10681, %v10733
        %v10735 = vpop.f32.mrb[0].mxu0
        %v10736 = vadd.f32 %v10683, %v10735
        %v10737 = vpop.f32.mrb[0].mxu0
        %v10738 = vadd.f32 %v10685, %v10737
        %v10739 = vpop.f32.mrb[0].mxu0
        %v10740 = vadd.f32 %v10687, %v10739
        %10741 = vdwg.mxu0
        %10742 = vmatprep.subr.bf16.mxu0 %v6227
        %10743 = vmatpush1.bf16.msra.mxu0 %v6226
        %10744 = vmatprep.subr.bf16.mxu0 %v6243
        %10745 = vmatpush1.bf16.msra.mxu0 %v6242
        %10746 = vmatprep.subr.bf16.mxu0 %v6399
        %10747 = vmatpush1.bf16.msra.mxu0 %v6398
        %10748 = vmatprep.subr.bf16.mxu0 %v6415
        %10749 = vmatpush1.bf16.msra.mxu0 %v6414
        %10750 = vmatprep.subr.bf16.mxu0 %v6531
        %10751 = vmatpush1.bf16.msra.mxu0 %v6530
        %10752 = vmatprep.subr.bf16.mxu0 %v6547
        %10753 = vmatpush1.bf16.msra.mxu0 %v6546
        %10754 = vmatprep.subr.bf16.mxu0 %v6663
        %10755 = vmatpush1.bf16.msra.mxu0 %v6662
        %10756 = vmatprep.subr.bf16.mxu0 %v6679
        %10757 = vmatpush1.bf16.msra.mxu0 %v6678
        %10758 = vmatprep.subr.bf16.mxu0 %v6796
        %10759 = vmatpush1.bf16.msra.mxu0 %v6795
        %10760 = vmatprep.subr.bf16.mxu0 %v6812
        %10761 = vmatpush1.bf16.msra.mxu0 %v6811
        %10762 = vmatprep.subr.bf16.mxu0 %v6928
        %10763 = vmatpush1.bf16.msra.mxu0 %v6927
        %10764 = vmatprep.subr.bf16.mxu0 %v6944
        %10765 = vmatpush1.bf16.msra.mxu0 %v6943
        %10766 = vmatprep.subr.bf16.mxu0 %v7060
        %10767 = vmatpush1.bf16.msra.mxu0 %v7059
        %10768 = vmatprep.subr.bf16.mxu0 %v7076
        %10769 = vmatpush1.bf16.msra.mxu0 %v7075
        %10770 = vmatprep.subr.bf16.mxu0 %v7193
        %10771 = vmatpush1.bf16.msra.mxu0 %v7192
        %10772 = vmatprep.subr.bf16.mxu0 %v7209
        %10773 = vmatpush1.bf16.msra.mxu0 %v7208
        %10774 = vmatprep.mubr.bf16.mxu0 %v9226
        %10775 = vmatmul.mubr.bf16.gmra.mrb[0].mxu0 %v9225
        %v10776 = vpop.f32.mrb[0].mxu0
        %v10777 = vadd.f32 %v9164, %v10776
        %v10778 = vpop.f32.mrb[0].mxu0
        %v10779 = vadd.f32 %v9164, %v10778
        %v10780 = vpop.f32.mrb[0].mxu0
        %v10781 = vadd.f32 %v9169, %v10780
        %v10782 = vpop.f32.mrb[0].mxu0
        %v10783 = vadd.f32 %v9169, %v10782
        %10784 = vmatprep.mubr.bf16.mxu0 %v9233
        %10785 = vmatmul.mubr.bf16.gmra.mrb[0].mxu0 %v9232
        %v10786 = vpop.f32.mrb[0].mxu0
        %v10787 = vadd.f32 %v9174, %v10786
        %v10788 = vpop.f32.mrb[0].mxu0
        %v10789 = vadd.f32 %v9174, %v10788
        %v10790 = vpop.f32.mrb[0].mxu0
        %v10791 = vadd.f32 %v9179, %v10790
        %v10792 = vpop.f32.mrb[0].mxu0
        %v10793 = vadd.f32 %v9179, %v10792
        %10794 = vdwg.mxu0
        %10795 = vmatprep.subr.bf16.mxu0 %v7325
        %10796 = vmatpush1.bf16.msra.mxu0 %v7324
        %10797 = vmatprep.subr.bf16.mxu0 %v7341
        %10798 = vmatpush1.bf16.msra.mxu0 %v7340
        %10799 = vmatprep.subr.bf16.mxu0 %v7458
        %10800 = vmatpush1.bf16.msra.mxu0 %v7457
        %10801 = vmatprep.subr.bf16.mxu0 %v7474
        %10802 = vmatpush1.bf16.msra.mxu0 %v7473
        %10803 = vmatprep.subr.bf16.mxu0 %v6244
        %10804 = vmatpush1.bf16.msra.mxu0 %v6227
        %10805 = vmatprep.subr.bf16.mxu0 %v6245
        %10806 = vmatpush1.bf16.msra.mxu0 %v6243
        %10807 = vmatprep.subr.bf16.mxu0 %v7513
        %10808 = vmatpush1.bf16.msra.mxu0 %v6399
        %10809 = vmatprep.subr.bf16.mxu0 %v7514
        %10810 = vmatpush1.bf16.msra.mxu0 %v6415
        %10811 = vmatprep.subr.bf16.mxu0 %v7521
        %10812 = vmatpush1.bf16.msra.mxu0 %v6531
        %10813 = vmatprep.subr.bf16.mxu0 %v7522
        %10814 = vmatpush1.bf16.msra.mxu0 %v6547
        %10815 = vmatprep.subr.bf16.mxu0 %v7529
        %10816 = vmatpush1.bf16.msra.mxu0 %v6663
        %10817 = vmatprep.subr.bf16.mxu0 %v7530
        %10818 = vmatpush1.bf16.msra.mxu0 %v6679
        %10819 = vmatprep.subr.bf16.mxu0 %v7537
        %10820 = vmatpush1.bf16.msra.mxu0 %v6796
        %10821 = vmatprep.subr.bf16.mxu0 %v7538
        %10822 = vmatpush1.bf16.msra.mxu0 %v6812
        %10823 = vmatprep.subr.bf16.mxu0 %v7545
        %10824 = vmatpush1.bf16.msra.mxu0 %v6928
        %10825 = vmatprep.subr.bf16.mxu0 %v7546
        %10826 = vmatpush1.bf16.msra.mxu0 %v6944
        %10827 = vmatprep.mubr.bf16.mxu0 %v9228
        %10828 = vmatmul.mubr.bf16.gmra.mrb[0].mxu0 %v9227
        %v10829 = vpop.f32.mrb[0].mxu0
        %v10830 = vadd.f32 %v10777, %v10829
        %v10831 = vpop.f32.mrb[0].mxu0
        %v10832 = vadd.f32 %v10779, %v10831
        %v10833 = vpop.f32.mrb[0].mxu0
        %v10834 = vadd.f32 %v10781, %v10833
        %v10835 = vpop.f32.mrb[0].mxu0
        %v10836 = vadd.f32 %v10783, %v10835
        %10837 = vmatprep.mubr.bf16.mxu0 %v9235
        %10838 = vmatmul.mubr.bf16.gmra.mrb[0].mxu0 %v9234
        %v10839 = vpop.f32.mrb[0].mxu0
        %v10840 = vadd.f32 %v10787, %v10839
        %v10841 = vpop.f32.mrb[0].mxu0
        %v10842 = vadd.f32 %v10789, %v10841
        %v10843 = vpop.f32.mrb[0].mxu0
        %v10844 = vadd.f32 %v10791, %v10843
        %v10845 = vpop.f32.mrb[0].mxu0
        %v10846 = vadd.f32 %v10793, %v10845
        %10847 = vdwg.mxu0
        %10848 = vmatprep.subr.bf16.mxu0 %v8625
        %10849 = vmatpush1.bf16.msra.mxu0 %v7060
        %10850 = vmatprep.subr.bf16.mxu0 %v8626
        %10851 = vmatpush1.bf16.msra.mxu0 %v7076
        %10852 = vmatprep.subr.bf16.mxu0 %v8642
        %10853 = vmatpush1.bf16.msra.mxu0 %v8641
        %10854 = vmatprep.subr.bf16.mxu0 %v8658
        %10855 = vmatpush1.bf16.msra.mxu0 %v8657
        %10856 = vmatprep.subr.bf16.mxu0 %v8674
        %10857 = vmatpush1.bf16.msra.mxu0 %v8673
        %10858 = vmatprep.subr.bf16.mxu0 %v8690
        %10859 = vmatpush1.bf16.msra.mxu0 %v8689
        %10860 = vmatprep.subr.bf16.mxu0 %v8706
        %10861 = vmatpush1.bf16.msra.mxu0 %v8705
        %10862 = vmatprep.subr.bf16.mxu0 %v8722
        %10863 = vmatpush1.bf16.msra.mxu0 %v8721
        %10864 = vmatprep.subr.bf16.mxu0 %v8738
        %10865 = vmatpush1.bf16.msra.mxu0 %v8737
        %10866 = vmatprep.subr.bf16.mxu0 %v8754
        %10867 = vmatpush1.bf16.msra.mxu0 %v8753
        %10868 = vmatprep.subr.bf16.mxu0 %v8770
        %10869 = vmatpush1.bf16.msra.mxu0 %v8769
        %10870 = vmatprep.subr.bf16.mxu0 %v8786
        %10871 = vmatpush1.bf16.msra.mxu0 %v8785
        %10872 = vmatprep.subr.bf16.mxu0 %v8802
        %10873 = vmatpush1.bf16.msra.mxu0 %v8801
        %10874 = vmatprep.subr.bf16.mxu0 %v8818
        %10875 = vmatpush1.bf16.msra.mxu0 %v8817
        %10876 = vmatprep.subr.bf16.mxu0 %v8834
        %10877 = vmatpush1.bf16.msra.mxu0 %v8833
        %10878 = vmatprep.subr.bf16.mxu0 %v8850
        %10879 = vmatpush1.bf16.msra.mxu0 %v8849
        %10880 = vmatprep.mubr.bf16.mxu0 %v9230
        %10881 = vmatmul.mubr.bf16.gmra.mrb[0].mxu0 %v9229
        %v10882 = vpop.f32.mrb[0].mxu0
        %v10883 = vadd.f32 %v10830, %v10882
        %v10884 = vpop.f32.mrb[0].mxu0
        %v10885 = vadd.f32 %v10832, %v10884
        %v10886 = vpop.f32.mrb[0].mxu0
        %v10887 = vadd.f32 %v10834, %v10886
        %v10888 = vpop.f32.mrb[0].mxu0
        %v10889 = vadd.f32 %v10836, %v10888
        %10890 = vmatprep.mubr.bf16.mxu0 %v9237
        %10891 = vmatmul.mubr.bf16.gmra.mrb[0].mxu0 %v9236
        %v10892 = vpop.f32.mrb[0].mxu0
        %v10893 = vadd.f32 %v10840, %v10892
        %v10894 = vpop.f32.mrb[0].mxu0
        %v10895 = vadd.f32 %v10842, %v10894
        %v10896 = vpop.f32.mrb[0].mxu0
        %v10897 = vadd.f32 %v10844, %v10896
        %v10898 = vpop.f32.mrb[0].mxu0
        %v10899 = vadd.f32 %v10846, %v10898
        %10900 = vdwg.mxu0
        %10901 = vmatprep.subr.bf16.mxu0 %v8866
        %10902 = vmatpush1.bf16.msra.mxu0 %v8865
        %10903 = vmatprep.subr.bf16.mxu0 %v8882
        %10904 = vmatpush1.bf16.msra.mxu0 %v8881
        %10905 = vmatprep.subr.bf16.mxu0 0
        %10906 = vmatpush1.bf16.msra.mxu0 0
        %10907 = vmatprep.subr.bf16.mxu0 0
        %10908 = vmatpush1.bf16.msra.mxu0 0
        %10909 = vmatprep.subr.bf16.mxu0 0
        %10910 = vmatpush1.bf16.msra.mxu0 0
        %10911 = vmatprep.subr.bf16.mxu0 0
        %10912 = vmatpush1.bf16.msra.mxu0 0
        %10913 = vmatprep.subr.bf16.mxu0 0
        %10914 = vmatpush1.bf16.msra.mxu0 0
        %10915 = vmatprep.subr.bf16.mxu0 0
        %10916 = vmatpush1.bf16.msra.mxu0 0
        %10917 = vmatprep.subr.bf16.mxu0 0
        %10918 = vmatpush1.bf16.msra.mxu0 0
        %10919 = vmatprep.subr.bf16.mxu0 0
        %10920 = vmatpush1.bf16.msra.mxu0 0
        %10921 = vmatprep.subr.bf16.mxu0 0
        %10922 = vmatpush1.bf16.msra.mxu0 0
        %10923 = vmatprep.subr.bf16.mxu0 0
        %10924 = vmatpush1.bf16.msra.mxu0 0
        %10925 = vmatprep.subr.bf16.mxu0 0
        %10926 = vmatpush1.bf16.msra.mxu0 0
        %10927 = vmatprep.subr.bf16.mxu0 0
        %10928 = vmatpush1.bf16.msra.mxu0 0
        %10929 = vmatprep.subr.bf16.mxu0 0
        %10930 = vmatpush1.bf16.msra.mxu0 0
        %10931 = vmatprep.subr.bf16.mxu0 0
        %10932 = vmatpush1.bf16.msra.mxu0 0
        %10933 = vmatprep.mubr.bf16.mxu0 0
        %10934 = vmatmul.mubr.bf16.gmra.mrb[0].mxu0 %v9253
        %v10935 = vpop.f32.mrb[0].mxu0
        %v10936 = vadd.f32 %v10883, %v10935
        %v10937 = vpop.f32.mrb[0].mxu0
        %v10938 = vadd.f32 %v10885, %v10937
        %v10939 = vpop.f32.mrb[0].mxu0
        %v10940 = vadd.f32 %v10887, %v10939
        %v10941 = vpop.f32.mrb[0].mxu0
        %v10942 = vadd.f32 %v10889, %v10941
        %10943 = vmatprep.mubr.bf16.mxu0 0
        %10944 = vmatmul.mubr.bf16.gmra.mrb[0].mxu0 %v9256
        %v10945 = vpop.f32.mrb[0].mxu0
        %v10946 = vadd.f32 %v10893, %v10945
        %v10947 = vpop.f32.mrb[0].mxu0
        %v10948 = vadd.f32 %v10895, %v10947
        %v10949 = vpop.f32.mrb[0].mxu0
        %v10950 = vadd.f32 %v10897, %v10949
        %v10951 = vpop.f32.mrb[0].mxu0
        %v10952 = vadd.f32 %v10899, %v10951
        %10953 = vdwg.mxu0
        %v10954 = vmax.f32 %v9452, 0.0
        %v10955 = vmax.f32 %v9454, 0.0
        %v10956 = vmax.f32 %v9664, 0.0
        %v10957 = vmax.f32 %v9666, 0.0
        %v10958 = vmax.f32 %v9876, 0.0
        %v10959 = vmax.f32 %v9878, 0.0
        %v10960 = vmax.f32 %v10088, 0.0
        %v10961 = vmax.f32 %v10090, 0.0
        %v10962 = vmax.f32 %v10300, 0.0
        %v10963 = vmax.f32 %v10302, 0.0
        %v10964 = vmax.f32 %v10512, 0.0
        %v10965 = vmax.f32 %v10514, 0.0
        %v10966 = vmax.f32 %v10724, 0.0
        %v10967 = vmax.f32 %v10726, 0.0
        %v10968 = vmax.f32 %v10936, 0.0
        %v10969 = vmax.f32 %v10938, 0.0
        %v10970 = vmax.f32 %v9456, 0.0
        %v10971 = vmax.f32 %v9458, 0.0
        %v10972 = vmax.f32 %v9668, 0.0
        %v10973 = vmax.f32 %v9670, 0.0
        %v10974 = vmax.f32 %v9880, 0.0
        %v10975 = vmax.f32 %v9882, 0.0
        %v10976 = vmax.f32 %v10092, 0.0
        %v10977 = vmax.f32 %v10094, 0.0
        %v10978 = vmax.f32 %v10304, 0.0
        %v10979 = vmax.f32 %v10306, 0.0
        %v10980 = vmax.f32 %v10516, 0.0
        %v10981 = vmax.f32 %v10518, 0.0
        %v10982 = vmax.f32 %v10728, 0.0
        %v10983 = vmax.f32 %v10730, 0.0
        %v10984 = vmax.f32 %v10940, 0.0
        %v10985 = vmax.f32 %v10942, 0.0
        %v10986 = vmax.f32 %v9462, 0.0
        %v10987 = vmax.f32 %v9464, 0.0
        %v10988 = vmax.f32 %v9674, 0.0
        %v10989 = vmax.f32 %v9676, 0.0
        %v10990 = vmax.f32 %v9886, 0.0
        %v10991 = vmax.f32 %v9888, 0.0
        %v10992 = vmax.f32 %v10098, 0.0
        %v10993 = vmax.f32 %v10100, 0.0
        %v10994 = vmax.f32 %v10310, 0.0
        %v10995 = vmax.f32 %v10312, 0.0
        %v10996 = vmax.f32 %v10522, 0.0
        %v10997 = vmax.f32 %v10524, 0.0
        %v10998 = vmax.f32 %v10734, 0.0
        %v10999 = vmax.f32 %v10736, 0.0
        %v11000 = vmax.f32 %v10946, 0.0
        %v11001 = vmax.f32 %v10948, 0.0
        %v11002 = vmax.f32 %v9466, 0.0
        %v11003 = vmax.f32 %v9468, 0.0
        %v11004 = vmax.f32 %v9678, 0.0
        %v11005 = vmax.f32 %v9680, 0.0
        %v11006 = vmax.f32 %v9890, 0.0
        %v11007 = vmax.f32 %v9892, 0.0
        %v11008 = vmax.f32 %v10102, 0.0
        %v11009 = vmax.f32 %v10104, 0.0
        %v11010 = vmax.f32 %v10314, 0.0
        %v11011 = vmax.f32 %v10316, 0.0
        %v11012 = vmax.f32 %v10526, 0.0
        %v11013 = vmax.f32 %v10528, 0.0
        %v11014 = vmax.f32 %v10738, 0.0
        %v11015 = vmax.f32 %v10740, 0.0
        %v11016 = vmax.f32 %v10950, 0.0
        %v11017 = vmax.f32 %v10952, 0.0
        %v11018 = vmin.f32 %v10954, 6.0
        %v11019 = vmin.f32 %v10955, 6.0
        %v11020 = vmin.f32 %v10956, 6.0
        %v11021 = vmin.f32 %v10957, 6.0
        %v11022 = vmin.f32 %v10958, 6.0
        %v11023 = vmin.f32 %v10959, 6.0
        %v11024 = vmin.f32 %v10960, 6.0
        %v11025 = vmin.f32 %v10961, 6.0
        %v11026 = vmin.f32 %v10962, 6.0
        %v11027 = vmin.f32 %v10963, 6.0
        %v11028 = vmin.f32 %v10964, 6.0
        %v11029 = vmin.f32 %v10965, 6.0
        %v11030 = vmin.f32 %v10966, 6.0
        %v11031 = vmin.f32 %v10967, 6.0
        %v11032 = vmin.f32 %v10968, 6.0
        %v11033 = vmin.f32 %v10969, 6.0
        %v11034 = vmin.f32 %v10970, 6.0
        %v11035 = vmin.f32 %v10971, 6.0
        %v11036 = vmin.f32 %v10972, 6.0
        %v11037 = vmin.f32 %v10973, 6.0
        %v11038 = vmin.f32 %v10974, 6.0
        %v11039 = vmin.f32 %v10975, 6.0
        %v11040 = vmin.f32 %v10976, 6.0
        %v11041 = vmin.f32 %v10977, 6.0
        %v11042 = vmin.f32 %v10978, 6.0
        %v11043 = vmin.f32 %v10979, 6.0
        %v11044 = vmin.f32 %v10980, 6.0
        %v11045 = vmin.f32 %v10981, 6.0
        %v11046 = vmin.f32 %v10982, 6.0
        %v11047 = vmin.f32 %v10983, 6.0
        %v11048 = vmin.f32 %v10984, 6.0
        %v11049 = vmin.f32 %v10985, 6.0
        %v11050 = vmin.f32 %v10986, 6.0
        %v11051 = vmin.f32 %v10987, 6.0
        %v11052 = vmin.f32 %v10988, 6.0
        %v11053 = vmin.f32 %v10989, 6.0
        %v11054 = vmin.f32 %v10990, 6.0
        %v11055 = vmin.f32 %v10991, 6.0
        %v11056 = vmin.f32 %v10992, 6.0
        %v11057 = vmin.f32 %v10993, 6.0
        %v11058 = vmin.f32 %v10994, 6.0
        %v11059 = vmin.f32 %v10995, 6.0
        %v11060 = vmin.f32 %v10996, 6.0
        %v11061 = vmin.f32 %v10997, 6.0
        %v11062 = vmin.f32 %v10998, 6.0
        %v11063 = vmin.f32 %v10999, 6.0
        %v11064 = vmin.f32 %v11000, 6.0
        %v11065 = vmin.f32 %v11001, 6.0
        %v11066 = vmin.f32 %v11002, 6.0
        %v11067 = vmin.f32 %v11003, 6.0
        %v11068 = vmin.f32 %v11004, 6.0
        %v11069 = vmin.f32 %v11005, 6.0
        %v11070 = vmin.f32 %v11006, 6.0
        %v11071 = vmin.f32 %v11007, 6.0
        %v11072 = vmin.f32 %v11008, 6.0
        %v11073 = vmin.f32 %v11009, 6.0
        %v11074 = vmin.f32 %v11010, 6.0
        %v11075 = vmin.f32 %v11011, 6.0
        %v11076 = vmin.f32 %v11012, 6.0
        %v11077 = vmin.f32 %v11013, 6.0
        %v11078 = vmin.f32 %v11014, 6.0
        %v11079 = vmin.f32 %v11015, 6.0
        %v11080 = vmin.f32 %v11016, 6.0
        %v11081 = vmin.f32 %v11017, 6.0
        %v11082 = vpack.c.bf16 %v11034, %v11018
        %v11083 = vpack.c.bf16 %v11035, %v11019
        %v11084 = vpack.c.bf16 %v11036, %v11020
        %v11085 = vpack.c.bf16 %v11037, %v11021
        %v11086 = vpack.c.bf16 %v11038, %v11022
        %v11087 = vpack.c.bf16 %v11039, %v11023
        %v11088 = vpack.c.bf16 %v11040, %v11024
        %v11089 = vpack.c.bf16 %v11041, %v11025
        %v11090 = vpack.c.bf16 %v11042, %v11026
        %v11091 = vpack.c.bf16 %v11043, %v11027
        %v11092 = vpack.c.bf16 %v11044, %v11028
        %v11093 = vpack.c.bf16 %v11045, %v11029
        %v11094 = vpack.c.bf16 %v11046, %v11030
        %v11095 = vpack.c.bf16 %v11047, %v11031
        %v11096 = vpack.c.bf16 %v11048, %v11032
        %v11097 = vpack.c.bf16 %v11049, %v11033
        %v11098 = vpack.c.bf16 %v11066, %v11050
        %v11099 = vpack.c.bf16 %v11067, %v11051
        %v11100 = vpack.c.bf16 %v11068, %v11052
        %v11101 = vpack.c.bf16 %v11069, %v11053
        %v11102 = vpack.c.bf16 %v11070, %v11054
        %v11103 = vpack.c.bf16 %v11071, %v11055
        %v11104 = vpack.c.bf16 %v11072, %v11056
        %v11105 = vpack.c.bf16 %v11073, %v11057
        %v11106 = vpack.c.bf16 %v11074, %v11058
        %v11107 = vpack.c.bf16 %v11075, %v11059
        %v11108 = vpack.c.bf16 %v11076, %v11060
        %v11109 = vpack.c.bf16 %v11077, %v11061
        %v11110 = vpack.c.bf16 %v11078, %v11062
        %v11111 = vpack.c.bf16 %v11079, %v11063
        %v11112 = vpack.c.bf16 %v11080, %v11064
        %v11113 = vpack.c.bf16 %v11081, %v11065
        %11114 = vst [vmem:[#allocation5] sm:$0xff] %v11082
        %11115 = vst [vmem:[#allocation5 + $0x8] sm:$0xff] %v11083
        %11116 = vst [vmem:[#allocation5 + $0x10] sm:$0xff] %v11084
        %11117 = vst [vmem:[#allocation5 + $0x18] sm:$0xff] %v11085
        %11118 = vst [vmem:[#allocation5 + $0x20] sm:$0xff] %v11086
        %11119 = vst [vmem:[#allocation5 + $0x28] sm:$0xff] %v11087
        %11120 = vst [vmem:[#allocation5 + $0x30] sm:$0xff] %v11088
        %11121 = vst [vmem:[#allocation5 + $0x38] sm:$0xff] %v11089
        %11122 = vst [vmem:[#allocation5 + $0x40] sm:$0xff] %v11090
        %11123 = vst [vmem:[#allocation5 + $0x48] sm:$0xff] %v11091
        %11124 = vst [vmem:[#allocation5 + $0x50] sm:$0xff] %v11092
        %11125 = vst [vmem:[#allocation5 + $0x58] sm:$0xff] %v11093
        %11126 = vst [vmem:[#allocation5 + $0x60] sm:$0xff] %v11094
        %11127 = vst [vmem:[#allocation5 + $0x68] sm:$0xff] %v11095
        %11128 = vst [vmem:[#allocation5 + $0x70] sm:$0xff] %v11096
        %11129 = vst [vmem:[#allocation5 + $0x78] sm:$0xff] %v11097
        %11130 = vst [vmem:[#allocation5 + $0x88] sm:$0xff] %v11098
        %11131 = vst [vmem:[#allocation5 + $0x90] sm:$0xff] %v11099
        %11132 = vst [vmem:[#allocation5 + $0x98] sm:$0xff] %v11100
        %11133 = vst [vmem:[#allocation5 + $0xa0] sm:$0xff] %v11101
        %11134 = vst [vmem:[#allocation5 + $0xa8] sm:$0xff] %v11102
        %11135 = vst [vmem:[#allocation5 + $0xb0] sm:$0xff] %v11103
        %11136 = vst [vmem:[#allocation5 + $0xb8] sm:$0xff] %v11104
        %11137 = vst [vmem:[#allocation5 + $0xc0] sm:$0xff] %v11105
        %11138 = vst [vmem:[#allocation5 + $0xc8] sm:$0xff] %v11106
        %11139 = vst [vmem:[#allocation5 + $0xd0] sm:$0xff] %v11107
        %11140 = vst [vmem:[#allocation5 + $0xd8] sm:$0xff] %v11108
        %11141 = vst [vmem:[#allocation5 + $0xe0] sm:$0xff] %v11109
        %11142 = vst [vmem:[#allocation5 + $0xe8] sm:$0xff] %v11110
        %11143 = vst [vmem:[#allocation5 + $0xf0] sm:$0xff] %v11111
        %11144 = vst [vmem:[#allocation5 + $0xf8] sm:$0xff] %v11112
        %11145 = vst [vmem:[#allocation5 + $0x100] sm:$0xff] %v11113
        %v11146 = vld [vmem:[#allocation5] sm:$0xff]
        %v11147 = vld [vmem:[#allocation5 + $0x8] sm:$0xff]
        %v11148 = vld [vmem:[#allocation5 + $0x10] sm:$0xff]
        %v11149 = vld [vmem:[#allocation5 + $0x18] sm:$0xff]
        %v11150 = vld [vmem:[#allocation5 + $0x20] sm:$0xff]
        %v11151 = vld [vmem:[#allocation5 + $0x28] sm:$0xff]
        %v11152 = vld [vmem:[#allocation5 + $0x30] sm:$0xff]
        %v11153 = vld [vmem:[#allocation5 + $0x38] sm:$0xff]
        %v11154 = vld [vmem:[#allocation5 + $0x40] sm:$0xff]
        %v11155 = vld [vmem:[#allocation5 + $0x48] sm:$0xff]
        %v11156 = vld [vmem:[#allocation5 + $0x50] sm:$0xff]
        %v11157 = vld [vmem:[#allocation5 + $0x58] sm:$0xff]
        %v11158 = vld [vmem:[#allocation5 + $0x60] sm:$0xff]
        %v11159 = vld [vmem:[#allocation5 + $0x68] sm:$0xff]
        %v11160 = vld [vmem:[#allocation5 + $0x70] sm:$0xff]
        %v11161 = vld [vmem:[#allocation5 + $0x78] sm:$0xff]
        %v11162 = vld [vmem:[#allocation5 + $0x88] sm:$0xff]
        %v11163 = vld [vmem:[#allocation5 + $0x90] sm:$0xff]
        %v11164 = vld [vmem:[#allocation5 + $0x98] sm:$0xff]
        %v11165 = vld [vmem:[#allocation5 + $0xa0] sm:$0xff]
        %v11166 = vld [vmem:[#allocation5 + $0xa8] sm:$0xff]
        %v11167 = vld [vmem:[#allocation5 + $0xb0] sm:$0xff]
        %v11168 = vld [vmem:[#allocation5 + $0xb8] sm:$0xff]
        %v11169 = vld [vmem:[#allocation5 + $0xc0] sm:$0xff]
        %v11170 = vld [vmem:[#allocation5 + $0xc8] sm:$0xff]
        %v11171 = vld [vmem:[#allocation5 + $0xd0] sm:$0xff]
        %v11172 = vld [vmem:[#allocation5 + $0xd8] sm:$0xff]
        %v11173 = vld [vmem:[#allocation5 + $0xe0] sm:$0xff]
        %v11174 = vld [vmem:[#allocation5 + $0xe8] sm:$0xff]
        %v11175 = vld [vmem:[#allocation5 + $0xf0] sm:$0xff]
        %v11176 = vld [vmem:[#allocation5 + $0xf8] sm:$0xff]
        %v11177 = vld [vmem:[#allocation5 + $0x100] sm:$0xff]
        %v11178 = vld [vmem:[#allocation5] sm:$0xff]
        %v11179 = vld [vmem:[#allocation5 + $0x8] sm:$0xff]
        %v11180 = vld [vmem:[#allocation5 + $0x10] sm:$0xff]
        %v11181 = vld [vmem:[#allocation5 + $0x18] sm:$0xff]
        %v11182 = vld [vmem:[#allocation5 + $0x20] sm:$0xff]
        %v11183 = vld [vmem:[#allocation5 + $0x28] sm:$0xff]
        %v11184 = vld [vmem:[#allocation5 + $0x30] sm:$0xff]
        %v11185 = vld [vmem:[#allocation5 + $0x38] sm:$0xff]
        %v11186 = vld [vmem:[#allocation5 + $0x40] sm:$0xff]
        %v11187 = vld [vmem:[#allocation5 + $0x48] sm:$0xff]
        %v11188 = vld [vmem:[#allocation5 + $0x50] sm:$0xff]
        %v11189 = vld [vmem:[#allocation5 + $0x58] sm:$0xff]
        %v11190 = vld [vmem:[#allocation5 + $0x60] sm:$0xff]
        %v11191 = vld [vmem:[#allocation5 + $0x68] sm:$0xff]
        %v11192 = vld [vmem:[#allocation5 + $0x70] sm:$0xff]
        %v11193 = vld [vmem:[#allocation5 + $0x78] sm:$0xff]
        %v11194 = vld [vmem:[#allocation5 + $0x80] sm:$0xff]
        %v11195 = vld [vmem:[#allocation5 + $0x88] sm:$0xff]
        %v11196 = vld [vmem:[#allocation5 + $0x90] sm:$0xff]
        %v11197 = vld [vmem:[#allocation5 + $0x98] sm:$0xff]
        %v11198 = vld [vmem:[#allocation5 + $0xa0] sm:$0xff]
        %v11199 = vld [vmem:[#allocation5 + $0xa8] sm:$0xff]
        %v11200 = vld [vmem:[#allocation5 + $0xb0] sm:$0xff]
        %v11201 = vld [vmem:[#allocation5 + $0xb8] sm:$0xff]
        %v11202 = vld [vmem:[#allocation5 + $0xc0] sm:$0xff]
        %v11203 = vld [vmem:[#allocation5 + $0xc8] sm:$0xff]
        %v11204 = vld [vmem:[#allocation5 + $0xd0] sm:$0xff]
        %v11205 = vld [vmem:[#allocation5 + $0xd8] sm:$0xff]
        %v11206 = vld [vmem:[#allocation5 + $0xe0] sm:$0xff]
        %v11207 = vld [vmem:[#allocation5 + $0xe8] sm:$0xff]
        %v11208 = vld [vmem:[#allocation5 + $0xf0] sm:$0xff]
        %v11209 = vld [vmem:[#allocation5 + $0xf8] sm:$0xff]
        %v11210 = vld [vmem:[#allocation5 + $0x100] sm:$0xff]
        %v11211 = vld [vmem:[#allocation5 + $0x108] sm:$0xff]
        %11246 = vrot.lane.b32.xlu0 %v11178, 126
        %v11247 = vpop.permute.xlu0 %11246
        %11248 = vrot.lane.b32.xlu0 %v11179, 126
        %v11249 = vpop.permute.xlu0 %11248
        %11250 = vrot.lane.b32.xlu0 %v11180, 126
        %v11251 = vpop.permute.xlu0 %11250
        %11252 = vrot.lane.b32.xlu0 %v11181, 126
        %v11253 = vpop.permute.xlu0 %11252
        %11254 = vrot.lane.b32.xlu0 %v11182, 126
        %v11255 = vpop.permute.xlu0 %11254
        %11256 = vrot.lane.b32.xlu0 %v11183, 126
        %v11257 = vpop.permute.xlu0 %11256
        %11258 = vrot.lane.b32.xlu0 %v11184, 126
        %v11259 = vpop.permute.xlu0 %11258
        %11260 = vrot.lane.b32.xlu0 %v11185, 126
        %v11261 = vpop.permute.xlu0 %11260
        %11262 = vrot.lane.b32.xlu0 %v11186, 126
        %v11263 = vpop.permute.xlu0 %11262
        %11264 = vrot.lane.b32.xlu0 %v11187, 126
        %v11265 = vpop.permute.xlu0 %11264
        %11266 = vrot.lane.b32.xlu0 %v11188, 126
        %v11267 = vpop.permute.xlu0 %11266
        %11268 = vrot.lane.b32.xlu0 %v11189, 126
        %v11269 = vpop.permute.xlu0 %11268
        %11270 = vrot.lane.b32.xlu0 %v11190, 126
        %v11271 = vpop.permute.xlu0 %11270
        %11272 = vrot.lane.b32.xlu0 %v11191, 126
        %v11273 = vpop.permute.xlu0 %11272
        %11274 = vrot.lane.b32.xlu0 %v11192, 126
        %v11275 = vpop.permute.xlu0 %11274
        %11276 = vrot.lane.b32.xlu0 %v11193, 126
        %v11277 = vpop.permute.xlu0 %11276
        %11278 = vrot.lane.b32.xlu0 %v11194, 126
        %v11279 = vpop.permute.xlu0 %11278
        %11280 = vrot.lane.b32.xlu0 %v11195, 126
        %v11281 = vpop.permute.xlu0 %11280
        %11282 = vrot.lane.b32.xlu0 %v11196, 126
        %v11283 = vpop.permute.xlu0 %11282
        %11284 = vrot.lane.b32.xlu0 %v11197, 126
        %v11285 = vpop.permute.xlu0 %11284
        %11286 = vrot.lane.b32.xlu0 %v11198, 126
        %v11287 = vpop.permute.xlu0 %11286
        %11288 = vrot.lane.b32.xlu0 %v11199, 126
        %v11289 = vpop.permute.xlu0 %11288
        %11290 = vrot.lane.b32.xlu0 %v11200, 126
        %v11291 = vpop.permute.xlu0 %11290
        %11292 = vrot.lane.b32.xlu0 %v11201, 126
        %v11293 = vpop.permute.xlu0 %11292
        %11294 = vrot.lane.b32.xlu0 %v11202, 126
        %v11295 = vpop.permute.xlu0 %11294
        %11296 = vrot.lane.b32.xlu0 %v11203, 126
        %v11297 = vpop.permute.xlu0 %11296
        %11298 = vrot.lane.b32.xlu0 %v11204, 126
        %v11299 = vpop.permute.xlu0 %11298
        %11300 = vrot.lane.b32.xlu0 %v11205, 126
        %v11301 = vpop.permute.xlu0 %11300
        %11302 = vrot.lane.b32.xlu0 %v11206, 126
        %v11303 = vpop.permute.xlu0 %11302
        %11304 = vrot.lane.b32.xlu0 %v11207, 126
        %v11305 = vpop.permute.xlu0 %11304
        %11306 = vrot.lane.b32.xlu0 %v11208, 126
        %v11307 = vpop.permute.xlu0 %11306
        %11308 = vrot.lane.b32.xlu0 %v11209, 126
        %v11309 = vpop.permute.xlu0 %11308
        %11310 = vrot.lane.b32.xlu0 %v11210, 126
        %v11311 = vpop.permute.xlu0 %11310
        %11312 = vrot.lane.b32.xlu0 %v11211, 126
        %v11313 = vpop.permute.xlu0 %11312
        %v11314 = vsel %vm444, %v11247, %v11249
        %v11315 = vsel %vm444, %v11249, %v11251
        %v11316 = vsel %vm444, %v11251, %v11253
        %v11317 = vsel %vm444, %v11253, %v11255
        %v11318 = vsel %vm444, %v11255, %v11257
        %v11319 = vsel %vm444, %v11257, %v11259
        %v11320 = vsel %vm444, %v11259, %v11261
        %v11321 = vsel %vm444, %v11261, %v11263
        %v11322 = vsel %vm444, %v11263, %v11265
        %v11323 = vsel %vm444, %v11265, %v11267
        %v11324 = vsel %vm444, %v11267, %v11269
        %v11325 = vsel %vm444, %v11269, %v11271
        %v11326 = vsel %vm444, %v11271, %v11273
        %v11327 = vsel %vm444, %v11273, %v11275
        %v11328 = vsel %vm444, %v11275, %v11277
        %v11329 = vsel %vm444, %v11277, %v11279
        %v11330 = vsel %vm444, %v11281, %v11283
        %v11331 = vsel %vm444, %v11283, %v11285
        %v11332 = vsel %vm444, %v11285, %v11287
        %v11333 = vsel %vm444, %v11287, %v11289
        %v11334 = vsel %vm444, %v11289, %v11291
        %v11335 = vsel %vm444, %v11291, %v11293
        %v11336 = vsel %vm444, %v11293, %v11295
        %v11337 = vsel %vm444, %v11295, %v11297
        %v11338 = vsel %vm444, %v11297, %v11299
        %v11339 = vsel %vm444, %v11299, %v11301
        %v11340 = vsel %vm444, %v11301, %v11303
        %v11341 = vsel %vm444, %v11303, %v11305
        %v11342 = vsel %vm444, %v11305, %v11307
        %v11343 = vsel %vm444, %v11307, %v11309
        %v11344 = vsel %vm444, %v11309, %v11311
        %v11345 = vsel %vm444, %v11311, %v11313
        %v11378 = vmax.bf16 %v11146, %v11314
        %v11379 = vmax.bf16 %v11147, %v11315
        %v11380 = vmax.bf16 %v11148, %v11316
        %v11381 = vmax.bf16 %v11149, %v11317
        %v11382 = vmax.bf16 %v11150, %v11318
        %v11383 = vmax.bf16 %v11151, %v11319
        %v11384 = vmax.bf16 %v11152, %v11320
        %v11385 = vmax.bf16 %v11153, %v11321
        %v11386 = vmax.bf16 %v11154, %v11322
        %v11387 = vmax.bf16 %v11155, %v11323
        %v11388 = vmax.bf16 %v11156, %v11324
        %v11389 = vmax.bf16 %v11157, %v11325
        %v11390 = vmax.bf16 %v11158, %v11326
        %v11391 = vmax.bf16 %v11159, %v11327
        %v11392 = vmax.bf16 %v11160, %v11328
        %v11393 = vmax.bf16 %v11161, %v11329
        %v11394 = vmax.bf16 %v11162, %v11330
        %v11395 = vmax.bf16 %v11163, %v11331
        %v11396 = vmax.bf16 %v11164, %v11332
        %v11397 = vmax.bf16 %v11165, %v11333
        %v11398 = vmax.bf16 %v11166, %v11334
        %v11399 = vmax.bf16 %v11167, %v11335
        %v11400 = vmax.bf16 %v11168, %v11336
        %v11401 = vmax.bf16 %v11169, %v11337
        %v11402 = vmax.bf16 %v11170, %v11338
        %v11403 = vmax.bf16 %v11171, %v11339
        %v11404 = vmax.bf16 %v11172, %v11340
        %v11405 = vmax.bf16 %v11173, %v11341
        %v11406 = vmax.bf16 %v11174, %v11342
        %v11407 = vmax.bf16 %v11175, %v11343
        %v11408 = vmax.bf16 %v11176, %v11344
        %v11409 = vmax.bf16 %v11177, %v11345
        %v11412 = vmax.bf16 %v11178, %v11314
        %v11413 = vmax.bf16 %v11179, %v11315
        %v11414 = vmax.bf16 %v11180, %v11316
        %v11415 = vmax.bf16 %v11181, %v11317
        %v11416 = vmax.bf16 %v11182, %v11318
        %v11417 = vmax.bf16 %v11183, %v11319
        %v11418 = vmax.bf16 %v11184, %v11320
        %v11419 = vmax.bf16 %v11185, %v11321
        %v11420 = vmax.bf16 %v11186, %v11322
        %v11421 = vmax.bf16 %v11187, %v11323
        %v11422 = vmax.bf16 %v11188, %v11324
        %v11423 = vmax.bf16 %v11189, %v11325
        %v11424 = vmax.bf16 %v11190, %v11326
        %v11425 = vmax.bf16 %v11191, %v11327
        %v11426 = vmax.bf16 %v11192, %v11328
        %v11427 = vmax.bf16 %v11193, %v11329
        %v11428 = vmax.bf16 %v11194, %v11279
        %v11429 = vmax.bf16 %v11195, %v11330
        %v11430 = vmax.bf16 %v11196, %v11331
        %v11431 = vmax.bf16 %v11197, %v11332
        %v11432 = vmax.bf16 %v11198, %v11333
        %v11433 = vmax.bf16 %v11199, %v11334
        %v11434 = vmax.bf16 %v11200, %v11335
        %v11435 = vmax.bf16 %v11201, %v11336
        %v11436 = vmax.bf16 %v11202, %v11337
        %v11437 = vmax.bf16 %v11203, %v11338
        %v11438 = vmax.bf16 %v11204, %v11339
        %v11439 = vmax.bf16 %v11205, %v11340
        %v11440 = vmax.bf16 %v11206, %v11341
        %v11441 = vmax.bf16 %v11207, %v11342
        %v11442 = vmax.bf16 %v11208, %v11343
        %v11443 = vmax.bf16 %v11209, %v11344
        %v11444 = vmax.bf16 %v11210, %v11345
        %v11445 = vmax.bf16 %v11211, %v11313
        %11480 = vrot.lane.b32.xlu0 %v11412, 64
        %v11481 = vpop.permute.xlu0 %11480
        %11482 = vrot.lane.b32.xlu0 %v11413, 64
        %v11483 = vpop.permute.xlu0 %11482
        %11484 = vrot.lane.b32.xlu0 %v11414, 64
        %v11485 = vpop.permute.xlu0 %11484
        %11486 = vrot.lane.b32.xlu0 %v11415, 64
        %v11487 = vpop.permute.xlu0 %11486
        %11488 = vrot.lane.b32.xlu0 %v11416, 64
        %v11489 = vpop.permute.xlu0 %11488
        %11490 = vrot.lane.b32.xlu0 %v11417, 64
        %v11491 = vpop.permute.xlu0 %11490
        %11492 = vrot.lane.b32.xlu0 %v11418, 64
        %v11493 = vpop.permute.xlu0 %11492
        %11494 = vrot.lane.b32.xlu0 %v11419, 64
        %v11495 = vpop.permute.xlu0 %11494
        %11496 = vrot.lane.b32.xlu0 %v11420, 64
        %v11497 = vpop.permute.xlu0 %11496
        %11498 = vrot.lane.b32.xlu0 %v11421, 64
        %v11499 = vpop.permute.xlu0 %11498
        %11500 = vrot.lane.b32.xlu0 %v11422, 64
        %v11501 = vpop.permute.xlu0 %11500
        %11502 = vrot.lane.b32.xlu0 %v11423, 64
        %v11503 = vpop.permute.xlu0 %11502
        %11504 = vrot.lane.b32.xlu0 %v11424, 64
        %v11505 = vpop.permute.xlu0 %11504
        %11506 = vrot.lane.b32.xlu0 %v11425, 64
        %v11507 = vpop.permute.xlu0 %11506
        %11508 = vrot.lane.b32.xlu0 %v11426, 64
        %v11509 = vpop.permute.xlu0 %11508
        %11510 = vrot.lane.b32.xlu0 %v11427, 64
        %v11511 = vpop.permute.xlu0 %11510
        %11512 = vrot.lane.b32.xlu0 %v11428, 64
        %v11513 = vpop.permute.xlu0 %11512
        %11514 = vrot.lane.b32.xlu0 %v11429, 64
        %v11515 = vpop.permute.xlu0 %11514
        %11516 = vrot.lane.b32.xlu0 %v11430, 64
        %v11517 = vpop.permute.xlu0 %11516
        %11518 = vrot.lane.b32.xlu0 %v11431, 64
        %v11519 = vpop.permute.xlu0 %11518
        %11520 = vrot.lane.b32.xlu0 %v11432, 64
        %v11521 = vpop.permute.xlu0 %11520
        %11522 = vrot.lane.b32.xlu0 %v11433, 64
        %v11523 = vpop.permute.xlu0 %11522
        %11524 = vrot.lane.b32.xlu0 %v11434, 64
        %v11525 = vpop.permute.xlu0 %11524
        %11526 = vrot.lane.b32.xlu0 %v11435, 64
        %v11527 = vpop.permute.xlu0 %11526
        %11528 = vrot.lane.b32.xlu0 %v11436, 64
        %v11529 = vpop.permute.xlu0 %11528
        %11530 = vrot.lane.b32.xlu0 %v11437, 64
        %v11531 = vpop.permute.xlu0 %11530
        %11532 = vrot.lane.b32.xlu0 %v11438, 64
        %v11533 = vpop.permute.xlu0 %11532
        %11534 = vrot.lane.b32.xlu0 %v11439, 64
        %v11535 = vpop.permute.xlu0 %11534
        %11536 = vrot.lane.b32.xlu0 %v11440, 64
        %v11537 = vpop.permute.xlu0 %11536
        %11538 = vrot.lane.b32.xlu0 %v11441, 64
        %v11539 = vpop.permute.xlu0 %11538
        %11540 = vrot.lane.b32.xlu0 %v11442, 64
        %v11541 = vpop.permute.xlu0 %11540
        %11542 = vrot.lane.b32.xlu0 %v11443, 64
        %v11543 = vpop.permute.xlu0 %11542
        %11544 = vrot.lane.b32.xlu0 %v11444, 64
        %v11545 = vpop.permute.xlu0 %11544
        %11546 = vrot.lane.b32.xlu0 %v11445, 64
        %v11547 = vpop.permute.xlu0 %11546
        %v11548 = vsel %vm1056, %v11481, %v11483
        %v11549 = vsel %vm1056, %v11483, %v11485
        %v11550 = vsel %vm1056, %v11485, %v11487
        %v11551 = vsel %vm1056, %v11487, %v11489
        %v11552 = vsel %vm1056, %v11489, %v11491
        %v11553 = vsel %vm1056, %v11491, %v11493
        %v11554 = vsel %vm1056, %v11493, %v11495
        %v11555 = vsel %vm1056, %v11495, %v11497
        %v11556 = vsel %vm1056, %v11497, %v11499
        %v11557 = vsel %vm1056, %v11499, %v11501
        %v11558 = vsel %vm1056, %v11501, %v11503
        %v11559 = vsel %vm1056, %v11503, %v11505
        %v11560 = vsel %vm1056, %v11505, %v11507
        %v11561 = vsel %vm1056, %v11507, %v11509
        %v11562 = vsel %vm1056, %v11509, %v11511
        %v11563 = vsel %vm1056, %v11511, %v11513
        %v11564 = vsel %vm1056, %v11515, %v11517
        %v11565 = vsel %vm1056, %v11517, %v11519
        %v11566 = vsel %vm1056, %v11519, %v11521
        %v11567 = vsel %vm1056, %v11521, %v11523
        %v11568 = vsel %vm1056, %v11523, %v11525
        %v11569 = vsel %vm1056, %v11525, %v11527
        %v11570 = vsel %vm1056, %v11527, %v11529
        %v11571 = vsel %vm1056, %v11529, %v11531
        %v11572 = vsel %vm1056, %v11531, %v11533
        %v11573 = vsel %vm1056, %v11533, %v11535
        %v11574 = vsel %vm1056, %v11535, %v11537
        %v11575 = vsel %vm1056, %v11537, %v11539
        %v11576 = vsel %vm1056, %v11539, %v11541
        %v11577 = vsel %vm1056, %v11541, %v11543
        %v11578 = vsel %vm1056, %v11543, %v11545
        %v11579 = vsel %vm1056, %v11545, %v11547
        %v11612 = vmax.bf16 %v11378, %v11548
        %v11613 = vmax.bf16 %v11379, %v11549
        %v11614 = vmax.bf16 %v11380, %v11550
        %v11615 = vmax.bf16 %v11381, %v11551
        %v11616 = vmax.bf16 %v11382, %v11552
        %v11617 = vmax.bf16 %v11383, %v11553
        %v11618 = vmax.bf16 %v11384, %v11554
        %v11619 = vmax.bf16 %v11385, %v11555
        %v11620 = vmax.bf16 %v11386, %v11556
        %v11621 = vmax.bf16 %v11387, %v11557
        %v11622 = vmax.bf16 %v11388, %v11558
        %v11623 = vmax.bf16 %v11389, %v11559
        %v11624 = vmax.bf16 %v11390, %v11560
        %v11625 = vmax.bf16 %v11391, %v11561
        %v11626 = vmax.bf16 %v11392, %v11562
        %v11627 = vmax.bf16 %v11393, %v11563
        %v11628 = vmax.bf16 %v11394, %v11564
        %v11629 = vmax.bf16 %v11395, %v11565
        %v11630 = vmax.bf16 %v11396, %v11566
        %v11631 = vmax.bf16 %v11397, %v11567
        %v11632 = vmax.bf16 %v11398, %v11568
        %v11633 = vmax.bf16 %v11399, %v11569
        %v11634 = vmax.bf16 %v11400, %v11570
        %v11635 = vmax.bf16 %v11401, %v11571
        %v11636 = vmax.bf16 %v11402, %v11572
        %v11637 = vmax.bf16 %v11403, %v11573
        %v11638 = vmax.bf16 %v11404, %v11574
        %v11639 = vmax.bf16 %v11405, %v11575
        %v11640 = vmax.bf16 %v11406, %v11576
        %v11641 = vmax.bf16 %v11407, %v11577
        %v11642 = vmax.bf16 %v11408, %v11578
        %v11643 = vmax.bf16 %v11409, %v11579
        %v11676 = vunpack.c.l.b16 %v11612
        %v11677 = vunpack.c.l.b16 %v11613
        %v11678 = vunpack.c.l.b16 %v11614
        %v11679 = vunpack.c.l.b16 %v11615
        %v11680 = vunpack.c.l.b16 %v11616
        %v11681 = vunpack.c.l.b16 %v11617
        %v11682 = vunpack.c.l.b16 %v11618
        %v11683 = vunpack.c.l.b16 %v11619
        %v11684 = vunpack.c.l.b16 %v11620
        %v11685 = vunpack.c.l.b16 %v11621
        %v11686 = vunpack.c.l.b16 %v11622
        %v11687 = vunpack.c.l.b16 %v11623
        %v11688 = vunpack.c.l.b16 %v11624
        %v11689 = vunpack.c.l.b16 %v11625
        %v11690 = vunpack.c.l.b16 %v11626
        %v11691 = vunpack.c.l.b16 %v11627
        %v11692 = vunpack.c.h.b16 %v11612
        %v11693 = vunpack.c.h.b16 %v11613
        %v11694 = vunpack.c.h.b16 %v11614
        %v11695 = vunpack.c.h.b16 %v11615
        %v11696 = vunpack.c.h.b16 %v11616
        %v11697 = vunpack.c.h.b16 %v11617
        %v11698 = vunpack.c.h.b16 %v11618
        %v11699 = vunpack.c.h.b16 %v11619
        %v11700 = vunpack.c.h.b16 %v11620
        %v11701 = vunpack.c.h.b16 %v11621
        %v11702 = vunpack.c.h.b16 %v11622
        %v11703 = vunpack.c.h.b16 %v11623
        %v11704 = vunpack.c.h.b16 %v11624
        %v11705 = vunpack.c.h.b16 %v11625
        %v11706 = vunpack.c.h.b16 %v11626
        %v11707 = vunpack.c.h.b16 %v11627
        %v11708 = vunpack.c.l.b16 %v11628
        %v11709 = vunpack.c.l.b16 %v11629
        %v11710 = vunpack.c.l.b16 %v11630
        %v11711 = vunpack.c.l.b16 %v11631
        %v11712 = vunpack.c.l.b16 %v11632
        %v11713 = vunpack.c.l.b16 %v11633
        %v11714 = vunpack.c.l.b16 %v11634
        %v11715 = vunpack.c.l.b16 %v11635
        %v11716 = vunpack.c.l.b16 %v11636
        %v11717 = vunpack.c.l.b16 %v11637
        %v11718 = vunpack.c.l.b16 %v11638
        %v11719 = vunpack.c.l.b16 %v11639
        %v11720 = vunpack.c.l.b16 %v11640
        %v11721 = vunpack.c.l.b16 %v11641
        %v11722 = vunpack.c.l.b16 %v11642
        %v11723 = vunpack.c.l.b16 %v11643
        %v11724 = vunpack.c.h.b16 %v11628
        %v11725 = vunpack.c.h.b16 %v11629
        %v11726 = vunpack.c.h.b16 %v11630
        %v11727 = vunpack.c.h.b16 %v11631
        %v11728 = vunpack.c.h.b16 %v11632
        %v11729 = vunpack.c.h.b16 %v11633
        %v11730 = vunpack.c.h.b16 %v11634
        %v11731 = vunpack.c.h.b16 %v11635
        %v11732 = vunpack.c.h.b16 %v11636
        %v11733 = vunpack.c.h.b16 %v11637
        %v11734 = vunpack.c.h.b16 %v11638
        %v11735 = vunpack.c.h.b16 %v11639
        %v11736 = vunpack.c.h.b16 %v11640
        %v11737 = vunpack.c.h.b16 %v11641
        %v11738 = vunpack.c.h.b16 %v11642
        %v11739 = vunpack.c.h.b16 %v11643
        %v11740 = vpack.c.b16 %v11677, %v11676
        %v11741 = vpack.c.b16 %v11679, %v11678
        %v11742 = vpack.c.b16 %v11681, %v11680
        %v11743 = vpack.c.b16 %v11683, %v11682
        %v11744 = vpack.c.b16 %v11685, %v11684
        %v11745 = vpack.c.b16 %v11687, %v11686
        %v11746 = vpack.c.b16 %v11689, %v11688
        %v11747 = vpack.c.b16 %v11691, %v11690
        %v11748 = vpack.c.b16 %v11693, %v11692
        %v11749 = vpack.c.b16 %v11695, %v11694
        %v11750 = vpack.c.b16 %v11697, %v11696
        %v11751 = vpack.c.b16 %v11699, %v11698
        %v11752 = vpack.c.b16 %v11701, %v11700
        %v11753 = vpack.c.b16 %v11703, %v11702
        %v11754 = vpack.c.b16 %v11705, %v11704
        %v11755 = vpack.c.b16 %v11707, %v11706
        %v11756 = vpack.c.b16 %v11709, %v11708
        %v11757 = vpack.c.b16 %v11711, %v11710
        %v11758 = vpack.c.b16 %v11713, %v11712
        %v11759 = vpack.c.b16 %v11715, %v11714
        %v11760 = vpack.c.b16 %v11717, %v11716
        %v11761 = vpack.c.b16 %v11719, %v11718
        %v11762 = vpack.c.b16 %v11721, %v11720
        %v11763 = vpack.c.b16 %v11723, %v11722
        %v11764 = vpack.c.b16 %v11725, %v11724
        %v11765 = vpack.c.b16 %v11727, %v11726
        %v11766 = vpack.c.b16 %v11729, %v11728
        %v11767 = vpack.c.b16 %v11731, %v11730
        %v11768 = vpack.c.b16 %v11733, %v11732
        %v11769 = vpack.c.b16 %v11735, %v11734
        %v11770 = vpack.c.b16 %v11737, %v11736
        %v11771 = vpack.c.b16 %v11739, %v11738
        %11804 = vst [vmem:[%s255] sm:$0xff] %v11740
        %11805 = vst [vmem:[%s255 + $0x8] sm:$0xff] %v11741
        %11806 = vst [vmem:[%s255 + $0x10] sm:$0xff] %v11742
        %11807 = vst [vmem:[%s255 + $0x18] sm:$0xff] %v11743
        %11808 = vst [vmem:[%s255 + $0x20] sm:$0xff] %v11744
        %11809 = vst [vmem:[%s255 + $0x28] sm:$0xff] %v11745
        %11810 = vst [vmem:[%s255 + $0x30] sm:$0xff] %v11746
        %11811 = vst [vmem:[%s255 + $0x38] sm:$0xff] %v11747
        %11812 = vst [vmem:[%s255 + $0x40] sm:$0xff] %v11748
        %11813 = vst [vmem:[%s255 + $0x48] sm:$0xff] %v11749
        %11814 = vst [vmem:[%s255 + $0x50] sm:$0xff] %v11750
        %11815 = vst [vmem:[%s255 + $0x58] sm:$0xff] %v11751
        %11816 = vst [vmem:[%s255 + $0x60] sm:$0xff] %v11752
        %11817 = vst [vmem:[%s255 + $0x68] sm:$0xff] %v11753
        %11818 = vst [vmem:[%s255 + $0x70] sm:$0xff] %v11754
        %11819 = vst [vmem:[%s255 + $0x78] sm:$0xff] %v11755
        %11820 = vst [vmem:[%s255 + $0x80] sm:$0xff] %v11756
        %11821 = vst [vmem:[%s255 + $0x88] sm:$0xff] %v11757
        %11822 = vst [vmem:[%s255 + $0x90] sm:$0xff] %v11758
        %11823 = vst [vmem:[%s255 + $0x98] sm:$0xff] %v11759
        %11824 = vst [vmem:[%s255 + $0xa0] sm:$0xff] %v11760
        %11825 = vst [vmem:[%s255 + $0xa8] sm:$0xff] %v11761
        %11826 = vst [vmem:[%s255 + $0xb0] sm:$0xff] %v11762
        %11827 = vst [vmem:[%s255 + $0xb8] sm:$0xff] %v11763
        %11828 = vst [vmem:[%s255 + $0xc0] sm:$0xff] %v11764
        %11829 = vst [vmem:[%s255 + $0xc8] sm:$0xff] %v11765
        %11830 = vst [vmem:[%s255 + $0xd0] sm:$0xff] %v11766
        %11831 = vst [vmem:[%s255 + $0xd8] sm:$0xff] %v11767
        %11832 = vst [vmem:[%s255 + $0xe0] sm:$0xff] %v11768
        %11833 = vst [vmem:[%s255 + $0xe8] sm:$0xff] %v11769
        %11834 = vst [vmem:[%s255 + $0xf0] sm:$0xff] %v11770
        %11835 = vst [vmem:[%s255 + $0xf8] sm:$0xff] %v11771
        %s11836 = sand.u32 %s141, 1
        %s11837 = scalar_lea.sflag [#allocation8], %s11836
        %s11838 = sand.u32 %s141, 1
        %s11839 = smul.addr %s11838, 256
        %s11840 = scalar_lea.vmem [#allocation11], %s11839
        // Predicated region
        $region53: #{tpu_custom_call.1} parent=39 // pred_check
          %p11841 = pneg %p151
        $region54: #{tpu_custom_call.1} parent=39 // pred_check_branch
          %11843 = sbr.rel (%p11841) target = $region56
        $region55: #{tpu_custom_call.1} parent=39 // pred_region
          %s11844 = smul.u32 16, %s23
          %s11846 = ssub.s32 4096, 4096
          %11847 = vsyncadd %s11837, %s11846
          %s11848 = smul.addr %s11844, 64
          %s11849 = scalar_lea.hbm %s5, %s11848
          %s11850 = sshll.u32 %s11840, 4
          %s11851 = int_to_ptr.vmem [resolvable:$true] %s11850
          %11856 = dma.vmem_to_hbm [thread:$0]  %s11851, 4096, %s11849, %s11837, 1024, 2048, 64
        $region56: #{tpu_custom_call.1} parent=39 // pred_fallthru
          _
      $region40: #{tpu_custom_call.1} parent=5 // pred_fallthru
        _
      %p11857 = scmp.le.s32.totalorder 2, %s18
      // Predicated region
      $region57: #{tpu_custom_call.1} parent=5 // pred_check
        %p11858 = pneg %p11857
      $region58: #{tpu_custom_call.1} parent=5 // pred_check_branch
        %11860 = sbr.rel (%p11858) target = $region60
      $region59: #{tpu_custom_call.1} parent=5 // pred_region
        %s11861 = ssub.s32 %s18, 2
        // Predicated region
        $region61: #{tpu_custom_call.1} parent=59 // pred_check
          %p11862 = pneg %p157
        $region62: #{tpu_custom_call.1} parent=59 // pred_check_branch
          %11864 = sbr.rel (%p11862) target = $region64
        $region63: #{tpu_custom_call.1} parent=59 // pred_region
          %s11865 = sand.u32 %s142, 1
          %s11866 = scalar_lea.sflag [#allocation8], %s11865
          %s11867 = sand.u32 %s142, 1
          %s11868 = smul.addr %s11867, 256
          %s11869 = scalar_lea.vmem [#allocation11], %s11868
          %11870 = dma.done %s11866, 4096
        $region64: #{tpu_custom_call.1} parent=59 // pred_fallthru
          _
      $region60: #{tpu_custom_call.1} parent=5 // pred_fallthru
        _
    $region6: #{tpu_custom_call.1} parent=1 // loop_footer
      %s22 = sadd.s32 1, %s18
    $region7: #{tpu_custom_call.1} parent=1 // loop_footer_branch
      %17 = sbr.rel target = $region3
    $region8: #{tpu_custom_call.1} parent=1 // loop_exit
      _
    %11871 = vsyncpa [#allocation7], 1
    %s11872 = scalar_lea.sflag [#allocation7], 1
    %11873 = vsyncpa %s11872, 1
    %11874 = vsyncpa [#allocation10], 1
    %11875 = vsyncpa [#allocation8], 1
    %s11876 = scalar_lea.sflag [#allocation8], 1
    %11877 = vsyncpa %s11876, 1

</llo_original>
